<compile_context>
chip_gen: v7x
topology: tpu7x:2x2x1
jax: 0.10.0
libtpu: 0.0.40
codegen_flags: <defaults>
</compile_context>

<pallas_src>
import jax
import jax.numpy as jnp
import numpy as np
from jax.experimental import pallas as pl
from jax.experimental.pallas import tpu as pltpu

EPS = 1e-5
LANE = 128          # lane padding for channel dims
ELT_TM_MAX = 4096   # row tile for the elementwise BN + add + ReLU pass


def _round_up(x, m):
    return (x + m - 1) // m * m


# ---------------------------------------------------------------------------
# Pallas kernels
# ---------------------------------------------------------------------------
def _make_conv3x3_kernel(H, W, fuse_bn_relu):
    """3x3, stride-1, 'same' conv for one image as 9 accumulating MXU matmuls over a
    zero-padded VMEM halo buffer.  Also emits per-channel sum / sum-of-squares of the raw
    conv output (pass 1 of two-pass training-mode BatchNorm).  If `fuse_bn_relu`, the
    previous layer's folded BN scale/bias + ReLU is applied to the input on the fly."""
    HW = H * W

    def kernel(*args):
        if fuse_bn_relu:
            x_ref, s_ref, b_ref, w_ref, y_ref, st_ref, pad_ref = args
        else:
            x_ref, w_ref, y_ref, st_ref, pad_ref = args
        c = pad_ref.shape[-1]
        cout = y_ref.shape[-1]

        x = x_ref[0]                                              # (H, W, C) bf16
        if fuse_bn_relu:
            x = jnp.maximum(x.astype(jnp.float32) * s_ref[...] + b_ref[...], 0.0)
            x = x.astype(jnp.bfloat16)

        # Build the spatially zero-padded activation and park it in the VMEM halo buffer.
        zcol = jnp.zeros((H, 1, c), x.dtype)
        xp = jnp.concatenate([zcol, x, zcol], axis=1)             # (H, W+2, C)
        zrow = jnp.zeros((1, W + 2, c), x.dtype)
        xp = jnp.concatenate([zrow, xp, zrow], axis=0)            # (H+2, W+2, C)
        pad_ref[...] = xp

        # 9 accumulating matmuls, one per 3x3 tap (f32 accumulation on the MXU).
        acc = jnp.zeros((HW, cout), jnp.float32)
        for ky in range(3):
            for kx in range(3):
                win = pad_ref[ky:ky + H, kx:kx + W, :].reshape(HW, c)
                acc = acc + jnp.dot(win, w_ref[ky, kx],
                                    preferred_element_type=jnp.float32)

        y_ref[...] = acc.reshape(1, H, W, cout).astype(y_ref.dtype)
        s = jnp.sum(acc, axis=0, keepdims=True)                   # (1, C) channel sum
        ss = jnp.sum(acc * acc, axis=0, keepdims=True)            # (1, C) channel sum of squares
        st_ref[...] = jnp.concatenate([s, ss], axis=0).reshape(1, 2, cout)

    return kernel


def _bn_add_relu_kernel(x_ref, scale_ref, bias_ref, id_ref, o_ref):
    """Fused per-channel scale/shift + residual add + ReLU."""
    y = x_ref[...].astype(jnp.float32) * scale_ref[...] + bias_ref[...] + id_ref[...]
    o_ref[...] = jnp.maximum(y, 0.0)


# ---------------------------------------------------------------------------
# pallas_call wrappers
# ---------------------------------------------------------------------------
def _conv3x3(x, w, scale=None, bias=None):
    """x (N,H,W,C) bf16, w (3,3,C,C) bf16, optional folded-BN scale/bias (1,C) f32 applied
    (with ReLU) to the input on the fly.  Returns raw conv output (N,H,W,C) bf16 and
    per-image channel stats (N,2,C) f32 (row 0 = sum, row 1 = sum of squares)."""
    N, H, W, C = x.shape
    fuse = scale is not None
    kernel = _make_conv3x3_kernel(H, W, fuse)

    in_specs = [pl.BlockSpec((1, H, W, C), lambda n: (n, 0, 0, 0))]
    inputs = [x]
    if fuse:
        in_specs += [pl.BlockSpec((1, C), lambda n: (0, 0)),
                     pl.BlockSpec((1, C), lambda n: (0, 0))]
        inputs += [scale, bias]
    # Full-array weight block with a constant index_map -> resident in VMEM across the grid.
    in_specs.append(pl.BlockSpec((3, 3, C, C), lambda n: (0, 0, 0, 0)))
    inputs.append(w)

    return pl.pallas_call(
        kernel,
        out_shape=(jax.ShapeDtypeStruct((N, H, W, C), jnp.bfloat16),
                   jax.ShapeDtypeStruct((N, 2, C), jnp.float32)),
        grid_spec=pltpu.PrefetchScalarGridSpec(
            num_scalar_prefetch=0,
            grid=(N,),
            in_specs=in_specs,
            out_specs=[pl.BlockSpec((1, H, W, C), lambda n: (n, 0, 0, 0)),
                       pl.BlockSpec((1, 2, C), lambda n: (n, 0, 0))],
            scratch_shapes=[pltpu.VMEM((H + 2, W + 2, C), jnp.bfloat16)]),
        compiler_params=pltpu.CompilerParams(
            dimension_semantics=("parallel",)),
    )(*inputs)


def _bn_add_relu(y2, scale, bias, identity):
    """y2 (M,C) bf16 raw conv2 output, identity (M,C) f32 -> relu(y2*scale + bias + id) f32."""
    M, C = identity.shape
    m8 = _round_up(M, 8)
    tm = m8 if m8 <= ELT_TM_MAX else ELT_TM_MAX        # large, lane-dense row tiles
    m_pad = _round_up(M, tm)
    y2p = jnp.pad(y2, ((0, m_pad - M), (0, 0)))
    idp = jnp.pad(identity, ((0, m_pad - M), (0, 0)))
    out = pl.pallas_call(
        _bn_add_relu_kernel,
        out_shape=jax.ShapeDtypeStruct((m_pad, C), jnp.float32),
        grid_spec=pltpu.PrefetchScalarGridSpec(
            num_scalar_prefetch=0,
            grid=(m_pad // tm,),
            in_specs=[pl.BlockSpec((tm, C), lambda i: (i, 0)),
                      pl.BlockSpec((1, C), lambda i: (0, 0)),
                      pl.BlockSpec((1, C), lambda i: (0, 0)),
                      pl.BlockSpec((tm, C), lambda i: (i, 0))],
            out_specs=pl.BlockSpec((tm, C), lambda i: (i, 0))),
        compiler_params=pltpu.CompilerParams(dimension_semantics=("parallel",)),
    )(y2p, scale, bias, idp)
    return out[:M]


# ---------------------------------------------------------------------------
# Glue (layout / parameter packing / BN folding) in plain JAX
# ---------------------------------------------------------------------------
def _pack_conv_weight(w_oihw, c_pad):
    """PyTorch (Cout, Cin, 3, 3) -> zero-padded bf16 weight (3, 3, c_pad, c_pad)."""
    cout, cin = w_oihw.shape[0], w_oihw.shape[1]
    w = jnp.transpose(w_oihw, (2, 3, 1, 0))                      # (3, 3, Cin, Cout)
    w = jnp.pad(w, ((0, 0), (0, 0), (0, c_pad - cin), (0, c_pad - cout)))
    return w.astype(jnp.bfloat16)


def _fold_bn(stats, count, gamma, beta, c_pad):
    """Per-image partial sums -> global batch mean/var -> folded per-channel scale/bias."""
    s = jnp.sum(stats[:, 0, :], axis=0)                          # (c_pad,)
    ss = jnp.sum(stats[:, 1, :], axis=0)
    mean = s / count
    var = jnp.maximum(ss / count - mean * mean, 0.0)
    g = jnp.pad(gamma, (0, c_pad - gamma.shape[0]))
    b = jnp.pad(beta, (0, c_pad - beta.shape[0]))
    scale = g * jax.lax.rsqrt(var + EPS)
    bias = b - mean * scale
    return scale.reshape(1, c_pad), bias.reshape(1, c_pad)


@jax.jit
def res_block_forward(x_nchw, params):
    # Conv biases cancel exactly under training-mode BatchNorm -> not used.
    w1, _b1, g1, be1, w2, _b2, g2, be2 = params
    x = jnp.transpose(x_nchw, (0, 2, 3, 1)).astype(jnp.float32)   # NCHW -> NHWC
    N, H, W, Cin = x.shape
    Cout = w1.shape[0]
    M = N * H * W
    c_pad = _round_up(max(Cin, Cout), LANE)

    x_pad = jnp.pad(x, ((0, 0), (0, 0), (0, 0), (0, c_pad - Cin)))  # lane-dense channels
    x_bf = x_pad.astype(jnp.bfloat16)
    w1p = _pack_conv_weight(w1, c_pad)
    w2p = _pack_conv_weight(w2, c_pad)

    # conv1 (+ per-channel batch stats for bn1)
    y1, st1 = _conv3x3(x_bf, w1p)
    s1, sh1 = _fold_bn(st1, M, g1, be1, c_pad)

    # conv2 with bn1 + ReLU fused into its input path (+ stats for bn2)
    y2, st2 = _conv3x3(y1, w2p, scale=s1, bias=sh1)
    s2, sh2 = _fold_bn(st2, M, g2, be2, c_pad)

    # bn2 + residual add + ReLU
    out = _bn_add_relu(y2.reshape(M, c_pad), s2, sh2, x_pad.reshape(M, c_pad))
    out = out[:, :Cout].reshape(N, H, W, Cout)
    return jnp.transpose(out, (0, 3, 1, 2))                       # NHWC -> NCHW


# ---------------------------------------------------------------------------
# Pure-JAX reference (for correctness check only)
# ---------------------------------------------------------------------------
def _reference(x_nchw, params):
    w1, b1, g1, be1, w2, b2, g2, be2 = params

    def conv(x, w, b):
        y = jax.lax.conv_general_dilated(
            x, w, window_strides=(1, 1), padding=((1, 1), (1, 1)),
            dimension_numbers=("NCHW", "OIHW", "NCHW"))
        return y + b[None, :, None, None]

    def bn_train(x, g, be):
        mean = jnp.mean(x, axis=(0, 2, 3), keepdims=True)
        var = jnp.mean(jnp.square(x - mean), axis=(0, 2, 3), keepdims=True)
        return (x - mean) * jax.lax.rsqrt(var + EPS) * g[None, :, None, None] \
            + be[None, :, None, None]

    out = jax.nn.relu(bn_train(conv(x_nchw, w1, b1), g1, be1))
    out = bn_train(conv(out, w2, b2), g2, be2)
    out = out + x_nchw
    return jax.nn.relu(out)


# ---------------------------------------------------------------------------
if __name__ == "__main__":
    N, C, H, W = 2, 4, 16, 16        # inplanes == planes, stride=1, downsample=None
    key = jax.random.PRNGKey(0)
    ks = jax.random.split(key, 7)

    x = jax.random.normal(ks[0], (N, C, H, W), jnp.float32)

    # Deterministic parameter init (PyTorch shapes: conv weight (Cout, Cin, 3, 3)).
    w1 = 0.1 * jax.random.normal(ks[1], (C, C, 3, 3), jnp.float32)
    b1 = 0.05 * jax.random.normal(ks[2], (C,), jnp.float32)
    g1 = 1.0 + 0.1 * jax.random.normal(ks[3], (C,), jnp.float32)
    be1 = 0.1 * jax.random.normal(ks[4], (C,), jnp.float32)
    w2 = 0.1 * jax.random.normal(ks[5], (C, C, 3, 3), jnp.float32)
    b2 = 0.05 * jax.random.normal(ks[6], (C,), jnp.float32)
    g2 = jnp.ones((C,), jnp.float32)
    be2 = jnp.zeros((C,), jnp.float32)

    params = (w1, b1, g1, be1, w2, b2, g2, be2)

    out = jax.block_until_ready(res_block_forward(x, params))
    ref = jax.block_until_ready(_reference(x, params))
    # bf16 MXU operands (f32 accumulation) dominate the tolerance; a genuine windowing /
    # BN bug would produce O(1) errors and still be caught here.
    np.testing.assert_allclose(np.asarray(out), np.asarray(ref), atol=1e-1, rtol=1e-1)

    print("KERNEL_OK")
</pallas_src>

<mosaic_0001>
module attributes {stable_mosaic.version = 11 : i64} {
  func.func @kernel(%arg0: i32, %arg1: memref<1x16x16x128xbf16, #tpu.memory_space<vmem>>, %arg2: memref<3x3x128x128xbf16, #tpu.memory_space<vmem>>, %arg3: memref<1x16x16x128xbf16, #tpu.memory_space<vmem>>, %arg4: memref<1x2x128xf32, #tpu.memory_space<vmem>>, %arg5: memref<18x18x128xbf16, #tpu.memory_space<vmem>>) attributes {dimension_semantics = [#tpu.dimension_semantics<parallel>], iteration_bounds = array<i64: 2>, scalar_prefetch = 0 : i64, scratch_operands = 1 : i64, tpu.core_type = #tpu.core_type<tc>, window_params = [{transform_indices = @transform_0, window_bounds = array<i64: 1, 16, 16, 128>}, {pipeline_mode = #tpu.pipeline_mode<synchronous>, transform_indices = @transform_1, window_bounds = array<i64: 3, 3, 128, 128>}, {transform_indices = @transform_2, window_bounds = array<i64: 1, 16, 16, 128>}, {transform_indices = @transform_3, window_bounds = array<i64: 1, 2, 128>}]} {
    %c0 = arith.constant 0 : index
    %c0_0 = arith.constant 0 : index
    %c0_1 = arith.constant 0 : index
    %c0_2 = arith.constant 0 : index
    %0 = vector.load %arg1[%c0, %c0_0, %c0_1, %c0_2] : memref<1x16x16x128xbf16, #tpu.memory_space<vmem>>, vector<1x16x16x128xbf16>
    %1 = vector.shape_cast %0 : vector<1x16x16x128xbf16> to vector<16x16x128xbf16>
    %cst = arith.constant 0.000000e+00 : bf16
    %2 = vector.broadcast %cst : bf16 to vector<16x1x128xbf16>
    %3 = tpu.concatenate %2, %1, %2 in 1 : vector<16x1x128xbf16>, vector<16x16x128xbf16>, vector<16x1x128xbf16> -> vector<16x18x128xbf16>
    %cst_3 = arith.constant 0.000000e+00 : bf16
    %4 = vector.broadcast %cst_3 : bf16 to vector<1x18x128xbf16>
    %5 = tpu.concatenate %4, %3, %4 in 0 : vector<1x18x128xbf16>, vector<16x18x128xbf16>, vector<1x18x128xbf16> -> vector<18x18x128xbf16>
    %c0_4 = arith.constant 0 : index
    %c0_5 = arith.constant 0 : index
    %c0_6 = arith.constant 0 : index
    %6 = vector.load %arg5[%c0_4, %c0_5, %c0_6] : memref<18x18x128xbf16, #tpu.memory_space<vmem>>, vector<18x18x128xbf16>
    tpu.vector_store %arg5[%c0_4, %c0_5, %c0_6], %5 {strides = array<i32>} : memref<18x18x128xbf16, #tpu.memory_space<vmem>>, vector<18x18x128xbf16>,
    %cst_7 = arith.constant 0.000000e+00 : f32
    %7 = vector.broadcast %cst_7 : f32 to vector<256x128xf32>
    %c0_8 = arith.constant 0 : index
    %c0_9 = arith.constant 0 : index
    %c0_10 = arith.constant 0 : index
    %8 = vector.load %arg5[%c0_8, %c0_9, %c0_10] : memref<18x18x128xbf16, #tpu.memory_space<vmem>>, vector<16x16x128xbf16>
    %9 = vector.shape_cast %8 : vector<16x16x128xbf16> to vector<256x128xbf16>
    %c0_11 = arith.constant 0 : index
    %c0_12 = arith.constant 0 : index
    %c0_13 = arith.constant 0 : index
    %c0_14 = arith.constant 0 : index
    %10 = vector.load %arg2[%c0_11, %c0_12, %c0_13, %c0_14] : memref<3x3x128x128xbf16, #tpu.memory_space<vmem>>, vector<1x1x128x128xbf16>
    %11 = vector.shape_cast %10 : vector<1x1x128x128xbf16> to vector<128x128xbf16>
    %cst_15 = arith.constant dense<0.000000e+00> : vector<256x128xf32>
    %12 = tpu.matmul %9, %11, %cst_15 {dimension_numbers = #tpu.dot_dimension_numbers<[1], [0], [0], [1], [0, 0, 1, 1], [], []>} : vector<256x128xbf16>, vector<128x128xbf16>, vector<256x128xf32> -> vector<256x128xf32>
    %13 = arith.addf %7, %12 : vector<256x128xf32>
    %c0_16 = arith.constant 0 : index
    %c1 = arith.constant 1 : index
    %c0_17 = arith.constant 0 : index
    %14 = vector.load %arg5[%c0_16, %c1, %c0_17] : memref<18x18x128xbf16, #tpu.memory_space<vmem>>, vector<16x16x128xbf16>
    %15 = vector.shape_cast %14 : vector<16x16x128xbf16> to vector<256x128xbf16>
    %c0_18 = arith.constant 0 : index
    %c1_19 = arith.constant 1 : index
    %c0_20 = arith.constant 0 : index
    %c0_21 = arith.constant 0 : index
    %16 = vector.load %arg2[%c0_18, %c1_19, %c0_20, %c0_21] : memref<3x3x128x128xbf16, #tpu.memory_space<vmem>>, vector<1x1x128x128xbf16>
    %17 = vector.shape_cast %16 : vector<1x1x128x128xbf16> to vector<128x128xbf16>
    %cst_22 = arith.constant dense<0.000000e+00> : vector<256x128xf32>
    %18 = tpu.matmul %15, %17, %cst_22 {dimension_numbers = #tpu.dot_dimension_numbers<[1], [0], [0], [1], [0, 0, 1, 1], [], []>} : vector<256x128xbf16>, vector<128x128xbf16>, vector<256x128xf32> -> vector<256x128xf32>
    %19 = arith.addf %13, %18 : vector<256x128xf32>
    %c0_23 = arith.constant 0 : index
    %c2 = arith.constant 2 : index
    %c0_24 = arith.constant 0 : index
    %20 = vector.load %arg5[%c0_23, %c2, %c0_24] : memref<18x18x128xbf16, #tpu.memory_space<vmem>>, vector<16x16x128xbf16>
    %21 = vector.shape_cast %20 : vector<16x16x128xbf16> to vector<256x128xbf16>
    %c0_25 = arith.constant 0 : index
    %c2_26 = arith.constant 2 : index
    %c0_27 = arith.constant 0 : index
    %c0_28 = arith.constant 0 : index
    %22 = vector.load %arg2[%c0_25, %c2_26, %c0_27, %c0_28] : memref<3x3x128x128xbf16, #tpu.memory_space<vmem>>, vector<1x1x128x128xbf16>
    %23 = vector.shape_cast %22 : vector<1x1x128x128xbf16> to vector<128x128xbf16>
    %cst_29 = arith.constant dense<0.000000e+00> : vector<256x128xf32>
    %24 = tpu.matmul %21, %23, %cst_29 {dimension_numbers = #tpu.dot_dimension_numbers<[1], [0], [0], [1], [0, 0, 1, 1], [], []>} : vector<256x128xbf16>, vector<128x128xbf16>, vector<256x128xf32> -> vector<256x128xf32>
    %25 = arith.addf %19, %24 : vector<256x128xf32>
    %c1_30 = arith.constant 1 : index
    %c0_31 = arith.constant 0 : index
    %c0_32 = arith.constant 0 : index
    %26 = vector.load %arg5[%c1_30, %c0_31, %c0_32] : memref<18x18x128xbf16, #tpu.memory_space<vmem>>, vector<16x16x128xbf16>
    %27 = vector.shape_cast %26 : vector<16x16x128xbf16> to vector<256x128xbf16>
    %c1_33 = arith.constant 1 : index
    %c0_34 = arith.constant 0 : index
    %c0_35 = arith.constant 0 : index
    %c0_36 = arith.constant 0 : index
    %28 = vector.load %arg2[%c1_33, %c0_34, %c0_35, %c0_36] : memref<3x3x128x128xbf16, #tpu.memory_space<vmem>>, vector<1x1x128x128xbf16>
    %29 = vector.shape_cast %28 : vector<1x1x128x128xbf16> to vector<128x128xbf16>
    %cst_37 = arith.constant dense<0.000000e+00> : vector<256x128xf32>
    %30 = tpu.matmul %27, %29, %cst_37 {dimension_numbers = #tpu.dot_dimension_numbers<[1], [0], [0], [1], [0, 0, 1, 1], [], []>} : vector<256x128xbf16>, vector<128x128xbf16>, vector<256x128xf32> -> vector<256x128xf32>
    %31 = arith.addf %25, %30 : vector<256x128xf32>
    %c1_38 = arith.constant 1 : index
    %c1_39 = arith.constant 1 : index
    %c0_40 = arith.constant 0 : index
    %32 = vector.load %arg5[%c1_38, %c1_39, %c0_40] : memref<18x18x128xbf16, #tpu.memory_space<vmem>>, vector<16x16x128xbf16>
    %33 = vector.shape_cast %32 : vector<16x16x128xbf16> to vector<256x128xbf16>
    %c1_41 = arith.constant 1 : index
    %c1_42 = arith.constant 1 : index
    %c0_43 = arith.constant 0 : index
    %c0_44 = arith.constant 0 : index
    %34 = vector.load %arg2[%c1_41, %c1_42, %c0_43, %c0_44] : memref<3x3x128x128xbf16, #tpu.memory_space<vmem>>, vector<1x1x128x128xbf16>
    %35 = vector.shape_cast %34 : vector<1x1x128x128xbf16> to vector<128x128xbf16>
    %cst_45 = arith.constant dense<0.000000e+00> : vector<256x128xf32>
    %36 = tpu.matmul %33, %35, %cst_45 {dimension_numbers = #tpu.dot_dimension_numbers<[1], [0], [0], [1], [0, 0, 1, 1], [], []>} : vector<256x128xbf16>, vector<128x128xbf16>, vector<256x128xf32> -> vector<256x128xf32>
    %37 = arith.addf %31, %36 : vector<256x128xf32>
    %c1_46 = arith.constant 1 : index
    %c2_47 = arith.constant 2 : index
    %c0_48 = arith.constant 0 : index
    %38 = vector.load %arg5[%c1_46, %c2_47, %c0_48] : memref<18x18x128xbf16, #tpu.memory_space<vmem>>, vector<16x16x128xbf16>
    %39 = vector.shape_cast %38 : vector<16x16x128xbf16> to vector<256x128xbf16>
    %c1_49 = arith.constant 1 : index
    %c2_50 = arith.constant 2 : index
    %c0_51 = arith.constant 0 : index
    %c0_52 = arith.constant 0 : index
    %40 = vector.load %arg2[%c1_49, %c2_50, %c0_51, %c0_52] : memref<3x3x128x128xbf16, #tpu.memory_space<vmem>>, vector<1x1x128x128xbf16>
    %41 = vector.shape_cast %40 : vector<1x1x128x128xbf16> to vector<128x128xbf16>
    %cst_53 = arith.constant dense<0.000000e+00> : vector<256x128xf32>
    %42 = tpu.matmul %39, %41, %cst_53 {dimension_numbers = #tpu.dot_dimension_numbers<[1], [0], [0], [1], [0, 0, 1, 1], [], []>} : vector<256x128xbf16>, vector<128x128xbf16>, vector<256x128xf32> -> vector<256x128xf32>
    %43 = arith.addf %37, %42 : vector<256x128xf32>
    %c2_54 = arith.constant 2 : index
    %c0_55 = arith.constant 0 : index
    %c0_56 = arith.constant 0 : index
    %44 = vector.load %arg5[%c2_54, %c0_55, %c0_56] : memref<18x18x128xbf16, #tpu.memory_space<vmem>>, vector<16x16x128xbf16>
    %45 = vector.shape_cast %44 : vector<16x16x128xbf16> to vector<256x128xbf16>
    %c2_57 = arith.constant 2 : index
    %c0_58 = arith.constant 0 : index
    %c0_59 = arith.constant 0 : index
    %c0_60 = arith.constant 0 : index
    %46 = vector.load %arg2[%c2_57, %c0_58, %c0_59, %c0_60] : memref<3x3x128x128xbf16, #tpu.memory_space<vmem>>, vector<1x1x128x128xbf16>
    %47 = vector.shape_cast %46 : vector<1x1x128x128xbf16> to vector<128x128xbf16>
    %cst_61 = arith.constant dense<0.000000e+00> : vector<256x128xf32>
    %48 = tpu.matmul %45, %47, %cst_61 {dimension_numbers = #tpu.dot_dimension_numbers<[1], [0], [0], [1], [0, 0, 1, 1], [], []>} : vector<256x128xbf16>, vector<128x128xbf16>, vector<256x128xf32> -> vector<256x128xf32>
    %49 = arith.addf %43, %48 : vector<256x128xf32>
    %c2_62 = arith.constant 2 : index
    %c1_63 = arith.constant 1 : index
    %c0_64 = arith.constant 0 : index
    %50 = vector.load %arg5[%c2_62, %c1_63, %c0_64] : memref<18x18x128xbf16, #tpu.memory_space<vmem>>, vector<16x16x128xbf16>
    %51 = vector.shape_cast %50 : vector<16x16x128xbf16> to vector<256x128xbf16>
    %c2_65 = arith.constant 2 : index
    %c1_66 = arith.constant 1 : index
    %c0_67 = arith.constant 0 : index
    %c0_68 = arith.constant 0 : index
    %52 = vector.load %arg2[%c2_65, %c1_66, %c0_67, %c0_68] : memref<3x3x128x128xbf16, #tpu.memory_space<vmem>>, vector<1x1x128x128xbf16>
    %53 = vector.shape_cast %52 : vector<1x1x128x128xbf16> to vector<128x128xbf16>
    %cst_69 = arith.constant dense<0.000000e+00> : vector<256x128xf32>
    %54 = tpu.matmul %51, %53, %cst_69 {dimension_numbers = #tpu.dot_dimension_numbers<[1], [0], [0], [1], [0, 0, 1, 1], [], []>} : vector<256x128xbf16>, vector<128x128xbf16>, vector<256x128xf32> -> vector<256x128xf32>
    %55 = arith.addf %49, %54 : vector<256x128xf32>
    %c2_70 = arith.constant 2 : index
    %c2_71 = arith.constant 2 : index
    %c0_72 = arith.constant 0 : index
    %56 = vector.load %arg5[%c2_70, %c2_71, %c0_72] : memref<18x18x128xbf16, #tpu.memory_space<vmem>>, vector<16x16x128xbf16>
    %57 = vector.shape_cast %56 : vector<16x16x128xbf16> to vector<256x128xbf16>
    %c2_73 = arith.constant 2 : index
    %c2_74 = arith.constant 2 : index
    %c0_75 = arith.constant 0 : index
    %c0_76 = arith.constant 0 : index
    %58 = vector.load %arg2[%c2_73, %c2_74, %c0_75, %c0_76] : memref<3x3x128x128xbf16, #tpu.memory_space<vmem>>, vector<1x1x128x128xbf16>
    %59 = vector.shape_cast %58 : vector<1x1x128x128xbf16> to vector<128x128xbf16>
    %cst_77 = arith.constant dense<0.000000e+00> : vector<256x128xf32>
    %60 = tpu.matmul %57, %59, %cst_77 {dimension_numbers = #tpu.dot_dimension_numbers<[1], [0], [0], [1], [0, 0, 1, 1], [], []>} : vector<256x128xbf16>, vector<128x128xbf16>, vector<256x128xf32> -> vector<256x128xf32>
    %61 = arith.addf %55, %60 : vector<256x128xf32>
    %62 = vector.shape_cast %61 : vector<256x128xf32> to vector<1x16x16x128xf32>
    %63 = arith.truncf %62 : vector<1x16x16x128xf32> to vector<1x16x16x128xbf16>
    %c0_78 = arith.constant 0 : index
    %c0_79 = arith.constant 0 : index
    %c0_80 = arith.constant 0 : index
    %c0_81 = arith.constant 0 : index
    %64 = vector.load %arg3[%c0_78, %c0_79, %c0_80, %c0_81] : memref<1x16x16x128xbf16, #tpu.memory_space<vmem>>, vector<1x16x16x128xbf16>
    tpu.vector_store %arg3[%c0_78, %c0_79, %c0_80, %c0_81], %63 {strides = array<i32>} : memref<1x16x16x128xbf16, #tpu.memory_space<vmem>>, vector<1x16x16x128xbf16>,
    %cst_82 = arith.constant dense<0.000000e+00> : vector<128xf32>
    %65 = vector.multi_reduction <add>, %61, %cst_82 [0] : vector<256x128xf32> to vector<128xf32>
    %66 = vector.shape_cast %65 : vector<128xf32> to vector<1x128xf32>
    %67 = arith.mulf %61, %61 : vector<256x128xf32>
    %cst_83 = arith.constant dense<0.000000e+00> : vector<128xf32>
    %68 = vector.multi_reduction <add>, %67, %cst_83 [0] : vector<256x128xf32> to vector<128xf32>
    %69 = vector.shape_cast %68 : vector<128xf32> to vector<1x128xf32>
    %70 = tpu.concatenate %66, %69 in 0 : vector<1x128xf32>, vector<1x128xf32> -> vector<2x128xf32>
    %71 = vector.shape_cast %70 : vector<2x128xf32> to vector<1x2x128xf32>
    %c0_84 = arith.constant 0 : index
    %c0_85 = arith.constant 0 : index
    %c0_86 = arith.constant 0 : index
    %72 = vector.load %arg4[%c0_84, %c0_85, %c0_86] : memref<1x2x128xf32, #tpu.memory_space<vmem>>, vector<1x2x128xf32>
    tpu.vector_store %arg4[%c0_84, %c0_85, %c0_86], %71 {strides = array<i32>} : memref<1x2x128xf32, #tpu.memory_space<vmem>>, vector<1x2x128xf32>,
    return
  }
  func.func @transform_0(%arg0: i32) -> (i32, i32, i32, i32) {
    %c0_i32 = arith.constant 0 : i32
    %c0_i32_0 = arith.constant 0 : i32
    %c0_i32_1 = arith.constant 0 : i32
    %c0_i32_2 = arith.constant 0 : i32
    return %arg0, %c0_i32, %c0_i32_0, %c0_i32_1 : i32, i32, i32, i32
  }
  func.func @transform_1(%arg0: i32) -> (i32, i32, i32, i32) {
    %c0_i32 = arith.constant 0 : i32
    %c0_i32_0 = arith.constant 0 : i32
    %c0_i32_1 = arith.constant 0 : i32
    %c0_i32_2 = arith.constant 0 : i32
    %c0_i32_3 = arith.constant 0 : i32
    return %c0_i32, %c0_i32_0, %c0_i32_1, %c0_i32_2 : i32, i32, i32, i32
  }
  func.func @transform_2(%arg0: i32) -> (i32, i32, i32, i32) {
    %c0_i32 = arith.constant 0 : i32
    %c0_i32_0 = arith.constant 0 : i32
    %c0_i32_1 = arith.constant 0 : i32
    %c0_i32_2 = arith.constant 0 : i32
    return %arg0, %c0_i32, %c0_i32_0, %c0_i32_1 : i32, i32, i32, i32
  }
  func.func @transform_3(%arg0: i32) -> (i32, i32, i32) {
    %c0_i32 = arith.constant 0 : i32
    %c0_i32_0 = arith.constant 0 : i32
    %c0_i32_1 = arith.constant 0 : i32
    return %arg0, %c0_i32, %c0_i32_0 : i32, i32, i32
  }
}

module attributes {stable_mosaic.version = 11 : i64} {
  func.func @_bn_add_relu_kernel(%arg0: i32, %arg1: memref<512x128xbf16, #tpu.memory_space<vmem>>, %arg2: memref<1x128xf32, #tpu.memory_space<vmem>>, %arg3: memref<1x128xf32, #tpu.memory_space<vmem>>, %arg4: memref<512x128xf32, #tpu.memory_space<vmem>>, %arg5: memref<512x128xf32, #tpu.memory_space<vmem>>) attributes {dimension_semantics = [#tpu.dimension_semantics<parallel>], iteration_bounds = array<i64: 1>, scalar_prefetch = 0 : i64, scratch_operands = 0 : i64, tpu.core_type = #tpu.core_type<tc>, window_params = [{transform_indices = @transform_0, window_bounds = array<i64: 512, 128>}, {pipeline_mode = #tpu.pipeline_mode<synchronous>, transform_indices = @transform_1, window_bounds = array<i64: 1, 128>}, {pipeline_mode = #tpu.pipeline_mode<synchronous>, transform_indices = @transform_2, window_bounds = array<i64: 1, 128>}, {transform_indices = @transform_3, window_bounds = array<i64: 512, 128>}, {transform_indices = @transform_4, window_bounds = array<i64: 512, 128>}]} {
    %c0 = arith.constant 0 : index
    %c0_0 = arith.constant 0 : index
    %0 = vector.load %arg1[%c0, %c0_0] : memref<512x128xbf16, #tpu.memory_space<vmem>>, vector<512x128xbf16>
    %1 = arith.extf %0 : vector<512x128xbf16> to vector<512x128xf32>
    %c0_1 = arith.constant 0 : index
    %c0_2 = arith.constant 0 : index
    %2 = vector.load %arg2[%c0_1, %c0_2] : memref<1x128xf32, #tpu.memory_space<vmem>>, vector<1x128xf32>
    %3 = vector.broadcast %2 : vector<1x128xf32> to vector<512x128xf32>
    %4 = arith.mulf %1, %3 : vector<512x128xf32>
    %c0_3 = arith.constant 0 : index
    %c0_4 = arith.constant 0 : index
    %5 = vector.load %arg3[%c0_3, %c0_4] : memref<1x128xf32, #tpu.memory_space<vmem>>, vector<1x128xf32>
    %6 = vector.broadcast %5 : vector<1x128xf32> to vector<512x128xf32>
    %7 = arith.addf %4, %6 : vector<512x128xf32>
    %c0_5 = arith.constant 0 : index
    %c0_6 = arith.constant 0 : index
    %8 = vector.load %arg4[%c0_5, %c0_6] : memref<512x128xf32, #tpu.memory_space<vmem>>, vector<512x128xf32>
    %9 = arith.addf %7, %8 : vector<512x128xf32>
    %cst = arith.constant 0.000000e+00 : f32
    %10 = vector.broadcast %cst : f32 to vector<512x128xf32>
    %11 = arith.maximumf %9, %10 : vector<512x128xf32>
    %c0_7 = arith.constant 0 : index
    %c0_8 = arith.constant 0 : index
    %12 = vector.load %arg5[%c0_7, %c0_8] : memref<512x128xf32, #tpu.memory_space<vmem>>, vector<512x128xf32>
    tpu.vector_store %arg5[%c0_7, %c0_8], %11 {strides = array<i32>} : memref<512x128xf32, #tpu.memory_space<vmem>>, vector<512x128xf32>,
    return
  }
  func.func @transform_0(%arg0: i32) -> (i32, i32) {
    %c0_i32 = arith.constant 0 : i32
    %c0_i32_0 = arith.constant 0 : i32
    return %arg0, %c0_i32 : i32, i32
  }
  func.func @transform_1(%arg0: i32) -> (i32, i32) {
    %c0_i32 = arith.constant 0 : i32
    %c0_i32_0 = arith.constant 0 : i32
    %c0_i32_1 = arith.constant 0 : i32
    return %c0_i32, %c0_i32_0 : i32, i32
  }
  func.func @transform_2(%arg0: i32) -> (i32, i32) {
    %c0_i32 = arith.constant 0 : i32
    %c0_i32_0 = arith.constant 0 : i32
    %c0_i32_1 = arith.constant 0 : i32
    return %c0_i32, %c0_i32_0 : i32, i32
  }
  func.func @transform_3(%arg0: i32) -> (i32, i32) {
    %c0_i32 = arith.constant 0 : i32
    %c0_i32_0 = arith.constant 0 : i32
    return %arg0, %c0_i32 : i32, i32
  }
  func.func @transform_4(%arg0: i32) -> (i32, i32) {
    %c0_i32 = arith.constant 0 : i32
    %c0_i32_0 = arith.constant 0 : i32
    return %arg0, %c0_i32 : i32, i32
  }
}

module attributes {stable_mosaic.version = 11 : i64} {
  func.func @kernel(%arg0: i32, %arg1: memref<1x16x16x128xbf16, #tpu.memory_space<vmem>>, %arg2: memref<1x128xf32, #tpu.memory_space<vmem>>, %arg3: memref<1x128xf32, #tpu.memory_space<vmem>>, %arg4: memref<3x3x128x128xbf16, #tpu.memory_space<vmem>>, %arg5: memref<1x16x16x128xbf16, #tpu.memory_space<vmem>>, %arg6: memref<1x2x128xf32, #tpu.memory_space<vmem>>, %arg7: memref<18x18x128xbf16, #tpu.memory_space<vmem>>) attributes {dimension_semantics = [#tpu.dimension_semantics<parallel>], iteration_bounds = array<i64: 2>, scalar_prefetch = 0 : i64, scratch_operands = 1 : i64, tpu.core_type = #tpu.core_type<tc>, window_params = [{transform_indices = @transform_0, window_bounds = array<i64: 1, 16, 16, 128>}, {pipeline_mode = #tpu.pipeline_mode<synchronous>, transform_indices = @transform_1, window_bounds = array<i64: 1, 128>}, {pipeline_mode = #tpu.pipeline_mode<synchronous>, transform_indices = @transform_2, window_bounds = array<i64: 1, 128>}, {pipeline_mode = #tpu.pipeline_mode<synchronous>, transform_indices = @transform_3, window_bounds = array<i64: 3, 3, 128, 128>}, {transform_indices = @transform_4, window_bounds = array<i64: 1, 16, 16, 128>}, {transform_indices = @transform_5, window_bounds = array<i64: 1, 2, 128>}]} {
    %c0 = arith.constant 0 : index
    %c0_0 = arith.constant 0 : index
    %c0_1 = arith.constant 0 : index
    %c0_2 = arith.constant 0 : index
    %0 = vector.load %arg1[%c0, %c0_0, %c0_1, %c0_2] : memref<1x16x16x128xbf16, #tpu.memory_space<vmem>>, vector<1x16x16x128xbf16>
    %1 = vector.shape_cast %0 : vector<1x16x16x128xbf16> to vector<16x16x128xbf16>
    %2 = arith.extf %1 : vector<16x16x128xbf16> to vector<16x16x128xf32>
    %c0_3 = arith.constant 0 : index
    %c0_4 = arith.constant 0 : index
    %3 = vector.load %arg2[%c0_3, %c0_4] : memref<1x128xf32, #tpu.memory_space<vmem>>, vector<1x128xf32>
    %4 = vector.shape_cast %3 : vector<1x128xf32> to vector<1x1x128xf32>
    %5 = vector.broadcast %4 : vector<1x1x128xf32> to vector<16x16x128xf32>
    %6 = arith.mulf %2, %5 : vector<16x16x128xf32>
    %c0_5 = arith.constant 0 : index
    %c0_6 = arith.constant 0 : index
    %7 = vector.load %arg3[%c0_5, %c0_6] : memref<1x128xf32, #tpu.memory_space<vmem>>, vector<1x128xf32>
    %8 = vector.shape_cast %7 : vector<1x128xf32> to vector<1x1x128xf32>
    %9 = vector.broadcast %8 : vector<1x1x128xf32> to vector<16x16x128xf32>
    %10 = arith.addf %6, %9 : vector<16x16x128xf32>
    %cst = arith.constant 0.000000e+00 : f32
    %11 = vector.broadcast %cst : f32 to vector<16x16x128xf32>
    %12 = arith.maximumf %10, %11 : vector<16x16x128xf32>
    %13 = arith.truncf %12 : vector<16x16x128xf32> to vector<16x16x128xbf16>
    %cst_7 = arith.constant 0.000000e+00 : bf16
    %14 = vector.broadcast %cst_7 : bf16 to vector<16x1x128xbf16>
    %15 = tpu.concatenate %14, %13, %14 in 1 : vector<16x1x128xbf16>, vector<16x16x128xbf16>, vector<16x1x128xbf16> -> vector<16x18x128xbf16>
    %cst_8 = arith.constant 0.000000e+00 : bf16
    %16 = vector.broadcast %cst_8 : bf16 to vector<1x18x128xbf16>
    %17 = tpu.concatenate %16, %15, %16 in 0 : vector<1x18x128xbf16>, vector<16x18x128xbf16>, vector<1x18x128xbf16> -> vector<18x18x128xbf16>
    %c0_9 = arith.constant 0 : index
    %c0_10 = arith.constant 0 : index
    %c0_11 = arith.constant 0 : index
    %18 = vector.load %arg7[%c0_9, %c0_10, %c0_11] : memref<18x18x128xbf16, #tpu.memory_space<vmem>>, vector<18x18x128xbf16>
    tpu.vector_store %arg7[%c0_9, %c0_10, %c0_11], %17 {strides = array<i32>} : memref<18x18x128xbf16, #tpu.memory_space<vmem>>, vector<18x18x128xbf16>,
    %cst_12 = arith.constant 0.000000e+00 : f32
    %19 = vector.broadcast %cst_12 : f32 to vector<256x128xf32>
    %c0_13 = arith.constant 0 : index
    %c0_14 = arith.constant 0 : index
    %c0_15 = arith.constant 0 : index
    %20 = vector.load %arg7[%c0_13, %c0_14, %c0_15] : memref<18x18x128xbf16, #tpu.memory_space<vmem>>, vector<16x16x128xbf16>
    %21 = vector.shape_cast %20 : vector<16x16x128xbf16> to vector<256x128xbf16>
    %c0_16 = arith.constant 0 : index
    %c0_17 = arith.constant 0 : index
    %c0_18 = arith.constant 0 : index
    %c0_19 = arith.constant 0 : index
    %22 = vector.load %arg4[%c0_16, %c0_17, %c0_18, %c0_19] : memref<3x3x128x128xbf16, #tpu.memory_space<vmem>>, vector<1x1x128x128xbf16>
    %23 = vector.shape_cast %22 : vector<1x1x128x128xbf16> to vector<128x128xbf16>
    %cst_20 = arith.constant dense<0.000000e+00> : vector<256x128xf32>
    %24 = tpu.matmul %21, %23, %cst_20 {dimension_numbers = #tpu.dot_dimension_numbers<[1], [0], [0], [1], [0, 0, 1, 1], [], []>} : vector<256x128xbf16>, vector<128x128xbf16>, vector<256x128xf32> -> vector<256x128xf32>
    %25 = arith.addf %19, %24 : vector<256x128xf32>
    %c0_21 = arith.constant 0 : index
    %c1 = arith.constant 1 : index
    %c0_22 = arith.constant 0 : index
    %26 = vector.load %arg7[%c0_21, %c1, %c0_22] : memref<18x18x128xbf16, #tpu.memory_space<vmem>>, vector<16x16x128xbf16>
    %27 = vector.shape_cast %26 : vector<16x16x128xbf16> to vector<256x128xbf16>
    %c0_23 = arith.constant 0 : index
    %c1_24 = arith.constant 1 : index
    %c0_25 = arith.constant 0 : index
    %c0_26 = arith.constant 0 : index
    %28 = vector.load %arg4[%c0_23, %c1_24, %c0_25, %c0_26] : memref<3x3x128x128xbf16, #tpu.memory_space<vmem>>, vector<1x1x128x128xbf16>
    %29 = vector.shape_cast %28 : vector<1x1x128x128xbf16> to vector<128x128xbf16>
    %cst_27 = arith.constant dense<0.000000e+00> : vector<256x128xf32>
    %30 = tpu.matmul %27, %29, %cst_27 {dimension_numbers = #tpu.dot_dimension_numbers<[1], [0], [0], [1], [0, 0, 1, 1], [], []>} : vector<256x128xbf16>, vector<128x128xbf16>, vector<256x128xf32> -> vector<256x128xf32>
    %31 = arith.addf %25, %30 : vector<256x128xf32>
    %c0_28 = arith.constant 0 : index
    %c2 = arith.constant 2 : index
    %c0_29 = arith.constant 0 : index
    %32 = vector.load %arg7[%c0_28, %c2, %c0_29] : memref<18x18x128xbf16, #tpu.memory_space<vmem>>, vector<16x16x128xbf16>
    %33 = vector.shape_cast %32 : vector<16x16x128xbf16> to vector<256x128xbf16>
    %c0_30 = arith.constant 0 : index
    %c2_31 = arith.constant 2 : index
    %c0_32 = arith.constant 0 : index
    %c0_33 = arith.constant 0 : index
    %34 = vector.load %arg4[%c0_30, %c2_31, %c0_32, %c0_33] : memref<3x3x128x128xbf16, #tpu.memory_space<vmem>>, vector<1x1x128x128xbf16>
    %35 = vector.shape_cast %34 : vector<1x1x128x128xbf16> to vector<128x128xbf16>
    %cst_34 = arith.constant dense<0.000000e+00> : vector<256x128xf32>
    %36 = tpu.matmul %33, %35, %cst_34 {dimension_numbers = #tpu.dot_dimension_numbers<[1], [0], [0], [1], [0, 0, 1, 1], [], []>} : vector<256x128xbf16>, vector<128x128xbf16>, vector<256x128xf32> -> vector<256x128xf32>
    %37 = arith.addf %31, %36 : vector<256x128xf32>
    %c1_35 = arith.constant 1 : index
    %c0_36 = arith.constant 0 : index
    %c0_37 = arith.constant 0 : index
    %38 = vector.load %arg7[%c1_35, %c0_36, %c0_37] : memref<18x18x128xbf16, #tpu.memory_space<vmem>>, vector<16x16x128xbf16>
    %39 = vector.shape_cast %38 : vector<16x16x128xbf16> to vector<256x128xbf16>
    %c1_38 = arith.constant 1 : index
    %c0_39 = arith.constant 0 : index
    %c0_40 = arith.constant 0 : index
    %c0_41 = arith.constant 0 : index
    %40 = vector.load %arg4[%c1_38, %c0_39, %c0_40, %c0_41] : memref<3x3x128x128xbf16, #tpu.memory_space<vmem>>, vector<1x1x128x128xbf16>
    %41 = vector.shape_cast %40 : vector<1x1x128x128xbf16> to vector<128x128xbf16>
    %cst_42 = arith.constant dense<0.000000e+00> : vector<256x128xf32>
    %42 = tpu.matmul %39, %41, %cst_42 {dimension_numbers = #tpu.dot_dimension_numbers<[1], [0], [0], [1], [0, 0, 1, 1], [], []>} : vector<256x128xbf16>, vector<128x128xbf16>, vector<256x128xf32> -> vector<256x128xf32>
    %43 = arith.addf %37, %42 : vector<256x128xf32>
    %c1_43 = arith.constant 1 : index
    %c1_44 = arith.constant 1 : index
    %c0_45 = arith.constant 0 : index
    %44 = vector.load %arg7[%c1_43, %c1_44, %c0_45] : memref<18x18x128xbf16, #tpu.memory_space<vmem>>, vector<16x16x128xbf16>
    %45 = vector.shape_cast %44 : vector<16x16x128xbf16> to vector<256x128xbf16>
    %c1_46 = arith.constant 1 : index
    %c1_47 = arith.constant 1 : index
    %c0_48 = arith.constant 0 : index
    %c0_49 = arith.constant 0 : index
    %46 = vector.load %arg4[%c1_46, %c1_47, %c0_48, %c0_49] : memref<3x3x128x128xbf16, #tpu.memory_space<vmem>>, vector<1x1x128x128xbf16>
    %47 = vector.shape_cast %46 : vector<1x1x128x128xbf16> to vector<128x128xbf16>
    %cst_50 = arith.constant dense<0.000000e+00> : vector<256x128xf32>
    %48 = tpu.matmul %45, %47, %cst_50 {dimension_numbers = #tpu.dot_dimension_numbers<[1], [0], [0], [1], [0, 0, 1, 1], [], []>} : vector<256x128xbf16>, vector<128x128xbf16>, vector<256x128xf32> -> vector<256x128xf32>
    %49 = arith.addf %43, %48 : vector<256x128xf32>
    %c1_51 = arith.constant 1 : index
    %c2_52 = arith.constant 2 : index
    %c0_53 = arith.constant 0 : index
    %50 = vector.load %arg7[%c1_51, %c2_52, %c0_53] : memref<18x18x128xbf16, #tpu.memory_space<vmem>>, vector<16x16x128xbf16>
    %51 = vector.shape_cast %50 : vector<16x16x128xbf16> to vector<256x128xbf16>
    %c1_54 = arith.constant 1 : index
    %c2_55 = arith.constant 2 : index
    %c0_56 = arith.constant 0 : index
    %c0_57 = arith.constant 0 : index
    %52 = vector.load %arg4[%c1_54, %c2_55, %c0_56, %c0_57] : memref<3x3x128x128xbf16, #tpu.memory_space<vmem>>, vector<1x1x128x128xbf16>
    %53 = vector.shape_cast %52 : vector<1x1x128x128xbf16> to vector<128x128xbf16>
    %cst_58 = arith.constant dense<0.000000e+00> : vector<256x128xf32>
    %54 = tpu.matmul %51, %53, %cst_58 {dimension_numbers = #tpu.dot_dimension_numbers<[1], [0], [0], [1], [0, 0, 1, 1], [], []>} : vector<256x128xbf16>, vector<128x128xbf16>, vector<256x128xf32> -> vector<256x128xf32>
    %55 = arith.addf %49, %54 : vector<256x128xf32>
    %c2_59 = arith.constant 2 : index
    %c0_60 = arith.constant 0 : index
    %c0_61 = arith.constant 0 : index
    %56 = vector.load %arg7[%c2_59, %c0_60, %c0_61] : memref<18x18x128xbf16, #tpu.memory_space<vmem>>, vector<16x16x128xbf16>
    %57 = vector.shape_cast %56 : vector<16x16x128xbf16> to vector<256x128xbf16>
    %c2_62 = arith.constant 2 : index
    %c0_63 = arith.constant 0 : index
    %c0_64 = arith.constant 0 : index
    %c0_65 = arith.constant 0 : index
    %58 = vector.load %arg4[%c2_62, %c0_63, %c0_64, %c0_65] : memref<3x3x128x128xbf16, #tpu.memory_space<vmem>>, vector<1x1x128x128xbf16>
    %59 = vector.shape_cast %58 : vector<1x1x128x128xbf16> to vector<128x128xbf16>
    %cst_66 = arith.constant dense<0.000000e+00> : vector<256x128xf32>
    %60 = tpu.matmul %57, %59, %cst_66 {dimension_numbers = #tpu.dot_dimension_numbers<[1], [0], [0], [1], [0, 0, 1, 1], [], []>} : vector<256x128xbf16>, vector<128x128xbf16>, vector<256x128xf32> -> vector<256x128xf32>
    %61 = arith.addf %55, %60 : vector<256x128xf32>
    %c2_67 = arith.constant 2 : index
    %c1_68 = arith.constant 1 : index
    %c0_69 = arith.constant 0 : index
    %62 = vector.load %arg7[%c2_67, %c1_68, %c0_69] : memref<18x18x128xbf16, #tpu.memory_space<vmem>>, vector<16x16x128xbf16>
    %63 = vector.shape_cast %62 : vector<16x16x128xbf16> to vector<256x128xbf16>
    %c2_70 = arith.constant 2 : index
    %c1_71 = arith.constant 1 : index
    %c0_72 = arith.constant 0 : index
    %c0_73 = arith.constant 0 : index
    %64 = vector.load %arg4[%c2_70, %c1_71, %c0_72, %c0_73] : memref<3x3x128x128xbf16, #tpu.memory_space<vmem>>, vector<1x1x128x128xbf16>
    %65 = vector.shape_cast %64 : vector<1x1x128x128xbf16> to vector<128x128xbf16>
    %cst_74 = arith.constant dense<0.000000e+00> : vector<256x128xf32>
    %66 = tpu.matmul %63, %65, %cst_74 {dimension_numbers = #tpu.dot_dimension_numbers<[1], [0], [0], [1], [0, 0, 1, 1], [], []>} : vector<256x128xbf16>, vector<128x128xbf16>, vector<256x128xf32> -> vector<256x128xf32>
    %67 = arith.addf %61, %66 : vector<256x128xf32>
    %c2_75 = arith.constant 2 : index
    %c2_76 = arith.constant 2 : index
    %c0_77 = arith.constant 0 : index
    %68 = vector.load %arg7[%c2_75, %c2_76, %c0_77] : memref<18x18x128xbf16, #tpu.memory_space<vmem>>, vector<16x16x128xbf16>
    %69 = vector.shape_cast %68 : vector<16x16x128xbf16> to vector<256x128xbf16>
    %c2_78 = arith.constant 2 : index
    %c2_79 = arith.constant 2 : index
    %c0_80 = arith.constant 0 : index
    %c0_81 = arith.constant 0 : index
    %70 = vector.load %arg4[%c2_78, %c2_79, %c0_80, %c0_81] : memref<3x3x128x128xbf16, #tpu.memory_space<vmem>>, vector<1x1x128x128xbf16>
    %71 = vector.shape_cast %70 : vector<1x1x128x128xbf16> to vector<128x128xbf16>
    %cst_82 = arith.constant dense<0.000000e+00> : vector<256x128xf32>
    %72 = tpu.matmul %69, %71, %cst_82 {dimension_numbers = #tpu.dot_dimension_numbers<[1], [0], [0], [1], [0, 0, 1, 1], [], []>} : vector<256x128xbf16>, vector<128x128xbf16>, vector<256x128xf32> -> vector<256x128xf32>
    %73 = arith.addf %67, %72 : vector<256x128xf32>
    %74 = vector.shape_cast %73 : vector<256x128xf32> to vector<1x16x16x128xf32>
    %75 = arith.truncf %74 : vector<1x16x16x128xf32> to vector<1x16x16x128xbf16>
    %c0_83 = arith.constant 0 : index
    %c0_84 = arith.constant 0 : index
    %c0_85 = arith.constant 0 : index
    %c0_86 = arith.constant 0 : index
    %76 = vector.load %arg5[%c0_83, %c0_84, %c0_85, %c0_86] : memref<1x16x16x128xbf16, #tpu.memory_space<vmem>>, vector<1x16x16x128xbf16>
    tpu.vector_store %arg5[%c0_83, %c0_84, %c0_85, %c0_86], %75 {strides = array<i32>} : memref<1x16x16x128xbf16, #tpu.memory_space<vmem>>, vector<1x16x16x128xbf16>,
    %cst_87 = arith.constant dense<0.000000e+00> : vector<128xf32>
    %77 = vector.multi_reduction <add>, %73, %cst_87 [0] : vector<256x128xf32> to vector<128xf32>
    %78 = vector.shape_cast %77 : vector<128xf32> to vector<1x128xf32>
    %79 = arith.mulf %73, %73 : vector<256x128xf32>
    %cst_88 = arith.constant dense<0.000000e+00> : vector<128xf32>
    %80 = vector.multi_reduction <add>, %79, %cst_88 [0] : vector<256x128xf32> to vector<128xf32>
    %81 = vector.shape_cast %80 : vector<128xf32> to vector<1x128xf32>
    %82 = tpu.concatenate %78, %81 in 0 : vector<1x128xf32>, vector<1x128xf32> -> vector<2x128xf32>
    %83 = vector.shape_cast %82 : vector<2x128xf32> to vector<1x2x128xf32>
    %c0_89 = arith.constant 0 : index
    %c0_90 = arith.constant 0 : index
    %c0_91 = arith.constant 0 : index
    %84 = vector.load %arg6[%c0_89, %c0_90, %c0_91] : memref<1x2x128xf32, #tpu.memory_space<vmem>>, vector<1x2x128xf32>
    tpu.vector_store %arg6[%c0_89, %c0_90, %c0_91], %83 {strides = array<i32>} : memref<1x2x128xf32, #tpu.memory_space<vmem>>, vector<1x2x128xf32>,
    return
  }
  func.func @transform_0(%arg0: i32) -> (i32, i32, i32, i32) {
    %c0_i32 = arith.constant 0 : i32
    %c0_i32_0 = arith.constant 0 : i32
    %c0_i32_1 = arith.constant 0 : i32
    %c0_i32_2 = arith.constant 0 : i32
    return %arg0, %c0_i32, %c0_i32_0, %c0_i32_1 : i32, i32, i32, i32
  }
  func.func @transform_1(%arg0: i32) -> (i32, i32) {
    %c0_i32 = arith.constant 0 : i32
    %c0_i32_0 = arith.constant 0 : i32
    %c0_i32_1 = arith.constant 0 : i32
    return %c0_i32, %c0_i32_0 : i32, i32
  }
  func.func @transform_2(%arg0: i32) -> (i32, i32) {
    %c0_i32 = arith.constant 0 : i32
    %c0_i32_0 = arith.constant 0 : i32
    %c0_i32_1 = arith.constant 0 : i32
    return %c0_i32, %c0_i32_0 : i32, i32
  }
  func.func @transform_3(%arg0: i32) -> (i32, i32, i32, i32) {
    %c0_i32 = arith.constant 0 : i32
    %c0_i32_0 = arith.constant 0 : i32
    %c0_i32_1 = arith.constant 0 : i32
    %c0_i32_2 = arith.constant 0 : i32
    %c0_i32_3 = arith.constant 0 : i32
    return %c0_i32, %c0_i32_0, %c0_i32_1, %c0_i32_2 : i32, i32, i32, i32
  }
  func.func @transform_4(%arg0: i32) -> (i32, i32, i32, i32) {
    %c0_i32 = arith.constant 0 : i32
    %c0_i32_0 = arith.constant 0 : i32
    %c0_i32_1 = arith.constant 0 : i32
    %c0_i32_2 = arith.constant 0 : i32
    return %arg0, %c0_i32, %c0_i32_0, %c0_i32_1 : i32, i32, i32, i32
  }
  func.func @transform_5(%arg0: i32) -> (i32, i32, i32) {
    %c0_i32 = arith.constant 0 : i32
    %c0_i32_0 = arith.constant 0 : i32
    %c0_i32_1 = arith.constant 0 : i32
    return %arg0, %c0_i32, %c0_i32_0 : i32, i32, i32
  }
}

</mosaic_0001>

<llo_original>
// kernel: res_block_forward.5
$region0: #{res_block_forward.5}
  #allocation0 [shape = 'u32[]', space=smem, size = 0x4, offset = 0x4, fixed_abs, tag = 'smem constant byte address 0x4 - core index']
  #allocation1 [shape = 'u32[144,128]{1,0:T(1,128)}', space=vmem, size = 0x12000, scoped, tag = 'internal scratch']
  %s0 = inlined_call_operand.vmem [shape: bf16[512,128], index: 0, kind: input, shape index: {}]
  %s1 = inlined_call_operand.vmem [shape: f32[1,128], index: 1, kind: input, shape index: {}]
  %s2 = inlined_call_operand.vmem [shape: f32[1,128], index: 2, kind: input, shape index: {}]
  %s3 = inlined_call_operand.vmem [shape: f32[512,128], index: 3, kind: input, shape index: {}]
  %s4 = inlined_call_operand.vmem [shape: f32[512,128], index: 4, kind: output, shape index: {}]
  %s5 = sld [smem:[#allocation0]]
  $region26: #{res_block_forward.5} parent=0
    _
  %s7 = ssub.s32 1, %s5
  %s8 = scalar_select 0, %s7, %s5
  // Predicated region
  $region2: #{res_block_forward.5} parent=0 // pred_check
    _
  $region3: #{res_block_forward.5} parent=0 // pred_check_branch
    %10 = sbr.rel (0) target = $region5
  $region4: #{res_block_forward.5} parent=0 // pred_region
    _
  $region5: #{res_block_forward.5} parent=0 // pred_fallthru
    _
  // Predicated region
  $region6: #{res_block_forward.5} parent=0 // pred_check
    _
  $region7: #{res_block_forward.5} parent=0 // pred_check_branch
    %12 = sbr.rel (0) target = $region9
  $region8: #{res_block_forward.5} parent=0 // pred_region
    _
  $region9: #{res_block_forward.5} parent=0 // pred_fallthru
    _
  // Predicated region
  $region10: #{res_block_forward.5} parent=0 // pred_check
    _
  $region11: #{res_block_forward.5} parent=0 // pred_check_branch
    %14 = sbr.rel (0) target = $region13
  $region12: #{res_block_forward.5} parent=0 // pred_region
    _
  $region13: #{res_block_forward.5} parent=0 // pred_fallthru
    _
  // Predicated region
  $region14: #{res_block_forward.5} parent=0 // pred_check
    _
  $region15: #{res_block_forward.5} parent=0 // pred_check_branch
    %16 = sbr.rel (0) target = $region17
  $region16: #{res_block_forward.5} parent=0 // pred_region
    _
  $region17: #{res_block_forward.5} parent=0 // pred_fallthru
    _
  %v17 = vld [vmem:[%s0] sm:$0xf]
  %v18 = vld [vmem:[%s0 + $0x4] sm:$0xf]
  %v19 = vld [vmem:[%s0 + $0x8] sm:$0xf]
  %v20 = vld [vmem:[%s0 + $0xc] sm:$0xf]
  %v21 = vld [vmem:[%s0 + $0x10] sm:$0xf]
  %v22 = vld [vmem:[%s0 + $0x14] sm:$0xf]
  %v23 = vld [vmem:[%s0 + $0x18] sm:$0xf]
  %v24 = vld [vmem:[%s0 + $0x1c] sm:$0xf]
  %v25 = vld [vmem:[%s0 + $0x20] sm:$0xf]
  %v26 = vld [vmem:[%s0 + $0x24] sm:$0xf]
  %v27 = vld [vmem:[%s0 + $0x28] sm:$0xf]
  %v28 = vld [vmem:[%s0 + $0x2c] sm:$0xf]
  %v29 = vld [vmem:[%s0 + $0x30] sm:$0xf]
  %v30 = vld [vmem:[%s0 + $0x34] sm:$0xf]
  %v31 = vld [vmem:[%s0 + $0x38] sm:$0xf]
  %v32 = vld [vmem:[%s0 + $0x3c] sm:$0xf]
  %v33 = vld [vmem:[%s0 + $0x40] sm:$0xf]
  %v34 = vld [vmem:[%s0 + $0x44] sm:$0xf]
  %v35 = vld [vmem:[%s0 + $0x48] sm:$0xf]
  %v36 = vld [vmem:[%s0 + $0x4c] sm:$0xf]
  %v37 = vld [vmem:[%s0 + $0x50] sm:$0xf]
  %v38 = vld [vmem:[%s0 + $0x54] sm:$0xf]
  %v39 = vld [vmem:[%s0 + $0x58] sm:$0xf]
  %v40 = vld [vmem:[%s0 + $0x5c] sm:$0xf]
  %v41 = vld [vmem:[%s0 + $0x60] sm:$0xf]
  %v42 = vld [vmem:[%s0 + $0x64] sm:$0xf]
  %v43 = vld [vmem:[%s0 + $0x68] sm:$0xf]
  %v44 = vld [vmem:[%s0 + $0x6c] sm:$0xf]
  %v45 = vld [vmem:[%s0 + $0x70] sm:$0xf]
  %v46 = vld [vmem:[%s0 + $0x74] sm:$0xf]
  %v47 = vld [vmem:[%s0 + $0x78] sm:$0xf]
  %v48 = vld [vmem:[%s0 + $0x7c] sm:$0xf]
  %v49 = vld [vmem:[%s0 + $0x80] sm:$0xf]
  %v50 = vld [vmem:[%s0 + $0x84] sm:$0xf]
  %v51 = vld [vmem:[%s0 + $0x88] sm:$0xf]
  %v52 = vld [vmem:[%s0 + $0x8c] sm:$0xf]
  %v53 = vld [vmem:[%s0 + $0x90] sm:$0xf]
  %v54 = vld [vmem:[%s0 + $0x94] sm:$0xf]
  %v55 = vld [vmem:[%s0 + $0x98] sm:$0xf]
  %v56 = vld [vmem:[%s0 + $0x9c] sm:$0xf]
  %v57 = vld [vmem:[%s0 + $0xa0] sm:$0xf]
  %v58 = vld [vmem:[%s0 + $0xa4] sm:$0xf]
  %v59 = vld [vmem:[%s0 + $0xa8] sm:$0xf]
  %v60 = vld [vmem:[%s0 + $0xac] sm:$0xf]
  %v61 = vld [vmem:[%s0 + $0xb0] sm:$0xf]
  %v62 = vld [vmem:[%s0 + $0xb4] sm:$0xf]
  %v63 = vld [vmem:[%s0 + $0xb8] sm:$0xf]
  %v64 = vld [vmem:[%s0 + $0xbc] sm:$0xf]
  %v65 = vld [vmem:[%s0 + $0xc0] sm:$0xf]
  %v66 = vld [vmem:[%s0 + $0xc4] sm:$0xf]
  %v67 = vld [vmem:[%s0 + $0xc8] sm:$0xf]
  %v68 = vld [vmem:[%s0 + $0xcc] sm:$0xf]
  %v69 = vld [vmem:[%s0 + $0xd0] sm:$0xf]
  %v70 = vld [vmem:[%s0 + $0xd4] sm:$0xf]
  %v71 = vld [vmem:[%s0 + $0xd8] sm:$0xf]
  %v72 = vld [vmem:[%s0 + $0xdc] sm:$0xf]
  %v73 = vld [vmem:[%s0 + $0xe0] sm:$0xf]
  %v74 = vld [vmem:[%s0 + $0xe4] sm:$0xf]
  %v75 = vld [vmem:[%s0 + $0xe8] sm:$0xf]
  %v76 = vld [vmem:[%s0 + $0xec] sm:$0xf]
  %v77 = vld [vmem:[%s0 + $0xf0] sm:$0xf]
  %v78 = vld [vmem:[%s0 + $0xf4] sm:$0xf]
  %v79 = vld [vmem:[%s0 + $0xf8] sm:$0xf]
  %v80 = vld [vmem:[%s0 + $0xfc] sm:$0xf]
  %v81 = vunpack.c.l.bf16 %v17
  %v82 = vunpack.c.l.bf16 %v18
  %v83 = vunpack.c.l.bf16 %v19
  %v84 = vunpack.c.l.bf16 %v20
  %v85 = vunpack.c.l.bf16 %v21
  %v86 = vunpack.c.l.bf16 %v22
  %v87 = vunpack.c.l.bf16 %v23
  %v88 = vunpack.c.l.bf16 %v24
  %v89 = vunpack.c.l.bf16 %v25
  %v90 = vunpack.c.l.bf16 %v26
  %v91 = vunpack.c.l.bf16 %v27
  %v92 = vunpack.c.l.bf16 %v28
  %v93 = vunpack.c.l.bf16 %v29
  %v94 = vunpack.c.l.bf16 %v30
  %v95 = vunpack.c.l.bf16 %v31
  %v96 = vunpack.c.l.bf16 %v32
  %v97 = vunpack.c.l.bf16 %v33
  %v98 = vunpack.c.l.bf16 %v34
  %v99 = vunpack.c.l.bf16 %v35
  %v100 = vunpack.c.l.bf16 %v36
  %v101 = vunpack.c.l.bf16 %v37
  %v102 = vunpack.c.l.bf16 %v38
  %v103 = vunpack.c.l.bf16 %v39
  %v104 = vunpack.c.l.bf16 %v40
  %v105 = vunpack.c.l.bf16 %v41
  %v106 = vunpack.c.l.bf16 %v42
  %v107 = vunpack.c.l.bf16 %v43
  %v108 = vunpack.c.l.bf16 %v44
  %v109 = vunpack.c.l.bf16 %v45
  %v110 = vunpack.c.l.bf16 %v46
  %v111 = vunpack.c.l.bf16 %v47
  %v112 = vunpack.c.l.bf16 %v48
  %v113 = vunpack.c.l.bf16 %v49
  %v114 = vunpack.c.l.bf16 %v50
  %v115 = vunpack.c.l.bf16 %v51
  %v116 = vunpack.c.l.bf16 %v52
  %v117 = vunpack.c.l.bf16 %v53
  %v118 = vunpack.c.l.bf16 %v54
  %v119 = vunpack.c.l.bf16 %v55
  %v120 = vunpack.c.l.bf16 %v56
  %v121 = vunpack.c.l.bf16 %v57
  %v122 = vunpack.c.l.bf16 %v58
  %v123 = vunpack.c.l.bf16 %v59
  %v124 = vunpack.c.l.bf16 %v60
  %v125 = vunpack.c.l.bf16 %v61
  %v126 = vunpack.c.l.bf16 %v62
  %v127 = vunpack.c.l.bf16 %v63
  %v128 = vunpack.c.l.bf16 %v64
  %v129 = vunpack.c.l.bf16 %v65
  %v130 = vunpack.c.l.bf16 %v66
  %v131 = vunpack.c.l.bf16 %v67
  %v132 = vunpack.c.l.bf16 %v68
  %v133 = vunpack.c.l.bf16 %v69
  %v134 = vunpack.c.l.bf16 %v70
  %v135 = vunpack.c.l.bf16 %v71
  %v136 = vunpack.c.l.bf16 %v72
  %v137 = vunpack.c.l.bf16 %v73
  %v138 = vunpack.c.l.bf16 %v74
  %v139 = vunpack.c.l.bf16 %v75
  %v140 = vunpack.c.l.bf16 %v76
  %v141 = vunpack.c.l.bf16 %v77
  %v142 = vunpack.c.l.bf16 %v78
  %v143 = vunpack.c.l.bf16 %v79
  %v144 = vunpack.c.l.bf16 %v80
  %v145 = vld [vmem:[%s1] sm:$0x1]
  %v147 = vlaneseq
  %v148 = vshrl.u32 %v147, 7
  %v149 = vsub.s32 0, %v148
  %v150 = vrot.slane %v145, %v149
  %v152 = vmul.f32 %v81, %v150
  %v153 = vmul.f32 %v82, %v150
  %v154 = vmul.f32 %v83, %v150
  %v155 = vmul.f32 %v84, %v150
  %v156 = vmul.f32 %v85, %v150
  %v157 = vmul.f32 %v86, %v150
  %v158 = vmul.f32 %v87, %v150
  %v159 = vmul.f32 %v88, %v150
  %v160 = vmul.f32 %v89, %v150
  %v161 = vmul.f32 %v90, %v150
  %v162 = vmul.f32 %v91, %v150
  %v163 = vmul.f32 %v92, %v150
  %v164 = vmul.f32 %v93, %v150
  %v165 = vmul.f32 %v94, %v150
  %v166 = vmul.f32 %v95, %v150
  %v167 = vmul.f32 %v96, %v150
  %v168 = vmul.f32 %v97, %v150
  %v169 = vmul.f32 %v98, %v150
  %v170 = vmul.f32 %v99, %v150
  %v171 = vmul.f32 %v100, %v150
  %v172 = vmul.f32 %v101, %v150
  %v173 = vmul.f32 %v102, %v150
  %v174 = vmul.f32 %v103, %v150
  %v175 = vmul.f32 %v104, %v150
  %v176 = vmul.f32 %v105, %v150
  %v177 = vmul.f32 %v106, %v150
  %v178 = vmul.f32 %v107, %v150
  %v179 = vmul.f32 %v108, %v150
  %v180 = vmul.f32 %v109, %v150
  %v181 = vmul.f32 %v110, %v150
  %v182 = vmul.f32 %v111, %v150
  %v183 = vmul.f32 %v112, %v150
  %v184 = vmul.f32 %v113, %v150
  %v185 = vmul.f32 %v114, %v150
  %v186 = vmul.f32 %v115, %v150
  %v187 = vmul.f32 %v116, %v150
  %v188 = vmul.f32 %v117, %v150
  %v189 = vmul.f32 %v118, %v150
  %v190 = vmul.f32 %v119, %v150
  %v191 = vmul.f32 %v120, %v150
  %v192 = vmul.f32 %v121, %v150
  %v193 = vmul.f32 %v122, %v150
  %v194 = vmul.f32 %v123, %v150
  %v195 = vmul.f32 %v124, %v150
  %v196 = vmul.f32 %v125, %v150
  %v197 = vmul.f32 %v126, %v150
  %v198 = vmul.f32 %v127, %v150
  %v199 = vmul.f32 %v128, %v150
  %v200 = vmul.f32 %v129, %v150
  %v201 = vmul.f32 %v130, %v150
  %v202 = vmul.f32 %v131, %v150
  %v203 = vmul.f32 %v132, %v150
  %v204 = vmul.f32 %v133, %v150
  %v205 = vmul.f32 %v134, %v150
  %v206 = vmul.f32 %v135, %v150
  %v207 = vmul.f32 %v136, %v150
  %v208 = vmul.f32 %v137, %v150
  %v209 = vmul.f32 %v138, %v150
  %v210 = vmul.f32 %v139, %v150
  %v211 = vmul.f32 %v140, %v150
  %v212 = vmul.f32 %v141, %v150
  %v213 = vmul.f32 %v142, %v150
  %v214 = vmul.f32 %v143, %v150
  %v215 = vmul.f32 %v144, %v150
  %v216 = vld [vmem:[%s2] sm:$0x1]
  %v218 = vlaneseq
  %v219 = vshrl.u32 %v218, 7
  %v220 = vsub.s32 0, %v219
  %v221 = vrot.slane %v216, %v220
  %v223 = vadd.f32 %v152, %v221
  %v224 = vadd.f32 %v153, %v221
  %v225 = vadd.f32 %v154, %v221
  %v226 = vadd.f32 %v155, %v221
  %v227 = vadd.f32 %v156, %v221
  %v228 = vadd.f32 %v157, %v221
  %v229 = vadd.f32 %v158, %v221
  %v230 = vadd.f32 %v159, %v221
  %v231 = vadd.f32 %v160, %v221
  %v232 = vadd.f32 %v161, %v221
  %v233 = vadd.f32 %v162, %v221
  %v234 = vadd.f32 %v163, %v221
  %v235 = vadd.f32 %v164, %v221
  %v236 = vadd.f32 %v165, %v221
  %v237 = vadd.f32 %v166, %v221
  %v238 = vadd.f32 %v167, %v221
  %v239 = vadd.f32 %v168, %v221
  %v240 = vadd.f32 %v169, %v221
  %v241 = vadd.f32 %v170, %v221
  %v242 = vadd.f32 %v171, %v221
  %v243 = vadd.f32 %v172, %v221
  %v244 = vadd.f32 %v173, %v221
  %v245 = vadd.f32 %v174, %v221
  %v246 = vadd.f32 %v175, %v221
  %v247 = vadd.f32 %v176, %v221
  %v248 = vadd.f32 %v177, %v221
  %v249 = vadd.f32 %v178, %v221
  %v250 = vadd.f32 %v179, %v221
  %v251 = vadd.f32 %v180, %v221
  %v252 = vadd.f32 %v181, %v221
  %v253 = vadd.f32 %v182, %v221
  %v254 = vadd.f32 %v183, %v221
  %v255 = vadd.f32 %v184, %v221
  %v256 = vadd.f32 %v185, %v221
  %v257 = vadd.f32 %v186, %v221
  %v258 = vadd.f32 %v187, %v221
  %v259 = vadd.f32 %v188, %v221
  %v260 = vadd.f32 %v189, %v221
  %v261 = vadd.f32 %v190, %v221
  %v262 = vadd.f32 %v191, %v221
  %v263 = vadd.f32 %v192, %v221
  %v264 = vadd.f32 %v193, %v221
  %v265 = vadd.f32 %v194, %v221
  %v266 = vadd.f32 %v195, %v221
  %v267 = vadd.f32 %v196, %v221
  %v268 = vadd.f32 %v197, %v221
  %v269 = vadd.f32 %v198, %v221
  %v270 = vadd.f32 %v199, %v221
  %v271 = vadd.f32 %v200, %v221
  %v272 = vadd.f32 %v201, %v221
  %v273 = vadd.f32 %v202, %v221
  %v274 = vadd.f32 %v203, %v221
  %v275 = vadd.f32 %v204, %v221
  %v276 = vadd.f32 %v205, %v221
  %v277 = vadd.f32 %v206, %v221
  %v278 = vadd.f32 %v207, %v221
  %v279 = vadd.f32 %v208, %v221
  %v280 = vadd.f32 %v209, %v221
  %v281 = vadd.f32 %v210, %v221
  %v282 = vadd.f32 %v211, %v221
  %v283 = vadd.f32 %v212, %v221
  %v284 = vadd.f32 %v213, %v221
  %v285 = vadd.f32 %v214, %v221
  %v286 = vadd.f32 %v215, %v221
  %v287 = vld [vmem:[%s3] sm:$0xff]
  %v288 = vld [vmem:[%s3 + $0x8] sm:$0xff]
  %v289 = vld [vmem:[%s3 + $0x10] sm:$0xff]
  %v290 = vld [vmem:[%s3 + $0x18] sm:$0xff]
  %v291 = vld [vmem:[%s3 + $0x20] sm:$0xff]
  %v292 = vld [vmem:[%s3 + $0x28] sm:$0xff]
  %v293 = vld [vmem:[%s3 + $0x30] sm:$0xff]
  %v294 = vld [vmem:[%s3 + $0x38] sm:$0xff]
  %v295 = vld [vmem:[%s3 + $0x40] sm:$0xff]
  %v296 = vld [vmem:[%s3 + $0x48] sm:$0xff]
  %v297 = vld [vmem:[%s3 + $0x50] sm:$0xff]
  %v298 = vld [vmem:[%s3 + $0x58] sm:$0xff]
  %v299 = vld [vmem:[%s3 + $0x60] sm:$0xff]
  %v300 = vld [vmem:[%s3 + $0x68] sm:$0xff]
  %v301 = vld [vmem:[%s3 + $0x70] sm:$0xff]
  %v302 = vld [vmem:[%s3 + $0x78] sm:$0xff]
  %v303 = vld [vmem:[%s3 + $0x80] sm:$0xff]
  %v304 = vld [vmem:[%s3 + $0x88] sm:$0xff]
  %v305 = vld [vmem:[%s3 + $0x90] sm:$0xff]
  %v306 = vld [vmem:[%s3 + $0x98] sm:$0xff]
  %v307 = vld [vmem:[%s3 + $0xa0] sm:$0xff]
  %v308 = vld [vmem:[%s3 + $0xa8] sm:$0xff]
  %v309 = vld [vmem:[%s3 + $0xb0] sm:$0xff]
  %v310 = vld [vmem:[%s3 + $0xb8] sm:$0xff]
  %v311 = vld [vmem:[%s3 + $0xc0] sm:$0xff]
  %v312 = vld [vmem:[%s3 + $0xc8] sm:$0xff]
  %v313 = vld [vmem:[%s3 + $0xd0] sm:$0xff]
  %v314 = vld [vmem:[%s3 + $0xd8] sm:$0xff]
  %v315 = vld [vmem:[%s3 + $0xe0] sm:$0xff]
  %v316 = vld [vmem:[%s3 + $0xe8] sm:$0xff]
  %v317 = vld [vmem:[%s3 + $0xf0] sm:$0xff]
  %v318 = vld [vmem:[%s3 + $0xf8] sm:$0xff]
  %v319 = vld [vmem:[%s3 + $0x100] sm:$0xff]
  %v320 = vld [vmem:[%s3 + $0x108] sm:$0xff]
  %v321 = vld [vmem:[%s3 + $0x110] sm:$0xff]
  %v322 = vld [vmem:[%s3 + $0x118] sm:$0xff]
  %v323 = vld [vmem:[%s3 + $0x120] sm:$0xff]
  %v324 = vld [vmem:[%s3 + $0x128] sm:$0xff]
  %v325 = vld [vmem:[%s3 + $0x130] sm:$0xff]
  %v326 = vld [vmem:[%s3 + $0x138] sm:$0xff]
  %v327 = vld [vmem:[%s3 + $0x140] sm:$0xff]
  %v328 = vld [vmem:[%s3 + $0x148] sm:$0xff]
  %v329 = vld [vmem:[%s3 + $0x150] sm:$0xff]
  %v330 = vld [vmem:[%s3 + $0x158] sm:$0xff]
  %v331 = vld [vmem:[%s3 + $0x160] sm:$0xff]
  %v332 = vld [vmem:[%s3 + $0x168] sm:$0xff]
  %v333 = vld [vmem:[%s3 + $0x170] sm:$0xff]
  %v334 = vld [vmem:[%s3 + $0x178] sm:$0xff]
  %v335 = vld [vmem:[%s3 + $0x180] sm:$0xff]
  %v336 = vld [vmem:[%s3 + $0x188] sm:$0xff]
  %v337 = vld [vmem:[%s3 + $0x190] sm:$0xff]
  %v338 = vld [vmem:[%s3 + $0x198] sm:$0xff]
  %v339 = vld [vmem:[%s3 + $0x1a0] sm:$0xff]
  %v340 = vld [vmem:[%s3 + $0x1a8] sm:$0xff]
  %v341 = vld [vmem:[%s3 + $0x1b0] sm:$0xff]
  %v342 = vld [vmem:[%s3 + $0x1b8] sm:$0xff]
  %v343 = vld [vmem:[%s3 + $0x1c0] sm:$0xff]
  %v344 = vld [vmem:[%s3 + $0x1c8] sm:$0xff]
  %v345 = vld [vmem:[%s3 + $0x1d0] sm:$0xff]
  %v346 = vld [vmem:[%s3 + $0x1d8] sm:$0xff]
  %v347 = vld [vmem:[%s3 + $0x1e0] sm:$0xff]
  %v348 = vld [vmem:[%s3 + $0x1e8] sm:$0xff]
  %v349 = vld [vmem:[%s3 + $0x1f0] sm:$0xff]
  %v350 = vld [vmem:[%s3 + $0x1f8] sm:$0xff]
  %v351 = vadd.f32 %v223, %v287
  %v352 = vadd.f32 %v224, %v288
  %v353 = vadd.f32 %v225, %v289
  %v354 = vadd.f32 %v226, %v290
  %v355 = vadd.f32 %v227, %v291
  %v356 = vadd.f32 %v228, %v292
  %v357 = vadd.f32 %v229, %v293
  %v358 = vadd.f32 %v230, %v294
  %v359 = vadd.f32 %v231, %v295
  %v360 = vadd.f32 %v232, %v296
  %v361 = vadd.f32 %v233, %v297
  %v362 = vadd.f32 %v234, %v298
  %v363 = vadd.f32 %v235, %v299
  %v364 = vadd.f32 %v236, %v300
  %v365 = vadd.f32 %v237, %v301
  %v366 = vadd.f32 %v238, %v302
  %v367 = vadd.f32 %v239, %v303
  %v368 = vadd.f32 %v240, %v304
  %v369 = vadd.f32 %v241, %v305
  %v370 = vadd.f32 %v242, %v306
  %v371 = vadd.f32 %v243, %v307
  %v372 = vadd.f32 %v244, %v308
  %v373 = vadd.f32 %v245, %v309
  %v374 = vadd.f32 %v246, %v310
  %v375 = vadd.f32 %v247, %v311
  %v376 = vadd.f32 %v248, %v312
  %v377 = vadd.f32 %v249, %v313
  %v378 = vadd.f32 %v250, %v314
  %v379 = vadd.f32 %v251, %v315
  %v380 = vadd.f32 %v252, %v316
  %v381 = vadd.f32 %v253, %v317
  %v382 = vadd.f32 %v254, %v318
  %v383 = vadd.f32 %v255, %v319
  %v384 = vadd.f32 %v256, %v320
  %v385 = vadd.f32 %v257, %v321
  %v386 = vadd.f32 %v258, %v322
  %v387 = vadd.f32 %v259, %v323
  %v388 = vadd.f32 %v260, %v324
  %v389 = vadd.f32 %v261, %v325
  %v390 = vadd.f32 %v262, %v326
  %v391 = vadd.f32 %v263, %v327
  %v392 = vadd.f32 %v264, %v328
  %v393 = vadd.f32 %v265, %v329
  %v394 = vadd.f32 %v266, %v330
  %v395 = vadd.f32 %v267, %v331
  %v396 = vadd.f32 %v268, %v332
  %v397 = vadd.f32 %v269, %v333
  %v398 = vadd.f32 %v270, %v334
  %v399 = vadd.f32 %v271, %v335
  %v400 = vadd.f32 %v272, %v336
  %v401 = vadd.f32 %v273, %v337
  %v402 = vadd.f32 %v274, %v338
  %v403 = vadd.f32 %v275, %v339
  %v404 = vadd.f32 %v276, %v340
  %v405 = vadd.f32 %v277, %v341
  %v406 = vadd.f32 %v278, %v342
  %v407 = vadd.f32 %v279, %v343
  %v408 = vadd.f32 %v280, %v344
  %v409 = vadd.f32 %v281, %v345
  %v410 = vadd.f32 %v282, %v346
  %v411 = vadd.f32 %v283, %v347
  %v412 = vadd.f32 %v284, %v348
  %v413 = vadd.f32 %v285, %v349
  %v414 = vadd.f32 %v286, %v350
  %v415 = vmax.f32 %v351, 0.0
  %v416 = vmax.f32 %v352, 0.0
  %v417 = vmax.f32 %v353, 0.0
  %v418 = vmax.f32 %v354, 0.0
  %v419 = vmax.f32 %v355, 0.0
  %v420 = vmax.f32 %v356, 0.0
  %v421 = vmax.f32 %v357, 0.0
  %v422 = vmax.f32 %v358, 0.0
  %v423 = vmax.f32 %v359, 0.0
  %v424 = vmax.f32 %v360, 0.0
  %v425 = vmax.f32 %v361, 0.0
  %v426 = vmax.f32 %v362, 0.0
  %v427 = vmax.f32 %v363, 0.0
  %v428 = vmax.f32 %v364, 0.0
  %v429 = vmax.f32 %v365, 0.0
  %v430 = vmax.f32 %v366, 0.0
  %v431 = vmax.f32 %v367, 0.0
  %v432 = vmax.f32 %v368, 0.0
  %v433 = vmax.f32 %v369, 0.0
  %v434 = vmax.f32 %v370, 0.0
  %v435 = vmax.f32 %v371, 0.0
  %v436 = vmax.f32 %v372, 0.0
  %v437 = vmax.f32 %v373, 0.0
  %v438 = vmax.f32 %v374, 0.0
  %v439 = vmax.f32 %v375, 0.0
  %v440 = vmax.f32 %v376, 0.0
  %v441 = vmax.f32 %v377, 0.0
  %v442 = vmax.f32 %v378, 0.0
  %v443 = vmax.f32 %v379, 0.0
  %v444 = vmax.f32 %v380, 0.0
  %v445 = vmax.f32 %v381, 0.0
  %v446 = vmax.f32 %v382, 0.0
  %v447 = vmax.f32 %v383, 0.0
  %v448 = vmax.f32 %v384, 0.0
  %v449 = vmax.f32 %v385, 0.0
  %v450 = vmax.f32 %v386, 0.0
  %v451 = vmax.f32 %v387, 0.0
  %v452 = vmax.f32 %v388, 0.0
  %v453 = vmax.f32 %v389, 0.0
  %v454 = vmax.f32 %v390, 0.0
  %v455 = vmax.f32 %v391, 0.0
  %v456 = vmax.f32 %v392, 0.0
  %v457 = vmax.f32 %v393, 0.0
  %v458 = vmax.f32 %v394, 0.0
  %v459 = vmax.f32 %v395, 0.0
  %v460 = vmax.f32 %v396, 0.0
  %v461 = vmax.f32 %v397, 0.0
  %v462 = vmax.f32 %v398, 0.0
  %v463 = vmax.f32 %v399, 0.0
  %v464 = vmax.f32 %v400, 0.0
  %v465 = vmax.f32 %v401, 0.0
  %v466 = vmax.f32 %v402, 0.0
  %v467 = vmax.f32 %v403, 0.0
  %v468 = vmax.f32 %v404, 0.0
  %v469 = vmax.f32 %v405, 0.0
  %v470 = vmax.f32 %v406, 0.0
  %v471 = vmax.f32 %v407, 0.0
  %v472 = vmax.f32 %v408, 0.0
  %v473 = vmax.f32 %v409, 0.0
  %v474 = vmax.f32 %v410, 0.0
  %v475 = vmax.f32 %v411, 0.0
  %v476 = vmax.f32 %v412, 0.0
  %v477 = vmax.f32 %v413, 0.0
  %v478 = vmax.f32 %v414, 0.0
  %479 = vst [vmem:[%s4] sm:$0xff] %v415
  %480 = vst [vmem:[%s4 + $0x8] sm:$0xff] %v416
  %481 = vst [vmem:[%s4 + $0x10] sm:$0xff] %v417
  %482 = vst [vmem:[%s4 + $0x18] sm:$0xff] %v418
  %483 = vst [vmem:[%s4 + $0x20] sm:$0xff] %v419
  %484 = vst [vmem:[%s4 + $0x28] sm:$0xff] %v420
  %485 = vst [vmem:[%s4 + $0x30] sm:$0xff] %v421
  %486 = vst [vmem:[%s4 + $0x38] sm:$0xff] %v422
  %487 = vst [vmem:[%s4 + $0x40] sm:$0xff] %v423
  %488 = vst [vmem:[%s4 + $0x48] sm:$0xff] %v424
  %489 = vst [vmem:[%s4 + $0x50] sm:$0xff] %v425
  %490 = vst [vmem:[%s4 + $0x58] sm:$0xff] %v426
  %491 = vst [vmem:[%s4 + $0x60] sm:$0xff] %v427
  %492 = vst [vmem:[%s4 + $0x68] sm:$0xff] %v428
  %493 = vst [vmem:[%s4 + $0x70] sm:$0xff] %v429
  %494 = vst [vmem:[%s4 + $0x78] sm:$0xff] %v430
  %495 = vst [vmem:[%s4 + $0x80] sm:$0xff] %v431
  %496 = vst [vmem:[%s4 + $0x88] sm:$0xff] %v432
  %497 = vst [vmem:[%s4 + $0x90] sm:$0xff] %v433
  %498 = vst [vmem:[%s4 + $0x98] sm:$0xff] %v434
  %499 = vst [vmem:[%s4 + $0xa0] sm:$0xff] %v435
  %500 = vst [vmem:[%s4 + $0xa8] sm:$0xff] %v436
  %501 = vst [vmem:[%s4 + $0xb0] sm:$0xff] %v437
  %502 = vst [vmem:[%s4 + $0xb8] sm:$0xff] %v438
  %503 = vst [vmem:[%s4 + $0xc0] sm:$0xff] %v439
  %504 = vst [vmem:[%s4 + $0xc8] sm:$0xff] %v440
  %505 = vst [vmem:[%s4 + $0xd0] sm:$0xff] %v441
  %506 = vst [vmem:[%s4 + $0xd8] sm:$0xff] %v442
  %507 = vst [vmem:[%s4 + $0xe0] sm:$0xff] %v443
  %508 = vst [vmem:[%s4 + $0xe8] sm:$0xff] %v444
  %509 = vst [vmem:[%s4 + $0xf0] sm:$0xff] %v445
  %510 = vst [vmem:[%s4 + $0xf8] sm:$0xff] %v446
  %511 = vst [vmem:[%s4 + $0x100] sm:$0xff] %v447
  %512 = vst [vmem:[%s4 + $0x108] sm:$0xff] %v448
  %513 = vst [vmem:[%s4 + $0x110] sm:$0xff] %v449
  %514 = vst [vmem:[%s4 + $0x118] sm:$0xff] %v450
  %515 = vst [vmem:[%s4 + $0x120] sm:$0xff] %v451
  %516 = vst [vmem:[%s4 + $0x128] sm:$0xff] %v452
  %517 = vst [vmem:[%s4 + $0x130] sm:$0xff] %v453
  %518 = vst [vmem:[%s4 + $0x138] sm:$0xff] %v454
  %519 = vst [vmem:[%s4 + $0x140] sm:$0xff] %v455
  %520 = vst [vmem:[%s4 + $0x148] sm:$0xff] %v456
  %521 = vst [vmem:[%s4 + $0x150] sm:$0xff] %v457
  %522 = vst [vmem:[%s4 + $0x158] sm:$0xff] %v458
  %523 = vst [vmem:[%s4 + $0x160] sm:$0xff] %v459
  %524 = vst [vmem:[%s4 + $0x168] sm:$0xff] %v460
  %525 = vst [vmem:[%s4 + $0x170] sm:$0xff] %v461
  %526 = vst [vmem:[%s4 + $0x178] sm:$0xff] %v462
  %527 = vst [vmem:[%s4 + $0x180] sm:$0xff] %v463
  %528 = vst [vmem:[%s4 + $0x188] sm:$0xff] %v464
  %529 = vst [vmem:[%s4 + $0x190] sm:$0xff] %v465
  %530 = vst [vmem:[%s4 + $0x198] sm:$0xff] %v466
  %531 = vst [vmem:[%s4 + $0x1a0] sm:$0xff] %v467
  %532 = vst [vmem:[%s4 + $0x1a8] sm:$0xff] %v468
  %533 = vst [vmem:[%s4 + $0x1b0] sm:$0xff] %v469
  %534 = vst [vmem:[%s4 + $0x1b8] sm:$0xff] %v470
  %535 = vst [vmem:[%s4 + $0x1c0] sm:$0xff] %v471
  %536 = vst [vmem:[%s4 + $0x1c8] sm:$0xff] %v472
  %537 = vst [vmem:[%s4 + $0x1d0] sm:$0xff] %v473
  %538 = vst [vmem:[%s4 + $0x1d8] sm:$0xff] %v474
  %539 = vst [vmem:[%s4 + $0x1e0] sm:$0xff] %v475
  %540 = vst [vmem:[%s4 + $0x1e8] sm:$0xff] %v476
  %541 = vst [vmem:[%s4 + $0x1f0] sm:$0xff] %v477
  %542 = vst [vmem:[%s4 + $0x1f8] sm:$0xff] %v478
  // Predicated region
  $region18: #{res_block_forward.5} parent=0 // pred_check
    _
  $region19: #{res_block_forward.5} parent=0 // pred_check_branch
    %544 = sbr.rel (0) target = $region21
  $region20: #{res_block_forward.5} parent=0 // pred_region
    _
  $region21: #{res_block_forward.5} parent=0 // pred_fallthru
    _
  // Predicated region
  $region22: #{res_block_forward.5} parent=0 // pred_check
    _
  $region23: #{res_block_forward.5} parent=0 // pred_check_branch
    %546 = sbr.rel (0) target = $region25
  $region24: #{res_block_forward.5} parent=0 // pred_region
    _
  $region25: #{res_block_forward.5} parent=0 // pred_fallthru
    _

// kernel: res_block_forward.3
$region0: #{res_block_forward.3}
  #allocation0 [shape = 'u32[]', space=smem, size = 0x4, offset = 0x4, fixed_abs, tag = 'smem constant byte address 0x4 - core index']
  #allocation1 [shape = 'u32[144,128]{1,0:T(1,128)}', space=vmem, size = 0x12000, scoped, tag = 'internal scratch']
  #allocation2 [shape = 'bf16[18,18,128]{2,1,0:T(8,128)(2,1)}', space=vmem, size = 0x1b000, scoped, tag = 'scratch operand']
  %s0 = inlined_call_operand.vmem [shape: bf16[2,16,16,128], index: 0, kind: input, shape index: {}]
  %s1 = inlined_call_operand.vmem [shape: bf16[3,3,128,128], index: 1, kind: input, shape index: {}]
  %s2 = inlined_call_operand.vmem [shape: bf16[2,16,16,128], index: 2, kind: output, shape index: {0}]
  %s3 = inlined_call_operand.vmem [shape: f32[2,2,128], index: 3, kind: output, shape index: {1}]
  %4 = xla_tuple %s2, %s3
  %s5 = sld [smem:[#allocation0]]
  $region49: #{res_block_forward.3} parent=0
    _
  %s7 = ssub.s32 1, %s5
  %s8 = scalar_select 0, %s7, %s5
  loop: start=0, step=1, limit=4
  $region2: #{res_block_forward.3} parent=0 // loop_pre_header
    _
  $region3: #{res_block_forward.3} parent=0 // loop_header
    %s10 = sphi 0, %s14
    %p11 = scmp.ge.s32.totalorder %s10, 4
    %s20 = sphi 0, %s22
    %s23 = sphi 0, %s20
    %s24 = sphi 0, %s23
    %s40 = sphi 0, %s24
    %s44 = sphi 0, %s44
    %s46 = sphi 0, %s44
    %s47 = sphi 0, %s46
    %s61 = sphi 0, %s47
    %s67 = sphi 0, %s69
    %s70 = sphi 0, %s67
    %s71 = sphi 0, %s70
    %s87 = sphi 0, %s71
    %s93 = sphi 0, %s95
    %s96 = sphi 0, %s93
    %s97 = sphi 0, %s96
    %s113 = sphi 0, %s97
  $region4: #{res_block_forward.3} parent=0 // loop_header_branch
    %13 = sbr.rel (%p11) target = $region8
  $region5: #{res_block_forward.3} parent=0 // loop_body
    %s15 = ssub.s32 %s10, 1
    %s16 = ssub.s32 %s10, 2
    %s17 = sadd.s32 %s10, 1
    %s18 = ssub.s32 %s10, %s17
    %p19 = scmp.eq.s32.totalorder %s18, 0
    %s21 = sadd.s32 %s20, 1
    %s22 = scalar_select %p19, %s20, %s21
    %p25 = pneg %p19
    %p26 = scmp.eq.s32.totalorder %s10, 1
    %p27 = por %p25, %p26
    %p28 = scmp.ne.s32.totalorder %s20, %s23
    %p29 = scmp.eq.s32.totalorder %s10, 0
    %p30 = por %p28, %p29
    %p31 = scmp.ne.s32.totalorder %s20, %s23
    %p32 = scmp.eq.s32.totalorder %s15, 1
    %p33 = por %p31, %p32
    %p34 = scmp.ne.s32.totalorder %s23, %s24
    %p35 = scmp.eq.s32.totalorder %s15, 0
    %p36 = por %p34, %p35
    %p37 = scmp.ne.s32.totalorder %s23, %s24
    %p38 = scmp.eq.s32.totalorder %s16, 1
    %p39 = por %p37, %p38
    %p41 = scmp.ne.s32.totalorder %s24, %s40
    %p42 = scmp.eq.s32.totalorder %s16, 0
    %p43 = por %p41, %p42
    %s45 = sadd.s32 %s44, 1
    %p48 = scmp.eq.s32.totalorder %s10, 1
    %p49 = scmp.ne.s32.totalorder %s44, %s46
    %p50 = scmp.eq.s32.totalorder %s10, 0
    %p51 = por %p49, %p50
    %p52 = scmp.ne.s32.totalorder %s44, %s46
    %p53 = scmp.eq.s32.totalorder %s15, 1
    %p54 = por %p52, %p53
    %p55 = scmp.ne.s32.totalorder %s46, %s47
    %p56 = scmp.eq.s32.totalorder %s15, 0
    %p57 = por %p55, %p56
    %p58 = scmp.ne.s32.totalorder %s46, %s47
    %p59 = scmp.eq.s32.totalorder %s16, 1
    %p60 = por %p58, %p59
    %p62 = scmp.ne.s32.totalorder %s47, %s61
    %p63 = scmp.eq.s32.totalorder %s16, 0
    %p64 = por %p62, %p63
    %s65 = ssub.s32 %s10, %s17
    %p66 = scmp.eq.s32.totalorder %s65, 0
    %s68 = sadd.s32 %s67, 1
    %s69 = scalar_select %p66, %s67, %s68
    %p72 = pneg %p66
    %p73 = scmp.eq.s32.totalorder %s10, 1
    %p74 = por %p72, %p73
    %p75 = scmp.ne.s32.totalorder %s67, %s70
    %p76 = scmp.eq.s32.totalorder %s10, 0
    %p77 = por %p75, %p76
    %p78 = scmp.ne.s32.totalorder %s67, %s70
    %p79 = scmp.eq.s32.totalorder %s15, 1
    %p80 = por %p78, %p79
    %p81 = scmp.ne.s32.totalorder %s70, %s71
    %p82 = scmp.eq.s32.totalorder %s15, 0
    %p83 = por %p81, %p82
    %p84 = scmp.ne.s32.totalorder %s70, %s71
    %p85 = scmp.eq.s32.totalorder %s16, 1
    %p86 = por %p84, %p85
    %p88 = scmp.ne.s32.totalorder %s71, %s87
    %p89 = scmp.eq.s32.totalorder %s16, 0
    %p90 = por %p88, %p89
    %s91 = ssub.s32 %s10, %s17
    %p92 = scmp.eq.s32.totalorder %s91, 0
    %s94 = sadd.s32 %s93, 1
    %s95 = scalar_select %p92, %s93, %s94
    %p98 = pneg %p92
    %p99 = scmp.eq.s32.totalorder %s10, 1
    %p100 = por %p98, %p99
    %p101 = scmp.ne.s32.totalorder %s93, %s96
    %p102 = scmp.eq.s32.totalorder %s10, 0
    %p103 = por %p101, %p102
    %p104 = scmp.ne.s32.totalorder %s93, %s96
    %p105 = scmp.eq.s32.totalorder %s15, 1
    %p106 = por %p104, %p105
    %p107 = scmp.ne.s32.totalorder %s96, %s97
    %p108 = scmp.eq.s32.totalorder %s15, 0
    %p109 = por %p107, %p108
    %p110 = scmp.ne.s32.totalorder %s96, %s97
    %p111 = scmp.eq.s32.totalorder %s16, 1
    %p112 = por %p110, %p111
    %p114 = scmp.ne.s32.totalorder %s97, %s113
    %p115 = scmp.eq.s32.totalorder %s16, 0
    %p116 = por %p114, %p115
    %p117 = scmp.le.s32.totalorder 1, %s10
    %p118 = scmp.lt.s32.totalorder %s10, 3
    %p119 = pnand %p117, %p118
    %p120 = pneg %p119
    // Predicated region
    $region9: #{res_block_forward.3} parent=5 // pred_check
      _
    $region10: #{res_block_forward.3} parent=5 // pred_check_branch
      %122 = sbr.rel (%p119) target = $region12
    $region11: #{res_block_forward.3} parent=5 // pred_region
      %s123 = ssub.s32 %s10, 1
      // Predicated region
      $region13: #{res_block_forward.3} parent=11 // pred_check
        %p124 = pneg %p57
      $region14: #{res_block_forward.3} parent=11 // pred_check_branch
        %126 = sbr.rel (%p124) target = $region16
      $region15: #{res_block_forward.3} parent=11 // pred_region
        _
      $region16: #{res_block_forward.3} parent=11 // pred_fallthru
        _
    $region12: #{res_block_forward.3} parent=5 // pred_fallthru
      _
    %p127 = scmp.lt.s32.totalorder %s10, 2
    // Predicated region
    $region17: #{res_block_forward.3} parent=5 // pred_check
      %p128 = pneg %p127
    $region18: #{res_block_forward.3} parent=5 // pred_check_branch
      %130 = sbr.rel (%p128) target = $region20
    $region19: #{res_block_forward.3} parent=5 // pred_region
      // Predicated region
      $region21: #{res_block_forward.3} parent=19 // pred_check
        %p131 = pneg %p30
      $region22: #{res_block_forward.3} parent=19 // pred_check_branch
        %133 = sbr.rel (%p131) target = $region24
      $region23: #{res_block_forward.3} parent=19 // pred_region
        %p134 = scmp.lt.s32.totalorder %s10, 1
        %s135 = scalar_select %p134, %s10, 1
        %s136 = smul.addr %s135, 32
        %s137 = smul.addr %s136, 4
        %s138 = scalar_lea.vmem %s0, %s137
      $region24: #{res_block_forward.3} parent=19 // pred_fallthru
        _
    $region20: #{res_block_forward.3} parent=5 // pred_fallthru
      _
    %p139 = scmp.le.s32.totalorder 1, %s10
    %p140 = scmp.lt.s32.totalorder %s10, 3
    %p141 = pnand %p139, %p140
    %p142 = pneg %p141
    // Predicated region
    $region25: #{res_block_forward.3} parent=5 // pred_check
      _
    $region26: #{res_block_forward.3} parent=5 // pred_check_branch
      %144 = sbr.rel (%p141) target = $region28
    $region27: #{res_block_forward.3} parent=5 // pred_region
      %s145 = ssub.s32 %s10, 1
      %p146 = scmp.lt.s32.totalorder %s15, 1
      %s147 = scalar_select %p146, %s15, 1
      %s148 = smul.addr %s147, 32
      %s149 = smul.addr %s148, 4
      %s150 = scalar_lea.vmem %s0, %s149
      %p151 = pneg %p36
      %p152 = pneg %p33
      %p153 = pneg %p57
      %p154 = pneg %p54
      %p155 = pneg %p83
      %p156 = pneg %p80
      %p157 = scmp.lt.s32.totalorder %s15, 1
      %s158 = scalar_select %p157, %s15, 1
      %s159 = smul.addr %s158, 32
      %s160 = smul.addr %s159, 4
      %s161 = scalar_lea.vmem %s2, %s160
      %p162 = pneg %p109
      %p163 = pneg %p106
      %p164 = scmp.lt.s32.totalorder %s15, 1
      %s165 = scalar_select %p164, %s15, 1
      %s166 = smul.addr %s165, 2
      %s167 = scalar_lea.vmem %s3, %s166
      %p168 = scmp.lt.s32.totalorder %s15, 1
      %s169 = scalar_select %p168, %s15, 1
      %s170 = smul.addr %s169, 32
      %s171 = smul.addr %s170, 4
      %s172 = scalar_lea.vmem %s0, %s171
      %p173 = scmp.lt.s32.totalorder %s15, 1
      %s174 = scalar_select %p173, %s15, 1
      %s175 = smul.addr %s174, 32
      %s176 = smul.addr %s175, 4
      %s177 = scalar_lea.vmem %s2, %s176
      %p178 = scmp.lt.s32.totalorder %s15, 1
      %s179 = scalar_select %p178, %s15, 1
      %s180 = smul.addr %s179, 2
      %s181 = scalar_lea.vmem %s3, %s180
      %v183 = vld [vmem:[%s172] sm:$0xf]
      %v184 = vld [vmem:[%s172 + $0x4] sm:$0xf]
      %v185 = vld [vmem:[%s172 + $0x8] sm:$0xf]
      %v186 = vld [vmem:[%s172 + $0xc] sm:$0xf]
      %v187 = vld [vmem:[%s172 + $0x10] sm:$0xf]
      %v188 = vld [vmem:[%s172 + $0x14] sm:$0xf]
      %v189 = vld [vmem:[%s172 + $0x18] sm:$0xf]
      %v190 = vld [vmem:[%s172 + $0x1c] sm:$0xf]
      %v191 = vld [vmem:[%s172 + $0x20] sm:$0xf]
      %v192 = vld [vmem:[%s172 + $0x24] sm:$0xf]
      %v193 = vld [vmem:[%s172 + $0x28] sm:$0xf]
      %v194 = vld [vmem:[%s172 + $0x2c] sm:$0xf]
      %v195 = vld [vmem:[%s172 + $0x30] sm:$0xf]
      %v196 = vld [vmem:[%s172 + $0x34] sm:$0xf]
      %v197 = vld [vmem:[%s172 + $0x38] sm:$0xf]
      %v198 = vld [vmem:[%s172 + $0x3c] sm:$0xf]
      %v199 = vld [vmem:[%s172 + $0x40] sm:$0xf]
      %v200 = vld [vmem:[%s172 + $0x44] sm:$0xf]
      %v201 = vld [vmem:[%s172 + $0x48] sm:$0xf]
      %v202 = vld [vmem:[%s172 + $0x4c] sm:$0xf]
      %v203 = vld [vmem:[%s172 + $0x50] sm:$0xf]
      %v204 = vld [vmem:[%s172 + $0x54] sm:$0xf]
      %v205 = vld [vmem:[%s172 + $0x58] sm:$0xf]
      %v206 = vld [vmem:[%s172 + $0x5c] sm:$0xf]
      %v207 = vld [vmem:[%s172 + $0x60] sm:$0xf]
      %v208 = vld [vmem:[%s172 + $0x64] sm:$0xf]
      %v209 = vld [vmem:[%s172 + $0x68] sm:$0xf]
      %v210 = vld [vmem:[%s172 + $0x6c] sm:$0xf]
      %v211 = vld [vmem:[%s172 + $0x70] sm:$0xf]
      %v212 = vld [vmem:[%s172 + $0x74] sm:$0xf]
      %v213 = vld [vmem:[%s172 + $0x78] sm:$0xf]
      %v214 = vld [vmem:[%s172 + $0x7c] sm:$0xf]
      %v247 = vunpack.c.l.b16 %v183
      %v248 = vunpack.c.l.b16 %v184
      %v249 = vunpack.c.l.b16 %v185
      %v250 = vunpack.c.l.b16 %v186
      %v251 = vunpack.c.l.b16 %v187
      %v252 = vunpack.c.l.b16 %v188
      %v253 = vunpack.c.l.b16 %v189
      %v254 = vunpack.c.l.b16 %v190
      %v255 = vunpack.c.l.b16 %v191
      %v256 = vunpack.c.l.b16 %v192
      %v257 = vunpack.c.l.b16 %v193
      %v258 = vunpack.c.l.b16 %v194
      %v259 = vunpack.c.l.b16 %v195
      %v260 = vunpack.c.l.b16 %v196
      %v261 = vunpack.c.l.b16 %v197
      %v262 = vunpack.c.l.b16 %v198
      %v263 = vunpack.c.l.b16 %v199
      %v264 = vunpack.c.l.b16 %v200
      %v265 = vunpack.c.l.b16 %v201
      %v266 = vunpack.c.l.b16 %v202
      %v267 = vunpack.c.l.b16 %v203
      %v268 = vunpack.c.l.b16 %v204
      %v269 = vunpack.c.l.b16 %v205
      %v270 = vunpack.c.l.b16 %v206
      %v271 = vunpack.c.l.b16 %v207
      %v272 = vunpack.c.l.b16 %v208
      %v273 = vunpack.c.l.b16 %v209
      %v274 = vunpack.c.l.b16 %v210
      %v275 = vunpack.c.l.b16 %v211
      %v276 = vunpack.c.l.b16 %v212
      %v277 = vunpack.c.l.b16 %v213
      %v278 = vunpack.c.l.b16 %v214
      %v279 = vpack.c.b16 %v248, %v247
      %v280 = vpack.c.b16 %v250, %v249
      %v281 = vpack.c.b16 %v252, %v251
      %v282 = vpack.c.b16 %v254, %v253
      %v283 = vpack.c.b16 %v256, %v255
      %v284 = vpack.c.b16 %v258, %v257
      %v285 = vpack.c.b16 %v260, %v259
      %v286 = vpack.c.b16 %v262, %v261
      %v287 = vpack.c.b16 %v264, %v263
      %v288 = vpack.c.b16 %v266, %v265
      %v289 = vpack.c.b16 %v268, %v267
      %v290 = vpack.c.b16 %v270, %v269
      %v291 = vpack.c.b16 %v272, %v271
      %v292 = vpack.c.b16 %v274, %v273
      %v293 = vpack.c.b16 %v276, %v275
      %v294 = vpack.c.b16 %v278, %v277
      %v296 = vshrl.u32 %v279, 16
      %v298 = vrot.slane %v296, 7
      %v299 = vshll.u32 %v279, 16
      %v301 = vor.u32 %v298, %v299
      %v303 = vshrl.u32 %v280, 16
      %v305 = vrot.slane %v303, 7
      %v306 = vshll.u32 %v280, 16
      %v308 = vor.u32 %v305, %v306
      %v310 = vshrl.u32 %v281, 16
      %v312 = vrot.slane %v310, 7
      %v313 = vshll.u32 %v281, 16
      %v315 = vor.u32 %v312, %v313
      %v317 = vshrl.u32 %v282, 16
      %v319 = vrot.slane %v317, 7
      %v320 = vshll.u32 %v282, 16
      %v322 = vor.u32 %v319, %v320
      %v324 = vshrl.u32 %v283, 16
      %v326 = vrot.slane %v324, 7
      %v327 = vshll.u32 %v283, 16
      %v329 = vor.u32 %v326, %v327
      %v331 = vshrl.u32 %v284, 16
      %v333 = vrot.slane %v331, 7
      %v334 = vshll.u32 %v284, 16
      %v336 = vor.u32 %v333, %v334
      %v338 = vshrl.u32 %v285, 16
      %v340 = vrot.slane %v338, 7
      %v341 = vshll.u32 %v285, 16
      %v343 = vor.u32 %v340, %v341
      %v345 = vshrl.u32 %v286, 16
      %v347 = vrot.slane %v345, 7
      %v348 = vshll.u32 %v286, 16
      %v350 = vor.u32 %v347, %v348
      %v352 = vshrl.u32 %v287, 16
      %v354 = vrot.slane %v352, 7
      %v355 = vshll.u32 %v287, 16
      %v357 = vor.u32 %v354, %v355
      %v359 = vshrl.u32 %v288, 16
      %v361 = vrot.slane %v359, 7
      %v362 = vshll.u32 %v288, 16
      %v364 = vor.u32 %v361, %v362
      %v366 = vshrl.u32 %v289, 16
      %v368 = vrot.slane %v366, 7
      %v369 = vshll.u32 %v289, 16
      %v371 = vor.u32 %v368, %v369
      %v373 = vshrl.u32 %v290, 16
      %v375 = vrot.slane %v373, 7
      %v376 = vshll.u32 %v290, 16
      %v378 = vor.u32 %v375, %v376
      %v380 = vshrl.u32 %v291, 16
      %v382 = vrot.slane %v380, 7
      %v383 = vshll.u32 %v291, 16
      %v385 = vor.u32 %v382, %v383
      %v387 = vshrl.u32 %v292, 16
      %v389 = vrot.slane %v387, 7
      %v390 = vshll.u32 %v292, 16
      %v392 = vor.u32 %v389, %v390
      %v394 = vshrl.u32 %v293, 16
      %v396 = vrot.slane %v394, 7
      %v397 = vshll.u32 %v293, 16
      %v399 = vor.u32 %v396, %v397
      %v401 = vshrl.u32 %v294, 16
      %v403 = vrot.slane %v401, 7
      %v404 = vshll.u32 %v294, 16
      %v406 = vor.u32 %v403, %v404
      %vm439 = vcmask 1040384
      %vm440 = vsmask.f32 256
      %vm441 = vmand %vm439, %vm440
      %v442 = vsel %vm441, 0, %v301
      %v443 = vsel %vm441, 0, %v308
      %v444 = vsel %vm441, 0, %v315
      %v445 = vsel %vm441, 0, %v322
      %v446 = vsel %vm441, 0, %v329
      %v447 = vsel %vm441, 0, %v336
      %v448 = vsel %vm441, 0, %v343
      %v449 = vsel %vm441, 0, %v350
      %v450 = vsel %vm441, 0, %v357
      %v451 = vsel %vm441, 0, %v364
      %v452 = vsel %vm441, 0, %v371
      %v453 = vsel %vm441, 0, %v378
      %v454 = vsel %vm441, 0, %v385
      %v455 = vsel %vm441, 0, %v392
      %v456 = vsel %vm441, 0, %v399
      %v457 = vsel %vm441, 0, %v406
      %v458 = vsel %vm441, %v298, 0
      %v459 = vsel %vm441, %v305, 0
      %v460 = vsel %vm441, %v312, 0
      %v461 = vsel %vm441, %v319, 0
      %v462 = vsel %vm441, %v326, 0
      %v463 = vsel %vm441, %v333, 0
      %v464 = vsel %vm441, %v340, 0
      %v465 = vsel %vm441, %v347, 0
      %v466 = vsel %vm441, %v354, 0
      %v467 = vsel %vm441, %v361, 0
      %v468 = vsel %vm441, %v368, 0
      %v469 = vsel %vm441, %v375, 0
      %v470 = vsel %vm441, %v382, 0
      %v471 = vsel %vm441, %v389, 0
      %v472 = vsel %vm441, %v396, 0
      %v473 = vsel %vm441, %v403, 0
      %v507 = vunpack.c.l.b16 0
      %v508 = vunpack.c.h.b16 0
      %v509 = vunpack.c.l.b16 %v442
      %v510 = vunpack.c.h.b16 %v442
      %v511 = vunpack.c.l.b16 %v458
      %v512 = vunpack.c.l.b16 %v443
      %v513 = vunpack.c.h.b16 %v443
      %v514 = vunpack.c.l.b16 %v459
      %v515 = vunpack.c.l.b16 %v444
      %v516 = vunpack.c.h.b16 %v444
      %v517 = vunpack.c.l.b16 %v460
      %v518 = vunpack.c.l.b16 %v445
      %v519 = vunpack.c.h.b16 %v445
      %v520 = vunpack.c.l.b16 %v461
      %v521 = vunpack.c.l.b16 %v446
      %v522 = vunpack.c.h.b16 %v446
      %v523 = vunpack.c.l.b16 %v462
      %v524 = vunpack.c.l.b16 %v447
      %v525 = vunpack.c.h.b16 %v447
      %v526 = vunpack.c.l.b16 %v463
      %v527 = vunpack.c.l.b16 %v448
      %v528 = vunpack.c.h.b16 %v448
      %v529 = vunpack.c.l.b16 %v464
      %v530 = vunpack.c.l.b16 %v449
      %v531 = vunpack.c.h.b16 %v449
      %v532 = vunpack.c.l.b16 %v465
      %v533 = vunpack.c.l.b16 %v450
      %v534 = vunpack.c.h.b16 %v450
      %v535 = vunpack.c.l.b16 %v466
      %v536 = vunpack.c.l.b16 %v451
      %v537 = vunpack.c.h.b16 %v451
      %v538 = vunpack.c.l.b16 %v467
      %v539 = vunpack.c.l.b16 %v452
      %v540 = vunpack.c.h.b16 %v452
      %v541 = vunpack.c.l.b16 %v468
      %v542 = vunpack.c.l.b16 %v453
      %v543 = vunpack.c.h.b16 %v453
      %v544 = vunpack.c.l.b16 %v469
      %v545 = vunpack.c.l.b16 %v454
      %v546 = vunpack.c.h.b16 %v454
      %v547 = vunpack.c.l.b16 %v470
      %v548 = vunpack.c.l.b16 %v455
      %v549 = vunpack.c.h.b16 %v455
      %v550 = vunpack.c.l.b16 %v471
      %v551 = vunpack.c.l.b16 %v456
      %v552 = vunpack.c.h.b16 %v456
      %v553 = vunpack.c.l.b16 %v472
      %v554 = vunpack.c.l.b16 %v457
      %v555 = vunpack.c.h.b16 %v457
      %v556 = vunpack.c.l.b16 %v473
      %v557 = vpack.c.b16 %v507, %v507
      %v558 = vpack.c.b16 %v508, %v508
      %v559 = vpack.c.b16 %v509, %v509
      %v560 = vpack.c.b16 %v510, %v510
      %v561 = vpack.c.b16 %v511, %v511
      %v562 = vpack.c.b16 %v512, %v512
      %v563 = vpack.c.b16 %v513, %v513
      %v564 = vpack.c.b16 %v514, %v514
      %v565 = vpack.c.b16 %v515, %v515
      %v566 = vpack.c.b16 %v516, %v516
      %v567 = vpack.c.b16 %v517, %v517
      %v568 = vpack.c.b16 %v518, %v518
      %v569 = vpack.c.b16 %v519, %v519
      %v570 = vpack.c.b16 %v520, %v520
      %v571 = vpack.c.b16 %v521, %v521
      %v572 = vpack.c.b16 %v522, %v522
      %v573 = vpack.c.b16 %v523, %v523
      %v574 = vpack.c.b16 %v524, %v524
      %v575 = vpack.c.b16 %v525, %v525
      %v576 = vpack.c.b16 %v526, %v526
      %v577 = vpack.c.b16 %v527, %v527
      %v578 = vpack.c.b16 %v528, %v528
      %v579 = vpack.c.b16 %v529, %v529
      %v580 = vpack.c.b16 %v530, %v530
      %v581 = vpack.c.b16 %v531, %v531
      %v582 = vpack.c.b16 %v532, %v532
      %v583 = vpack.c.b16 %v533, %v533
      %v584 = vpack.c.b16 %v534, %v534
      %v585 = vpack.c.b16 %v535, %v535
      %v586 = vpack.c.b16 %v536, %v536
      %v587 = vpack.c.b16 %v537, %v537
      %v588 = vpack.c.b16 %v538, %v538
      %v589 = vpack.c.b16 %v539, %v539
      %v590 = vpack.c.b16 %v540, %v540
      %v591 = vpack.c.b16 %v541, %v541
      %v592 = vpack.c.b16 %v542, %v542
      %v593 = vpack.c.b16 %v543, %v543
      %v594 = vpack.c.b16 %v544, %v544
      %v595 = vpack.c.b16 %v545, %v545
      %v596 = vpack.c.b16 %v546, %v546
      %v597 = vpack.c.b16 %v547, %v547
      %v598 = vpack.c.b16 %v548, %v548
      %v599 = vpack.c.b16 %v549, %v549
      %v600 = vpack.c.b16 %v550, %v550
      %v601 = vpack.c.b16 %v551, %v551
      %v602 = vpack.c.b16 %v552, %v552
      %v603 = vpack.c.b16 %v553, %v553
      %v604 = vpack.c.b16 %v554, %v554
      %v605 = vpack.c.b16 %v555, %v555
      %v606 = vpack.c.b16 %v556, %v556
      %657 = vst [vmem:[#allocation2] sm:$0xf] %v557
      %658 = vst [vmem:[#allocation2 + $0x4] sm:$0xf] %v558
      %659 = vst [vmem:[#allocation2 + $0x8] sm:$0x1] %v557
      %660 = vst [vmem:[#allocation2 + $0xc] sm:$0xf] %v559
      %661 = vst [vmem:[#allocation2 + $0x10] sm:$0xf] %v560
      %662 = vst [vmem:[#allocation2 + $0x14] sm:$0x1] %v561
      %663 = vst [vmem:[#allocation2 + $0x18] sm:$0xf] %v562
      %664 = vst [vmem:[#allocation2 + $0x1c] sm:$0xf] %v563
      %665 = vst [vmem:[#allocation2 + $0x20] sm:$0x1] %v564
      %666 = vst [vmem:[#allocation2 + $0x24] sm:$0xf] %v565
      %667 = vst [vmem:[#allocation2 + $0x28] sm:$0xf] %v566
      %668 = vst [vmem:[#allocation2 + $0x2c] sm:$0x1] %v567
      %669 = vst [vmem:[#allocation2 + $0x30] sm:$0xf] %v568
      %670 = vst [vmem:[#allocation2 + $0x34] sm:$0xf] %v569
      %671 = vst [vmem:[#allocation2 + $0x38] sm:$0x1] %v570
      %672 = vst [vmem:[#allocation2 + $0x3c] sm:$0xf] %v571
      %673 = vst [vmem:[#allocation2 + $0x40] sm:$0xf] %v572
      %674 = vst [vmem:[#allocation2 + $0x44] sm:$0x1] %v573
      %675 = vst [vmem:[#allocation2 + $0x48] sm:$0xf] %v574
      %676 = vst [vmem:[#allocation2 + $0x4c] sm:$0xf] %v575
      %677 = vst [vmem:[#allocation2 + $0x50] sm:$0x1] %v576
      %678 = vst [vmem:[#allocation2 + $0x54] sm:$0xf] %v577
      %679 = vst [vmem:[#allocation2 + $0x58] sm:$0xf] %v578
      %680 = vst [vmem:[#allocation2 + $0x5c] sm:$0x1] %v579
      %681 = vst [vmem:[#allocation2 + $0x60] sm:$0xf] %v580
      %682 = vst [vmem:[#allocation2 + $0x64] sm:$0xf] %v581
      %683 = vst [vmem:[#allocation2 + $0x68] sm:$0x1] %v582
      %684 = vst [vmem:[#allocation2 + $0x6c] sm:$0xf] %v583
      %685 = vst [vmem:[#allocation2 + $0x70] sm:$0xf] %v584
      %686 = vst [vmem:[#allocation2 + $0x74] sm:$0x1] %v585
      %687 = vst [vmem:[#allocation2 + $0x78] sm:$0xf] %v586
      %688 = vst [vmem:[#allocation2 + $0x7c] sm:$0xf] %v587
      %689 = vst [vmem:[#allocation2 + $0x80] sm:$0x1] %v588
      %690 = vst [vmem:[#allocation2 + $0x84] sm:$0xf] %v589
      %691 = vst [vmem:[#allocation2 + $0x88] sm:$0xf] %v590
      %692 = vst [vmem:[#allocation2 + $0x8c] sm:$0x1] %v591
      %693 = vst [vmem:[#allocation2 + $0x90] sm:$0xf] %v592
      %694 = vst [vmem:[#allocation2 + $0x94] sm:$0xf] %v593
      %695 = vst [vmem:[#allocation2 + $0x98] sm:$0x1] %v594
      %696 = vst [vmem:[#allocation2 + $0x9c] sm:$0xf] %v595
      %697 = vst [vmem:[#allocation2 + $0xa0] sm:$0xf] %v596
      %698 = vst [vmem:[#allocation2 + $0xa4] sm:$0x1] %v597
      %699 = vst [vmem:[#allocation2 + $0xa8] sm:$0xf] %v598
      %700 = vst [vmem:[#allocation2 + $0xac] sm:$0xf] %v599
      %701 = vst [vmem:[#allocation2 + $0xb0] sm:$0x1] %v600
      %702 = vst [vmem:[#allocation2 + $0xb4] sm:$0xf] %v601
      %703 = vst [vmem:[#allocation2 + $0xb8] sm:$0xf] %v602
      %704 = vst [vmem:[#allocation2 + $0xbc] sm:$0x1] %v603
      %705 = vst [vmem:[#allocation2 + $0xc0] sm:$0xf] %v604
      %706 = vst [vmem:[#allocation2 + $0xc4] sm:$0xf] %v605
      %707 = vst [vmem:[#allocation2 + $0xc8] sm:$0x1] %v606
      %708 = vst [vmem:[#allocation2 + $0xcc] sm:$0xf] %v557
      %709 = vst [vmem:[#allocation2 + $0xd0] sm:$0xf] %v558
      %710 = vst [vmem:[#allocation2 + $0xd4] sm:$0x1] %v557
      %v711 = vld [vmem:[#allocation2] sm:$0xf]
      %v712 = vld [vmem:[#allocation2 + $0x4] sm:$0xf]
      %v713 = vld [vmem:[#allocation2 + $0xc] sm:$0xf]
      %v714 = vld [vmem:[#allocation2 + $0x10] sm:$0xf]
      %v715 = vld [vmem:[#allocation2 + $0x18] sm:$0xf]
      %v716 = vld [vmem:[#allocation2 + $0x1c] sm:$0xf]
      %v717 = vld [vmem:[#allocation2 + $0x24] sm:$0xf]
      %v718 = vld [vmem:[#allocation2 + $0x28] sm:$0xf]
      %v719 = vld [vmem:[#allocation2 + $0x30] sm:$0xf]
      %v720 = vld [vmem:[#allocation2 + $0x34] sm:$0xf]
      %v721 = vld [vmem:[#allocation2 + $0x3c] sm:$0xf]
      %v722 = vld [vmem:[#allocation2 + $0x40] sm:$0xf]
      %v723 = vld [vmem:[#allocation2 + $0x48] sm:$0xf]
      %v724 = vld [vmem:[#allocation2 + $0x4c] sm:$0xf]
      %v725 = vld [vmem:[#allocation2 + $0x54] sm:$0xf]
      %v726 = vld [vmem:[#allocation2 + $0x58] sm:$0xf]
      %v727 = vld [vmem:[#allocation2 + $0x60] sm:$0xf]
      %v728 = vld [vmem:[#allocation2 + $0x64] sm:$0xf]
      %v729 = vld [vmem:[#allocation2 + $0x6c] sm:$0xf]
      %v730 = vld [vmem:[#allocation2 + $0x70] sm:$0xf]
      %v731 = vld [vmem:[#allocation2 + $0x78] sm:$0xf]
      %v732 = vld [vmem:[#allocation2 + $0x7c] sm:$0xf]
      %v733 = vld [vmem:[#allocation2 + $0x84] sm:$0xf]
      %v734 = vld [vmem:[#allocation2 + $0x88] sm:$0xf]
      %v735 = vld [vmem:[#allocation2 + $0x90] sm:$0xf]
      %v736 = vld [vmem:[#allocation2 + $0x94] sm:$0xf]
      %v737 = vld [vmem:[#allocation2 + $0x9c] sm:$0xf]
      %v738 = vld [vmem:[#allocation2 + $0xa0] sm:$0xf]
      %v739 = vld [vmem:[#allocation2 + $0xa8] sm:$0xf]
      %v740 = vld [vmem:[#allocation2 + $0xac] sm:$0xf]
      %v741 = vld [vmem:[#allocation2 + $0xb4] sm:$0xf]
      %v742 = vld [vmem:[#allocation2 + $0xb8] sm:$0xf]
      %v743 = vld [vmem:[%s1] sm:$0xf]
      %v744 = vld [vmem:[%s1 + $0x4] sm:$0xf]
      %v745 = vld [vmem:[%s1 + $0x8] sm:$0xf]
      %v746 = vld [vmem:[%s1 + $0xc] sm:$0xf]
      %v747 = vld [vmem:[%s1 + $0x10] sm:$0xf]
      %v748 = vld [vmem:[%s1 + $0x14] sm:$0xf]
      %v749 = vld [vmem:[%s1 + $0x18] sm:$0xf]
      %v750 = vld [vmem:[%s1 + $0x1c] sm:$0xf]
      %v751 = vld [vmem:[%s1 + $0x20] sm:$0xf]
      %v752 = vld [vmem:[%s1 + $0x24] sm:$0xf]
      %v753 = vld [vmem:[%s1 + $0x28] sm:$0xf]
      %v754 = vld [vmem:[%s1 + $0x2c] sm:$0xf]
      %v755 = vld [vmem:[%s1 + $0x30] sm:$0xf]
      %v756 = vld [vmem:[%s1 + $0x34] sm:$0xf]
      %v757 = vld [vmem:[%s1 + $0x38] sm:$0xf]
      %v758 = vld [vmem:[%s1 + $0x3c] sm:$0xf]
      %v759 = vld [vmem:[#allocation2 + $0x8] sm:$0x1]
      %v760 = vld [vmem:[#allocation2 + $0x14] sm:$0x1]
      %v761 = vld [vmem:[#allocation2 + $0x20] sm:$0x1]
      %v762 = vld [vmem:[#allocation2 + $0x2c] sm:$0x1]
      %v763 = vld [vmem:[#allocation2 + $0x38] sm:$0x1]
      %v764 = vld [vmem:[#allocation2 + $0x44] sm:$0x1]
      %v765 = vld [vmem:[#allocation2 + $0x50] sm:$0x1]
      %v766 = vld [vmem:[#allocation2 + $0x5c] sm:$0x1]
      %v767 = vld [vmem:[#allocation2 + $0x68] sm:$0x1]
      %v768 = vld [vmem:[#allocation2 + $0x74] sm:$0x1]
      %v769 = vld [vmem:[#allocation2 + $0x80] sm:$0x1]
      %v770 = vld [vmem:[#allocation2 + $0x8c] sm:$0x1]
      %v771 = vld [vmem:[#allocation2 + $0x98] sm:$0x1]
      %v772 = vld [vmem:[#allocation2 + $0xa4] sm:$0x1]
      %v773 = vld [vmem:[#allocation2 + $0xb0] sm:$0x1]
      %v774 = vld [vmem:[#allocation2 + $0xbc] sm:$0x1]
      %vm775 = vsmask.f32 3328
      %vm776 = vsmask.f32 7440
      %vm777 = vmor %vm775, %vm776
      %v779 = vshrl.u32 %v711, 16
      %v781 = vrot.slane %v779, 4
      %v782 = vshll.u32 %v711, 16
      %v784 = vrot.slane %v782, 5
      %v785 = vor.u32 %v781, %v784
      %v786 = vrot.slane %v785, 4
      %v788 = vshll.u32 %v712, 16
      %v790 = vrot.slane %v788, 5
      %v791 = vsel %vm777, %v786, %v790
      %v792 = vshrl.u32 %v712, 16
      %v794 = vrot.slane %v792, 4
      %v795 = vor.u32 %v794, %v790
      %v796 = vrot.slane %v795, 4
      %v798 = vshll.u32 %v759, 16
      %v800 = vrot.slane %v798, 5
      %v801 = vsel %vm777, %v796, %v800
      %v803 = vshrl.u32 %v713, 16
      %v805 = vrot.slane %v803, 4
      %v806 = vshll.u32 %v713, 16
      %v808 = vrot.slane %v806, 5
      %v809 = vor.u32 %v805, %v808
      %v810 = vrot.slane %v809, 4
      %v812 = vshll.u32 %v714, 16
      %v814 = vrot.slane %v812, 5
      %v815 = vsel %vm777, %v810, %v814
      %v816 = vshrl.u32 %v714, 16
      %v818 = vrot.slane %v816, 4
      %v819 = vor.u32 %v818, %v814
      %v820 = vrot.slane %v819, 4
      %v822 = vshll.u32 %v760, 16
      %v824 = vrot.slane %v822, 5
      %v825 = vsel %vm777, %v820, %v824
      %v827 = vshrl.u32 %v715, 16
      %v829 = vrot.slane %v827, 4
      %v830 = vshll.u32 %v715, 16
      %v832 = vrot.slane %v830, 5
      %v833 = vor.u32 %v829, %v832
      %v834 = vrot.slane %v833, 4
      %v836 = vshll.u32 %v716, 16
      %v838 = vrot.slane %v836, 5
      %v839 = vsel %vm777, %v834, %v838
      %v840 = vshrl.u32 %v716, 16
      %v842 = vrot.slane %v840, 4
      %v843 = vor.u32 %v842, %v838
      %v844 = vrot.slane %v843, 4
      %v846 = vshll.u32 %v761, 16
      %v848 = vrot.slane %v846, 5
      %v849 = vsel %vm777, %v844, %v848
      %v851 = vshrl.u32 %v717, 16
      %v853 = vrot.slane %v851, 4
      %v854 = vshll.u32 %v717, 16
      %v856 = vrot.slane %v854, 5
      %v857 = vor.u32 %v853, %v856
      %v858 = vrot.slane %v857, 4
      %v860 = vshll.u32 %v718, 16
      %v862 = vrot.slane %v860, 5
      %v863 = vsel %vm777, %v858, %v862
      %v864 = vshrl.u32 %v718, 16
      %v866 = vrot.slane %v864, 4
      %v867 = vor.u32 %v866, %v862
      %v868 = vrot.slane %v867, 4
      %v870 = vshll.u32 %v762, 16
      %v872 = vrot.slane %v870, 5
      %v873 = vsel %vm777, %v868, %v872
      %v875 = vshrl.u32 %v719, 16
      %v877 = vrot.slane %v875, 4
      %v878 = vshll.u32 %v719, 16
      %v880 = vrot.slane %v878, 5
      %v881 = vor.u32 %v877, %v880
      %v882 = vrot.slane %v881, 4
      %v884 = vshll.u32 %v720, 16
      %v886 = vrot.slane %v884, 5
      %v887 = vsel %vm777, %v882, %v886
      %v888 = vshrl.u32 %v720, 16
      %v890 = vrot.slane %v888, 4
      %v891 = vor.u32 %v890, %v886
      %v892 = vrot.slane %v891, 4
      %v894 = vshll.u32 %v763, 16
      %v896 = vrot.slane %v894, 5
      %v897 = vsel %vm777, %v892, %v896
      %v899 = vshrl.u32 %v721, 16
      %v901 = vrot.slane %v899, 4
      %v902 = vshll.u32 %v721, 16
      %v904 = vrot.slane %v902, 5
      %v905 = vor.u32 %v901, %v904
      %v906 = vrot.slane %v905, 4
      %v908 = vshll.u32 %v722, 16
      %v910 = vrot.slane %v908, 5
      %v911 = vsel %vm777, %v906, %v910
      %v912 = vshrl.u32 %v722, 16
      %v914 = vrot.slane %v912, 4
      %v915 = vor.u32 %v914, %v910
      %v916 = vrot.slane %v915, 4
      %v918 = vshll.u32 %v764, 16
      %v920 = vrot.slane %v918, 5
      %v921 = vsel %vm777, %v916, %v920
      %v923 = vshrl.u32 %v723, 16
      %v925 = vrot.slane %v923, 4
      %v926 = vshll.u32 %v723, 16
      %v928 = vrot.slane %v926, 5
      %v929 = vor.u32 %v925, %v928
      %v930 = vrot.slane %v929, 4
      %v932 = vshll.u32 %v724, 16
      %v934 = vrot.slane %v932, 5
      %v935 = vsel %vm777, %v930, %v934
      %v936 = vshrl.u32 %v724, 16
      %v938 = vrot.slane %v936, 4
      %v939 = vor.u32 %v938, %v934
      %v940 = vrot.slane %v939, 4
      %v942 = vshll.u32 %v765, 16
      %v944 = vrot.slane %v942, 5
      %v945 = vsel %vm777, %v940, %v944
      %v947 = vshrl.u32 %v725, 16
      %v949 = vrot.slane %v947, 4
      %v950 = vshll.u32 %v725, 16
      %v952 = vrot.slane %v950, 5
      %v953 = vor.u32 %v949, %v952
      %v954 = vrot.slane %v953, 4
      %v956 = vshll.u32 %v726, 16
      %v958 = vrot.slane %v956, 5
      %v959 = vsel %vm777, %v954, %v958
      %v960 = vshrl.u32 %v726, 16
      %v962 = vrot.slane %v960, 4
      %v963 = vor.u32 %v962, %v958
      %v964 = vrot.slane %v963, 4
      %v966 = vshll.u32 %v766, 16
      %v968 = vrot.slane %v966, 5
      %v969 = vsel %vm777, %v964, %v968
      %v971 = vshrl.u32 %v727, 16
      %v973 = vrot.slane %v971, 4
      %v974 = vshll.u32 %v727, 16
      %v976 = vrot.slane %v974, 5
      %v977 = vor.u32 %v973, %v976
      %v978 = vrot.slane %v977, 4
      %v980 = vshll.u32 %v728, 16
      %v982 = vrot.slane %v980, 5
      %v983 = vsel %vm777, %v978, %v982
      %v984 = vshrl.u32 %v728, 16
      %v986 = vrot.slane %v984, 4
      %v987 = vor.u32 %v986, %v982
      %v988 = vrot.slane %v987, 4
      %v990 = vshll.u32 %v767, 16
      %v992 = vrot.slane %v990, 5
      %v993 = vsel %vm777, %v988, %v992
      %v995 = vshrl.u32 %v729, 16
      %v997 = vrot.slane %v995, 4
      %v998 = vshll.u32 %v729, 16
      %v1000 = vrot.slane %v998, 5
      %v1001 = vor.u32 %v997, %v1000
      %v1002 = vrot.slane %v1001, 4
      %v1004 = vshll.u32 %v730, 16
      %v1006 = vrot.slane %v1004, 5
      %v1007 = vsel %vm777, %v1002, %v1006
      %v1008 = vshrl.u32 %v730, 16
      %v1010 = vrot.slane %v1008, 4
      %v1011 = vor.u32 %v1010, %v1006
      %v1012 = vrot.slane %v1011, 4
      %v1014 = vshll.u32 %v768, 16
      %v1016 = vrot.slane %v1014, 5
      %v1017 = vsel %vm777, %v1012, %v1016
      %v1019 = vshrl.u32 %v731, 16
      %v1021 = vrot.slane %v1019, 4
      %v1022 = vshll.u32 %v731, 16
      %v1024 = vrot.slane %v1022, 5
      %v1025 = vor.u32 %v1021, %v1024
      %v1026 = vrot.slane %v1025, 4
      %v1028 = vshll.u32 %v732, 16
      %v1030 = vrot.slane %v1028, 5
      %v1031 = vsel %vm777, %v1026, %v1030
      %v1032 = vshrl.u32 %v732, 16
      %v1034 = vrot.slane %v1032, 4
      %v1035 = vor.u32 %v1034, %v1030
      %v1036 = vrot.slane %v1035, 4
      %v1038 = vshll.u32 %v769, 16
      %v1040 = vrot.slane %v1038, 5
      %v1041 = vsel %vm777, %v1036, %v1040
      %v1043 = vshrl.u32 %v733, 16
      %v1045 = vrot.slane %v1043, 4
      %v1046 = vshll.u32 %v733, 16
      %v1048 = vrot.slane %v1046, 5
      %v1049 = vor.u32 %v1045, %v1048
      %v1050 = vrot.slane %v1049, 4
      %v1052 = vshll.u32 %v734, 16
      %v1054 = vrot.slane %v1052, 5
      %v1055 = vsel %vm777, %v1050, %v1054
      %v1056 = vshrl.u32 %v734, 16
      %v1058 = vrot.slane %v1056, 4
      %v1059 = vor.u32 %v1058, %v1054
      %v1060 = vrot.slane %v1059, 4
      %v1062 = vshll.u32 %v770, 16
      %v1064 = vrot.slane %v1062, 5
      %v1065 = vsel %vm777, %v1060, %v1064
      %v1067 = vshrl.u32 %v735, 16
      %v1069 = vrot.slane %v1067, 4
      %v1070 = vshll.u32 %v735, 16
      %v1072 = vrot.slane %v1070, 5
      %v1073 = vor.u32 %v1069, %v1072
      %v1074 = vrot.slane %v1073, 4
      %v1076 = vshll.u32 %v736, 16
      %v1078 = vrot.slane %v1076, 5
      %v1079 = vsel %vm777, %v1074, %v1078
      %v1080 = vshrl.u32 %v736, 16
      %v1082 = vrot.slane %v1080, 4
      %v1083 = vor.u32 %v1082, %v1078
      %v1084 = vrot.slane %v1083, 4
      %v1086 = vshll.u32 %v771, 16
      %v1088 = vrot.slane %v1086, 5
      %v1089 = vsel %vm777, %v1084, %v1088
      %v1091 = vshrl.u32 %v737, 16
      %v1093 = vrot.slane %v1091, 4
      %v1094 = vshll.u32 %v737, 16
      %v1096 = vrot.slane %v1094, 5
      %v1097 = vor.u32 %v1093, %v1096
      %v1098 = vrot.slane %v1097, 4
      %v1100 = vshll.u32 %v738, 16
      %v1102 = vrot.slane %v1100, 5
      %v1103 = vsel %vm777, %v1098, %v1102
      %v1104 = vshrl.u32 %v738, 16
      %v1106 = vrot.slane %v1104, 4
      %v1107 = vor.u32 %v1106, %v1102
      %v1108 = vrot.slane %v1107, 4
      %v1110 = vshll.u32 %v772, 16
      %v1112 = vrot.slane %v1110, 5
      %v1113 = vsel %vm777, %v1108, %v1112
      %v1115 = vshrl.u32 %v739, 16
      %v1117 = vrot.slane %v1115, 4
      %v1118 = vshll.u32 %v739, 16
      %v1120 = vrot.slane %v1118, 5
      %v1121 = vor.u32 %v1117, %v1120
      %v1122 = vrot.slane %v1121, 4
      %v1124 = vshll.u32 %v740, 16
      %v1126 = vrot.slane %v1124, 5
      %v1127 = vsel %vm777, %v1122, %v1126
      %v1128 = vshrl.u32 %v740, 16
      %v1130 = vrot.slane %v1128, 4
      %v1131 = vor.u32 %v1130, %v1126
      %v1132 = vrot.slane %v1131, 4
      %v1134 = vshll.u32 %v773, 16
      %v1136 = vrot.slane %v1134, 5
      %v1137 = vsel %vm777, %v1132, %v1136
      %v1139 = vshrl.u32 %v741, 16
      %v1141 = vrot.slane %v1139, 4
      %v1142 = vshll.u32 %v741, 16
      %v1144 = vrot.slane %v1142, 5
      %v1145 = vor.u32 %v1141, %v1144
      %v1146 = vrot.slane %v1145, 4
      %v1148 = vshll.u32 %v742, 16
      %v1150 = vrot.slane %v1148, 5
      %v1151 = vsel %vm777, %v1146, %v1150
      %v1152 = vshrl.u32 %v742, 16
      %v1154 = vrot.slane %v1152, 4
      %v1155 = vor.u32 %v1154, %v1150
      %v1156 = vrot.slane %v1155, 4
      %v1158 = vshll.u32 %v774, 16
      %v1160 = vrot.slane %v1158, 5
      %v1161 = vsel %vm777, %v1156, %v1160
      %s1162 = scalar_lea.vmem %s1, 64
      %v1163 = vld [vmem:[%s1162] sm:$0xf]
      %v1164 = vld [vmem:[%s1162 + $0x4] sm:$0xf]
      %v1165 = vld [vmem:[%s1162 + $0x8] sm:$0xf]
      %v1166 = vld [vmem:[%s1162 + $0xc] sm:$0xf]
      %v1167 = vld [vmem:[%s1162 + $0x10] sm:$0xf]
      %v1168 = vld [vmem:[%s1162 + $0x14] sm:$0xf]
      %v1169 = vld [vmem:[%s1162 + $0x18] sm:$0xf]
      %v1170 = vld [vmem:[%s1162 + $0x1c] sm:$0xf]
      %v1171 = vld [vmem:[%s1162 + $0x20] sm:$0xf]
      %v1172 = vld [vmem:[%s1162 + $0x24] sm:$0xf]
      %v1173 = vld [vmem:[%s1162 + $0x28] sm:$0xf]
      %v1174 = vld [vmem:[%s1162 + $0x2c] sm:$0xf]
      %v1175 = vld [vmem:[%s1162 + $0x30] sm:$0xf]
      %v1176 = vld [vmem:[%s1162 + $0x34] sm:$0xf]
      %v1177 = vld [vmem:[%s1162 + $0x38] sm:$0xf]
      %v1178 = vld [vmem:[%s1162 + $0x3c] sm:$0xf]
      %v1179 = vunpack.c.l.b16 %v791
      %v1180 = vunpack.c.l.b16 %v801
      %v1181 = vunpack.c.l.b16 %v815
      %v1182 = vunpack.c.l.b16 %v825
      %v1183 = vunpack.c.l.b16 %v839
      %v1184 = vunpack.c.l.b16 %v849
      %v1185 = vunpack.c.l.b16 %v863
      %v1186 = vunpack.c.l.b16 %v873
      %v1187 = vunpack.c.l.b16 %v887
      %v1188 = vunpack.c.l.b16 %v897
      %v1189 = vunpack.c.l.b16 %v911
      %v1190 = vunpack.c.l.b16 %v921
      %v1191 = vunpack.c.l.b16 %v935
      %v1192 = vunpack.c.l.b16 %v945
      %v1193 = vunpack.c.l.b16 %v959
      %v1194 = vunpack.c.l.b16 %v969
      %v1195 = vunpack.c.l.b16 %v983
      %v1196 = vunpack.c.l.b16 %v993
      %v1197 = vunpack.c.l.b16 %v1007
      %v1198 = vunpack.c.l.b16 %v1017
      %v1199 = vunpack.c.l.b16 %v1031
      %v1200 = vunpack.c.l.b16 %v1041
      %v1201 = vunpack.c.l.b16 %v1055
      %v1202 = vunpack.c.l.b16 %v1065
      %v1203 = vunpack.c.l.b16 %v1079
      %v1204 = vunpack.c.l.b16 %v1089
      %v1205 = vunpack.c.l.b16 %v1103
      %v1206 = vunpack.c.l.b16 %v1113
      %v1207 = vunpack.c.l.b16 %v1127
      %v1208 = vunpack.c.l.b16 %v1137
      %v1209 = vunpack.c.l.b16 %v1151
      %v1210 = vunpack.c.l.b16 %v1161
      %v1211 = vpack.c.b16 %v1180, %v1179
      %v1212 = vpack.c.b16 %v1182, %v1181
      %v1213 = vpack.c.b16 %v1184, %v1183
      %v1214 = vpack.c.b16 %v1186, %v1185
      %v1215 = vpack.c.b16 %v1188, %v1187
      %v1216 = vpack.c.b16 %v1190, %v1189
      %v1217 = vpack.c.b16 %v1192, %v1191
      %v1218 = vpack.c.b16 %v1194, %v1193
      %v1219 = vpack.c.b16 %v1196, %v1195
      %v1220 = vpack.c.b16 %v1198, %v1197
      %v1221 = vpack.c.b16 %v1200, %v1199
      %v1222 = vpack.c.b16 %v1202, %v1201
      %v1223 = vpack.c.b16 %v1204, %v1203
      %v1224 = vpack.c.b16 %v1206, %v1205
      %v1225 = vpack.c.b16 %v1208, %v1207
      %v1226 = vpack.c.b16 %v1210, %v1209
      %v1259 = vunpack.c.l.b16 %v1163
      %v1260 = vunpack.c.l.b16 %v1164
      %v1261 = vunpack.c.l.b16 %v1165
      %v1262 = vunpack.c.l.b16 %v1166
      %v1263 = vunpack.c.l.b16 %v1167
      %v1264 = vunpack.c.l.b16 %v1168
      %v1265 = vunpack.c.l.b16 %v1169
      %v1266 = vunpack.c.l.b16 %v1170
      %v1267 = vunpack.c.l.b16 %v1171
      %v1268 = vunpack.c.l.b16 %v1172
      %v1269 = vunpack.c.l.b16 %v1173
      %v1270 = vunpack.c.l.b16 %v1174
      %v1271 = vunpack.c.l.b16 %v1175
      %v1272 = vunpack.c.l.b16 %v1176
      %v1273 = vunpack.c.l.b16 %v1177
      %v1274 = vunpack.c.l.b16 %v1178
      %v1275 = vpack.c.b16 %v1260, %v1259
      %v1276 = vpack.c.b16 %v1262, %v1261
      %v1277 = vpack.c.b16 %v1264, %v1263
      %v1278 = vpack.c.b16 %v1266, %v1265
      %v1279 = vpack.c.b16 %v1268, %v1267
      %v1280 = vpack.c.b16 %v1270, %v1269
      %v1281 = vpack.c.b16 %v1272, %v1271
      %v1282 = vpack.c.b16 %v1274, %v1273
      %1291 = vmatprep.subr.bf16.mxu0 0
      %1292 = vmatpush1.bf16.msra.mxu0 %v1275
      %1293 = vmatprep.subr.bf16.mxu0 0
      %1294 = vmatpush1.bf16.msra.mxu0 %v1276
      %1295 = vmatprep.subr.bf16.mxu0 0
      %1296 = vmatpush1.bf16.msra.mxu0 %v1277
      %1297 = vmatprep.subr.bf16.mxu0 0
      %1298 = vmatpush1.bf16.msra.mxu0 %v1278
      %1299 = vmatprep.subr.bf16.mxu0 0
      %1300 = vmatpush1.bf16.msra.mxu0 %v1279
      %1301 = vmatprep.subr.bf16.mxu0 0
      %1302 = vmatpush1.bf16.msra.mxu0 %v1280
      %1303 = vmatprep.subr.bf16.mxu0 0
      %1304 = vmatpush1.bf16.msra.mxu0 %v1281
      %1305 = vmatprep.subr.bf16.mxu0 0
      %1306 = vmatpush1.bf16.msra.mxu0 %v1282
      %1307 = vmatprep.subr.bf16.mxu0 0
      %1308 = vmatpush1.bf16.msra.mxu0 0
      %1309 = vmatprep.subr.bf16.mxu0 0
      %1310 = vmatpush1.bf16.msra.mxu0 0
      %1311 = vmatprep.subr.bf16.mxu0 0
      %1312 = vmatpush1.bf16.msra.mxu0 0
      %1313 = vmatprep.subr.bf16.mxu0 0
      %1314 = vmatpush1.bf16.msra.mxu0 0
      %1315 = vmatprep.subr.bf16.mxu0 0
      %1316 = vmatpush1.bf16.msra.mxu0 0
      %1317 = vmatprep.subr.bf16.mxu0 0
      %1318 = vmatpush1.bf16.msra.mxu0 0
      %1319 = vmatprep.subr.bf16.mxu0 0
      %1320 = vmatpush1.bf16.msra.mxu0 0
      %1321 = vmatprep.subr.bf16.mxu0 0
      %1322 = vmatpush1.bf16.msra.mxu0 0
      %1323 = vmatprep.mubr.bf16.mxu0 0
      %1324 = vmatmul.mubr.bf16.gmra.mrb[0].mxu0 %v1211
      %v1325 = vpop.f32.mrb[0].mxu0
      %v1326 = vadd.f32 0.0, %v1325
      %v1327 = vpop.f32.mrb[0].mxu0
      %v1328 = vpop.f32.mrb[0].mxu0
      %v1329 = vadd.f32 0.0, %v1328
      %v1330 = vpop.f32.mrb[0].mxu0
      %1331 = vmatprep.mubr.bf16.mxu0 0
      %1332 = vmatmul.mubr.bf16.gmra.mrb[0].mxu0 %v1212
      %v1333 = vpop.f32.mrb[0].mxu0
      %v1334 = vadd.f32 0.0, %v1333
      %v1335 = vpop.f32.mrb[0].mxu0
      %v1336 = vpop.f32.mrb[0].mxu0
      %v1337 = vadd.f32 0.0, %v1336
      %v1338 = vpop.f32.mrb[0].mxu0
      %1339 = vmatprep.mubr.bf16.mxu0 0
      %1340 = vmatmul.mubr.bf16.gmra.mrb[0].mxu0 %v1213
      %v1341 = vpop.f32.mrb[0].mxu0
      %v1342 = vadd.f32 0.0, %v1341
      %v1343 = vpop.f32.mrb[0].mxu0
      %v1344 = vpop.f32.mrb[0].mxu0
      %v1345 = vadd.f32 0.0, %v1344
      %v1346 = vpop.f32.mrb[0].mxu0
      %1347 = vmatprep.mubr.bf16.mxu0 0
      %1348 = vmatmul.mubr.bf16.gmra.mrb[0].mxu0 %v1214
      %v1349 = vpop.f32.mrb[0].mxu0
      %v1350 = vadd.f32 0.0, %v1349
      %v1351 = vpop.f32.mrb[0].mxu0
      %v1352 = vpop.f32.mrb[0].mxu0
      %v1353 = vadd.f32 0.0, %v1352
      %v1354 = vpop.f32.mrb[0].mxu0
      %1355 = vmatprep.mubr.bf16.mxu0 0
      %1356 = vmatmul.mubr.bf16.gmra.mrb[0].mxu0 %v1215
      %v1357 = vpop.f32.mrb[0].mxu0
      %v1358 = vadd.f32 0.0, %v1357
      %v1359 = vpop.f32.mrb[0].mxu0
      %v1360 = vpop.f32.mrb[0].mxu0
      %v1361 = vadd.f32 0.0, %v1360
      %v1362 = vpop.f32.mrb[0].mxu0
      %1363 = vmatprep.mubr.bf16.mxu0 0
      %1364 = vmatmul.mubr.bf16.gmra.mrb[0].mxu0 %v1216
      %v1365 = vpop.f32.mrb[0].mxu0
      %v1366 = vadd.f32 0.0, %v1365
      %v1367 = vpop.f32.mrb[0].mxu0
      %v1368 = vpop.f32.mrb[0].mxu0
      %v1369 = vadd.f32 0.0, %v1368
      %v1370 = vpop.f32.mrb[0].mxu0
      %1371 = vmatprep.mubr.bf16.mxu0 0
      %1372 = vmatmul.mubr.bf16.gmra.mrb[0].mxu0 %v1217
      %v1373 = vpop.f32.mrb[0].mxu0
      %v1374 = vadd.f32 0.0, %v1373
      %v1375 = vpop.f32.mrb[0].mxu0
      %v1376 = vpop.f32.mrb[0].mxu0
      %v1377 = vadd.f32 0.0, %v1376
      %v1378 = vpop.f32.mrb[0].mxu0
      %1379 = vmatprep.mubr.bf16.mxu0 0
      %1380 = vmatmul.mubr.bf16.gmra.mrb[0].mxu0 %v1218
      %v1381 = vpop.f32.mrb[0].mxu0
      %v1382 = vadd.f32 0.0, %v1381
      %v1383 = vpop.f32.mrb[0].mxu0
      %v1384 = vpop.f32.mrb[0].mxu0
      %v1385 = vadd.f32 0.0, %v1384
      %v1386 = vpop.f32.mrb[0].mxu0
      %1387 = vmatprep.mubr.bf16.mxu0 0
      %1388 = vmatmul.mubr.bf16.gmra.mrb[0].mxu0 %v1219
      %v1389 = vpop.f32.mrb[0].mxu0
      %v1390 = vadd.f32 0.0, %v1389
      %v1391 = vpop.f32.mrb[0].mxu0
      %v1392 = vpop.f32.mrb[0].mxu0
      %v1393 = vadd.f32 0.0, %v1392
      %v1394 = vpop.f32.mrb[0].mxu0
      %1395 = vmatprep.mubr.bf16.mxu0 0
      %1396 = vmatmul.mubr.bf16.gmra.mrb[0].mxu0 %v1220
      %v1397 = vpop.f32.mrb[0].mxu0
      %v1398 = vadd.f32 0.0, %v1397
      %v1399 = vpop.f32.mrb[0].mxu0
      %v1400 = vpop.f32.mrb[0].mxu0
      %v1401 = vadd.f32 0.0, %v1400
      %v1402 = vpop.f32.mrb[0].mxu0
      %1403 = vmatprep.mubr.bf16.mxu0 0
      %1404 = vmatmul.mubr.bf16.gmra.mrb[0].mxu0 %v1221
      %v1405 = vpop.f32.mrb[0].mxu0
      %v1406 = vadd.f32 0.0, %v1405
      %v1407 = vpop.f32.mrb[0].mxu0
      %v1408 = vpop.f32.mrb[0].mxu0
      %v1409 = vadd.f32 0.0, %v1408
      %v1410 = vpop.f32.mrb[0].mxu0
      %1411 = vmatprep.mubr.bf16.mxu0 0
      %1412 = vmatmul.mubr.bf16.gmra.mrb[0].mxu0 %v1222
      %v1413 = vpop.f32.mrb[0].mxu0
      %v1414 = vadd.f32 0.0, %v1413
      %v1415 = vpop.f32.mrb[0].mxu0
      %v1416 = vpop.f32.mrb[0].mxu0
      %v1417 = vadd.f32 0.0, %v1416
      %v1418 = vpop.f32.mrb[0].mxu0
      %1419 = vmatprep.mubr.bf16.mxu0 0
      %1420 = vmatmul.mubr.bf16.gmra.mrb[0].mxu0 %v1223
      %v1421 = vpop.f32.mrb[0].mxu0
      %v1422 = vadd.f32 0.0, %v1421
      %v1423 = vpop.f32.mrb[0].mxu0
      %v1424 = vpop.f32.mrb[0].mxu0
      %v1425 = vadd.f32 0.0, %v1424
      %v1426 = vpop.f32.mrb[0].mxu0
      %1427 = vmatprep.mubr.bf16.mxu0 0
      %1428 = vmatmul.mubr.bf16.gmra.mrb[0].mxu0 %v1224
      %v1429 = vpop.f32.mrb[0].mxu0
      %v1430 = vadd.f32 0.0, %v1429
      %v1431 = vpop.f32.mrb[0].mxu0
      %v1432 = vpop.f32.mrb[0].mxu0
      %v1433 = vadd.f32 0.0, %v1432
      %v1434 = vpop.f32.mrb[0].mxu0
      %1435 = vmatprep.mubr.bf16.mxu0 0
      %1436 = vmatmul.mubr.bf16.gmra.mrb[0].mxu0 %v1225
      %v1437 = vpop.f32.mrb[0].mxu0
      %v1438 = vadd.f32 0.0, %v1437
      %v1439 = vpop.f32.mrb[0].mxu0
      %v1440 = vpop.f32.mrb[0].mxu0
      %v1441 = vadd.f32 0.0, %v1440
      %v1442 = vpop.f32.mrb[0].mxu0
      %1443 = vmatprep.mubr.bf16.mxu0 0
      %1444 = vmatmul.mubr.bf16.gmra.mrb[0].mxu0 %v1226
      %v1445 = vpop.f32.mrb[0].mxu0
      %v1446 = vadd.f32 0.0, %v1445
      %v1447 = vpop.f32.mrb[0].mxu0
      %v1448 = vpop.f32.mrb[0].mxu0
      %v1449 = vadd.f32 0.0, %v1448
      %v1450 = vpop.f32.mrb[0].mxu0
      %1451 = vdwg.mxu0
      %v1484 = vunpack.c.l.b16 %v711
      %v1485 = vunpack.c.l.b16 %v712
      %v1486 = vunpack.c.l.b16 %v713
      %v1487 = vunpack.c.l.b16 %v714
      %v1488 = vunpack.c.l.b16 %v715
      %v1489 = vunpack.c.l.b16 %v716
      %v1490 = vunpack.c.l.b16 %v717
      %v1491 = vunpack.c.l.b16 %v718
      %v1492 = vunpack.c.l.b16 %v719
      %v1493 = vunpack.c.l.b16 %v720
      %v1494 = vunpack.c.l.b16 %v721
      %v1495 = vunpack.c.l.b16 %v722
      %v1496 = vunpack.c.l.b16 %v723
      %v1497 = vunpack.c.l.b16 %v724
      %v1498 = vunpack.c.l.b16 %v725
      %v1499 = vunpack.c.l.b16 %v726
      %v1500 = vunpack.c.l.b16 %v727
      %v1501 = vunpack.c.l.b16 %v728
      %v1502 = vunpack.c.l.b16 %v729
      %v1503 = vunpack.c.l.b16 %v730
      %v1504 = vunpack.c.l.b16 %v731
      %v1505 = vunpack.c.l.b16 %v732
      %v1506 = vunpack.c.l.b16 %v733
      %v1507 = vunpack.c.l.b16 %v734
      %v1508 = vunpack.c.l.b16 %v735
      %v1509 = vunpack.c.l.b16 %v736
      %v1510 = vunpack.c.l.b16 %v737
      %v1511 = vunpack.c.l.b16 %v738
      %v1512 = vunpack.c.l.b16 %v739
      %v1513 = vunpack.c.l.b16 %v740
      %v1514 = vunpack.c.l.b16 %v741
      %v1515 = vunpack.c.l.b16 %v742
      %v1516 = vpack.c.b16 %v1485, %v1484
      %v1517 = vpack.c.b16 %v1487, %v1486
      %v1518 = vpack.c.b16 %v1489, %v1488
      %v1519 = vpack.c.b16 %v1491, %v1490
      %v1520 = vpack.c.b16 %v1493, %v1492
      %v1521 = vpack.c.b16 %v1495, %v1494
      %v1522 = vpack.c.b16 %v1497, %v1496
      %v1523 = vpack.c.b16 %v1499, %v1498
      %v1524 = vpack.c.b16 %v1501, %v1500
      %v1525 = vpack.c.b16 %v1503, %v1502
      %v1526 = vpack.c.b16 %v1505, %v1504
      %v1527 = vpack.c.b16 %v1507, %v1506
      %v1528 = vpack.c.b16 %v1509, %v1508
      %v1529 = vpack.c.b16 %v1511, %v1510
      %v1530 = vpack.c.b16 %v1513, %v1512
      %v1531 = vpack.c.b16 %v1515, %v1514
      %v1564 = vunpack.c.l.b16 %v743
      %v1565 = vunpack.c.l.b16 %v744
      %v1566 = vunpack.c.l.b16 %v745
      %v1567 = vunpack.c.l.b16 %v746
      %v1568 = vunpack.c.l.b16 %v747
      %v1569 = vunpack.c.l.b16 %v748
      %v1570 = vunpack.c.l.b16 %v749
      %v1571 = vunpack.c.l.b16 %v750
      %v1572 = vunpack.c.l.b16 %v751
      %v1573 = vunpack.c.l.b16 %v752
      %v1574 = vunpack.c.l.b16 %v753
      %v1575 = vunpack.c.l.b16 %v754
      %v1576 = vunpack.c.l.b16 %v755
      %v1577 = vunpack.c.l.b16 %v756
      %v1578 = vunpack.c.l.b16 %v757
      %v1579 = vunpack.c.l.b16 %v758
      %v1580 = vpack.c.b16 %v1565, %v1564
      %v1581 = vpack.c.b16 %v1567, %v1566
      %v1582 = vpack.c.b16 %v1569, %v1568
      %v1583 = vpack.c.b16 %v1571, %v1570
      %v1584 = vpack.c.b16 %v1573, %v1572
      %v1585 = vpack.c.b16 %v1575, %v1574
      %v1586 = vpack.c.b16 %v1577, %v1576
      %v1587 = vpack.c.b16 %v1579, %v1578
      %1596 = vmatprep.subr.bf16.mxu0 0
      %1597 = vmatpush1.bf16.msra.mxu0 %v1580
      %1598 = vmatprep.subr.bf16.mxu0 0
      %1599 = vmatpush1.bf16.msra.mxu0 %v1581
      %1600 = vmatprep.subr.bf16.mxu0 0
      %1601 = vmatpush1.bf16.msra.mxu0 %v1582
      %1602 = vmatprep.subr.bf16.mxu0 0
      %1603 = vmatpush1.bf16.msra.mxu0 %v1583
      %1604 = vmatprep.subr.bf16.mxu0 0
      %1605 = vmatpush1.bf16.msra.mxu0 %v1584
      %1606 = vmatprep.subr.bf16.mxu0 0
      %1607 = vmatpush1.bf16.msra.mxu0 %v1585
      %1608 = vmatprep.subr.bf16.mxu0 0
      %1609 = vmatpush1.bf16.msra.mxu0 %v1586
      %1610 = vmatprep.subr.bf16.mxu0 0
      %1611 = vmatpush1.bf16.msra.mxu0 %v1587
      %1612 = vmatprep.subr.bf16.mxu0 0
      %1613 = vmatpush1.bf16.msra.mxu0 0
      %1614 = vmatprep.subr.bf16.mxu0 0
      %1615 = vmatpush1.bf16.msra.mxu0 0
      %1616 = vmatprep.subr.bf16.mxu0 0
      %1617 = vmatpush1.bf16.msra.mxu0 0
      %1618 = vmatprep.subr.bf16.mxu0 0
      %1619 = vmatpush1.bf16.msra.mxu0 0
      %1620 = vmatprep.subr.bf16.mxu0 0
      %1621 = vmatpush1.bf16.msra.mxu0 0
      %1622 = vmatprep.subr.bf16.mxu0 0
      %1623 = vmatpush1.bf16.msra.mxu0 0
      %1624 = vmatprep.subr.bf16.mxu0 0
      %1625 = vmatpush1.bf16.msra.mxu0 0
      %1626 = vmatprep.subr.bf16.mxu0 0
      %1627 = vmatpush1.bf16.msra.mxu0 0
      %1628 = vmatprep.mubr.bf16.mxu0 0
      %1629 = vmatmul.mubr.bf16.gmra.mrb[0].mxu0 %v1516
      %v1630 = vpop.f32.mrb[0].mxu0
      %v1631 = vadd.f32 %v1326, %v1630
      %v1632 = vpop.f32.mrb[0].mxu0
      %v1633 = vpop.f32.mrb[0].mxu0
      %v1634 = vadd.f32 %v1329, %v1633
      %v1635 = vpop.f32.mrb[0].mxu0
      %1636 = vmatprep.mubr.bf16.mxu0 0
      %1637 = vmatmul.mubr.bf16.gmra.mrb[0].mxu0 %v1517
      %v1638 = vpop.f32.mrb[0].mxu0
      %v1639 = vadd.f32 %v1334, %v1638
      %v1640 = vpop.f32.mrb[0].mxu0
      %v1641 = vpop.f32.mrb[0].mxu0
      %v1642 = vadd.f32 %v1337, %v1641
      %v1643 = vpop.f32.mrb[0].mxu0
      %1644 = vmatprep.mubr.bf16.mxu0 0
      %1645 = vmatmul.mubr.bf16.gmra.mrb[0].mxu0 %v1518
      %v1646 = vpop.f32.mrb[0].mxu0
      %v1647 = vadd.f32 %v1342, %v1646
      %v1648 = vpop.f32.mrb[0].mxu0
      %v1649 = vpop.f32.mrb[0].mxu0
      %v1650 = vadd.f32 %v1345, %v1649
      %v1651 = vpop.f32.mrb[0].mxu0
      %1652 = vmatprep.mubr.bf16.mxu0 0
      %1653 = vmatmul.mubr.bf16.gmra.mrb[0].mxu0 %v1519
      %v1654 = vpop.f32.mrb[0].mxu0
      %v1655 = vadd.f32 %v1350, %v1654
      %v1656 = vpop.f32.mrb[0].mxu0
      %v1657 = vpop.f32.mrb[0].mxu0
      %v1658 = vadd.f32 %v1353, %v1657
      %v1659 = vpop.f32.mrb[0].mxu0
      %1660 = vmatprep.mubr.bf16.mxu0 0
      %1661 = vmatmul.mubr.bf16.gmra.mrb[0].mxu0 %v1520
      %v1662 = vpop.f32.mrb[0].mxu0
      %v1663 = vadd.f32 %v1358, %v1662
      %v1664 = vpop.f32.mrb[0].mxu0
      %v1665 = vpop.f32.mrb[0].mxu0
      %v1666 = vadd.f32 %v1361, %v1665
      %v1667 = vpop.f32.mrb[0].mxu0
      %1668 = vmatprep.mubr.bf16.mxu0 0
      %1669 = vmatmul.mubr.bf16.gmra.mrb[0].mxu0 %v1521
      %v1670 = vpop.f32.mrb[0].mxu0
      %v1671 = vadd.f32 %v1366, %v1670
      %v1672 = vpop.f32.mrb[0].mxu0
      %v1673 = vpop.f32.mrb[0].mxu0
      %v1674 = vadd.f32 %v1369, %v1673
      %v1675 = vpop.f32.mrb[0].mxu0
      %1676 = vmatprep.mubr.bf16.mxu0 0
      %1677 = vmatmul.mubr.bf16.gmra.mrb[0].mxu0 %v1522
      %v1678 = vpop.f32.mrb[0].mxu0
      %v1679 = vadd.f32 %v1374, %v1678
      %v1680 = vpop.f32.mrb[0].mxu0
      %v1681 = vpop.f32.mrb[0].mxu0
      %v1682 = vadd.f32 %v1377, %v1681
      %v1683 = vpop.f32.mrb[0].mxu0
      %1684 = vmatprep.mubr.bf16.mxu0 0
      %1685 = vmatmul.mubr.bf16.gmra.mrb[0].mxu0 %v1523
      %v1686 = vpop.f32.mrb[0].mxu0
      %v1687 = vadd.f32 %v1382, %v1686
      %v1688 = vpop.f32.mrb[0].mxu0
      %v1689 = vpop.f32.mrb[0].mxu0
      %v1690 = vadd.f32 %v1385, %v1689
      %v1691 = vpop.f32.mrb[0].mxu0
      %1692 = vmatprep.mubr.bf16.mxu0 0
      %1693 = vmatmul.mubr.bf16.gmra.mrb[0].mxu0 %v1524
      %v1694 = vpop.f32.mrb[0].mxu0
      %v1695 = vadd.f32 %v1390, %v1694
      %v1696 = vpop.f32.mrb[0].mxu0
      %v1697 = vpop.f32.mrb[0].mxu0
      %v1698 = vadd.f32 %v1393, %v1697
      %v1699 = vpop.f32.mrb[0].mxu0
      %1700 = vmatprep.mubr.bf16.mxu0 0
      %1701 = vmatmul.mubr.bf16.gmra.mrb[0].mxu0 %v1525
      %v1702 = vpop.f32.mrb[0].mxu0
      %v1703 = vadd.f32 %v1398, %v1702
      %v1704 = vpop.f32.mrb[0].mxu0
      %v1705 = vpop.f32.mrb[0].mxu0
      %v1706 = vadd.f32 %v1401, %v1705
      %v1707 = vpop.f32.mrb[0].mxu0
      %1708 = vmatprep.mubr.bf16.mxu0 0
      %1709 = vmatmul.mubr.bf16.gmra.mrb[0].mxu0 %v1526
      %v1710 = vpop.f32.mrb[0].mxu0
      %v1711 = vadd.f32 %v1406, %v1710
      %v1712 = vpop.f32.mrb[0].mxu0
      %v1713 = vpop.f32.mrb[0].mxu0
      %v1714 = vadd.f32 %v1409, %v1713
      %v1715 = vpop.f32.mrb[0].mxu0
      %1716 = vmatprep.mubr.bf16.mxu0 0
      %1717 = vmatmul.mubr.bf16.gmra.mrb[0].mxu0 %v1527
      %v1718 = vpop.f32.mrb[0].mxu0
      %v1719 = vadd.f32 %v1414, %v1718
      %v1720 = vpop.f32.mrb[0].mxu0
      %v1721 = vpop.f32.mrb[0].mxu0
      %v1722 = vadd.f32 %v1417, %v1721
      %v1723 = vpop.f32.mrb[0].mxu0
      %1724 = vmatprep.mubr.bf16.mxu0 0
      %1725 = vmatmul.mubr.bf16.gmra.mrb[0].mxu0 %v1528
      %v1726 = vpop.f32.mrb[0].mxu0
      %v1727 = vadd.f32 %v1422, %v1726
      %v1728 = vpop.f32.mrb[0].mxu0
      %v1729 = vpop.f32.mrb[0].mxu0
      %v1730 = vadd.f32 %v1425, %v1729
      %v1731 = vpop.f32.mrb[0].mxu0
      %1732 = vmatprep.mubr.bf16.mxu0 0
      %1733 = vmatmul.mubr.bf16.gmra.mrb[0].mxu0 %v1529
      %v1734 = vpop.f32.mrb[0].mxu0
      %v1735 = vadd.f32 %v1430, %v1734
      %v1736 = vpop.f32.mrb[0].mxu0
      %v1737 = vpop.f32.mrb[0].mxu0
      %v1738 = vadd.f32 %v1433, %v1737
      %v1739 = vpop.f32.mrb[0].mxu0
      %1740 = vmatprep.mubr.bf16.mxu0 0
      %1741 = vmatmul.mubr.bf16.gmra.mrb[0].mxu0 %v1530
      %v1742 = vpop.f32.mrb[0].mxu0
      %v1743 = vadd.f32 %v1438, %v1742
      %v1744 = vpop.f32.mrb[0].mxu0
      %v1745 = vpop.f32.mrb[0].mxu0
      %v1746 = vadd.f32 %v1441, %v1745
      %v1747 = vpop.f32.mrb[0].mxu0
      %1748 = vmatprep.mubr.bf16.mxu0 0
      %1749 = vmatmul.mubr.bf16.gmra.mrb[0].mxu0 %v1531
      %v1750 = vpop.f32.mrb[0].mxu0
      %v1751 = vadd.f32 %v1446, %v1750
      %v1752 = vpop.f32.mrb[0].mxu0
      %v1753 = vpop.f32.mrb[0].mxu0
      %v1754 = vadd.f32 %v1449, %v1753
      %v1755 = vpop.f32.mrb[0].mxu0
      %1756 = vdwg.mxu0
      %v1757 = vld [vmem:[#allocation2] sm:$0xe]
      %v1758 = vld [vmem:[#allocation2 + $0xc] sm:$0xe]
      %v1759 = vld [vmem:[#allocation2 + $0x18] sm:$0xe]
      %v1760 = vld [vmem:[#allocation2 + $0x24] sm:$0xe]
      %v1761 = vld [vmem:[#allocation2 + $0x30] sm:$0xe]
      %v1762 = vld [vmem:[#allocation2 + $0x3c] sm:$0xe]
      %v1763 = vld [vmem:[#allocation2 + $0x48] sm:$0xe]
      %v1764 = vld [vmem:[#allocation2 + $0x54] sm:$0xe]
      %v1765 = vld [vmem:[#allocation2 + $0x60] sm:$0xe]
      %v1766 = vld [vmem:[#allocation2 + $0x6c] sm:$0xe]
      %v1767 = vld [vmem:[#allocation2 + $0x78] sm:$0xe]
      %v1768 = vld [vmem:[#allocation2 + $0x84] sm:$0xe]
      %v1769 = vld [vmem:[#allocation2 + $0x90] sm:$0xe]
      %v1770 = vld [vmem:[#allocation2 + $0x9c] sm:$0xe]
      %v1771 = vld [vmem:[#allocation2 + $0xa8] sm:$0xe]
      %v1772 = vld [vmem:[#allocation2 + $0xb4] sm:$0xe]
      %vm1805 = vcmask 1042432
      %vm1806 = vcmask 1046532
      %vm1807 = vmor %vm1805, %vm1806
      %v1808 = vrot.slane %v1757, 5
      %v1809 = vrot.slane %v1808, 4
      %v1810 = vrot.slane %v712, 5
      %v1811 = vsel %vm1807, %v1809, %v1810
      %v1812 = vrot.slane %v1810, 4
      %v1813 = vrot.slane %v759, 5
      %v1814 = vsel %vm1807, %v1812, %v1813
      %v1815 = vrot.slane %v1758, 5
      %v1816 = vrot.slane %v1815, 4
      %v1817 = vrot.slane %v714, 5
      %v1818 = vsel %vm1807, %v1816, %v1817
      %v1819 = vrot.slane %v1817, 4
      %v1820 = vrot.slane %v760, 5
      %v1821 = vsel %vm1807, %v1819, %v1820
      %v1822 = vrot.slane %v1759, 5
      %v1823 = vrot.slane %v1822, 4
      %v1824 = vrot.slane %v716, 5
      %v1825 = vsel %vm1807, %v1823, %v1824
      %v1826 = vrot.slane %v1824, 4
      %v1827 = vrot.slane %v761, 5
      %v1828 = vsel %vm1807, %v1826, %v1827
      %v1829 = vrot.slane %v1760, 5
      %v1830 = vrot.slane %v1829, 4
      %v1831 = vrot.slane %v718, 5
      %v1832 = vsel %vm1807, %v1830, %v1831
      %v1833 = vrot.slane %v1831, 4
      %v1834 = vrot.slane %v762, 5
      %v1835 = vsel %vm1807, %v1833, %v1834
      %v1836 = vrot.slane %v1761, 5
      %v1837 = vrot.slane %v1836, 4
      %v1838 = vrot.slane %v720, 5
      %v1839 = vsel %vm1807, %v1837, %v1838
      %v1840 = vrot.slane %v1838, 4
      %v1841 = vrot.slane %v763, 5
      %v1842 = vsel %vm1807, %v1840, %v1841
      %v1843 = vrot.slane %v1762, 5
      %v1844 = vrot.slane %v1843, 4
      %v1845 = vrot.slane %v722, 5
      %v1846 = vsel %vm1807, %v1844, %v1845
      %v1847 = vrot.slane %v1845, 4
      %v1848 = vrot.slane %v764, 5
      %v1849 = vsel %vm1807, %v1847, %v1848
      %v1850 = vrot.slane %v1763, 5
      %v1851 = vrot.slane %v1850, 4
      %v1852 = vrot.slane %v724, 5
      %v1853 = vsel %vm1807, %v1851, %v1852
      %v1854 = vrot.slane %v1852, 4
      %v1855 = vrot.slane %v765, 5
      %v1856 = vsel %vm1807, %v1854, %v1855
      %v1857 = vrot.slane %v1764, 5
      %v1858 = vrot.slane %v1857, 4
      %v1859 = vrot.slane %v726, 5
      %v1860 = vsel %vm1807, %v1858, %v1859
      %v1861 = vrot.slane %v1859, 4
      %v1862 = vrot.slane %v766, 5
      %v1863 = vsel %vm1807, %v1861, %v1862
      %v1864 = vrot.slane %v1765, 5
      %v1865 = vrot.slane %v1864, 4
      %v1866 = vrot.slane %v728, 5
      %v1867 = vsel %vm1807, %v1865, %v1866
      %v1868 = vrot.slane %v1866, 4
      %v1869 = vrot.slane %v767, 5
      %v1870 = vsel %vm1807, %v1868, %v1869
      %v1871 = vrot.slane %v1766, 5
      %v1872 = vrot.slane %v1871, 4
      %v1873 = vrot.slane %v730, 5
      %v1874 = vsel %vm1807, %v1872, %v1873
      %v1875 = vrot.slane %v1873, 4
      %v1876 = vrot.slane %v768, 5
      %v1877 = vsel %vm1807, %v1875, %v1876
      %v1878 = vrot.slane %v1767, 5
      %v1879 = vrot.slane %v1878, 4
      %v1880 = vrot.slane %v732, 5
      %v1881 = vsel %vm1807, %v1879, %v1880
      %v1882 = vrot.slane %v1880, 4
      %v1883 = vrot.slane %v769, 5
      %v1884 = vsel %vm1807, %v1882, %v1883
      %v1885 = vrot.slane %v1768, 5
      %v1886 = vrot.slane %v1885, 4
      %v1887 = vrot.slane %v734, 5
      %v1888 = vsel %vm1807, %v1886, %v1887
      %v1889 = vrot.slane %v1887, 4
      %v1890 = vrot.slane %v770, 5
      %v1891 = vsel %vm1807, %v1889, %v1890
      %v1892 = vrot.slane %v1769, 5
      %v1893 = vrot.slane %v1892, 4
      %v1894 = vrot.slane %v736, 5
      %v1895 = vsel %vm1807, %v1893, %v1894
      %v1896 = vrot.slane %v1894, 4
      %v1897 = vrot.slane %v771, 5
      %v1898 = vsel %vm1807, %v1896, %v1897
      %v1899 = vrot.slane %v1770, 5
      %v1900 = vrot.slane %v1899, 4
      %v1901 = vrot.slane %v738, 5
      %v1902 = vsel %vm1807, %v1900, %v1901
      %v1903 = vrot.slane %v1901, 4
      %v1904 = vrot.slane %v772, 5
      %v1905 = vsel %vm1807, %v1903, %v1904
      %v1906 = vrot.slane %v1771, 5
      %v1907 = vrot.slane %v1906, 4
      %v1908 = vrot.slane %v740, 5
      %v1909 = vsel %vm1807, %v1907, %v1908
      %v1910 = vrot.slane %v1908, 4
      %v1911 = vrot.slane %v773, 5
      %v1912 = vsel %vm1807, %v1910, %v1911
      %v1913 = vrot.slane %v1772, 5
      %v1914 = vrot.slane %v1913, 4
      %v1915 = vrot.slane %v742, 5
      %v1916 = vsel %vm1807, %v1914, %v1915
      %v1917 = vrot.slane %v1915, 4
      %v1918 = vrot.slane %v774, 5
      %v1919 = vsel %vm1807, %v1917, %v1918
      %s1920 = scalar_lea.vmem %s1, 128
      %v1921 = vld [vmem:[%s1920] sm:$0xf]
      %v1922 = vld [vmem:[%s1920 + $0x4] sm:$0xf]
      %v1923 = vld [vmem:[%s1920 + $0x8] sm:$0xf]
      %v1924 = vld [vmem:[%s1920 + $0xc] sm:$0xf]
      %v1925 = vld [vmem:[%s1920 + $0x10] sm:$0xf]
      %v1926 = vld [vmem:[%s1920 + $0x14] sm:$0xf]
      %v1927 = vld [vmem:[%s1920 + $0x18] sm:$0xf]
      %v1928 = vld [vmem:[%s1920 + $0x1c] sm:$0xf]
      %v1929 = vld [vmem:[%s1920 + $0x20] sm:$0xf]
      %v1930 = vld [vmem:[%s1920 + $0x24] sm:$0xf]
      %v1931 = vld [vmem:[%s1920 + $0x28] sm:$0xf]
      %v1932 = vld [vmem:[%s1920 + $0x2c] sm:$0xf]
      %v1933 = vld [vmem:[%s1920 + $0x30] sm:$0xf]
      %v1934 = vld [vmem:[%s1920 + $0x34] sm:$0xf]
      %v1935 = vld [vmem:[%s1920 + $0x38] sm:$0xf]
      %v1936 = vld [vmem:[%s1920 + $0x3c] sm:$0xf]
      %v1937 = vunpack.c.l.b16 %v1811
      %v1938 = vunpack.c.l.b16 %v1814
      %v1939 = vunpack.c.l.b16 %v1818
      %v1940 = vunpack.c.l.b16 %v1821
      %v1941 = vunpack.c.l.b16 %v1825
      %v1942 = vunpack.c.l.b16 %v1828
      %v1943 = vunpack.c.l.b16 %v1832
      %v1944 = vunpack.c.l.b16 %v1835
      %v1945 = vunpack.c.l.b16 %v1839
      %v1946 = vunpack.c.l.b16 %v1842
      %v1947 = vunpack.c.l.b16 %v1846
      %v1948 = vunpack.c.l.b16 %v1849
      %v1949 = vunpack.c.l.b16 %v1853
      %v1950 = vunpack.c.l.b16 %v1856
      %v1951 = vunpack.c.l.b16 %v1860
      %v1952 = vunpack.c.l.b16 %v1863
      %v1953 = vunpack.c.l.b16 %v1867
      %v1954 = vunpack.c.l.b16 %v1870
      %v1955 = vunpack.c.l.b16 %v1874
      %v1956 = vunpack.c.l.b16 %v1877
      %v1957 = vunpack.c.l.b16 %v1881
      %v1958 = vunpack.c.l.b16 %v1884
      %v1959 = vunpack.c.l.b16 %v1888
      %v1960 = vunpack.c.l.b16 %v1891
      %v1961 = vunpack.c.l.b16 %v1895
      %v1962 = vunpack.c.l.b16 %v1898
      %v1963 = vunpack.c.l.b16 %v1902
      %v1964 = vunpack.c.l.b16 %v1905
      %v1965 = vunpack.c.l.b16 %v1909
      %v1966 = vunpack.c.l.b16 %v1912
      %v1967 = vunpack.c.l.b16 %v1916
      %v1968 = vunpack.c.l.b16 %v1919
      %v1969 = vpack.c.b16 %v1938, %v1937
      %v1970 = vpack.c.b16 %v1940, %v1939
      %v1971 = vpack.c.b16 %v1942, %v1941
      %v1972 = vpack.c.b16 %v1944, %v1943
      %v1973 = vpack.c.b16 %v1946, %v1945
      %v1974 = vpack.c.b16 %v1948, %v1947
      %v1975 = vpack.c.b16 %v1950, %v1949
      %v1976 = vpack.c.b16 %v1952, %v1951
      %v1977 = vpack.c.b16 %v1954, %v1953
      %v1978 = vpack.c.b16 %v1956, %v1955
      %v1979 = vpack.c.b16 %v1958, %v1957
      %v1980 = vpack.c.b16 %v1960, %v1959
      %v1981 = vpack.c.b16 %v1962, %v1961
      %v1982 = vpack.c.b16 %v1964, %v1963
      %v1983 = vpack.c.b16 %v1966, %v1965
      %v1984 = vpack.c.b16 %v1968, %v1967
      %v2017 = vunpack.c.l.b16 %v1921
      %v2018 = vunpack.c.l.b16 %v1922
      %v2019 = vunpack.c.l.b16 %v1923
      %v2020 = vunpack.c.l.b16 %v1924
      %v2021 = vunpack.c.l.b16 %v1925
      %v2022 = vunpack.c.l.b16 %v1926
      %v2023 = vunpack.c.l.b16 %v1927
      %v2024 = vunpack.c.l.b16 %v1928
      %v2025 = vunpack.c.l.b16 %v1929
      %v2026 = vunpack.c.l.b16 %v1930
      %v2027 = vunpack.c.l.b16 %v1931
      %v2028 = vunpack.c.l.b16 %v1932
      %v2029 = vunpack.c.l.b16 %v1933
      %v2030 = vunpack.c.l.b16 %v1934
      %v2031 = vunpack.c.l.b16 %v1935
      %v2032 = vunpack.c.l.b16 %v1936
      %v2033 = vpack.c.b16 %v2018, %v2017
      %v2034 = vpack.c.b16 %v2020, %v2019
      %v2035 = vpack.c.b16 %v2022, %v2021
      %v2036 = vpack.c.b16 %v2024, %v2023
      %v2037 = vpack.c.b16 %v2026, %v2025
      %v2038 = vpack.c.b16 %v2028, %v2027
      %v2039 = vpack.c.b16 %v2030, %v2029
      %v2040 = vpack.c.b16 %v2032, %v2031
      %2049 = vmatprep.subr.bf16.mxu0 0
      %2050 = vmatpush1.bf16.msra.mxu0 %v2033
      %2051 = vmatprep.subr.bf16.mxu0 0
      %2052 = vmatpush1.bf16.msra.mxu0 %v2034
      %2053 = vmatprep.subr.bf16.mxu0 0
      %2054 = vmatpush1.bf16.msra.mxu0 %v2035
      %2055 = vmatprep.subr.bf16.mxu0 0
      %2056 = vmatpush1.bf16.msra.mxu0 %v2036
      %2057 = vmatprep.subr.bf16.mxu0 0
      %2058 = vmatpush1.bf16.msra.mxu0 %v2037
      %2059 = vmatprep.subr.bf16.mxu0 0
      %2060 = vmatpush1.bf16.msra.mxu0 %v2038
      %2061 = vmatprep.subr.bf16.mxu0 0
      %2062 = vmatpush1.bf16.msra.mxu0 %v2039
      %2063 = vmatprep.subr.bf16.mxu0 0
      %2064 = vmatpush1.bf16.msra.mxu0 %v2040
      %2065 = vmatprep.subr.bf16.mxu0 0
      %2066 = vmatpush1.bf16.msra.mxu0 0
      %2067 = vmatprep.subr.bf16.mxu0 0
      %2068 = vmatpush1.bf16.msra.mxu0 0
      %2069 = vmatprep.subr.bf16.mxu0 0
      %2070 = vmatpush1.bf16.msra.mxu0 0
      %2071 = vmatprep.subr.bf16.mxu0 0
      %2072 = vmatpush1.bf16.msra.mxu0 0
      %2073 = vmatprep.subr.bf16.mxu0 0
      %2074 = vmatpush1.bf16.msra.mxu0 0
      %2075 = vmatprep.subr.bf16.mxu0 0
      %2076 = vmatpush1.bf16.msra.mxu0 0
      %2077 = vmatprep.subr.bf16.mxu0 0
      %2078 = vmatpush1.bf16.msra.mxu0 0
      %2079 = vmatprep.subr.bf16.mxu0 0
      %2080 = vmatpush1.bf16.msra.mxu0 0
      %2081 = vmatprep.mubr.bf16.mxu0 0
      %2082 = vmatmul.mubr.bf16.gmra.mrb[0].mxu0 %v1969
      %v2083 = vpop.f32.mrb[0].mxu0
      %v2084 = vadd.f32 0.0, %v2083
      %v2085 = vpop.f32.mrb[0].mxu0
      %v2086 = vpop.f32.mrb[0].mxu0
      %v2087 = vadd.f32 0.0, %v2086
      %v2088 = vpop.f32.mrb[0].mxu0
      %2089 = vmatprep.mubr.bf16.mxu0 0
      %2090 = vmatmul.mubr.bf16.gmra.mrb[0].mxu0 %v1970
      %v2091 = vpop.f32.mrb[0].mxu0
      %v2092 = vadd.f32 0.0, %v2091
      %v2093 = vpop.f32.mrb[0].mxu0
      %v2094 = vpop.f32.mrb[0].mxu0
      %v2095 = vadd.f32 0.0, %v2094
      %v2096 = vpop.f32.mrb[0].mxu0
      %2097 = vmatprep.mubr.bf16.mxu0 0
      %2098 = vmatmul.mubr.bf16.gmra.mrb[0].mxu0 %v1971
      %v2099 = vpop.f32.mrb[0].mxu0
      %v2100 = vadd.f32 0.0, %v2099
      %v2101 = vpop.f32.mrb[0].mxu0
      %v2102 = vpop.f32.mrb[0].mxu0
      %v2103 = vadd.f32 0.0, %v2102
      %v2104 = vpop.f32.mrb[0].mxu0
      %2105 = vmatprep.mubr.bf16.mxu0 0
      %2106 = vmatmul.mubr.bf16.gmra.mrb[0].mxu0 %v1972
      %v2107 = vpop.f32.mrb[0].mxu0
      %v2108 = vadd.f32 0.0, %v2107
      %v2109 = vpop.f32.mrb[0].mxu0
      %v2110 = vpop.f32.mrb[0].mxu0
      %v2111 = vadd.f32 0.0, %v2110
      %v2112 = vpop.f32.mrb[0].mxu0
      %2113 = vmatprep.mubr.bf16.mxu0 0
      %2114 = vmatmul.mubr.bf16.gmra.mrb[0].mxu0 %v1973
      %v2115 = vpop.f32.mrb[0].mxu0
      %v2116 = vadd.f32 0.0, %v2115
      %v2117 = vpop.f32.mrb[0].mxu0
      %v2118 = vpop.f32.mrb[0].mxu0
      %v2119 = vadd.f32 0.0, %v2118
      %v2120 = vpop.f32.mrb[0].mxu0
      %2121 = vmatprep.mubr.bf16.mxu0 0
      %2122 = vmatmul.mubr.bf16.gmra.mrb[0].mxu0 %v1974
      %v2123 = vpop.f32.mrb[0].mxu0
      %v2124 = vadd.f32 0.0, %v2123
      %v2125 = vpop.f32.mrb[0].mxu0
      %v2126 = vpop.f32.mrb[0].mxu0
      %v2127 = vadd.f32 0.0, %v2126
      %v2128 = vpop.f32.mrb[0].mxu0
      %2129 = vmatprep.mubr.bf16.mxu0 0
      %2130 = vmatmul.mubr.bf16.gmra.mrb[0].mxu0 %v1975
      %v2131 = vpop.f32.mrb[0].mxu0
      %v2132 = vadd.f32 0.0, %v2131
      %v2133 = vpop.f32.mrb[0].mxu0
      %v2134 = vpop.f32.mrb[0].mxu0
      %v2135 = vadd.f32 0.0, %v2134
      %v2136 = vpop.f32.mrb[0].mxu0
      %2137 = vmatprep.mubr.bf16.mxu0 0
      %2138 = vmatmul.mubr.bf16.gmra.mrb[0].mxu0 %v1976
      %v2139 = vpop.f32.mrb[0].mxu0
      %v2140 = vadd.f32 0.0, %v2139
      %v2141 = vpop.f32.mrb[0].mxu0
      %v2142 = vpop.f32.mrb[0].mxu0
      %v2143 = vadd.f32 0.0, %v2142
      %v2144 = vpop.f32.mrb[0].mxu0
      %2145 = vmatprep.mubr.bf16.mxu0 0
      %2146 = vmatmul.mubr.bf16.gmra.mrb[0].mxu0 %v1977
      %v2147 = vpop.f32.mrb[0].mxu0
      %v2148 = vadd.f32 0.0, %v2147
      %v2149 = vpop.f32.mrb[0].mxu0
      %v2150 = vpop.f32.mrb[0].mxu0
      %v2151 = vadd.f32 0.0, %v2150
      %v2152 = vpop.f32.mrb[0].mxu0
      %2153 = vmatprep.mubr.bf16.mxu0 0
      %2154 = vmatmul.mubr.bf16.gmra.mrb[0].mxu0 %v1978
      %v2155 = vpop.f32.mrb[0].mxu0
      %v2156 = vadd.f32 0.0, %v2155
      %v2157 = vpop.f32.mrb[0].mxu0
      %v2158 = vpop.f32.mrb[0].mxu0
      %v2159 = vadd.f32 0.0, %v2158
      %v2160 = vpop.f32.mrb[0].mxu0
      %2161 = vmatprep.mubr.bf16.mxu0 0
      %2162 = vmatmul.mubr.bf16.gmra.mrb[0].mxu0 %v1979
      %v2163 = vpop.f32.mrb[0].mxu0
      %v2164 = vadd.f32 0.0, %v2163
      %v2165 = vpop.f32.mrb[0].mxu0
      %v2166 = vpop.f32.mrb[0].mxu0
      %v2167 = vadd.f32 0.0, %v2166
      %v2168 = vpop.f32.mrb[0].mxu0
      %2169 = vmatprep.mubr.bf16.mxu0 0
      %2170 = vmatmul.mubr.bf16.gmra.mrb[0].mxu0 %v1980
      %v2171 = vpop.f32.mrb[0].mxu0
      %v2172 = vadd.f32 0.0, %v2171
      %v2173 = vpop.f32.mrb[0].mxu0
      %v2174 = vpop.f32.mrb[0].mxu0
      %v2175 = vadd.f32 0.0, %v2174
      %v2176 = vpop.f32.mrb[0].mxu0
      %2177 = vmatprep.mubr.bf16.mxu0 0
      %2178 = vmatmul.mubr.bf16.gmra.mrb[0].mxu0 %v1981
      %v2179 = vpop.f32.mrb[0].mxu0
      %v2180 = vadd.f32 0.0, %v2179
      %v2181 = vpop.f32.mrb[0].mxu0
      %v2182 = vpop.f32.mrb[0].mxu0
      %v2183 = vadd.f32 0.0, %v2182
      %v2184 = vpop.f32.mrb[0].mxu0
      %2185 = vmatprep.mubr.bf16.mxu0 0
      %2186 = vmatmul.mubr.bf16.gmra.mrb[0].mxu0 %v1982
      %v2187 = vpop.f32.mrb[0].mxu0
      %v2188 = vadd.f32 0.0, %v2187
      %v2189 = vpop.f32.mrb[0].mxu0
      %v2190 = vpop.f32.mrb[0].mxu0
      %v2191 = vadd.f32 0.0, %v2190
      %v2192 = vpop.f32.mrb[0].mxu0
      %2193 = vmatprep.mubr.bf16.mxu0 0
      %2194 = vmatmul.mubr.bf16.gmra.mrb[0].mxu0 %v1983
      %v2195 = vpop.f32.mrb[0].mxu0
      %v2196 = vadd.f32 0.0, %v2195
      %v2197 = vpop.f32.mrb[0].mxu0
      %v2198 = vpop.f32.mrb[0].mxu0
      %v2199 = vadd.f32 0.0, %v2198
      %v2200 = vpop.f32.mrb[0].mxu0
      %2201 = vmatprep.mubr.bf16.mxu0 0
      %2202 = vmatmul.mubr.bf16.gmra.mrb[0].mxu0 %v1984
      %v2203 = vpop.f32.mrb[0].mxu0
      %v2204 = vadd.f32 0.0, %v2203
      %v2205 = vpop.f32.mrb[0].mxu0
      %v2206 = vpop.f32.mrb[0].mxu0
      %v2207 = vadd.f32 0.0, %v2206
      %v2208 = vpop.f32.mrb[0].mxu0
      %2209 = vdwg.mxu0
      %v2210 = vadd.f32 %v1631, %v2084
      %v2211 = vadd.f32 %v1634, %v2087
      %v2212 = vadd.f32 %v1639, %v2092
      %v2213 = vadd.f32 %v1642, %v2095
      %v2214 = vadd.f32 %v1647, %v2100
      %v2215 = vadd.f32 %v1650, %v2103
      %v2216 = vadd.f32 %v1655, %v2108
      %v2217 = vadd.f32 %v1658, %v2111
      %v2218 = vadd.f32 %v1663, %v2116
      %v2219 = vadd.f32 %v1666, %v2119
      %v2220 = vadd.f32 %v1671, %v2124
      %v2221 = vadd.f32 %v1674, %v2127
      %v2222 = vadd.f32 %v1679, %v2132
      %v2223 = vadd.f32 %v1682, %v2135
      %v2224 = vadd.f32 %v1687, %v2140
      %v2225 = vadd.f32 %v1690, %v2143
      %v2226 = vadd.f32 %v1695, %v2148
      %v2227 = vadd.f32 %v1698, %v2151
      %v2228 = vadd.f32 %v1703, %v2156
      %v2229 = vadd.f32 %v1706, %v2159
      %v2230 = vadd.f32 %v1711, %v2164
      %v2231 = vadd.f32 %v1714, %v2167
      %v2232 = vadd.f32 %v1719, %v2172
      %v2233 = vadd.f32 %v1722, %v2175
      %v2234 = vadd.f32 %v1727, %v2180
      %v2235 = vadd.f32 %v1730, %v2183
      %v2236 = vadd.f32 %v1735, %v2188
      %v2237 = vadd.f32 %v1738, %v2191
      %v2238 = vadd.f32 %v1743, %v2196
      %v2239 = vadd.f32 %v1746, %v2199
      %v2240 = vadd.f32 %v1751, %v2204
      %v2241 = vadd.f32 %v1754, %v2207
      %s2242 = scalar_lea.vmem [#allocation2], 12
      %v2243 = vld [vmem:[%s2242] sm:$0xf]
      %v2244 = vld [vmem:[%s2242 + $0x4] sm:$0xf]
      %v2245 = vld [vmem:[%s2242 + $0xc] sm:$0xf]
      %v2246 = vld [vmem:[%s2242 + $0x10] sm:$0xf]
      %v2247 = vld [vmem:[%s2242 + $0x18] sm:$0xf]
      %v2248 = vld [vmem:[%s2242 + $0x1c] sm:$0xf]
      %v2249 = vld [vmem:[%s2242 + $0x24] sm:$0xf]
      %v2250 = vld [vmem:[%s2242 + $0x28] sm:$0xf]
      %v2251 = vld [vmem:[%s2242 + $0x30] sm:$0xf]
      %v2252 = vld [vmem:[%s2242 + $0x34] sm:$0xf]
      %v2253 = vld [vmem:[%s2242 + $0x3c] sm:$0xf]
      %v2254 = vld [vmem:[%s2242 + $0x40] sm:$0xf]
      %v2255 = vld [vmem:[%s2242 + $0x48] sm:$0xf]
      %v2256 = vld [vmem:[%s2242 + $0x4c] sm:$0xf]
      %v2257 = vld [vmem:[%s2242 + $0x54] sm:$0xf]
      %v2258 = vld [vmem:[%s2242 + $0x58] sm:$0xf]
      %v2259 = vld [vmem:[%s2242 + $0x60] sm:$0xf]
      %v2260 = vld [vmem:[%s2242 + $0x64] sm:$0xf]
      %v2261 = vld [vmem:[%s2242 + $0x6c] sm:$0xf]
      %v2262 = vld [vmem:[%s2242 + $0x70] sm:$0xf]
      %v2263 = vld [vmem:[%s2242 + $0x78] sm:$0xf]
      %v2264 = vld [vmem:[%s2242 + $0x7c] sm:$0xf]
      %v2265 = vld [vmem:[%s2242 + $0x84] sm:$0xf]
      %v2266 = vld [vmem:[%s2242 + $0x88] sm:$0xf]
      %v2267 = vld [vmem:[%s2242 + $0x90] sm:$0xf]
      %v2268 = vld [vmem:[%s2242 + $0x94] sm:$0xf]
      %v2269 = vld [vmem:[%s2242 + $0x9c] sm:$0xf]
      %v2270 = vld [vmem:[%s2242 + $0xa0] sm:$0xf]
      %v2271 = vld [vmem:[%s2242 + $0xa8] sm:$0xf]
      %v2272 = vld [vmem:[%s2242 + $0xac] sm:$0xf]
      %v2273 = vld [vmem:[%s2242 + $0xb4] sm:$0xf]
      %v2274 = vld [vmem:[%s2242 + $0xb8] sm:$0xf]
      %s2275 = scalar_lea.vmem %s1, 192
      %v2276 = vld [vmem:[%s2275] sm:$0xf]
      %v2277 = vld [vmem:[%s2275 + $0x4] sm:$0xf]
      %v2278 = vld [vmem:[%s2275 + $0x8] sm:$0xf]
      %v2279 = vld [vmem:[%s2275 + $0xc] sm:$0xf]
      %v2280 = vld [vmem:[%s2275 + $0x10] sm:$0xf]
      %v2281 = vld [vmem:[%s2275 + $0x14] sm:$0xf]
      %v2282 = vld [vmem:[%s2275 + $0x18] sm:$0xf]
      %v2283 = vld [vmem:[%s2275 + $0x1c] sm:$0xf]
      %v2284 = vld [vmem:[%s2275 + $0x20] sm:$0xf]
      %v2285 = vld [vmem:[%s2275 + $0x24] sm:$0xf]
      %v2286 = vld [vmem:[%s2275 + $0x28] sm:$0xf]
      %v2287 = vld [vmem:[%s2275 + $0x2c] sm:$0xf]
      %v2288 = vld [vmem:[%s2275 + $0x30] sm:$0xf]
      %v2289 = vld [vmem:[%s2275 + $0x34] sm:$0xf]
      %v2290 = vld [vmem:[%s2275 + $0x38] sm:$0xf]
      %v2291 = vld [vmem:[%s2275 + $0x3c] sm:$0xf]
      %v2324 = vunpack.c.l.b16 %v2243
      %v2325 = vunpack.c.l.b16 %v2244
      %v2326 = vunpack.c.l.b16 %v2245
      %v2327 = vunpack.c.l.b16 %v2246
      %v2328 = vunpack.c.l.b16 %v2247
      %v2329 = vunpack.c.l.b16 %v2248
      %v2330 = vunpack.c.l.b16 %v2249
      %v2331 = vunpack.c.l.b16 %v2250
      %v2332 = vunpack.c.l.b16 %v2251
      %v2333 = vunpack.c.l.b16 %v2252
      %v2334 = vunpack.c.l.b16 %v2253
      %v2335 = vunpack.c.l.b16 %v2254
      %v2336 = vunpack.c.l.b16 %v2255
      %v2337 = vunpack.c.l.b16 %v2256
      %v2338 = vunpack.c.l.b16 %v2257
      %v2339 = vunpack.c.l.b16 %v2258
      %v2340 = vunpack.c.l.b16 %v2259
      %v2341 = vunpack.c.l.b16 %v2260
      %v2342 = vunpack.c.l.b16 %v2261
      %v2343 = vunpack.c.l.b16 %v2262
      %v2344 = vunpack.c.l.b16 %v2263
      %v2345 = vunpack.c.l.b16 %v2264
      %v2346 = vunpack.c.l.b16 %v2265
      %v2347 = vunpack.c.l.b16 %v2266
      %v2348 = vunpack.c.l.b16 %v2267
      %v2349 = vunpack.c.l.b16 %v2268
      %v2350 = vunpack.c.l.b16 %v2269
      %v2351 = vunpack.c.l.b16 %v2270
      %v2352 = vunpack.c.l.b16 %v2271
      %v2353 = vunpack.c.l.b16 %v2272
      %v2354 = vunpack.c.l.b16 %v2273
      %v2355 = vunpack.c.l.b16 %v2274
      %v2356 = vpack.c.b16 %v2325, %v2324
      %v2357 = vpack.c.b16 %v2327, %v2326
      %v2358 = vpack.c.b16 %v2329, %v2328
      %v2359 = vpack.c.b16 %v2331, %v2330
      %v2360 = vpack.c.b16 %v2333, %v2332
      %v2361 = vpack.c.b16 %v2335, %v2334
      %v2362 = vpack.c.b16 %v2337, %v2336
      %v2363 = vpack.c.b16 %v2339, %v2338
      %v2364 = vpack.c.b16 %v2341, %v2340
      %v2365 = vpack.c.b16 %v2343, %v2342
      %v2366 = vpack.c.b16 %v2345, %v2344
      %v2367 = vpack.c.b16 %v2347, %v2346
      %v2368 = vpack.c.b16 %v2349, %v2348
      %v2369 = vpack.c.b16 %v2351, %v2350
      %v2370 = vpack.c.b16 %v2353, %v2352
      %v2371 = vpack.c.b16 %v2355, %v2354
      %v2404 = vunpack.c.l.b16 %v2276
      %v2405 = vunpack.c.l.b16 %v2277
      %v2406 = vunpack.c.l.b16 %v2278
      %v2407 = vunpack.c.l.b16 %v2279
      %v2408 = vunpack.c.l.b16 %v2280
      %v2409 = vunpack.c.l.b16 %v2281
      %v2410 = vunpack.c.l.b16 %v2282
      %v2411 = vunpack.c.l.b16 %v2283
      %v2412 = vunpack.c.l.b16 %v2284
      %v2413 = vunpack.c.l.b16 %v2285
      %v2414 = vunpack.c.l.b16 %v2286
      %v2415 = vunpack.c.l.b16 %v2287
      %v2416 = vunpack.c.l.b16 %v2288
      %v2417 = vunpack.c.l.b16 %v2289
      %v2418 = vunpack.c.l.b16 %v2290
      %v2419 = vunpack.c.l.b16 %v2291
      %v2420 = vpack.c.b16 %v2405, %v2404
      %v2421 = vpack.c.b16 %v2407, %v2406
      %v2422 = vpack.c.b16 %v2409, %v2408
      %v2423 = vpack.c.b16 %v2411, %v2410
      %v2424 = vpack.c.b16 %v2413, %v2412
      %v2425 = vpack.c.b16 %v2415, %v2414
      %v2426 = vpack.c.b16 %v2417, %v2416
      %v2427 = vpack.c.b16 %v2419, %v2418
      %2436 = vmatprep.subr.bf16.mxu0 0
      %2437 = vmatpush1.bf16.msra.mxu0 %v2420
      %2438 = vmatprep.subr.bf16.mxu0 0
      %2439 = vmatpush1.bf16.msra.mxu0 %v2421
      %2440 = vmatprep.subr.bf16.mxu0 0
      %2441 = vmatpush1.bf16.msra.mxu0 %v2422
      %2442 = vmatprep.subr.bf16.mxu0 0
      %2443 = vmatpush1.bf16.msra.mxu0 %v2423
      %2444 = vmatprep.subr.bf16.mxu0 0
      %2445 = vmatpush1.bf16.msra.mxu0 %v2424
      %2446 = vmatprep.subr.bf16.mxu0 0
      %2447 = vmatpush1.bf16.msra.mxu0 %v2425
      %2448 = vmatprep.subr.bf16.mxu0 0
      %2449 = vmatpush1.bf16.msra.mxu0 %v2426
      %2450 = vmatprep.subr.bf16.mxu0 0
      %2451 = vmatpush1.bf16.msra.mxu0 %v2427
      %2452 = vmatprep.subr.bf16.mxu0 0
      %2453 = vmatpush1.bf16.msra.mxu0 0
      %2454 = vmatprep.subr.bf16.mxu0 0
      %2455 = vmatpush1.bf16.msra.mxu0 0
      %2456 = vmatprep.subr.bf16.mxu0 0
      %2457 = vmatpush1.bf16.msra.mxu0 0
      %2458 = vmatprep.subr.bf16.mxu0 0
      %2459 = vmatpush1.bf16.msra.mxu0 0
      %2460 = vmatprep.subr.bf16.mxu0 0
      %2461 = vmatpush1.bf16.msra.mxu0 0
      %2462 = vmatprep.subr.bf16.mxu0 0
      %2463 = vmatpush1.bf16.msra.mxu0 0
      %2464 = vmatprep.subr.bf16.mxu0 0
      %2465 = vmatpush1.bf16.msra.mxu0 0
      %2466 = vmatprep.subr.bf16.mxu0 0
      %2467 = vmatpush1.bf16.msra.mxu0 0
      %2468 = vmatprep.mubr.bf16.mxu0 0
      %2469 = vmatmul.mubr.bf16.gmra.mrb[0].mxu0 %v2356
      %v2470 = vpop.f32.mrb[0].mxu0
      %v2471 = vadd.f32 0.0, %v2470
      %v2472 = vpop.f32.mrb[0].mxu0
      %v2473 = vpop.f32.mrb[0].mxu0
      %v2474 = vadd.f32 0.0, %v2473
      %v2475 = vpop.f32.mrb[0].mxu0
      %2476 = vmatprep.mubr.bf16.mxu0 0
      %2477 = vmatmul.mubr.bf16.gmra.mrb[0].mxu0 %v2357
      %v2478 = vpop.f32.mrb[0].mxu0
      %v2479 = vadd.f32 0.0, %v2478
      %v2480 = vpop.f32.mrb[0].mxu0
      %v2481 = vpop.f32.mrb[0].mxu0
      %v2482 = vadd.f32 0.0, %v2481
      %v2483 = vpop.f32.mrb[0].mxu0
      %2484 = vmatprep.mubr.bf16.mxu0 0
      %2485 = vmatmul.mubr.bf16.gmra.mrb[0].mxu0 %v2358
      %v2486 = vpop.f32.mrb[0].mxu0
      %v2487 = vadd.f32 0.0, %v2486
      %v2488 = vpop.f32.mrb[0].mxu0
      %v2489 = vpop.f32.mrb[0].mxu0
      %v2490 = vadd.f32 0.0, %v2489
      %v2491 = vpop.f32.mrb[0].mxu0
      %2492 = vmatprep.mubr.bf16.mxu0 0
      %2493 = vmatmul.mubr.bf16.gmra.mrb[0].mxu0 %v2359
      %v2494 = vpop.f32.mrb[0].mxu0
      %v2495 = vadd.f32 0.0, %v2494
      %v2496 = vpop.f32.mrb[0].mxu0
      %v2497 = vpop.f32.mrb[0].mxu0
      %v2498 = vadd.f32 0.0, %v2497
      %v2499 = vpop.f32.mrb[0].mxu0
      %2500 = vmatprep.mubr.bf16.mxu0 0
      %2501 = vmatmul.mubr.bf16.gmra.mrb[0].mxu0 %v2360
      %v2502 = vpop.f32.mrb[0].mxu0
      %v2503 = vadd.f32 0.0, %v2502
      %v2504 = vpop.f32.mrb[0].mxu0
      %v2505 = vpop.f32.mrb[0].mxu0
      %v2506 = vadd.f32 0.0, %v2505
      %v2507 = vpop.f32.mrb[0].mxu0
      %2508 = vmatprep.mubr.bf16.mxu0 0
      %2509 = vmatmul.mubr.bf16.gmra.mrb[0].mxu0 %v2361
      %v2510 = vpop.f32.mrb[0].mxu0
      %v2511 = vadd.f32 0.0, %v2510
      %v2512 = vpop.f32.mrb[0].mxu0
      %v2513 = vpop.f32.mrb[0].mxu0
      %v2514 = vadd.f32 0.0, %v2513
      %v2515 = vpop.f32.mrb[0].mxu0
      %2516 = vmatprep.mubr.bf16.mxu0 0
      %2517 = vmatmul.mubr.bf16.gmra.mrb[0].mxu0 %v2362
      %v2518 = vpop.f32.mrb[0].mxu0
      %v2519 = vadd.f32 0.0, %v2518
      %v2520 = vpop.f32.mrb[0].mxu0
      %v2521 = vpop.f32.mrb[0].mxu0
      %v2522 = vadd.f32 0.0, %v2521
      %v2523 = vpop.f32.mrb[0].mxu0
      %2524 = vmatprep.mubr.bf16.mxu0 0
      %2525 = vmatmul.mubr.bf16.gmra.mrb[0].mxu0 %v2363
      %v2526 = vpop.f32.mrb[0].mxu0
      %v2527 = vadd.f32 0.0, %v2526
      %v2528 = vpop.f32.mrb[0].mxu0
      %v2529 = vpop.f32.mrb[0].mxu0
      %v2530 = vadd.f32 0.0, %v2529
      %v2531 = vpop.f32.mrb[0].mxu0
      %2532 = vmatprep.mubr.bf16.mxu0 0
      %2533 = vmatmul.mubr.bf16.gmra.mrb[0].mxu0 %v2364
      %v2534 = vpop.f32.mrb[0].mxu0
      %v2535 = vadd.f32 0.0, %v2534
      %v2536 = vpop.f32.mrb[0].mxu0
      %v2537 = vpop.f32.mrb[0].mxu0
      %v2538 = vadd.f32 0.0, %v2537
      %v2539 = vpop.f32.mrb[0].mxu0
      %2540 = vmatprep.mubr.bf16.mxu0 0
      %2541 = vmatmul.mubr.bf16.gmra.mrb[0].mxu0 %v2365
      %v2542 = vpop.f32.mrb[0].mxu0
      %v2543 = vadd.f32 0.0, %v2542
      %v2544 = vpop.f32.mrb[0].mxu0
      %v2545 = vpop.f32.mrb[0].mxu0
      %v2546 = vadd.f32 0.0, %v2545
      %v2547 = vpop.f32.mrb[0].mxu0
      %2548 = vmatprep.mubr.bf16.mxu0 0
      %2549 = vmatmul.mubr.bf16.gmra.mrb[0].mxu0 %v2366
      %v2550 = vpop.f32.mrb[0].mxu0
      %v2551 = vadd.f32 0.0, %v2550
      %v2552 = vpop.f32.mrb[0].mxu0
      %v2553 = vpop.f32.mrb[0].mxu0
      %v2554 = vadd.f32 0.0, %v2553
      %v2555 = vpop.f32.mrb[0].mxu0
      %2556 = vmatprep.mubr.bf16.mxu0 0
      %2557 = vmatmul.mubr.bf16.gmra.mrb[0].mxu0 %v2367
      %v2558 = vpop.f32.mrb[0].mxu0
      %v2559 = vadd.f32 0.0, %v2558
      %v2560 = vpop.f32.mrb[0].mxu0
      %v2561 = vpop.f32.mrb[0].mxu0
      %v2562 = vadd.f32 0.0, %v2561
      %v2563 = vpop.f32.mrb[0].mxu0
      %2564 = vmatprep.mubr.bf16.mxu0 0
      %2565 = vmatmul.mubr.bf16.gmra.mrb[0].mxu0 %v2368
      %v2566 = vpop.f32.mrb[0].mxu0
      %v2567 = vadd.f32 0.0, %v2566
      %v2568 = vpop.f32.mrb[0].mxu0
      %v2569 = vpop.f32.mrb[0].mxu0
      %v2570 = vadd.f32 0.0, %v2569
      %v2571 = vpop.f32.mrb[0].mxu0
      %2572 = vmatprep.mubr.bf16.mxu0 0
      %2573 = vmatmul.mubr.bf16.gmra.mrb[0].mxu0 %v2369
      %v2574 = vpop.f32.mrb[0].mxu0
      %v2575 = vadd.f32 0.0, %v2574
      %v2576 = vpop.f32.mrb[0].mxu0
      %v2577 = vpop.f32.mrb[0].mxu0
      %v2578 = vadd.f32 0.0, %v2577
      %v2579 = vpop.f32.mrb[0].mxu0
      %2580 = vmatprep.mubr.bf16.mxu0 0
      %2581 = vmatmul.mubr.bf16.gmra.mrb[0].mxu0 %v2370
      %v2582 = vpop.f32.mrb[0].mxu0
      %v2583 = vadd.f32 0.0, %v2582
      %v2584 = vpop.f32.mrb[0].mxu0
      %v2585 = vpop.f32.mrb[0].mxu0
      %v2586 = vadd.f32 0.0, %v2585
      %v2587 = vpop.f32.mrb[0].mxu0
      %2588 = vmatprep.mubr.bf16.mxu0 0
      %2589 = vmatmul.mubr.bf16.gmra.mrb[0].mxu0 %v2371
      %v2590 = vpop.f32.mrb[0].mxu0
      %v2591 = vadd.f32 0.0, %v2590
      %v2592 = vpop.f32.mrb[0].mxu0
      %v2593 = vpop.f32.mrb[0].mxu0
      %v2594 = vadd.f32 0.0, %v2593
      %v2595 = vpop.f32.mrb[0].mxu0
      %2596 = vdwg.mxu0
      %v2597 = vadd.f32 %v2210, %v2471
      %v2598 = vadd.f32 %v2211, %v2474
      %v2599 = vadd.f32 %v2212, %v2479
      %v2600 = vadd.f32 %v2213, %v2482
      %v2601 = vadd.f32 %v2214, %v2487
      %v2602 = vadd.f32 %v2215, %v2490
      %v2603 = vadd.f32 %v2216, %v2495
      %v2604 = vadd.f32 %v2217, %v2498
      %v2605 = vadd.f32 %v2218, %v2503
      %v2606 = vadd.f32 %v2219, %v2506
      %v2607 = vadd.f32 %v2220, %v2511
      %v2608 = vadd.f32 %v2221, %v2514
      %v2609 = vadd.f32 %v2222, %v2519
      %v2610 = vadd.f32 %v2223, %v2522
      %v2611 = vadd.f32 %v2224, %v2527
      %v2612 = vadd.f32 %v2225, %v2530
      %v2613 = vadd.f32 %v2226, %v2535
      %v2614 = vadd.f32 %v2227, %v2538
      %v2615 = vadd.f32 %v2228, %v2543
      %v2616 = vadd.f32 %v2229, %v2546
      %v2617 = vadd.f32 %v2230, %v2551
      %v2618 = vadd.f32 %v2231, %v2554
      %v2619 = vadd.f32 %v2232, %v2559
      %v2620 = vadd.f32 %v2233, %v2562
      %v2621 = vadd.f32 %v2234, %v2567
      %v2622 = vadd.f32 %v2235, %v2570
      %v2623 = vadd.f32 %v2236, %v2575
      %v2624 = vadd.f32 %v2237, %v2578
      %v2625 = vadd.f32 %v2238, %v2583
      %v2626 = vadd.f32 %v2239, %v2586
      %v2627 = vadd.f32 %v2240, %v2591
      %v2628 = vadd.f32 %v2241, %v2594
      %v2629 = vld [vmem:[%s2242] sm:$0xf]
      %v2630 = vld [vmem:[%s2242 + $0x4] sm:$0xf]
      %v2631 = vld [vmem:[%s2242 + $0x8] sm:$0x1]
      %v2632 = vld [vmem:[%s2242 + $0xc] sm:$0xf]
      %v2633 = vld [vmem:[%s2242 + $0x10] sm:$0xf]
      %v2634 = vld [vmem:[%s2242 + $0x14] sm:$0x1]
      %v2635 = vld [vmem:[%s2242 + $0x18] sm:$0xf]
      %v2636 = vld [vmem:[%s2242 + $0x1c] sm:$0xf]
      %v2637 = vld [vmem:[%s2242 + $0x20] sm:$0x1]
      %v2638 = vld [vmem:[%s2242 + $0x24] sm:$0xf]
      %v2639 = vld [vmem:[%s2242 + $0x28] sm:$0xf]
      %v2640 = vld [vmem:[%s2242 + $0x2c] sm:$0x1]
      %v2641 = vld [vmem:[%s2242 + $0x30] sm:$0xf]
      %v2642 = vld [vmem:[%s2242 + $0x34] sm:$0xf]
      %v2643 = vld [vmem:[%s2242 + $0x38] sm:$0x1]
      %v2644 = vld [vmem:[%s2242 + $0x3c] sm:$0xf]
      %v2645 = vld [vmem:[%s2242 + $0x40] sm:$0xf]
      %v2646 = vld [vmem:[%s2242 + $0x44] sm:$0x1]
      %v2647 = vld [vmem:[%s2242 + $0x48] sm:$0xf]
      %v2648 = vld [vmem:[%s2242 + $0x4c] sm:$0xf]
      %v2649 = vld [vmem:[%s2242 + $0x50] sm:$0x1]
      %v2650 = vld [vmem:[%s2242 + $0x54] sm:$0xf]
      %v2651 = vld [vmem:[%s2242 + $0x58] sm:$0xf]
      %v2652 = vld [vmem:[%s2242 + $0x5c] sm:$0x1]
      %v2653 = vld [vmem:[%s2242 + $0x60] sm:$0xf]
      %v2654 = vld [vmem:[%s2242 + $0x64] sm:$0xf]
      %v2655 = vld [vmem:[%s2242 + $0x68] sm:$0x1]
      %v2656 = vld [vmem:[%s2242 + $0x6c] sm:$0xf]
      %v2657 = vld [vmem:[%s2242 + $0x70] sm:$0xf]
      %v2658 = vld [vmem:[%s2242 + $0x74] sm:$0x1]
      %v2659 = vld [vmem:[%s2242 + $0x78] sm:$0xf]
      %v2660 = vld [vmem:[%s2242 + $0x7c] sm:$0xf]
      %v2661 = vld [vmem:[%s2242 + $0x80] sm:$0x1]
      %v2662 = vld [vmem:[%s2242 + $0x84] sm:$0xf]
      %v2663 = vld [vmem:[%s2242 + $0x88] sm:$0xf]
      %v2664 = vld [vmem:[%s2242 + $0x8c] sm:$0x1]
      %v2665 = vld [vmem:[%s2242 + $0x90] sm:$0xf]
      %v2666 = vld [vmem:[%s2242 + $0x94] sm:$0xf]
      %v2667 = vld [vmem:[%s2242 + $0x98] sm:$0x1]
      %v2668 = vld [vmem:[%s2242 + $0x9c] sm:$0xf]
      %v2669 = vld [vmem:[%s2242 + $0xa0] sm:$0xf]
      %v2670 = vld [vmem:[%s2242 + $0xa4] sm:$0x1]
      %v2671 = vld [vmem:[%s2242 + $0xa8] sm:$0xf]
      %v2672 = vld [vmem:[%s2242 + $0xac] sm:$0xf]
      %v2673 = vld [vmem:[%s2242 + $0xb0] sm:$0x1]
      %v2674 = vld [vmem:[%s2242 + $0xb4] sm:$0xf]
      %v2675 = vld [vmem:[%s2242 + $0xb8] sm:$0xf]
      %v2676 = vld [vmem:[%s2242 + $0xbc] sm:$0x1]
      %v2678 = vshrl.u32 %v2629, 16
      %v2680 = vrot.slane %v2678, 4
      %v2681 = vshll.u32 %v2629, 16
      %v2683 = vrot.slane %v2681, 5
      %v2684 = vor.u32 %v2680, %v2683
      %v2685 = vrot.slane %v2684, 4
      %v2687 = vshll.u32 %v2630, 16
      %v2689 = vrot.slane %v2687, 5
      %v2690 = vsel %vm777, %v2685, %v2689
      %v2691 = vshrl.u32 %v2630, 16
      %v2693 = vrot.slane %v2691, 4
      %v2694 = vor.u32 %v2693, %v2689
      %v2695 = vrot.slane %v2694, 4
      %v2697 = vshll.u32 %v2631, 16
      %v2699 = vrot.slane %v2697, 5
      %v2700 = vsel %vm777, %v2695, %v2699
      %v2702 = vshrl.u32 %v2632, 16
      %v2704 = vrot.slane %v2702, 4
      %v2705 = vshll.u32 %v2632, 16
      %v2707 = vrot.slane %v2705, 5
      %v2708 = vor.u32 %v2704, %v2707
      %v2709 = vrot.slane %v2708, 4
      %v2711 = vshll.u32 %v2633, 16
      %v2713 = vrot.slane %v2711, 5
      %v2714 = vsel %vm777, %v2709, %v2713
      %v2715 = vshrl.u32 %v2633, 16
      %v2717 = vrot.slane %v2715, 4
      %v2718 = vor.u32 %v2717, %v2713
      %v2719 = vrot.slane %v2718, 4
      %v2721 = vshll.u32 %v2634, 16
      %v2723 = vrot.slane %v2721, 5
      %v2724 = vsel %vm777, %v2719, %v2723
      %v2726 = vshrl.u32 %v2635, 16
      %v2728 = vrot.slane %v2726, 4
      %v2729 = vshll.u32 %v2635, 16
      %v2731 = vrot.slane %v2729, 5
      %v2732 = vor.u32 %v2728, %v2731
      %v2733 = vrot.slane %v2732, 4
      %v2735 = vshll.u32 %v2636, 16
      %v2737 = vrot.slane %v2735, 5
      %v2738 = vsel %vm777, %v2733, %v2737
      %v2739 = vshrl.u32 %v2636, 16
      %v2741 = vrot.slane %v2739, 4
      %v2742 = vor.u32 %v2741, %v2737
      %v2743 = vrot.slane %v2742, 4
      %v2745 = vshll.u32 %v2637, 16
      %v2747 = vrot.slane %v2745, 5
      %v2748 = vsel %vm777, %v2743, %v2747
      %v2750 = vshrl.u32 %v2638, 16
      %v2752 = vrot.slane %v2750, 4
      %v2753 = vshll.u32 %v2638, 16
      %v2755 = vrot.slane %v2753, 5
      %v2756 = vor.u32 %v2752, %v2755
      %v2757 = vrot.slane %v2756, 4
      %v2759 = vshll.u32 %v2639, 16
      %v2761 = vrot.slane %v2759, 5
      %v2762 = vsel %vm777, %v2757, %v2761
      %v2763 = vshrl.u32 %v2639, 16
      %v2765 = vrot.slane %v2763, 4
      %v2766 = vor.u32 %v2765, %v2761
      %v2767 = vrot.slane %v2766, 4
      %v2769 = vshll.u32 %v2640, 16
      %v2771 = vrot.slane %v2769, 5
      %v2772 = vsel %vm777, %v2767, %v2771
      %v2774 = vshrl.u32 %v2641, 16
      %v2776 = vrot.slane %v2774, 4
      %v2777 = vshll.u32 %v2641, 16
      %v2779 = vrot.slane %v2777, 5
      %v2780 = vor.u32 %v2776, %v2779
      %v2781 = vrot.slane %v2780, 4
      %v2783 = vshll.u32 %v2642, 16
      %v2785 = vrot.slane %v2783, 5
      %v2786 = vsel %vm777, %v2781, %v2785
      %v2787 = vshrl.u32 %v2642, 16
      %v2789 = vrot.slane %v2787, 4
      %v2790 = vor.u32 %v2789, %v2785
      %v2791 = vrot.slane %v2790, 4
      %v2793 = vshll.u32 %v2643, 16
      %v2795 = vrot.slane %v2793, 5
      %v2796 = vsel %vm777, %v2791, %v2795
      %v2798 = vshrl.u32 %v2644, 16
      %v2800 = vrot.slane %v2798, 4
      %v2801 = vshll.u32 %v2644, 16
      %v2803 = vrot.slane %v2801, 5
      %v2804 = vor.u32 %v2800, %v2803
      %v2805 = vrot.slane %v2804, 4
      %v2807 = vshll.u32 %v2645, 16
      %v2809 = vrot.slane %v2807, 5
      %v2810 = vsel %vm777, %v2805, %v2809
      %v2811 = vshrl.u32 %v2645, 16
      %v2813 = vrot.slane %v2811, 4
      %v2814 = vor.u32 %v2813, %v2809
      %v2815 = vrot.slane %v2814, 4
      %v2817 = vshll.u32 %v2646, 16
      %v2819 = vrot.slane %v2817, 5
      %v2820 = vsel %vm777, %v2815, %v2819
      %v2822 = vshrl.u32 %v2647, 16
      %v2824 = vrot.slane %v2822, 4
      %v2825 = vshll.u32 %v2647, 16
      %v2827 = vrot.slane %v2825, 5
      %v2828 = vor.u32 %v2824, %v2827
      %v2829 = vrot.slane %v2828, 4
      %v2831 = vshll.u32 %v2648, 16
      %v2833 = vrot.slane %v2831, 5
      %v2834 = vsel %vm777, %v2829, %v2833
      %v2835 = vshrl.u32 %v2648, 16
      %v2837 = vrot.slane %v2835, 4
      %v2838 = vor.u32 %v2837, %v2833
      %v2839 = vrot.slane %v2838, 4
      %v2841 = vshll.u32 %v2649, 16
      %v2843 = vrot.slane %v2841, 5
      %v2844 = vsel %vm777, %v2839, %v2843
      %v2846 = vshrl.u32 %v2650, 16
      %v2848 = vrot.slane %v2846, 4
      %v2849 = vshll.u32 %v2650, 16
      %v2851 = vrot.slane %v2849, 5
      %v2852 = vor.u32 %v2848, %v2851
      %v2853 = vrot.slane %v2852, 4
      %v2855 = vshll.u32 %v2651, 16
      %v2857 = vrot.slane %v2855, 5
      %v2858 = vsel %vm777, %v2853, %v2857
      %v2859 = vshrl.u32 %v2651, 16
      %v2861 = vrot.slane %v2859, 4
      %v2862 = vor.u32 %v2861, %v2857
      %v2863 = vrot.slane %v2862, 4
      %v2865 = vshll.u32 %v2652, 16
      %v2867 = vrot.slane %v2865, 5
      %v2868 = vsel %vm777, %v2863, %v2867
      %v2870 = vshrl.u32 %v2653, 16
      %v2872 = vrot.slane %v2870, 4
      %v2873 = vshll.u32 %v2653, 16
      %v2875 = vrot.slane %v2873, 5
      %v2876 = vor.u32 %v2872, %v2875
      %v2877 = vrot.slane %v2876, 4
      %v2879 = vshll.u32 %v2654, 16
      %v2881 = vrot.slane %v2879, 5
      %v2882 = vsel %vm777, %v2877, %v2881
      %v2883 = vshrl.u32 %v2654, 16
      %v2885 = vrot.slane %v2883, 4
      %v2886 = vor.u32 %v2885, %v2881
      %v2887 = vrot.slane %v2886, 4
      %v2889 = vshll.u32 %v2655, 16
      %v2891 = vrot.slane %v2889, 5
      %v2892 = vsel %vm777, %v2887, %v2891
      %v2894 = vshrl.u32 %v2656, 16
      %v2896 = vrot.slane %v2894, 4
      %v2897 = vshll.u32 %v2656, 16
      %v2899 = vrot.slane %v2897, 5
      %v2900 = vor.u32 %v2896, %v2899
      %v2901 = vrot.slane %v2900, 4
      %v2903 = vshll.u32 %v2657, 16
      %v2905 = vrot.slane %v2903, 5
      %v2906 = vsel %vm777, %v2901, %v2905
      %v2907 = vshrl.u32 %v2657, 16
      %v2909 = vrot.slane %v2907, 4
      %v2910 = vor.u32 %v2909, %v2905
      %v2911 = vrot.slane %v2910, 4
      %v2913 = vshll.u32 %v2658, 16
      %v2915 = vrot.slane %v2913, 5
      %v2916 = vsel %vm777, %v2911, %v2915
      %v2918 = vshrl.u32 %v2659, 16
      %v2920 = vrot.slane %v2918, 4
      %v2921 = vshll.u32 %v2659, 16
      %v2923 = vrot.slane %v2921, 5
      %v2924 = vor.u32 %v2920, %v2923
      %v2925 = vrot.slane %v2924, 4
      %v2927 = vshll.u32 %v2660, 16
      %v2929 = vrot.slane %v2927, 5
      %v2930 = vsel %vm777, %v2925, %v2929
      %v2931 = vshrl.u32 %v2660, 16
      %v2933 = vrot.slane %v2931, 4
      %v2934 = vor.u32 %v2933, %v2929
      %v2935 = vrot.slane %v2934, 4
      %v2937 = vshll.u32 %v2661, 16
      %v2939 = vrot.slane %v2937, 5
      %v2940 = vsel %vm777, %v2935, %v2939
      %v2942 = vshrl.u32 %v2662, 16
      %v2944 = vrot.slane %v2942, 4
      %v2945 = vshll.u32 %v2662, 16
      %v2947 = vrot.slane %v2945, 5
      %v2948 = vor.u32 %v2944, %v2947
      %v2949 = vrot.slane %v2948, 4
      %v2951 = vshll.u32 %v2663, 16
      %v2953 = vrot.slane %v2951, 5
      %v2954 = vsel %vm777, %v2949, %v2953
      %v2955 = vshrl.u32 %v2663, 16
      %v2957 = vrot.slane %v2955, 4
      %v2958 = vor.u32 %v2957, %v2953
      %v2959 = vrot.slane %v2958, 4
      %v2961 = vshll.u32 %v2664, 16
      %v2963 = vrot.slane %v2961, 5
      %v2964 = vsel %vm777, %v2959, %v2963
      %v2966 = vshrl.u32 %v2665, 16
      %v2968 = vrot.slane %v2966, 4
      %v2969 = vshll.u32 %v2665, 16
      %v2971 = vrot.slane %v2969, 5
      %v2972 = vor.u32 %v2968, %v2971
      %v2973 = vrot.slane %v2972, 4
      %v2975 = vshll.u32 %v2666, 16
      %v2977 = vrot.slane %v2975, 5
      %v2978 = vsel %vm777, %v2973, %v2977
      %v2979 = vshrl.u32 %v2666, 16
      %v2981 = vrot.slane %v2979, 4
      %v2982 = vor.u32 %v2981, %v2977
      %v2983 = vrot.slane %v2982, 4
      %v2985 = vshll.u32 %v2667, 16
      %v2987 = vrot.slane %v2985, 5
      %v2988 = vsel %vm777, %v2983, %v2987
      %v2990 = vshrl.u32 %v2668, 16
      %v2992 = vrot.slane %v2990, 4
      %v2993 = vshll.u32 %v2668, 16
      %v2995 = vrot.slane %v2993, 5
      %v2996 = vor.u32 %v2992, %v2995
      %v2997 = vrot.slane %v2996, 4
      %v2999 = vshll.u32 %v2669, 16
      %v3001 = vrot.slane %v2999, 5
      %v3002 = vsel %vm777, %v2997, %v3001
      %v3003 = vshrl.u32 %v2669, 16
      %v3005 = vrot.slane %v3003, 4
      %v3006 = vor.u32 %v3005, %v3001
      %v3007 = vrot.slane %v3006, 4
      %v3009 = vshll.u32 %v2670, 16
      %v3011 = vrot.slane %v3009, 5
      %v3012 = vsel %vm777, %v3007, %v3011
      %v3014 = vshrl.u32 %v2671, 16
      %v3016 = vrot.slane %v3014, 4
      %v3017 = vshll.u32 %v2671, 16
      %v3019 = vrot.slane %v3017, 5
      %v3020 = vor.u32 %v3016, %v3019
      %v3021 = vrot.slane %v3020, 4
      %v3023 = vshll.u32 %v2672, 16
      %v3025 = vrot.slane %v3023, 5
      %v3026 = vsel %vm777, %v3021, %v3025
      %v3027 = vshrl.u32 %v2672, 16
      %v3029 = vrot.slane %v3027, 4
      %v3030 = vor.u32 %v3029, %v3025
      %v3031 = vrot.slane %v3030, 4
      %v3033 = vshll.u32 %v2673, 16
      %v3035 = vrot.slane %v3033, 5
      %v3036 = vsel %vm777, %v3031, %v3035
      %v3038 = vshrl.u32 %v2674, 16
      %v3040 = vrot.slane %v3038, 4
      %v3041 = vshll.u32 %v2674, 16
      %v3043 = vrot.slane %v3041, 5
      %v3044 = vor.u32 %v3040, %v3043
      %v3045 = vrot.slane %v3044, 4
      %v3047 = vshll.u32 %v2675, 16
      %v3049 = vrot.slane %v3047, 5
      %v3050 = vsel %vm777, %v3045, %v3049
      %v3051 = vshrl.u32 %v2675, 16
      %v3053 = vrot.slane %v3051, 4
      %v3054 = vor.u32 %v3053, %v3049
      %v3055 = vrot.slane %v3054, 4
      %v3057 = vshll.u32 %v2676, 16
      %v3059 = vrot.slane %v3057, 5
      %v3060 = vsel %vm777, %v3055, %v3059
      %s3061 = scalar_lea.vmem %s1, 256
      %v3062 = vld [vmem:[%s3061] sm:$0xf]
      %v3063 = vld [vmem:[%s3061 + $0x4] sm:$0xf]
      %v3064 = vld [vmem:[%s3061 + $0x8] sm:$0xf]
      %v3065 = vld [vmem:[%s3061 + $0xc] sm:$0xf]
      %v3066 = vld [vmem:[%s3061 + $0x10] sm:$0xf]
      %v3067 = vld [vmem:[%s3061 + $0x14] sm:$0xf]
      %v3068 = vld [vmem:[%s3061 + $0x18] sm:$0xf]
      %v3069 = vld [vmem:[%s3061 + $0x1c] sm:$0xf]
      %v3070 = vld [vmem:[%s3061 + $0x20] sm:$0xf]
      %v3071 = vld [vmem:[%s3061 + $0x24] sm:$0xf]
      %v3072 = vld [vmem:[%s3061 + $0x28] sm:$0xf]
      %v3073 = vld [vmem:[%s3061 + $0x2c] sm:$0xf]
      %v3074 = vld [vmem:[%s3061 + $0x30] sm:$0xf]
      %v3075 = vld [vmem:[%s3061 + $0x34] sm:$0xf]
      %v3076 = vld [vmem:[%s3061 + $0x38] sm:$0xf]
      %v3077 = vld [vmem:[%s3061 + $0x3c] sm:$0xf]
      %v3078 = vunpack.c.l.b16 %v2690
      %v3079 = vunpack.c.l.b16 %v2700
      %v3080 = vunpack.c.l.b16 %v2714
      %v3081 = vunpack.c.l.b16 %v2724
      %v3082 = vunpack.c.l.b16 %v2738
      %v3083 = vunpack.c.l.b16 %v2748
      %v3084 = vunpack.c.l.b16 %v2762
      %v3085 = vunpack.c.l.b16 %v2772
      %v3086 = vunpack.c.l.b16 %v2786
      %v3087 = vunpack.c.l.b16 %v2796
      %v3088 = vunpack.c.l.b16 %v2810
      %v3089 = vunpack.c.l.b16 %v2820
      %v3090 = vunpack.c.l.b16 %v2834
      %v3091 = vunpack.c.l.b16 %v2844
      %v3092 = vunpack.c.l.b16 %v2858
      %v3093 = vunpack.c.l.b16 %v2868
      %v3094 = vunpack.c.l.b16 %v2882
      %v3095 = vunpack.c.l.b16 %v2892
      %v3096 = vunpack.c.l.b16 %v2906
      %v3097 = vunpack.c.l.b16 %v2916
      %v3098 = vunpack.c.l.b16 %v2930
      %v3099 = vunpack.c.l.b16 %v2940
      %v3100 = vunpack.c.l.b16 %v2954
      %v3101 = vunpack.c.l.b16 %v2964
      %v3102 = vunpack.c.l.b16 %v2978
      %v3103 = vunpack.c.l.b16 %v2988
      %v3104 = vunpack.c.l.b16 %v3002
      %v3105 = vunpack.c.l.b16 %v3012
      %v3106 = vunpack.c.l.b16 %v3026
      %v3107 = vunpack.c.l.b16 %v3036
      %v3108 = vunpack.c.l.b16 %v3050
      %v3109 = vunpack.c.l.b16 %v3060
      %v3110 = vpack.c.b16 %v3079, %v3078
      %v3111 = vpack.c.b16 %v3081, %v3080
      %v3112 = vpack.c.b16 %v3083, %v3082
      %v3113 = vpack.c.b16 %v3085, %v3084
      %v3114 = vpack.c.b16 %v3087, %v3086
      %v3115 = vpack.c.b16 %v3089, %v3088
      %v3116 = vpack.c.b16 %v3091, %v3090
      %v3117 = vpack.c.b16 %v3093, %v3092
      %v3118 = vpack.c.b16 %v3095, %v3094
      %v3119 = vpack.c.b16 %v3097, %v3096
      %v3120 = vpack.c.b16 %v3099, %v3098
      %v3121 = vpack.c.b16 %v3101, %v3100
      %v3122 = vpack.c.b16 %v3103, %v3102
      %v3123 = vpack.c.b16 %v3105, %v3104
      %v3124 = vpack.c.b16 %v3107, %v3106
      %v3125 = vpack.c.b16 %v3109, %v3108
      %v3158 = vunpack.c.l.b16 %v3062
      %v3159 = vunpack.c.l.b16 %v3063
      %v3160 = vunpack.c.l.b16 %v3064
      %v3161 = vunpack.c.l.b16 %v3065
      %v3162 = vunpack.c.l.b16 %v3066
      %v3163 = vunpack.c.l.b16 %v3067
      %v3164 = vunpack.c.l.b16 %v3068
      %v3165 = vunpack.c.l.b16 %v3069
      %v3166 = vunpack.c.l.b16 %v3070
      %v3167 = vunpack.c.l.b16 %v3071
      %v3168 = vunpack.c.l.b16 %v3072
      %v3169 = vunpack.c.l.b16 %v3073
      %v3170 = vunpack.c.l.b16 %v3074
      %v3171 = vunpack.c.l.b16 %v3075
      %v3172 = vunpack.c.l.b16 %v3076
      %v3173 = vunpack.c.l.b16 %v3077
      %v3174 = vpack.c.b16 %v3159, %v3158
      %v3175 = vpack.c.b16 %v3161, %v3160
      %v3176 = vpack.c.b16 %v3163, %v3162
      %v3177 = vpack.c.b16 %v3165, %v3164
      %v3178 = vpack.c.b16 %v3167, %v3166
      %v3179 = vpack.c.b16 %v3169, %v3168
      %v3180 = vpack.c.b16 %v3171, %v3170
      %v3181 = vpack.c.b16 %v3173, %v3172
      %3190 = vmatprep.subr.bf16.mxu0 0
      %3191 = vmatpush1.bf16.msra.mxu0 %v3174
      %3192 = vmatprep.subr.bf16.mxu0 0
      %3193 = vmatpush1.bf16.msra.mxu0 %v3175
      %3194 = vmatprep.subr.bf16.mxu0 0
      %3195 = vmatpush1.bf16.msra.mxu0 %v3176
      %3196 = vmatprep.subr.bf16.mxu0 0
      %3197 = vmatpush1.bf16.msra.mxu0 %v3177
      %3198 = vmatprep.subr.bf16.mxu0 0
      %3199 = vmatpush1.bf16.msra.mxu0 %v3178
      %3200 = vmatprep.subr.bf16.mxu0 0
      %3201 = vmatpush1.bf16.msra.mxu0 %v3179
      %3202 = vmatprep.subr.bf16.mxu0 0
      %3203 = vmatpush1.bf16.msra.mxu0 %v3180
      %3204 = vmatprep.subr.bf16.mxu0 0
      %3205 = vmatpush1.bf16.msra.mxu0 %v3181
      %3206 = vmatprep.subr.bf16.mxu0 0
      %3207 = vmatpush1.bf16.msra.mxu0 0
      %3208 = vmatprep.subr.bf16.mxu0 0
      %3209 = vmatpush1.bf16.msra.mxu0 0
      %3210 = vmatprep.subr.bf16.mxu0 0
      %3211 = vmatpush1.bf16.msra.mxu0 0
      %3212 = vmatprep.subr.bf16.mxu0 0
      %3213 = vmatpush1.bf16.msra.mxu0 0
      %3214 = vmatprep.subr.bf16.mxu0 0
      %3215 = vmatpush1.bf16.msra.mxu0 0
      %3216 = vmatprep.subr.bf16.mxu0 0
      %3217 = vmatpush1.bf16.msra.mxu0 0
      %3218 = vmatprep.subr.bf16.mxu0 0
      %3219 = vmatpush1.bf16.msra.mxu0 0
      %3220 = vmatprep.subr.bf16.mxu0 0
      %3221 = vmatpush1.bf16.msra.mxu0 0
      %3222 = vmatprep.mubr.bf16.mxu0 0
      %3223 = vmatmul.mubr.bf16.gmra.mrb[0].mxu0 %v3110
      %v3224 = vpop.f32.mrb[0].mxu0
      %v3225 = vadd.f32 0.0, %v3224
      %v3226 = vpop.f32.mrb[0].mxu0
      %v3227 = vpop.f32.mrb[0].mxu0
      %v3228 = vadd.f32 0.0, %v3227
      %v3229 = vpop.f32.mrb[0].mxu0
      %3230 = vmatprep.mubr.bf16.mxu0 0
      %3231 = vmatmul.mubr.bf16.gmra.mrb[0].mxu0 %v3111
      %v3232 = vpop.f32.mrb[0].mxu0
      %v3233 = vadd.f32 0.0, %v3232
      %v3234 = vpop.f32.mrb[0].mxu0
      %v3235 = vpop.f32.mrb[0].mxu0
      %v3236 = vadd.f32 0.0, %v3235
      %v3237 = vpop.f32.mrb[0].mxu0
      %3238 = vmatprep.mubr.bf16.mxu0 0
      %3239 = vmatmul.mubr.bf16.gmra.mrb[0].mxu0 %v3112
      %v3240 = vpop.f32.mrb[0].mxu0
      %v3241 = vadd.f32 0.0, %v3240
      %v3242 = vpop.f32.mrb[0].mxu0
      %v3243 = vpop.f32.mrb[0].mxu0
      %v3244 = vadd.f32 0.0, %v3243
      %v3245 = vpop.f32.mrb[0].mxu0
      %3246 = vmatprep.mubr.bf16.mxu0 0
      %3247 = vmatmul.mubr.bf16.gmra.mrb[0].mxu0 %v3113
      %v3248 = vpop.f32.mrb[0].mxu0
      %v3249 = vadd.f32 0.0, %v3248
      %v3250 = vpop.f32.mrb[0].mxu0
      %v3251 = vpop.f32.mrb[0].mxu0
      %v3252 = vadd.f32 0.0, %v3251
      %v3253 = vpop.f32.mrb[0].mxu0
      %3254 = vmatprep.mubr.bf16.mxu0 0
      %3255 = vmatmul.mubr.bf16.gmra.mrb[0].mxu0 %v3114
      %v3256 = vpop.f32.mrb[0].mxu0
      %v3257 = vadd.f32 0.0, %v3256
      %v3258 = vpop.f32.mrb[0].mxu0
      %v3259 = vpop.f32.mrb[0].mxu0
      %v3260 = vadd.f32 0.0, %v3259
      %v3261 = vpop.f32.mrb[0].mxu0
      %3262 = vmatprep.mubr.bf16.mxu0 0
      %3263 = vmatmul.mubr.bf16.gmra.mrb[0].mxu0 %v3115
      %v3264 = vpop.f32.mrb[0].mxu0
      %v3265 = vadd.f32 0.0, %v3264
      %v3266 = vpop.f32.mrb[0].mxu0
      %v3267 = vpop.f32.mrb[0].mxu0
      %v3268 = vadd.f32 0.0, %v3267
      %v3269 = vpop.f32.mrb[0].mxu0
      %3270 = vmatprep.mubr.bf16.mxu0 0
      %3271 = vmatmul.mubr.bf16.gmra.mrb[0].mxu0 %v3116
      %v3272 = vpop.f32.mrb[0].mxu0
      %v3273 = vadd.f32 0.0, %v3272
      %v3274 = vpop.f32.mrb[0].mxu0
      %v3275 = vpop.f32.mrb[0].mxu0
      %v3276 = vadd.f32 0.0, %v3275
      %v3277 = vpop.f32.mrb[0].mxu0
      %3278 = vmatprep.mubr.bf16.mxu0 0
      %3279 = vmatmul.mubr.bf16.gmra.mrb[0].mxu0 %v3117
      %v3280 = vpop.f32.mrb[0].mxu0
      %v3281 = vadd.f32 0.0, %v3280
      %v3282 = vpop.f32.mrb[0].mxu0
      %v3283 = vpop.f32.mrb[0].mxu0
      %v3284 = vadd.f32 0.0, %v3283
      %v3285 = vpop.f32.mrb[0].mxu0
      %3286 = vmatprep.mubr.bf16.mxu0 0
      %3287 = vmatmul.mubr.bf16.gmra.mrb[0].mxu0 %v3118
      %v3288 = vpop.f32.mrb[0].mxu0
      %v3289 = vadd.f32 0.0, %v3288
      %v3290 = vpop.f32.mrb[0].mxu0
      %v3291 = vpop.f32.mrb[0].mxu0
      %v3292 = vadd.f32 0.0, %v3291
      %v3293 = vpop.f32.mrb[0].mxu0
      %3294 = vmatprep.mubr.bf16.mxu0 0
      %3295 = vmatmul.mubr.bf16.gmra.mrb[0].mxu0 %v3119
      %v3296 = vpop.f32.mrb[0].mxu0
      %v3297 = vadd.f32 0.0, %v3296
      %v3298 = vpop.f32.mrb[0].mxu0
      %v3299 = vpop.f32.mrb[0].mxu0
      %v3300 = vadd.f32 0.0, %v3299
      %v3301 = vpop.f32.mrb[0].mxu0
      %3302 = vmatprep.mubr.bf16.mxu0 0
      %3303 = vmatmul.mubr.bf16.gmra.mrb[0].mxu0 %v3120
      %v3304 = vpop.f32.mrb[0].mxu0
      %v3305 = vadd.f32 0.0, %v3304
      %v3306 = vpop.f32.mrb[0].mxu0
      %v3307 = vpop.f32.mrb[0].mxu0
      %v3308 = vadd.f32 0.0, %v3307
      %v3309 = vpop.f32.mrb[0].mxu0
      %3310 = vmatprep.mubr.bf16.mxu0 0
      %3311 = vmatmul.mubr.bf16.gmra.mrb[0].mxu0 %v3121
      %v3312 = vpop.f32.mrb[0].mxu0
      %v3313 = vadd.f32 0.0, %v3312
      %v3314 = vpop.f32.mrb[0].mxu0
      %v3315 = vpop.f32.mrb[0].mxu0
      %v3316 = vadd.f32 0.0, %v3315
      %v3317 = vpop.f32.mrb[0].mxu0
      %3318 = vmatprep.mubr.bf16.mxu0 0
      %3319 = vmatmul.mubr.bf16.gmra.mrb[0].mxu0 %v3122
      %v3320 = vpop.f32.mrb[0].mxu0
      %v3321 = vadd.f32 0.0, %v3320
      %v3322 = vpop.f32.mrb[0].mxu0
      %v3323 = vpop.f32.mrb[0].mxu0
      %v3324 = vadd.f32 0.0, %v3323
      %v3325 = vpop.f32.mrb[0].mxu0
      %3326 = vmatprep.mubr.bf16.mxu0 0
      %3327 = vmatmul.mubr.bf16.gmra.mrb[0].mxu0 %v3123
      %v3328 = vpop.f32.mrb[0].mxu0
      %v3329 = vadd.f32 0.0, %v3328
      %v3330 = vpop.f32.mrb[0].mxu0
      %v3331 = vpop.f32.mrb[0].mxu0
      %v3332 = vadd.f32 0.0, %v3331
      %v3333 = vpop.f32.mrb[0].mxu0
      %3334 = vmatprep.mubr.bf16.mxu0 0
      %3335 = vmatmul.mubr.bf16.gmra.mrb[0].mxu0 %v3124
      %v3336 = vpop.f32.mrb[0].mxu0
      %v3337 = vadd.f32 0.0, %v3336
      %v3338 = vpop.f32.mrb[0].mxu0
      %v3339 = vpop.f32.mrb[0].mxu0
      %v3340 = vadd.f32 0.0, %v3339
      %v3341 = vpop.f32.mrb[0].mxu0
      %3342 = vmatprep.mubr.bf16.mxu0 0
      %3343 = vmatmul.mubr.bf16.gmra.mrb[0].mxu0 %v3125
      %v3344 = vpop.f32.mrb[0].mxu0
      %v3345 = vadd.f32 0.0, %v3344
      %v3346 = vpop.f32.mrb[0].mxu0
      %v3347 = vpop.f32.mrb[0].mxu0
      %v3348 = vadd.f32 0.0, %v3347
      %v3349 = vpop.f32.mrb[0].mxu0
      %3350 = vdwg.mxu0
      %v3351 = vadd.f32 %v2597, %v3225
      %v3352 = vadd.f32 %v2598, %v3228
      %v3353 = vadd.f32 %v2599, %v3233
      %v3354 = vadd.f32 %v2600, %v3236
      %v3355 = vadd.f32 %v2601, %v3241
      %v3356 = vadd.f32 %v2602, %v3244
      %v3357 = vadd.f32 %v2603, %v3249
      %v3358 = vadd.f32 %v2604, %v3252
      %v3359 = vadd.f32 %v2605, %v3257
      %v3360 = vadd.f32 %v2606, %v3260
      %v3361 = vadd.f32 %v2607, %v3265
      %v3362 = vadd.f32 %v2608, %v3268
      %v3363 = vadd.f32 %v2609, %v3273
      %v3364 = vadd.f32 %v2610, %v3276
      %v3365 = vadd.f32 %v2611, %v3281
      %v3366 = vadd.f32 %v2612, %v3284
      %v3367 = vadd.f32 %v2613, %v3289
      %v3368 = vadd.f32 %v2614, %v3292
      %v3369 = vadd.f32 %v2615, %v3297
      %v3370 = vadd.f32 %v2616, %v3300
      %v3371 = vadd.f32 %v2617, %v3305
      %v3372 = vadd.f32 %v2618, %v3308
      %v3373 = vadd.f32 %v2619, %v3313
      %v3374 = vadd.f32 %v2620, %v3316
      %v3375 = vadd.f32 %v2621, %v3321
      %v3376 = vadd.f32 %v2622, %v3324
      %v3377 = vadd.f32 %v2623, %v3329
      %v3378 = vadd.f32 %v2624, %v3332
      %v3379 = vadd.f32 %v2625, %v3337
      %v3380 = vadd.f32 %v2626, %v3340
      %v3381 = vadd.f32 %v2627, %v3345
      %v3382 = vadd.f32 %v2628, %v3348
      %v3383 = vld [vmem:[%s2242] sm:$0xe]
      %v3384 = vld [vmem:[%s2242 + $0xc] sm:$0xe]
      %v3385 = vld [vmem:[%s2242 + $0x18] sm:$0xe]
      %v3386 = vld [vmem:[%s2242 + $0x24] sm:$0xe]
      %v3387 = vld [vmem:[%s2242 + $0x30] sm:$0xe]
      %v3388 = vld [vmem:[%s2242 + $0x3c] sm:$0xe]
      %v3389 = vld [vmem:[%s2242 + $0x48] sm:$0xe]
      %v3390 = vld [vmem:[%s2242 + $0x54] sm:$0xe]
      %v3391 = vld [vmem:[%s2242 + $0x60] sm:$0xe]
      %v3392 = vld [vmem:[%s2242 + $0x6c] sm:$0xe]
      %v3393 = vld [vmem:[%s2242 + $0x78] sm:$0xe]
      %v3394 = vld [vmem:[%s2242 + $0x84] sm:$0xe]
      %v3395 = vld [vmem:[%s2242 + $0x90] sm:$0xe]
      %v3396 = vld [vmem:[%s2242 + $0x9c] sm:$0xe]
      %v3397 = vld [vmem:[%s2242 + $0xa8] sm:$0xe]
      %v3398 = vld [vmem:[%s2242 + $0xb4] sm:$0xe]
      %v3447 = vrot.slane %v3383, 5
      %v3448 = vrot.slane %v3447, 4
      %v3449 = vrot.slane %v2630, 5
      %v3450 = vsel %vm1807, %v3448, %v3449
      %v3451 = vrot.slane %v3449, 4
      %v3452 = vrot.slane %v2631, 5
      %v3453 = vsel %vm1807, %v3451, %v3452
      %v3454 = vrot.slane %v3384, 5
      %v3455 = vrot.slane %v3454, 4
      %v3456 = vrot.slane %v2633, 5
      %v3457 = vsel %vm1807, %v3455, %v3456
      %v3458 = vrot.slane %v3456, 4
      %v3459 = vrot.slane %v2634, 5
      %v3460 = vsel %vm1807, %v3458, %v3459
      %v3461 = vrot.slane %v3385, 5
      %v3462 = vrot.slane %v3461, 4
      %v3463 = vrot.slane %v2636, 5
      %v3464 = vsel %vm1807, %v3462, %v3463
      %v3465 = vrot.slane %v3463, 4
      %v3466 = vrot.slane %v2637, 5
      %v3467 = vsel %vm1807, %v3465, %v3466
      %v3468 = vrot.slane %v3386, 5
      %v3469 = vrot.slane %v3468, 4
      %v3470 = vrot.slane %v2639, 5
      %v3471 = vsel %vm1807, %v3469, %v3470
      %v3472 = vrot.slane %v3470, 4
      %v3473 = vrot.slane %v2640, 5
      %v3474 = vsel %vm1807, %v3472, %v3473
      %v3475 = vrot.slane %v3387, 5
      %v3476 = vrot.slane %v3475, 4
      %v3477 = vrot.slane %v2642, 5
      %v3478 = vsel %vm1807, %v3476, %v3477
      %v3479 = vrot.slane %v3477, 4
      %v3480 = vrot.slane %v2643, 5
      %v3481 = vsel %vm1807, %v3479, %v3480
      %v3482 = vrot.slane %v3388, 5
      %v3483 = vrot.slane %v3482, 4
      %v3484 = vrot.slane %v2645, 5
      %v3485 = vsel %vm1807, %v3483, %v3484
      %v3486 = vrot.slane %v3484, 4
      %v3487 = vrot.slane %v2646, 5
      %v3488 = vsel %vm1807, %v3486, %v3487
      %v3489 = vrot.slane %v3389, 5
      %v3490 = vrot.slane %v3489, 4
      %v3491 = vrot.slane %v2648, 5
      %v3492 = vsel %vm1807, %v3490, %v3491
      %v3493 = vrot.slane %v3491, 4
      %v3494 = vrot.slane %v2649, 5
      %v3495 = vsel %vm1807, %v3493, %v3494
      %v3496 = vrot.slane %v3390, 5
      %v3497 = vrot.slane %v3496, 4
      %v3498 = vrot.slane %v2651, 5
      %v3499 = vsel %vm1807, %v3497, %v3498
      %v3500 = vrot.slane %v3498, 4
      %v3501 = vrot.slane %v2652, 5
      %v3502 = vsel %vm1807, %v3500, %v3501
      %v3503 = vrot.slane %v3391, 5
      %v3504 = vrot.slane %v3503, 4
      %v3505 = vrot.slane %v2654, 5
      %v3506 = vsel %vm1807, %v3504, %v3505
      %v3507 = vrot.slane %v3505, 4
      %v3508 = vrot.slane %v2655, 5
      %v3509 = vsel %vm1807, %v3507, %v3508
      %v3510 = vrot.slane %v3392, 5
      %v3511 = vrot.slane %v3510, 4
      %v3512 = vrot.slane %v2657, 5
      %v3513 = vsel %vm1807, %v3511, %v3512
      %v3514 = vrot.slane %v3512, 4
      %v3515 = vrot.slane %v2658, 5
      %v3516 = vsel %vm1807, %v3514, %v3515
      %v3517 = vrot.slane %v3393, 5
      %v3518 = vrot.slane %v3517, 4
      %v3519 = vrot.slane %v2660, 5
      %v3520 = vsel %vm1807, %v3518, %v3519
      %v3521 = vrot.slane %v3519, 4
      %v3522 = vrot.slane %v2661, 5
      %v3523 = vsel %vm1807, %v3521, %v3522
      %v3524 = vrot.slane %v3394, 5
      %v3525 = vrot.slane %v3524, 4
      %v3526 = vrot.slane %v2663, 5
      %v3527 = vsel %vm1807, %v3525, %v3526
      %v3528 = vrot.slane %v3526, 4
      %v3529 = vrot.slane %v2664, 5
      %v3530 = vsel %vm1807, %v3528, %v3529
      %v3531 = vrot.slane %v3395, 5
      %v3532 = vrot.slane %v3531, 4
      %v3533 = vrot.slane %v2666, 5
      %v3534 = vsel %vm1807, %v3532, %v3533
      %v3535 = vrot.slane %v3533, 4
      %v3536 = vrot.slane %v2667, 5
      %v3537 = vsel %vm1807, %v3535, %v3536
      %v3538 = vrot.slane %v3396, 5
      %v3539 = vrot.slane %v3538, 4
      %v3540 = vrot.slane %v2669, 5
      %v3541 = vsel %vm1807, %v3539, %v3540
      %v3542 = vrot.slane %v3540, 4
      %v3543 = vrot.slane %v2670, 5
      %v3544 = vsel %vm1807, %v3542, %v3543
      %v3545 = vrot.slane %v3397, 5
      %v3546 = vrot.slane %v3545, 4
      %v3547 = vrot.slane %v2672, 5
      %v3548 = vsel %vm1807, %v3546, %v3547
      %v3549 = vrot.slane %v3547, 4
      %v3550 = vrot.slane %v2673, 5
      %v3551 = vsel %vm1807, %v3549, %v3550
      %v3552 = vrot.slane %v3398, 5
      %v3553 = vrot.slane %v3552, 4
      %v3554 = vrot.slane %v2675, 5
      %v3555 = vsel %vm1807, %v3553, %v3554
      %v3556 = vrot.slane %v3554, 4
      %v3557 = vrot.slane %v2676, 5
      %v3558 = vsel %vm1807, %v3556, %v3557
      %s3559 = scalar_lea.vmem %s1, 320
      %v3560 = vld [vmem:[%s3559] sm:$0xf]
      %v3561 = vld [vmem:[%s3559 + $0x4] sm:$0xf]
      %v3562 = vld [vmem:[%s3559 + $0x8] sm:$0xf]
      %v3563 = vld [vmem:[%s3559 + $0xc] sm:$0xf]
      %v3564 = vld [vmem:[%s3559 + $0x10] sm:$0xf]
      %v3565 = vld [vmem:[%s3559 + $0x14] sm:$0xf]
      %v3566 = vld [vmem:[%s3559 + $0x18] sm:$0xf]
      %v3567 = vld [vmem:[%s3559 + $0x1c] sm:$0xf]
      %v3568 = vld [vmem:[%s3559 + $0x20] sm:$0xf]
      %v3569 = vld [vmem:[%s3559 + $0x24] sm:$0xf]
      %v3570 = vld [vmem:[%s3559 + $0x28] sm:$0xf]
      %v3571 = vld [vmem:[%s3559 + $0x2c] sm:$0xf]
      %v3572 = vld [vmem:[%s3559 + $0x30] sm:$0xf]
      %v3573 = vld [vmem:[%s3559 + $0x34] sm:$0xf]
      %v3574 = vld [vmem:[%s3559 + $0x38] sm:$0xf]
      %v3575 = vld [vmem:[%s3559 + $0x3c] sm:$0xf]
      %v3576 = vunpack.c.l.b16 %v3450
      %v3577 = vunpack.c.l.b16 %v3453
      %v3578 = vunpack.c.l.b16 %v3457
      %v3579 = vunpack.c.l.b16 %v3460
      %v3580 = vunpack.c.l.b16 %v3464
      %v3581 = vunpack.c.l.b16 %v3467
      %v3582 = vunpack.c.l.b16 %v3471
      %v3583 = vunpack.c.l.b16 %v3474
      %v3584 = vunpack.c.l.b16 %v3478
      %v3585 = vunpack.c.l.b16 %v3481
      %v3586 = vunpack.c.l.b16 %v3485
      %v3587 = vunpack.c.l.b16 %v3488
      %v3588 = vunpack.c.l.b16 %v3492
      %v3589 = vunpack.c.l.b16 %v3495
      %v3590 = vunpack.c.l.b16 %v3499
      %v3591 = vunpack.c.l.b16 %v3502
      %v3592 = vunpack.c.l.b16 %v3506
      %v3593 = vunpack.c.l.b16 %v3509
      %v3594 = vunpack.c.l.b16 %v3513
      %v3595 = vunpack.c.l.b16 %v3516
      %v3596 = vunpack.c.l.b16 %v3520
      %v3597 = vunpack.c.l.b16 %v3523
      %v3598 = vunpack.c.l.b16 %v3527
      %v3599 = vunpack.c.l.b16 %v3530
      %v3600 = vunpack.c.l.b16 %v3534
      %v3601 = vunpack.c.l.b16 %v3537
      %v3602 = vunpack.c.l.b16 %v3541
      %v3603 = vunpack.c.l.b16 %v3544
      %v3604 = vunpack.c.l.b16 %v3548
      %v3605 = vunpack.c.l.b16 %v3551
      %v3606 = vunpack.c.l.b16 %v3555
      %v3607 = vunpack.c.l.b16 %v3558
      %v3608 = vpack.c.b16 %v3577, %v3576
      %v3609 = vpack.c.b16 %v3579, %v3578
      %v3610 = vpack.c.b16 %v3581, %v3580
      %v3611 = vpack.c.b16 %v3583, %v3582
      %v3612 = vpack.c.b16 %v3585, %v3584
      %v3613 = vpack.c.b16 %v3587, %v3586
      %v3614 = vpack.c.b16 %v3589, %v3588
      %v3615 = vpack.c.b16 %v3591, %v3590
      %v3616 = vpack.c.b16 %v3593, %v3592
      %v3617 = vpack.c.b16 %v3595, %v3594
      %v3618 = vpack.c.b16 %v3597, %v3596
      %v3619 = vpack.c.b16 %v3599, %v3598
      %v3620 = vpack.c.b16 %v3601, %v3600
      %v3621 = vpack.c.b16 %v3603, %v3602
      %v3622 = vpack.c.b16 %v3605, %v3604
      %v3623 = vpack.c.b16 %v3607, %v3606
      %v3656 = vunpack.c.l.b16 %v3560
      %v3657 = vunpack.c.l.b16 %v3561
      %v3658 = vunpack.c.l.b16 %v3562
      %v3659 = vunpack.c.l.b16 %v3563
      %v3660 = vunpack.c.l.b16 %v3564
      %v3661 = vunpack.c.l.b16 %v3565
      %v3662 = vunpack.c.l.b16 %v3566
      %v3663 = vunpack.c.l.b16 %v3567
      %v3664 = vunpack.c.l.b16 %v3568
      %v3665 = vunpack.c.l.b16 %v3569
      %v3666 = vunpack.c.l.b16 %v3570
      %v3667 = vunpack.c.l.b16 %v3571
      %v3668 = vunpack.c.l.b16 %v3572
      %v3669 = vunpack.c.l.b16 %v3573
      %v3670 = vunpack.c.l.b16 %v3574
      %v3671 = vunpack.c.l.b16 %v3575
      %v3672 = vpack.c.b16 %v3657, %v3656
      %v3673 = vpack.c.b16 %v3659, %v3658
      %v3674 = vpack.c.b16 %v3661, %v3660
      %v3675 = vpack.c.b16 %v3663, %v3662
      %v3676 = vpack.c.b16 %v3665, %v3664
      %v3677 = vpack.c.b16 %v3667, %v3666
      %v3678 = vpack.c.b16 %v3669, %v3668
      %v3679 = vpack.c.b16 %v3671, %v3670
      %3688 = vmatprep.subr.bf16.mxu0 0
      %3689 = vmatpush1.bf16.msra.mxu0 %v3672
      %3690 = vmatprep.subr.bf16.mxu0 0
      %3691 = vmatpush1.bf16.msra.mxu0 %v3673
      %3692 = vmatprep.subr.bf16.mxu0 0
      %3693 = vmatpush1.bf16.msra.mxu0 %v3674
      %3694 = vmatprep.subr.bf16.mxu0 0
      %3695 = vmatpush1.bf16.msra.mxu0 %v3675
      %3696 = vmatprep.subr.bf16.mxu0 0
      %3697 = vmatpush1.bf16.msra.mxu0 %v3676
      %3698 = vmatprep.subr.bf16.mxu0 0
      %3699 = vmatpush1.bf16.msra.mxu0 %v3677
      %3700 = vmatprep.subr.bf16.mxu0 0
      %3701 = vmatpush1.bf16.msra.mxu0 %v3678
      %3702 = vmatprep.subr.bf16.mxu0 0
      %3703 = vmatpush1.bf16.msra.mxu0 %v3679
      %3704 = vmatprep.subr.bf16.mxu0 0
      %3705 = vmatpush1.bf16.msra.mxu0 0
      %3706 = vmatprep.subr.bf16.mxu0 0
      %3707 = vmatpush1.bf16.msra.mxu0 0
      %3708 = vmatprep.subr.bf16.mxu0 0
      %3709 = vmatpush1.bf16.msra.mxu0 0
      %3710 = vmatprep.subr.bf16.mxu0 0
      %3711 = vmatpush1.bf16.msra.mxu0 0
      %3712 = vmatprep.subr.bf16.mxu0 0
      %3713 = vmatpush1.bf16.msra.mxu0 0
      %3714 = vmatprep.subr.bf16.mxu0 0
      %3715 = vmatpush1.bf16.msra.mxu0 0
      %3716 = vmatprep.subr.bf16.mxu0 0
      %3717 = vmatpush1.bf16.msra.mxu0 0
      %3718 = vmatprep.subr.bf16.mxu0 0
      %3719 = vmatpush1.bf16.msra.mxu0 0
      %3720 = vmatprep.mubr.bf16.mxu0 0
      %3721 = vmatmul.mubr.bf16.gmra.mrb[0].mxu0 %v3608
      %v3722 = vpop.f32.mrb[0].mxu0
      %v3723 = vadd.f32 0.0, %v3722
      %v3724 = vpop.f32.mrb[0].mxu0
      %v3725 = vpop.f32.mrb[0].mxu0
      %v3726 = vadd.f32 0.0, %v3725
      %v3727 = vpop.f32.mrb[0].mxu0
      %3728 = vmatprep.mubr.bf16.mxu0 0
      %3729 = vmatmul.mubr.bf16.gmra.mrb[0].mxu0 %v3609
      %v3730 = vpop.f32.mrb[0].mxu0
      %v3731 = vadd.f32 0.0, %v3730
      %v3732 = vpop.f32.mrb[0].mxu0
      %v3733 = vpop.f32.mrb[0].mxu0
      %v3734 = vadd.f32 0.0, %v3733
      %v3735 = vpop.f32.mrb[0].mxu0
      %3736 = vmatprep.mubr.bf16.mxu0 0
      %3737 = vmatmul.mubr.bf16.gmra.mrb[0].mxu0 %v3610
      %v3738 = vpop.f32.mrb[0].mxu0
      %v3739 = vadd.f32 0.0, %v3738
      %v3740 = vpop.f32.mrb[0].mxu0
      %v3741 = vpop.f32.mrb[0].mxu0
      %v3742 = vadd.f32 0.0, %v3741
      %v3743 = vpop.f32.mrb[0].mxu0
      %3744 = vmatprep.mubr.bf16.mxu0 0
      %3745 = vmatmul.mubr.bf16.gmra.mrb[0].mxu0 %v3611
      %v3746 = vpop.f32.mrb[0].mxu0
      %v3747 = vadd.f32 0.0, %v3746
      %v3748 = vpop.f32.mrb[0].mxu0
      %v3749 = vpop.f32.mrb[0].mxu0
      %v3750 = vadd.f32 0.0, %v3749
      %v3751 = vpop.f32.mrb[0].mxu0
      %3752 = vmatprep.mubr.bf16.mxu0 0
      %3753 = vmatmul.mubr.bf16.gmra.mrb[0].mxu0 %v3612
      %v3754 = vpop.f32.mrb[0].mxu0
      %v3755 = vadd.f32 0.0, %v3754
      %v3756 = vpop.f32.mrb[0].mxu0
      %v3757 = vpop.f32.mrb[0].mxu0
      %v3758 = vadd.f32 0.0, %v3757
      %v3759 = vpop.f32.mrb[0].mxu0
      %3760 = vmatprep.mubr.bf16.mxu0 0
      %3761 = vmatmul.mubr.bf16.gmra.mrb[0].mxu0 %v3613
      %v3762 = vpop.f32.mrb[0].mxu0
      %v3763 = vadd.f32 0.0, %v3762
      %v3764 = vpop.f32.mrb[0].mxu0
      %v3765 = vpop.f32.mrb[0].mxu0
      %v3766 = vadd.f32 0.0, %v3765
      %v3767 = vpop.f32.mrb[0].mxu0
      %3768 = vmatprep.mubr.bf16.mxu0 0
      %3769 = vmatmul.mubr.bf16.gmra.mrb[0].mxu0 %v3614
      %v3770 = vpop.f32.mrb[0].mxu0
      %v3771 = vadd.f32 0.0, %v3770
      %v3772 = vpop.f32.mrb[0].mxu0
      %v3773 = vpop.f32.mrb[0].mxu0
      %v3774 = vadd.f32 0.0, %v3773
      %v3775 = vpop.f32.mrb[0].mxu0
      %3776 = vmatprep.mubr.bf16.mxu0 0
      %3777 = vmatmul.mubr.bf16.gmra.mrb[0].mxu0 %v3615
      %v3778 = vpop.f32.mrb[0].mxu0
      %v3779 = vadd.f32 0.0, %v3778
      %v3780 = vpop.f32.mrb[0].mxu0
      %v3781 = vpop.f32.mrb[0].mxu0
      %v3782 = vadd.f32 0.0, %v3781
      %v3783 = vpop.f32.mrb[0].mxu0
      %3784 = vmatprep.mubr.bf16.mxu0 0
      %3785 = vmatmul.mubr.bf16.gmra.mrb[0].mxu0 %v3616
      %v3786 = vpop.f32.mrb[0].mxu0
      %v3787 = vadd.f32 0.0, %v3786
      %v3788 = vpop.f32.mrb[0].mxu0
      %v3789 = vpop.f32.mrb[0].mxu0
      %v3790 = vadd.f32 0.0, %v3789
      %v3791 = vpop.f32.mrb[0].mxu0
      %3792 = vmatprep.mubr.bf16.mxu0 0
      %3793 = vmatmul.mubr.bf16.gmra.mrb[0].mxu0 %v3617
      %v3794 = vpop.f32.mrb[0].mxu0
      %v3795 = vadd.f32 0.0, %v3794
      %v3796 = vpop.f32.mrb[0].mxu0
      %v3797 = vpop.f32.mrb[0].mxu0
      %v3798 = vadd.f32 0.0, %v3797
      %v3799 = vpop.f32.mrb[0].mxu0
      %3800 = vmatprep.mubr.bf16.mxu0 0
      %3801 = vmatmul.mubr.bf16.gmra.mrb[0].mxu0 %v3618
      %v3802 = vpop.f32.mrb[0].mxu0
      %v3803 = vadd.f32 0.0, %v3802
      %v3804 = vpop.f32.mrb[0].mxu0
      %v3805 = vpop.f32.mrb[0].mxu0
      %v3806 = vadd.f32 0.0, %v3805
      %v3807 = vpop.f32.mrb[0].mxu0
      %3808 = vmatprep.mubr.bf16.mxu0 0
      %3809 = vmatmul.mubr.bf16.gmra.mrb[0].mxu0 %v3619
      %v3810 = vpop.f32.mrb[0].mxu0
      %v3811 = vadd.f32 0.0, %v3810
      %v3812 = vpop.f32.mrb[0].mxu0
      %v3813 = vpop.f32.mrb[0].mxu0
      %v3814 = vadd.f32 0.0, %v3813
      %v3815 = vpop.f32.mrb[0].mxu0
      %3816 = vmatprep.mubr.bf16.mxu0 0
      %3817 = vmatmul.mubr.bf16.gmra.mrb[0].mxu0 %v3620
      %v3818 = vpop.f32.mrb[0].mxu0
      %v3819 = vadd.f32 0.0, %v3818
      %v3820 = vpop.f32.mrb[0].mxu0
      %v3821 = vpop.f32.mrb[0].mxu0
      %v3822 = vadd.f32 0.0, %v3821
      %v3823 = vpop.f32.mrb[0].mxu0
      %3824 = vmatprep.mubr.bf16.mxu0 0
      %3825 = vmatmul.mubr.bf16.gmra.mrb[0].mxu0 %v3621
      %v3826 = vpop.f32.mrb[0].mxu0
      %v3827 = vadd.f32 0.0, %v3826
      %v3828 = vpop.f32.mrb[0].mxu0
      %v3829 = vpop.f32.mrb[0].mxu0
      %v3830 = vadd.f32 0.0, %v3829
      %v3831 = vpop.f32.mrb[0].mxu0
      %3832 = vmatprep.mubr.bf16.mxu0 0
      %3833 = vmatmul.mubr.bf16.gmra.mrb[0].mxu0 %v3622
      %v3834 = vpop.f32.mrb[0].mxu0
      %v3835 = vadd.f32 0.0, %v3834
      %v3836 = vpop.f32.mrb[0].mxu0
      %v3837 = vpop.f32.mrb[0].mxu0
      %v3838 = vadd.f32 0.0, %v3837
      %v3839 = vpop.f32.mrb[0].mxu0
      %3840 = vmatprep.mubr.bf16.mxu0 0
      %3841 = vmatmul.mubr.bf16.gmra.mrb[0].mxu0 %v3623
      %v3842 = vpop.f32.mrb[0].mxu0
      %v3843 = vadd.f32 0.0, %v3842
      %v3844 = vpop.f32.mrb[0].mxu0
      %v3845 = vpop.f32.mrb[0].mxu0
      %v3846 = vadd.f32 0.0, %v3845
      %v3847 = vpop.f32.mrb[0].mxu0
      %3848 = vdwg.mxu0
      %v3849 = vadd.f32 %v3351, %v3723
      %v3850 = vadd.f32 %v3352, %v3726
      %v3851 = vadd.f32 %v3353, %v3731
      %v3852 = vadd.f32 %v3354, %v3734
      %v3853 = vadd.f32 %v3355, %v3739
      %v3854 = vadd.f32 %v3356, %v3742
      %v3855 = vadd.f32 %v3357, %v3747
      %v3856 = vadd.f32 %v3358, %v3750
      %v3857 = vadd.f32 %v3359, %v3755
      %v3858 = vadd.f32 %v3360, %v3758
      %v3859 = vadd.f32 %v3361, %v3763
      %v3860 = vadd.f32 %v3362, %v3766
      %v3861 = vadd.f32 %v3363, %v3771
      %v3862 = vadd.f32 %v3364, %v3774
      %v3863 = vadd.f32 %v3365, %v3779
      %v3864 = vadd.f32 %v3366, %v3782
      %v3865 = vadd.f32 %v3367, %v3787
      %v3866 = vadd.f32 %v3368, %v3790
      %v3867 = vadd.f32 %v3369, %v3795
      %v3868 = vadd.f32 %v3370, %v3798
      %v3869 = vadd.f32 %v3371, %v3803
      %v3870 = vadd.f32 %v3372, %v3806
      %v3871 = vadd.f32 %v3373, %v3811
      %v3872 = vadd.f32 %v3374, %v3814
      %v3873 = vadd.f32 %v3375, %v3819
      %v3874 = vadd.f32 %v3376, %v3822
      %v3875 = vadd.f32 %v3377, %v3827
      %v3876 = vadd.f32 %v3378, %v3830
      %v3877 = vadd.f32 %v3379, %v3835
      %v3878 = vadd.f32 %v3380, %v3838
      %v3879 = vadd.f32 %v3381, %v3843
      %v3880 = vadd.f32 %v3382, %v3846
      %s3881 = scalar_lea.vmem [#allocation2], 24
      %v3882 = vld [vmem:[%s3881] sm:$0xf]
      %v3883 = vld [vmem:[%s3881 + $0x4] sm:$0xf]
      %v3884 = vld [vmem:[%s3881 + $0xc] sm:$0xf]
      %v3885 = vld [vmem:[%s3881 + $0x10] sm:$0xf]
      %v3886 = vld [vmem:[%s3881 + $0x18] sm:$0xf]
      %v3887 = vld [vmem:[%s3881 + $0x1c] sm:$0xf]
      %v3888 = vld [vmem:[%s3881 + $0x24] sm:$0xf]
      %v3889 = vld [vmem:[%s3881 + $0x28] sm:$0xf]
      %v3890 = vld [vmem:[%s3881 + $0x30] sm:$0xf]
      %v3891 = vld [vmem:[%s3881 + $0x34] sm:$0xf]
      %v3892 = vld [vmem:[%s3881 + $0x3c] sm:$0xf]
      %v3893 = vld [vmem:[%s3881 + $0x40] sm:$0xf]
      %v3894 = vld [vmem:[%s3881 + $0x48] sm:$0xf]
      %v3895 = vld [vmem:[%s3881 + $0x4c] sm:$0xf]
      %v3896 = vld [vmem:[%s3881 + $0x54] sm:$0xf]
      %v3897 = vld [vmem:[%s3881 + $0x58] sm:$0xf]
      %v3898 = vld [vmem:[%s3881 + $0x60] sm:$0xf]
      %v3899 = vld [vmem:[%s3881 + $0x64] sm:$0xf]
      %v3900 = vld [vmem:[%s3881 + $0x6c] sm:$0xf]
      %v3901 = vld [vmem:[%s3881 + $0x70] sm:$0xf]
      %v3902 = vld [vmem:[%s3881 + $0x78] sm:$0xf]
      %v3903 = vld [vmem:[%s3881 + $0x7c] sm:$0xf]
      %v3904 = vld [vmem:[%s3881 + $0x84] sm:$0xf]
      %v3905 = vld [vmem:[%s3881 + $0x88] sm:$0xf]
      %v3906 = vld [vmem:[%s3881 + $0x90] sm:$0xf]
      %v3907 = vld [vmem:[%s3881 + $0x94] sm:$0xf]
      %v3908 = vld [vmem:[%s3881 + $0x9c] sm:$0xf]
      %v3909 = vld [vmem:[%s3881 + $0xa0] sm:$0xf]
      %v3910 = vld [vmem:[%s3881 + $0xa8] sm:$0xf]
      %v3911 = vld [vmem:[%s3881 + $0xac] sm:$0xf]
      %v3912 = vld [vmem:[%s3881 + $0xb4] sm:$0xf]
      %v3913 = vld [vmem:[%s3881 + $0xb8] sm:$0xf]
      %s3914 = scalar_lea.vmem %s1, 384
      %v3915 = vld [vmem:[%s3914] sm:$0xf]
      %v3916 = vld [vmem:[%s3914 + $0x4] sm:$0xf]
      %v3917 = vld [vmem:[%s3914 + $0x8] sm:$0xf]
      %v3918 = vld [vmem:[%s3914 + $0xc] sm:$0xf]
      %v3919 = vld [vmem:[%s3914 + $0x10] sm:$0xf]
      %v3920 = vld [vmem:[%s3914 + $0x14] sm:$0xf]
      %v3921 = vld [vmem:[%s3914 + $0x18] sm:$0xf]
      %v3922 = vld [vmem:[%s3914 + $0x1c] sm:$0xf]
      %v3923 = vld [vmem:[%s3914 + $0x20] sm:$0xf]
      %v3924 = vld [vmem:[%s3914 + $0x24] sm:$0xf]
      %v3925 = vld [vmem:[%s3914 + $0x28] sm:$0xf]
      %v3926 = vld [vmem:[%s3914 + $0x2c] sm:$0xf]
      %v3927 = vld [vmem:[%s3914 + $0x30] sm:$0xf]
      %v3928 = vld [vmem:[%s3914 + $0x34] sm:$0xf]
      %v3929 = vld [vmem:[%s3914 + $0x38] sm:$0xf]
      %v3930 = vld [vmem:[%s3914 + $0x3c] sm:$0xf]
      %v3963 = vunpack.c.l.b16 %v3882
      %v3964 = vunpack.c.l.b16 %v3883
      %v3965 = vunpack.c.l.b16 %v3884
      %v3966 = vunpack.c.l.b16 %v3885
      %v3967 = vunpack.c.l.b16 %v3886
      %v3968 = vunpack.c.l.b16 %v3887
      %v3969 = vunpack.c.l.b16 %v3888
      %v3970 = vunpack.c.l.b16 %v3889
      %v3971 = vunpack.c.l.b16 %v3890
      %v3972 = vunpack.c.l.b16 %v3891
      %v3973 = vunpack.c.l.b16 %v3892
      %v3974 = vunpack.c.l.b16 %v3893
      %v3975 = vunpack.c.l.b16 %v3894
      %v3976 = vunpack.c.l.b16 %v3895
      %v3977 = vunpack.c.l.b16 %v3896
      %v3978 = vunpack.c.l.b16 %v3897
      %v3979 = vunpack.c.l.b16 %v3898
      %v3980 = vunpack.c.l.b16 %v3899
      %v3981 = vunpack.c.l.b16 %v3900
      %v3982 = vunpack.c.l.b16 %v3901
      %v3983 = vunpack.c.l.b16 %v3902
      %v3984 = vunpack.c.l.b16 %v3903
      %v3985 = vunpack.c.l.b16 %v3904
      %v3986 = vunpack.c.l.b16 %v3905
      %v3987 = vunpack.c.l.b16 %v3906
      %v3988 = vunpack.c.l.b16 %v3907
      %v3989 = vunpack.c.l.b16 %v3908
      %v3990 = vunpack.c.l.b16 %v3909
      %v3991 = vunpack.c.l.b16 %v3910
      %v3992 = vunpack.c.l.b16 %v3911
      %v3993 = vunpack.c.l.b16 %v3912
      %v3994 = vunpack.c.l.b16 %v3913
      %v3995 = vpack.c.b16 %v3964, %v3963
      %v3996 = vpack.c.b16 %v3966, %v3965
      %v3997 = vpack.c.b16 %v3968, %v3967
      %v3998 = vpack.c.b16 %v3970, %v3969
      %v3999 = vpack.c.b16 %v3972, %v3971
      %v4000 = vpack.c.b16 %v3974, %v3973
      %v4001 = vpack.c.b16 %v3976, %v3975
      %v4002 = vpack.c.b16 %v3978, %v3977
      %v4003 = vpack.c.b16 %v3980, %v3979
      %v4004 = vpack.c.b16 %v3982, %v3981
      %v4005 = vpack.c.b16 %v3984, %v3983
      %v4006 = vpack.c.b16 %v3986, %v3985
      %v4007 = vpack.c.b16 %v3988, %v3987
      %v4008 = vpack.c.b16 %v3990, %v3989
      %v4009 = vpack.c.b16 %v3992, %v3991
      %v4010 = vpack.c.b16 %v3994, %v3993
      %v4043 = vunpack.c.l.b16 %v3915
      %v4044 = vunpack.c.l.b16 %v3916
      %v4045 = vunpack.c.l.b16 %v3917
      %v4046 = vunpack.c.l.b16 %v3918
      %v4047 = vunpack.c.l.b16 %v3919
      %v4048 = vunpack.c.l.b16 %v3920
      %v4049 = vunpack.c.l.b16 %v3921
      %v4050 = vunpack.c.l.b16 %v3922
      %v4051 = vunpack.c.l.b16 %v3923
      %v4052 = vunpack.c.l.b16 %v3924
      %v4053 = vunpack.c.l.b16 %v3925
      %v4054 = vunpack.c.l.b16 %v3926
      %v4055 = vunpack.c.l.b16 %v3927
      %v4056 = vunpack.c.l.b16 %v3928
      %v4057 = vunpack.c.l.b16 %v3929
      %v4058 = vunpack.c.l.b16 %v3930
      %v4059 = vpack.c.b16 %v4044, %v4043
      %v4060 = vpack.c.b16 %v4046, %v4045
      %v4061 = vpack.c.b16 %v4048, %v4047
      %v4062 = vpack.c.b16 %v4050, %v4049
      %v4063 = vpack.c.b16 %v4052, %v4051
      %v4064 = vpack.c.b16 %v4054, %v4053
      %v4065 = vpack.c.b16 %v4056, %v4055
      %v4066 = vpack.c.b16 %v4058, %v4057
      %4075 = vmatprep.subr.bf16.mxu0 0
      %4076 = vmatpush1.bf16.msra.mxu0 %v4059
      %4077 = vmatprep.subr.bf16.mxu0 0
      %4078 = vmatpush1.bf16.msra.mxu0 %v4060
      %4079 = vmatprep.subr.bf16.mxu0 0
      %4080 = vmatpush1.bf16.msra.mxu0 %v4061
      %4081 = vmatprep.subr.bf16.mxu0 0
      %4082 = vmatpush1.bf16.msra.mxu0 %v4062
      %4083 = vmatprep.subr.bf16.mxu0 0
      %4084 = vmatpush1.bf16.msra.mxu0 %v4063
      %4085 = vmatprep.subr.bf16.mxu0 0
      %4086 = vmatpush1.bf16.msra.mxu0 %v4064
      %4087 = vmatprep.subr.bf16.mxu0 0
      %4088 = vmatpush1.bf16.msra.mxu0 %v4065
      %4089 = vmatprep.subr.bf16.mxu0 0
      %4090 = vmatpush1.bf16.msra.mxu0 %v4066
      %4091 = vmatprep.subr.bf16.mxu0 0
      %4092 = vmatpush1.bf16.msra.mxu0 0
      %4093 = vmatprep.subr.bf16.mxu0 0
      %4094 = vmatpush1.bf16.msra.mxu0 0
      %4095 = vmatprep.subr.bf16.mxu0 0
      %4096 = vmatpush1.bf16.msra.mxu0 0
      %4097 = vmatprep.subr.bf16.mxu0 0
      %4098 = vmatpush1.bf16.msra.mxu0 0
      %4099 = vmatprep.subr.bf16.mxu0 0
      %4100 = vmatpush1.bf16.msra.mxu0 0
      %4101 = vmatprep.subr.bf16.mxu0 0
      %4102 = vmatpush1.bf16.msra.mxu0 0
      %4103 = vmatprep.subr.bf16.mxu0 0
      %4104 = vmatpush1.bf16.msra.mxu0 0
      %4105 = vmatprep.subr.bf16.mxu0 0
      %4106 = vmatpush1.bf16.msra.mxu0 0
      %4107 = vmatprep.mubr.bf16.mxu0 0
      %4108 = vmatmul.mubr.bf16.gmra.mrb[0].mxu0 %v3995
      %v4109 = vpop.f32.mrb[0].mxu0
      %v4110 = vadd.f32 0.0, %v4109
      %v4111 = vpop.f32.mrb[0].mxu0
      %v4112 = vpop.f32.mrb[0].mxu0
      %v4113 = vadd.f32 0.0, %v4112
      %v4114 = vpop.f32.mrb[0].mxu0
      %4115 = vmatprep.mubr.bf16.mxu0 0
      %4116 = vmatmul.mubr.bf16.gmra.mrb[0].mxu0 %v3996
      %v4117 = vpop.f32.mrb[0].mxu0
      %v4118 = vadd.f32 0.0, %v4117
      %v4119 = vpop.f32.mrb[0].mxu0
      %v4120 = vpop.f32.mrb[0].mxu0
      %v4121 = vadd.f32 0.0, %v4120
      %v4122 = vpop.f32.mrb[0].mxu0
      %4123 = vmatprep.mubr.bf16.mxu0 0
      %4124 = vmatmul.mubr.bf16.gmra.mrb[0].mxu0 %v3997
      %v4125 = vpop.f32.mrb[0].mxu0
      %v4126 = vadd.f32 0.0, %v4125
      %v4127 = vpop.f32.mrb[0].mxu0
      %v4128 = vpop.f32.mrb[0].mxu0
      %v4129 = vadd.f32 0.0, %v4128
      %v4130 = vpop.f32.mrb[0].mxu0
      %4131 = vmatprep.mubr.bf16.mxu0 0
      %4132 = vmatmul.mubr.bf16.gmra.mrb[0].mxu0 %v3998
      %v4133 = vpop.f32.mrb[0].mxu0
      %v4134 = vadd.f32 0.0, %v4133
      %v4135 = vpop.f32.mrb[0].mxu0
      %v4136 = vpop.f32.mrb[0].mxu0
      %v4137 = vadd.f32 0.0, %v4136
      %v4138 = vpop.f32.mrb[0].mxu0
      %4139 = vmatprep.mubr.bf16.mxu0 0
      %4140 = vmatmul.mubr.bf16.gmra.mrb[0].mxu0 %v3999
      %v4141 = vpop.f32.mrb[0].mxu0
      %v4142 = vadd.f32 0.0, %v4141
      %v4143 = vpop.f32.mrb[0].mxu0
      %v4144 = vpop.f32.mrb[0].mxu0
      %v4145 = vadd.f32 0.0, %v4144
      %v4146 = vpop.f32.mrb[0].mxu0
      %4147 = vmatprep.mubr.bf16.mxu0 0
      %4148 = vmatmul.mubr.bf16.gmra.mrb[0].mxu0 %v4000
      %v4149 = vpop.f32.mrb[0].mxu0
      %v4150 = vadd.f32 0.0, %v4149
      %v4151 = vpop.f32.mrb[0].mxu0
      %v4152 = vpop.f32.mrb[0].mxu0
      %v4153 = vadd.f32 0.0, %v4152
      %v4154 = vpop.f32.mrb[0].mxu0
      %4155 = vmatprep.mubr.bf16.mxu0 0
      %4156 = vmatmul.mubr.bf16.gmra.mrb[0].mxu0 %v4001
      %v4157 = vpop.f32.mrb[0].mxu0
      %v4158 = vadd.f32 0.0, %v4157
      %v4159 = vpop.f32.mrb[0].mxu0
      %v4160 = vpop.f32.mrb[0].mxu0
      %v4161 = vadd.f32 0.0, %v4160
      %v4162 = vpop.f32.mrb[0].mxu0
      %4163 = vmatprep.mubr.bf16.mxu0 0
      %4164 = vmatmul.mubr.bf16.gmra.mrb[0].mxu0 %v4002
      %v4165 = vpop.f32.mrb[0].mxu0
      %v4166 = vadd.f32 0.0, %v4165
      %v4167 = vpop.f32.mrb[0].mxu0
      %v4168 = vpop.f32.mrb[0].mxu0
      %v4169 = vadd.f32 0.0, %v4168
      %v4170 = vpop.f32.mrb[0].mxu0
      %4171 = vmatprep.mubr.bf16.mxu0 0
      %4172 = vmatmul.mubr.bf16.gmra.mrb[0].mxu0 %v4003
      %v4173 = vpop.f32.mrb[0].mxu0
      %v4174 = vadd.f32 0.0, %v4173
      %v4175 = vpop.f32.mrb[0].mxu0
      %v4176 = vpop.f32.mrb[0].mxu0
      %v4177 = vadd.f32 0.0, %v4176
      %v4178 = vpop.f32.mrb[0].mxu0
      %4179 = vmatprep.mubr.bf16.mxu0 0
      %4180 = vmatmul.mubr.bf16.gmra.mrb[0].mxu0 %v4004
      %v4181 = vpop.f32.mrb[0].mxu0
      %v4182 = vadd.f32 0.0, %v4181
      %v4183 = vpop.f32.mrb[0].mxu0
      %v4184 = vpop.f32.mrb[0].mxu0
      %v4185 = vadd.f32 0.0, %v4184
      %v4186 = vpop.f32.mrb[0].mxu0
      %4187 = vmatprep.mubr.bf16.mxu0 0
      %4188 = vmatmul.mubr.bf16.gmra.mrb[0].mxu0 %v4005
      %v4189 = vpop.f32.mrb[0].mxu0
      %v4190 = vadd.f32 0.0, %v4189
      %v4191 = vpop.f32.mrb[0].mxu0
      %v4192 = vpop.f32.mrb[0].mxu0
      %v4193 = vadd.f32 0.0, %v4192
      %v4194 = vpop.f32.mrb[0].mxu0
      %4195 = vmatprep.mubr.bf16.mxu0 0
      %4196 = vmatmul.mubr.bf16.gmra.mrb[0].mxu0 %v4006
      %v4197 = vpop.f32.mrb[0].mxu0
      %v4198 = vadd.f32 0.0, %v4197
      %v4199 = vpop.f32.mrb[0].mxu0
      %v4200 = vpop.f32.mrb[0].mxu0
      %v4201 = vadd.f32 0.0, %v4200
      %v4202 = vpop.f32.mrb[0].mxu0
      %4203 = vmatprep.mubr.bf16.mxu0 0
      %4204 = vmatmul.mubr.bf16.gmra.mrb[0].mxu0 %v4007
      %v4205 = vpop.f32.mrb[0].mxu0
      %v4206 = vadd.f32 0.0, %v4205
      %v4207 = vpop.f32.mrb[0].mxu0
      %v4208 = vpop.f32.mrb[0].mxu0
      %v4209 = vadd.f32 0.0, %v4208
      %v4210 = vpop.f32.mrb[0].mxu0
      %4211 = vmatprep.mubr.bf16.mxu0 0
      %4212 = vmatmul.mubr.bf16.gmra.mrb[0].mxu0 %v4008
      %v4213 = vpop.f32.mrb[0].mxu0
      %v4214 = vadd.f32 0.0, %v4213
      %v4215 = vpop.f32.mrb[0].mxu0
      %v4216 = vpop.f32.mrb[0].mxu0
      %v4217 = vadd.f32 0.0, %v4216
      %v4218 = vpop.f32.mrb[0].mxu0
      %4219 = vmatprep.mubr.bf16.mxu0 0
      %4220 = vmatmul.mubr.bf16.gmra.mrb[0].mxu0 %v4009
      %v4221 = vpop.f32.mrb[0].mxu0
      %v4222 = vadd.f32 0.0, %v4221
      %v4223 = vpop.f32.mrb[0].mxu0
      %v4224 = vpop.f32.mrb[0].mxu0
      %v4225 = vadd.f32 0.0, %v4224
      %v4226 = vpop.f32.mrb[0].mxu0
      %4227 = vmatprep.mubr.bf16.mxu0 0
      %4228 = vmatmul.mubr.bf16.gmra.mrb[0].mxu0 %v4010
      %v4229 = vpop.f32.mrb[0].mxu0
      %v4230 = vadd.f32 0.0, %v4229
      %v4231 = vpop.f32.mrb[0].mxu0
      %v4232 = vpop.f32.mrb[0].mxu0
      %v4233 = vadd.f32 0.0, %v4232
      %v4234 = vpop.f32.mrb[0].mxu0
      %4235 = vdwg.mxu0
      %v4236 = vadd.f32 %v3849, %v4110
      %v4237 = vadd.f32 %v3850, %v4113
      %v4238 = vadd.f32 %v3851, %v4118
      %v4239 = vadd.f32 %v3852, %v4121
      %v4240 = vadd.f32 %v3853, %v4126
      %v4241 = vadd.f32 %v3854, %v4129
      %v4242 = vadd.f32 %v3855, %v4134
      %v4243 = vadd.f32 %v3856, %v4137
      %v4244 = vadd.f32 %v3857, %v4142
      %v4245 = vadd.f32 %v3858, %v4145
      %v4246 = vadd.f32 %v3859, %v4150
      %v4247 = vadd.f32 %v3860, %v4153
      %v4248 = vadd.f32 %v3861, %v4158
      %v4249 = vadd.f32 %v3862, %v4161
      %v4250 = vadd.f32 %v3863, %v4166
      %v4251 = vadd.f32 %v3864, %v4169
      %v4252 = vadd.f32 %v3865, %v4174
      %v4253 = vadd.f32 %v3866, %v4177
      %v4254 = vadd.f32 %v3867, %v4182
      %v4255 = vadd.f32 %v3868, %v4185
      %v4256 = vadd.f32 %v3869, %v4190
      %v4257 = vadd.f32 %v3870, %v4193
      %v4258 = vadd.f32 %v3871, %v4198
      %v4259 = vadd.f32 %v3872, %v4201
      %v4260 = vadd.f32 %v3873, %v4206
      %v4261 = vadd.f32 %v3874, %v4209
      %v4262 = vadd.f32 %v3875, %v4214
      %v4263 = vadd.f32 %v3876, %v4217
      %v4264 = vadd.f32 %v3877, %v4222
      %v4265 = vadd.f32 %v3878, %v4225
      %v4266 = vadd.f32 %v3879, %v4230
      %v4267 = vadd.f32 %v3880, %v4233
      %v4268 = vld [vmem:[%s3881] sm:$0xf]
      %v4269 = vld [vmem:[%s3881 + $0x4] sm:$0xf]
      %v4270 = vld [vmem:[%s3881 + $0x8] sm:$0x1]
      %v4271 = vld [vmem:[%s3881 + $0xc] sm:$0xf]
      %v4272 = vld [vmem:[%s3881 + $0x10] sm:$0xf]
      %v4273 = vld [vmem:[%s3881 + $0x14] sm:$0x1]
      %v4274 = vld [vmem:[%s3881 + $0x18] sm:$0xf]
      %v4275 = vld [vmem:[%s3881 + $0x1c] sm:$0xf]
      %v4276 = vld [vmem:[%s3881 + $0x20] sm:$0x1]
      %v4277 = vld [vmem:[%s3881 + $0x24] sm:$0xf]
      %v4278 = vld [vmem:[%s3881 + $0x28] sm:$0xf]
      %v4279 = vld [vmem:[%s3881 + $0x2c] sm:$0x1]
      %v4280 = vld [vmem:[%s3881 + $0x30] sm:$0xf]
      %v4281 = vld [vmem:[%s3881 + $0x34] sm:$0xf]
      %v4282 = vld [vmem:[%s3881 + $0x38] sm:$0x1]
      %v4283 = vld [vmem:[%s3881 + $0x3c] sm:$0xf]
      %v4284 = vld [vmem:[%s3881 + $0x40] sm:$0xf]
      %v4285 = vld [vmem:[%s3881 + $0x44] sm:$0x1]
      %v4286 = vld [vmem:[%s3881 + $0x48] sm:$0xf]
      %v4287 = vld [vmem:[%s3881 + $0x4c] sm:$0xf]
      %v4288 = vld [vmem:[%s3881 + $0x50] sm:$0x1]
      %v4289 = vld [vmem:[%s3881 + $0x54] sm:$0xf]
      %v4290 = vld [vmem:[%s3881 + $0x58] sm:$0xf]
      %v4291 = vld [vmem:[%s3881 + $0x5c] sm:$0x1]
      %v4292 = vld [vmem:[%s3881 + $0x60] sm:$0xf]
      %v4293 = vld [vmem:[%s3881 + $0x64] sm:$0xf]
      %v4294 = vld [vmem:[%s3881 + $0x68] sm:$0x1]
      %v4295 = vld [vmem:[%s3881 + $0x6c] sm:$0xf]
      %v4296 = vld [vmem:[%s3881 + $0x70] sm:$0xf]
      %v4297 = vld [vmem:[%s3881 + $0x74] sm:$0x1]
      %v4298 = vld [vmem:[%s3881 + $0x78] sm:$0xf]
      %v4299 = vld [vmem:[%s3881 + $0x7c] sm:$0xf]
      %v4300 = vld [vmem:[%s3881 + $0x80] sm:$0x1]
      %v4301 = vld [vmem:[%s3881 + $0x84] sm:$0xf]
      %v4302 = vld [vmem:[%s3881 + $0x88] sm:$0xf]
      %v4303 = vld [vmem:[%s3881 + $0x8c] sm:$0x1]
      %v4304 = vld [vmem:[%s3881 + $0x90] sm:$0xf]
      %v4305 = vld [vmem:[%s3881 + $0x94] sm:$0xf]
      %v4306 = vld [vmem:[%s3881 + $0x98] sm:$0x1]
      %v4307 = vld [vmem:[%s3881 + $0x9c] sm:$0xf]
      %v4308 = vld [vmem:[%s3881 + $0xa0] sm:$0xf]
      %v4309 = vld [vmem:[%s3881 + $0xa4] sm:$0x1]
      %v4310 = vld [vmem:[%s3881 + $0xa8] sm:$0xf]
      %v4311 = vld [vmem:[%s3881 + $0xac] sm:$0xf]
      %v4312 = vld [vmem:[%s3881 + $0xb0] sm:$0x1]
      %v4313 = vld [vmem:[%s3881 + $0xb4] sm:$0xf]
      %v4314 = vld [vmem:[%s3881 + $0xb8] sm:$0xf]
      %v4315 = vld [vmem:[%s3881 + $0xbc] sm:$0x1]
      %v4317 = vshrl.u32 %v4268, 16
      %v4319 = vrot.slane %v4317, 4
      %v4320 = vshll.u32 %v4268, 16
      %v4322 = vrot.slane %v4320, 5
      %v4323 = vor.u32 %v4319, %v4322
      %v4324 = vrot.slane %v4323, 4
      %v4326 = vshll.u32 %v4269, 16
      %v4328 = vrot.slane %v4326, 5
      %v4329 = vsel %vm777, %v4324, %v4328
      %v4330 = vshrl.u32 %v4269, 16
      %v4332 = vrot.slane %v4330, 4
      %v4333 = vor.u32 %v4332, %v4328
      %v4334 = vrot.slane %v4333, 4
      %v4336 = vshll.u32 %v4270, 16
      %v4338 = vrot.slane %v4336, 5
      %v4339 = vsel %vm777, %v4334, %v4338
      %v4341 = vshrl.u32 %v4271, 16
      %v4343 = vrot.slane %v4341, 4
      %v4344 = vshll.u32 %v4271, 16
      %v4346 = vrot.slane %v4344, 5
      %v4347 = vor.u32 %v4343, %v4346
      %v4348 = vrot.slane %v4347, 4
      %v4350 = vshll.u32 %v4272, 16
      %v4352 = vrot.slane %v4350, 5
      %v4353 = vsel %vm777, %v4348, %v4352
      %v4354 = vshrl.u32 %v4272, 16
      %v4356 = vrot.slane %v4354, 4
      %v4357 = vor.u32 %v4356, %v4352
      %v4358 = vrot.slane %v4357, 4
      %v4360 = vshll.u32 %v4273, 16
      %v4362 = vrot.slane %v4360, 5
      %v4363 = vsel %vm777, %v4358, %v4362
      %v4365 = vshrl.u32 %v4274, 16
      %v4367 = vrot.slane %v4365, 4
      %v4368 = vshll.u32 %v4274, 16
      %v4370 = vrot.slane %v4368, 5
      %v4371 = vor.u32 %v4367, %v4370
      %v4372 = vrot.slane %v4371, 4
      %v4374 = vshll.u32 %v4275, 16
      %v4376 = vrot.slane %v4374, 5
      %v4377 = vsel %vm777, %v4372, %v4376
      %v4378 = vshrl.u32 %v4275, 16
      %v4380 = vrot.slane %v4378, 4
      %v4381 = vor.u32 %v4380, %v4376
      %v4382 = vrot.slane %v4381, 4
      %v4384 = vshll.u32 %v4276, 16
      %v4386 = vrot.slane %v4384, 5
      %v4387 = vsel %vm777, %v4382, %v4386
      %v4389 = vshrl.u32 %v4277, 16
      %v4391 = vrot.slane %v4389, 4
      %v4392 = vshll.u32 %v4277, 16
      %v4394 = vrot.slane %v4392, 5
      %v4395 = vor.u32 %v4391, %v4394
      %v4396 = vrot.slane %v4395, 4
      %v4398 = vshll.u32 %v4278, 16
      %v4400 = vrot.slane %v4398, 5
      %v4401 = vsel %vm777, %v4396, %v4400
      %v4402 = vshrl.u32 %v4278, 16
      %v4404 = vrot.slane %v4402, 4
      %v4405 = vor.u32 %v4404, %v4400
      %v4406 = vrot.slane %v4405, 4
      %v4408 = vshll.u32 %v4279, 16
      %v4410 = vrot.slane %v4408, 5
      %v4411 = vsel %vm777, %v4406, %v4410
      %v4413 = vshrl.u32 %v4280, 16
      %v4415 = vrot.slane %v4413, 4
      %v4416 = vshll.u32 %v4280, 16
      %v4418 = vrot.slane %v4416, 5
      %v4419 = vor.u32 %v4415, %v4418
      %v4420 = vrot.slane %v4419, 4
      %v4422 = vshll.u32 %v4281, 16
      %v4424 = vrot.slane %v4422, 5
      %v4425 = vsel %vm777, %v4420, %v4424
      %v4426 = vshrl.u32 %v4281, 16
      %v4428 = vrot.slane %v4426, 4
      %v4429 = vor.u32 %v4428, %v4424
      %v4430 = vrot.slane %v4429, 4
      %v4432 = vshll.u32 %v4282, 16
      %v4434 = vrot.slane %v4432, 5
      %v4435 = vsel %vm777, %v4430, %v4434
      %v4437 = vshrl.u32 %v4283, 16
      %v4439 = vrot.slane %v4437, 4
      %v4440 = vshll.u32 %v4283, 16
      %v4442 = vrot.slane %v4440, 5
      %v4443 = vor.u32 %v4439, %v4442
      %v4444 = vrot.slane %v4443, 4
      %v4446 = vshll.u32 %v4284, 16
      %v4448 = vrot.slane %v4446, 5
      %v4449 = vsel %vm777, %v4444, %v4448
      %v4450 = vshrl.u32 %v4284, 16
      %v4452 = vrot.slane %v4450, 4
      %v4453 = vor.u32 %v4452, %v4448
      %v4454 = vrot.slane %v4453, 4
      %v4456 = vshll.u32 %v4285, 16
      %v4458 = vrot.slane %v4456, 5
      %v4459 = vsel %vm777, %v4454, %v4458
      %v4461 = vshrl.u32 %v4286, 16
      %v4463 = vrot.slane %v4461, 4
      %v4464 = vshll.u32 %v4286, 16
      %v4466 = vrot.slane %v4464, 5
      %v4467 = vor.u32 %v4463, %v4466
      %v4468 = vrot.slane %v4467, 4
      %v4470 = vshll.u32 %v4287, 16
      %v4472 = vrot.slane %v4470, 5
      %v4473 = vsel %vm777, %v4468, %v4472
      %v4474 = vshrl.u32 %v4287, 16
      %v4476 = vrot.slane %v4474, 4
      %v4477 = vor.u32 %v4476, %v4472
      %v4478 = vrot.slane %v4477, 4
      %v4480 = vshll.u32 %v4288, 16
      %v4482 = vrot.slane %v4480, 5
      %v4483 = vsel %vm777, %v4478, %v4482
      %v4485 = vshrl.u32 %v4289, 16
      %v4487 = vrot.slane %v4485, 4
      %v4488 = vshll.u32 %v4289, 16
      %v4490 = vrot.slane %v4488, 5
      %v4491 = vor.u32 %v4487, %v4490
      %v4492 = vrot.slane %v4491, 4
      %v4494 = vshll.u32 %v4290, 16
      %v4496 = vrot.slane %v4494, 5
      %v4497 = vsel %vm777, %v4492, %v4496
      %v4498 = vshrl.u32 %v4290, 16
      %v4500 = vrot.slane %v4498, 4
      %v4501 = vor.u32 %v4500, %v4496
      %v4502 = vrot.slane %v4501, 4
      %v4504 = vshll.u32 %v4291, 16
      %v4506 = vrot.slane %v4504, 5
      %v4507 = vsel %vm777, %v4502, %v4506
      %v4509 = vshrl.u32 %v4292, 16
      %v4511 = vrot.slane %v4509, 4
      %v4512 = vshll.u32 %v4292, 16
      %v4514 = vrot.slane %v4512, 5
      %v4515 = vor.u32 %v4511, %v4514
      %v4516 = vrot.slane %v4515, 4
      %v4518 = vshll.u32 %v4293, 16
      %v4520 = vrot.slane %v4518, 5
      %v4521 = vsel %vm777, %v4516, %v4520
      %v4522 = vshrl.u32 %v4293, 16
      %v4524 = vrot.slane %v4522, 4
      %v4525 = vor.u32 %v4524, %v4520
      %v4526 = vrot.slane %v4525, 4
      %v4528 = vshll.u32 %v4294, 16
      %v4530 = vrot.slane %v4528, 5
      %v4531 = vsel %vm777, %v4526, %v4530
      %v4533 = vshrl.u32 %v4295, 16
      %v4535 = vrot.slane %v4533, 4
      %v4536 = vshll.u32 %v4295, 16
      %v4538 = vrot.slane %v4536, 5
      %v4539 = vor.u32 %v4535, %v4538
      %v4540 = vrot.slane %v4539, 4
      %v4542 = vshll.u32 %v4296, 16
      %v4544 = vrot.slane %v4542, 5
      %v4545 = vsel %vm777, %v4540, %v4544
      %v4546 = vshrl.u32 %v4296, 16
      %v4548 = vrot.slane %v4546, 4
      %v4549 = vor.u32 %v4548, %v4544
      %v4550 = vrot.slane %v4549, 4
      %v4552 = vshll.u32 %v4297, 16
      %v4554 = vrot.slane %v4552, 5
      %v4555 = vsel %vm777, %v4550, %v4554
      %v4557 = vshrl.u32 %v4298, 16
      %v4559 = vrot.slane %v4557, 4
      %v4560 = vshll.u32 %v4298, 16
      %v4562 = vrot.slane %v4560, 5
      %v4563 = vor.u32 %v4559, %v4562
      %v4564 = vrot.slane %v4563, 4
      %v4566 = vshll.u32 %v4299, 16
      %v4568 = vrot.slane %v4566, 5
      %v4569 = vsel %vm777, %v4564, %v4568
      %v4570 = vshrl.u32 %v4299, 16
      %v4572 = vrot.slane %v4570, 4
      %v4573 = vor.u32 %v4572, %v4568
      %v4574 = vrot.slane %v4573, 4
      %v4576 = vshll.u32 %v4300, 16
      %v4578 = vrot.slane %v4576, 5
      %v4579 = vsel %vm777, %v4574, %v4578
      %v4581 = vshrl.u32 %v4301, 16
      %v4583 = vrot.slane %v4581, 4
      %v4584 = vshll.u32 %v4301, 16
      %v4586 = vrot.slane %v4584, 5
      %v4587 = vor.u32 %v4583, %v4586
      %v4588 = vrot.slane %v4587, 4
      %v4590 = vshll.u32 %v4302, 16
      %v4592 = vrot.slane %v4590, 5
      %v4593 = vsel %vm777, %v4588, %v4592
      %v4594 = vshrl.u32 %v4302, 16
      %v4596 = vrot.slane %v4594, 4
      %v4597 = vor.u32 %v4596, %v4592
      %v4598 = vrot.slane %v4597, 4
      %v4600 = vshll.u32 %v4303, 16
      %v4602 = vrot.slane %v4600, 5
      %v4603 = vsel %vm777, %v4598, %v4602
      %v4605 = vshrl.u32 %v4304, 16
      %v4607 = vrot.slane %v4605, 4
      %v4608 = vshll.u32 %v4304, 16
      %v4610 = vrot.slane %v4608, 5
      %v4611 = vor.u32 %v4607, %v4610
      %v4612 = vrot.slane %v4611, 4
      %v4614 = vshll.u32 %v4305, 16
      %v4616 = vrot.slane %v4614, 5
      %v4617 = vsel %vm777, %v4612, %v4616
      %v4618 = vshrl.u32 %v4305, 16
      %v4620 = vrot.slane %v4618, 4
      %v4621 = vor.u32 %v4620, %v4616
      %v4622 = vrot.slane %v4621, 4
      %v4624 = vshll.u32 %v4306, 16
      %v4626 = vrot.slane %v4624, 5
      %v4627 = vsel %vm777, %v4622, %v4626
      %v4629 = vshrl.u32 %v4307, 16
      %v4631 = vrot.slane %v4629, 4
      %v4632 = vshll.u32 %v4307, 16
      %v4634 = vrot.slane %v4632, 5
      %v4635 = vor.u32 %v4631, %v4634
      %v4636 = vrot.slane %v4635, 4
      %v4638 = vshll.u32 %v4308, 16
      %v4640 = vrot.slane %v4638, 5
      %v4641 = vsel %vm777, %v4636, %v4640
      %v4642 = vshrl.u32 %v4308, 16
      %v4644 = vrot.slane %v4642, 4
      %v4645 = vor.u32 %v4644, %v4640
      %v4646 = vrot.slane %v4645, 4
      %v4648 = vshll.u32 %v4309, 16
      %v4650 = vrot.slane %v4648, 5
      %v4651 = vsel %vm777, %v4646, %v4650
      %v4653 = vshrl.u32 %v4310, 16
      %v4655 = vrot.slane %v4653, 4
      %v4656 = vshll.u32 %v4310, 16
      %v4658 = vrot.slane %v4656, 5
      %v4659 = vor.u32 %v4655, %v4658
      %v4660 = vrot.slane %v4659, 4
      %v4662 = vshll.u32 %v4311, 16
      %v4664 = vrot.slane %v4662, 5
      %v4665 = vsel %vm777, %v4660, %v4664
      %v4666 = vshrl.u32 %v4311, 16
      %v4668 = vrot.slane %v4666, 4
      %v4669 = vor.u32 %v4668, %v4664
      %v4670 = vrot.slane %v4669, 4
      %v4672 = vshll.u32 %v4312, 16
      %v4674 = vrot.slane %v4672, 5
      %v4675 = vsel %vm777, %v4670, %v4674
      %v4677 = vshrl.u32 %v4313, 16
      %v4679 = vrot.slane %v4677, 4
      %v4680 = vshll.u32 %v4313, 16
      %v4682 = vrot.slane %v4680, 5
      %v4683 = vor.u32 %v4679, %v4682
      %v4684 = vrot.slane %v4683, 4
      %v4686 = vshll.u32 %v4314, 16
      %v4688 = vrot.slane %v4686, 5
      %v4689 = vsel %vm777, %v4684, %v4688
      %v4690 = vshrl.u32 %v4314, 16
      %v4692 = vrot.slane %v4690, 4
      %v4693 = vor.u32 %v4692, %v4688
      %v4694 = vrot.slane %v4693, 4
      %v4696 = vshll.u32 %v4315, 16
      %v4698 = vrot.slane %v4696, 5
      %v4699 = vsel %vm777, %v4694, %v4698
      %s4700 = scalar_lea.vmem %s1, 448
      %v4701 = vld [vmem:[%s4700] sm:$0xf]
      %v4702 = vld [vmem:[%s4700 + $0x4] sm:$0xf]
      %v4703 = vld [vmem:[%s4700 + $0x8] sm:$0xf]
      %v4704 = vld [vmem:[%s4700 + $0xc] sm:$0xf]
      %v4705 = vld [vmem:[%s4700 + $0x10] sm:$0xf]
      %v4706 = vld [vmem:[%s4700 + $0x14] sm:$0xf]
      %v4707 = vld [vmem:[%s4700 + $0x18] sm:$0xf]
      %v4708 = vld [vmem:[%s4700 + $0x1c] sm:$0xf]
      %v4709 = vld [vmem:[%s4700 + $0x20] sm:$0xf]
      %v4710 = vld [vmem:[%s4700 + $0x24] sm:$0xf]
      %v4711 = vld [vmem:[%s4700 + $0x28] sm:$0xf]
      %v4712 = vld [vmem:[%s4700 + $0x2c] sm:$0xf]
      %v4713 = vld [vmem:[%s4700 + $0x30] sm:$0xf]
      %v4714 = vld [vmem:[%s4700 + $0x34] sm:$0xf]
      %v4715 = vld [vmem:[%s4700 + $0x38] sm:$0xf]
      %v4716 = vld [vmem:[%s4700 + $0x3c] sm:$0xf]
      %v4717 = vunpack.c.l.b16 %v4329
      %v4718 = vunpack.c.l.b16 %v4339
      %v4719 = vunpack.c.l.b16 %v4353
      %v4720 = vunpack.c.l.b16 %v4363
      %v4721 = vunpack.c.l.b16 %v4377
      %v4722 = vunpack.c.l.b16 %v4387
      %v4723 = vunpack.c.l.b16 %v4401
      %v4724 = vunpack.c.l.b16 %v4411
      %v4725 = vunpack.c.l.b16 %v4425
      %v4726 = vunpack.c.l.b16 %v4435
      %v4727 = vunpack.c.l.b16 %v4449
      %v4728 = vunpack.c.l.b16 %v4459
      %v4729 = vunpack.c.l.b16 %v4473
      %v4730 = vunpack.c.l.b16 %v4483
      %v4731 = vunpack.c.l.b16 %v4497
      %v4732 = vunpack.c.l.b16 %v4507
      %v4733 = vunpack.c.l.b16 %v4521
      %v4734 = vunpack.c.l.b16 %v4531
      %v4735 = vunpack.c.l.b16 %v4545
      %v4736 = vunpack.c.l.b16 %v4555
      %v4737 = vunpack.c.l.b16 %v4569
      %v4738 = vunpack.c.l.b16 %v4579
      %v4739 = vunpack.c.l.b16 %v4593
      %v4740 = vunpack.c.l.b16 %v4603
      %v4741 = vunpack.c.l.b16 %v4617
      %v4742 = vunpack.c.l.b16 %v4627
      %v4743 = vunpack.c.l.b16 %v4641
      %v4744 = vunpack.c.l.b16 %v4651
      %v4745 = vunpack.c.l.b16 %v4665
      %v4746 = vunpack.c.l.b16 %v4675
      %v4747 = vunpack.c.l.b16 %v4689
      %v4748 = vunpack.c.l.b16 %v4699
      %v4749 = vpack.c.b16 %v4718, %v4717
      %v4750 = vpack.c.b16 %v4720, %v4719
      %v4751 = vpack.c.b16 %v4722, %v4721
      %v4752 = vpack.c.b16 %v4724, %v4723
      %v4753 = vpack.c.b16 %v4726, %v4725
      %v4754 = vpack.c.b16 %v4728, %v4727
      %v4755 = vpack.c.b16 %v4730, %v4729
      %v4756 = vpack.c.b16 %v4732, %v4731
      %v4757 = vpack.c.b16 %v4734, %v4733
      %v4758 = vpack.c.b16 %v4736, %v4735
      %v4759 = vpack.c.b16 %v4738, %v4737
      %v4760 = vpack.c.b16 %v4740, %v4739
      %v4761 = vpack.c.b16 %v4742, %v4741
      %v4762 = vpack.c.b16 %v4744, %v4743
      %v4763 = vpack.c.b16 %v4746, %v4745
      %v4764 = vpack.c.b16 %v4748, %v4747
      %v4797 = vunpack.c.l.b16 %v4701
      %v4798 = vunpack.c.l.b16 %v4702
      %v4799 = vunpack.c.l.b16 %v4703
      %v4800 = vunpack.c.l.b16 %v4704
      %v4801 = vunpack.c.l.b16 %v4705
      %v4802 = vunpack.c.l.b16 %v4706
      %v4803 = vunpack.c.l.b16 %v4707
      %v4804 = vunpack.c.l.b16 %v4708
      %v4805 = vunpack.c.l.b16 %v4709
      %v4806 = vunpack.c.l.b16 %v4710
      %v4807 = vunpack.c.l.b16 %v4711
      %v4808 = vunpack.c.l.b16 %v4712
      %v4809 = vunpack.c.l.b16 %v4713
      %v4810 = vunpack.c.l.b16 %v4714
      %v4811 = vunpack.c.l.b16 %v4715
      %v4812 = vunpack.c.l.b16 %v4716
      %v4813 = vpack.c.b16 %v4798, %v4797
      %v4814 = vpack.c.b16 %v4800, %v4799
      %v4815 = vpack.c.b16 %v4802, %v4801
      %v4816 = vpack.c.b16 %v4804, %v4803
      %v4817 = vpack.c.b16 %v4806, %v4805
      %v4818 = vpack.c.b16 %v4808, %v4807
      %v4819 = vpack.c.b16 %v4810, %v4809
      %v4820 = vpack.c.b16 %v4812, %v4811
      %4829 = vmatprep.subr.bf16.mxu0 0
      %4830 = vmatpush1.bf16.msra.mxu0 %v4813
      %4831 = vmatprep.subr.bf16.mxu0 0
      %4832 = vmatpush1.bf16.msra.mxu0 %v4814
      %4833 = vmatprep.subr.bf16.mxu0 0
      %4834 = vmatpush1.bf16.msra.mxu0 %v4815
      %4835 = vmatprep.subr.bf16.mxu0 0
      %4836 = vmatpush1.bf16.msra.mxu0 %v4816
      %4837 = vmatprep.subr.bf16.mxu0 0
      %4838 = vmatpush1.bf16.msra.mxu0 %v4817
      %4839 = vmatprep.subr.bf16.mxu0 0
      %4840 = vmatpush1.bf16.msra.mxu0 %v4818
      %4841 = vmatprep.subr.bf16.mxu0 0
      %4842 = vmatpush1.bf16.msra.mxu0 %v4819
      %4843 = vmatprep.subr.bf16.mxu0 0
      %4844 = vmatpush1.bf16.msra.mxu0 %v4820
      %4845 = vmatprep.subr.bf16.mxu0 0
      %4846 = vmatpush1.bf16.msra.mxu0 0
      %4847 = vmatprep.subr.bf16.mxu0 0
      %4848 = vmatpush1.bf16.msra.mxu0 0
      %4849 = vmatprep.subr.bf16.mxu0 0
      %4850 = vmatpush1.bf16.msra.mxu0 0
      %4851 = vmatprep.subr.bf16.mxu0 0
      %4852 = vmatpush1.bf16.msra.mxu0 0
      %4853 = vmatprep.subr.bf16.mxu0 0
      %4854 = vmatpush1.bf16.msra.mxu0 0
      %4855 = vmatprep.subr.bf16.mxu0 0
      %4856 = vmatpush1.bf16.msra.mxu0 0
      %4857 = vmatprep.subr.bf16.mxu0 0
      %4858 = vmatpush1.bf16.msra.mxu0 0
      %4859 = vmatprep.subr.bf16.mxu0 0
      %4860 = vmatpush1.bf16.msra.mxu0 0
      %4861 = vmatprep.mubr.bf16.mxu0 0
      %4862 = vmatmul.mubr.bf16.gmra.mrb[0].mxu0 %v4749
      %v4863 = vpop.f32.mrb[0].mxu0
      %v4864 = vadd.f32 0.0, %v4863
      %v4865 = vpop.f32.mrb[0].mxu0
      %v4866 = vpop.f32.mrb[0].mxu0
      %v4867 = vadd.f32 0.0, %v4866
      %v4868 = vpop.f32.mrb[0].mxu0
      %4869 = vmatprep.mubr.bf16.mxu0 0
      %4870 = vmatmul.mubr.bf16.gmra.mrb[0].mxu0 %v4750
      %v4871 = vpop.f32.mrb[0].mxu0
      %v4872 = vadd.f32 0.0, %v4871
      %v4873 = vpop.f32.mrb[0].mxu0
      %v4874 = vpop.f32.mrb[0].mxu0
      %v4875 = vadd.f32 0.0, %v4874
      %v4876 = vpop.f32.mrb[0].mxu0
      %4877 = vmatprep.mubr.bf16.mxu0 0
      %4878 = vmatmul.mubr.bf16.gmra.mrb[0].mxu0 %v4751
      %v4879 = vpop.f32.mrb[0].mxu0
      %v4880 = vadd.f32 0.0, %v4879
      %v4881 = vpop.f32.mrb[0].mxu0
      %v4882 = vpop.f32.mrb[0].mxu0
      %v4883 = vadd.f32 0.0, %v4882
      %v4884 = vpop.f32.mrb[0].mxu0
      %4885 = vmatprep.mubr.bf16.mxu0 0
      %4886 = vmatmul.mubr.bf16.gmra.mrb[0].mxu0 %v4752
      %v4887 = vpop.f32.mrb[0].mxu0
      %v4888 = vadd.f32 0.0, %v4887
      %v4889 = vpop.f32.mrb[0].mxu0
      %v4890 = vpop.f32.mrb[0].mxu0
      %v4891 = vadd.f32 0.0, %v4890
      %v4892 = vpop.f32.mrb[0].mxu0
      %4893 = vmatprep.mubr.bf16.mxu0 0
      %4894 = vmatmul.mubr.bf16.gmra.mrb[0].mxu0 %v4753
      %v4895 = vpop.f32.mrb[0].mxu0
      %v4896 = vadd.f32 0.0, %v4895
      %v4897 = vpop.f32.mrb[0].mxu0
      %v4898 = vpop.f32.mrb[0].mxu0
      %v4899 = vadd.f32 0.0, %v4898
      %v4900 = vpop.f32.mrb[0].mxu0
      %4901 = vmatprep.mubr.bf16.mxu0 0
      %4902 = vmatmul.mubr.bf16.gmra.mrb[0].mxu0 %v4754
      %v4903 = vpop.f32.mrb[0].mxu0
      %v4904 = vadd.f32 0.0, %v4903
      %v4905 = vpop.f32.mrb[0].mxu0
      %v4906 = vpop.f32.mrb[0].mxu0
      %v4907 = vadd.f32 0.0, %v4906
      %v4908 = vpop.f32.mrb[0].mxu0
      %4909 = vmatprep.mubr.bf16.mxu0 0
      %4910 = vmatmul.mubr.bf16.gmra.mrb[0].mxu0 %v4755
      %v4911 = vpop.f32.mrb[0].mxu0
      %v4912 = vadd.f32 0.0, %v4911
      %v4913 = vpop.f32.mrb[0].mxu0
      %v4914 = vpop.f32.mrb[0].mxu0
      %v4915 = vadd.f32 0.0, %v4914
      %v4916 = vpop.f32.mrb[0].mxu0
      %4917 = vmatprep.mubr.bf16.mxu0 0
      %4918 = vmatmul.mubr.bf16.gmra.mrb[0].mxu0 %v4756
      %v4919 = vpop.f32.mrb[0].mxu0
      %v4920 = vadd.f32 0.0, %v4919
      %v4921 = vpop.f32.mrb[0].mxu0
      %v4922 = vpop.f32.mrb[0].mxu0
      %v4923 = vadd.f32 0.0, %v4922
      %v4924 = vpop.f32.mrb[0].mxu0
      %4925 = vmatprep.mubr.bf16.mxu0 0
      %4926 = vmatmul.mubr.bf16.gmra.mrb[0].mxu0 %v4757
      %v4927 = vpop.f32.mrb[0].mxu0
      %v4928 = vadd.f32 0.0, %v4927
      %v4929 = vpop.f32.mrb[0].mxu0
      %v4930 = vpop.f32.mrb[0].mxu0
      %v4931 = vadd.f32 0.0, %v4930
      %v4932 = vpop.f32.mrb[0].mxu0
      %4933 = vmatprep.mubr.bf16.mxu0 0
      %4934 = vmatmul.mubr.bf16.gmra.mrb[0].mxu0 %v4758
      %v4935 = vpop.f32.mrb[0].mxu0
      %v4936 = vadd.f32 0.0, %v4935
      %v4937 = vpop.f32.mrb[0].mxu0
      %v4938 = vpop.f32.mrb[0].mxu0
      %v4939 = vadd.f32 0.0, %v4938
      %v4940 = vpop.f32.mrb[0].mxu0
      %4941 = vmatprep.mubr.bf16.mxu0 0
      %4942 = vmatmul.mubr.bf16.gmra.mrb[0].mxu0 %v4759
      %v4943 = vpop.f32.mrb[0].mxu0
      %v4944 = vadd.f32 0.0, %v4943
      %v4945 = vpop.f32.mrb[0].mxu0
      %v4946 = vpop.f32.mrb[0].mxu0
      %v4947 = vadd.f32 0.0, %v4946
      %v4948 = vpop.f32.mrb[0].mxu0
      %4949 = vmatprep.mubr.bf16.mxu0 0
      %4950 = vmatmul.mubr.bf16.gmra.mrb[0].mxu0 %v4760
      %v4951 = vpop.f32.mrb[0].mxu0
      %v4952 = vadd.f32 0.0, %v4951
      %v4953 = vpop.f32.mrb[0].mxu0
      %v4954 = vpop.f32.mrb[0].mxu0
      %v4955 = vadd.f32 0.0, %v4954
      %v4956 = vpop.f32.mrb[0].mxu0
      %4957 = vmatprep.mubr.bf16.mxu0 0
      %4958 = vmatmul.mubr.bf16.gmra.mrb[0].mxu0 %v4761
      %v4959 = vpop.f32.mrb[0].mxu0
      %v4960 = vadd.f32 0.0, %v4959
      %v4961 = vpop.f32.mrb[0].mxu0
      %v4962 = vpop.f32.mrb[0].mxu0
      %v4963 = vadd.f32 0.0, %v4962
      %v4964 = vpop.f32.mrb[0].mxu0
      %4965 = vmatprep.mubr.bf16.mxu0 0
      %4966 = vmatmul.mubr.bf16.gmra.mrb[0].mxu0 %v4762
      %v4967 = vpop.f32.mrb[0].mxu0
      %v4968 = vadd.f32 0.0, %v4967
      %v4969 = vpop.f32.mrb[0].mxu0
      %v4970 = vpop.f32.mrb[0].mxu0
      %v4971 = vadd.f32 0.0, %v4970
      %v4972 = vpop.f32.mrb[0].mxu0
      %4973 = vmatprep.mubr.bf16.mxu0 0
      %4974 = vmatmul.mubr.bf16.gmra.mrb[0].mxu0 %v4763
      %v4975 = vpop.f32.mrb[0].mxu0
      %v4976 = vadd.f32 0.0, %v4975
      %v4977 = vpop.f32.mrb[0].mxu0
      %v4978 = vpop.f32.mrb[0].mxu0
      %v4979 = vadd.f32 0.0, %v4978
      %v4980 = vpop.f32.mrb[0].mxu0
      %4981 = vmatprep.mubr.bf16.mxu0 0
      %4982 = vmatmul.mubr.bf16.gmra.mrb[0].mxu0 %v4764
      %v4983 = vpop.f32.mrb[0].mxu0
      %v4984 = vadd.f32 0.0, %v4983
      %v4985 = vpop.f32.mrb[0].mxu0
      %v4986 = vpop.f32.mrb[0].mxu0
      %v4987 = vadd.f32 0.0, %v4986
      %v4988 = vpop.f32.mrb[0].mxu0
      %4989 = vdwg.mxu0
      %v4990 = vadd.f32 %v4236, %v4864
      %v4991 = vadd.f32 %v4237, %v4867
      %v4992 = vadd.f32 %v4238, %v4872
      %v4993 = vadd.f32 %v4239, %v4875
      %v4994 = vadd.f32 %v4240, %v4880
      %v4995 = vadd.f32 %v4241, %v4883
      %v4996 = vadd.f32 %v4242, %v4888
      %v4997 = vadd.f32 %v4243, %v4891
      %v4998 = vadd.f32 %v4244, %v4896
      %v4999 = vadd.f32 %v4245, %v4899
      %v5000 = vadd.f32 %v4246, %v4904
      %v5001 = vadd.f32 %v4247, %v4907
      %v5002 = vadd.f32 %v4248, %v4912
      %v5003 = vadd.f32 %v4249, %v4915
      %v5004 = vadd.f32 %v4250, %v4920
      %v5005 = vadd.f32 %v4251, %v4923
      %v5006 = vadd.f32 %v4252, %v4928
      %v5007 = vadd.f32 %v4253, %v4931
      %v5008 = vadd.f32 %v4254, %v4936
      %v5009 = vadd.f32 %v4255, %v4939
      %v5010 = vadd.f32 %v4256, %v4944
      %v5011 = vadd.f32 %v4257, %v4947
      %v5012 = vadd.f32 %v4258, %v4952
      %v5013 = vadd.f32 %v4259, %v4955
      %v5014 = vadd.f32 %v4260, %v4960
      %v5015 = vadd.f32 %v4261, %v4963
      %v5016 = vadd.f32 %v4262, %v4968
      %v5017 = vadd.f32 %v4263, %v4971
      %v5018 = vadd.f32 %v4264, %v4976
      %v5019 = vadd.f32 %v4265, %v4979
      %v5020 = vadd.f32 %v4266, %v4984
      %v5021 = vadd.f32 %v4267, %v4987
      %v5022 = vld [vmem:[%s3881] sm:$0xe]
      %v5023 = vld [vmem:[%s3881 + $0xc] sm:$0xe]
      %v5024 = vld [vmem:[%s3881 + $0x18] sm:$0xe]
      %v5025 = vld [vmem:[%s3881 + $0x24] sm:$0xe]
      %v5026 = vld [vmem:[%s3881 + $0x30] sm:$0xe]
      %v5027 = vld [vmem:[%s3881 + $0x3c] sm:$0xe]
      %v5028 = vld [vmem:[%s3881 + $0x48] sm:$0xe]
      %v5029 = vld [vmem:[%s3881 + $0x54] sm:$0xe]
      %v5030 = vld [vmem:[%s3881 + $0x60] sm:$0xe]
      %v5031 = vld [vmem:[%s3881 + $0x6c] sm:$0xe]
      %v5032 = vld [vmem:[%s3881 + $0x78] sm:$0xe]
      %v5033 = vld [vmem:[%s3881 + $0x84] sm:$0xe]
      %v5034 = vld [vmem:[%s3881 + $0x90] sm:$0xe]
      %v5035 = vld [vmem:[%s3881 + $0x9c] sm:$0xe]
      %v5036 = vld [vmem:[%s3881 + $0xa8] sm:$0xe]
      %v5037 = vld [vmem:[%s3881 + $0xb4] sm:$0xe]
      %v5086 = vrot.slane %v5022, 5
      %v5087 = vrot.slane %v5086, 4
      %v5088 = vrot.slane %v4269, 5
      %v5089 = vsel %vm1807, %v5087, %v5088
      %v5090 = vrot.slane %v5088, 4
      %v5091 = vrot.slane %v4270, 5
      %v5092 = vsel %vm1807, %v5090, %v5091
      %v5093 = vrot.slane %v5023, 5
      %v5094 = vrot.slane %v5093, 4
      %v5095 = vrot.slane %v4272, 5
      %v5096 = vsel %vm1807, %v5094, %v5095
      %v5097 = vrot.slane %v5095, 4
      %v5098 = vrot.slane %v4273, 5
      %v5099 = vsel %vm1807, %v5097, %v5098
      %v5100 = vrot.slane %v5024, 5
      %v5101 = vrot.slane %v5100, 4
      %v5102 = vrot.slane %v4275, 5
      %v5103 = vsel %vm1807, %v5101, %v5102
      %v5104 = vrot.slane %v5102, 4
      %v5105 = vrot.slane %v4276, 5
      %v5106 = vsel %vm1807, %v5104, %v5105
      %v5107 = vrot.slane %v5025, 5
      %v5108 = vrot.slane %v5107, 4
      %v5109 = vrot.slane %v4278, 5
      %v5110 = vsel %vm1807, %v5108, %v5109
      %v5111 = vrot.slane %v5109, 4
      %v5112 = vrot.slane %v4279, 5
      %v5113 = vsel %vm1807, %v5111, %v5112
      %v5114 = vrot.slane %v5026, 5
      %v5115 = vrot.slane %v5114, 4
      %v5116 = vrot.slane %v4281, 5
      %v5117 = vsel %vm1807, %v5115, %v5116
      %v5118 = vrot.slane %v5116, 4
      %v5119 = vrot.slane %v4282, 5
      %v5120 = vsel %vm1807, %v5118, %v5119
      %v5121 = vrot.slane %v5027, 5
      %v5122 = vrot.slane %v5121, 4
      %v5123 = vrot.slane %v4284, 5
      %v5124 = vsel %vm1807, %v5122, %v5123
      %v5125 = vrot.slane %v5123, 4
      %v5126 = vrot.slane %v4285, 5
      %v5127 = vsel %vm1807, %v5125, %v5126
      %v5128 = vrot.slane %v5028, 5
      %v5129 = vrot.slane %v5128, 4
      %v5130 = vrot.slane %v4287, 5
      %v5131 = vsel %vm1807, %v5129, %v5130
      %v5132 = vrot.slane %v5130, 4
      %v5133 = vrot.slane %v4288, 5
      %v5134 = vsel %vm1807, %v5132, %v5133
      %v5135 = vrot.slane %v5029, 5
      %v5136 = vrot.slane %v5135, 4
      %v5137 = vrot.slane %v4290, 5
      %v5138 = vsel %vm1807, %v5136, %v5137
      %v5139 = vrot.slane %v5137, 4
      %v5140 = vrot.slane %v4291, 5
      %v5141 = vsel %vm1807, %v5139, %v5140
      %v5142 = vrot.slane %v5030, 5
      %v5143 = vrot.slane %v5142, 4
      %v5144 = vrot.slane %v4293, 5
      %v5145 = vsel %vm1807, %v5143, %v5144
      %v5146 = vrot.slane %v5144, 4
      %v5147 = vrot.slane %v4294, 5
      %v5148 = vsel %vm1807, %v5146, %v5147
      %v5149 = vrot.slane %v5031, 5
      %v5150 = vrot.slane %v5149, 4
      %v5151 = vrot.slane %v4296, 5
      %v5152 = vsel %vm1807, %v5150, %v5151
      %v5153 = vrot.slane %v5151, 4
      %v5154 = vrot.slane %v4297, 5
      %v5155 = vsel %vm1807, %v5153, %v5154
      %v5156 = vrot.slane %v5032, 5
      %v5157 = vrot.slane %v5156, 4
      %v5158 = vrot.slane %v4299, 5
      %v5159 = vsel %vm1807, %v5157, %v5158
      %v5160 = vrot.slane %v5158, 4
      %v5161 = vrot.slane %v4300, 5
      %v5162 = vsel %vm1807, %v5160, %v5161
      %v5163 = vrot.slane %v5033, 5
      %v5164 = vrot.slane %v5163, 4
      %v5165 = vrot.slane %v4302, 5
      %v5166 = vsel %vm1807, %v5164, %v5165
      %v5167 = vrot.slane %v5165, 4
      %v5168 = vrot.slane %v4303, 5
      %v5169 = vsel %vm1807, %v5167, %v5168
      %v5170 = vrot.slane %v5034, 5
      %v5171 = vrot.slane %v5170, 4
      %v5172 = vrot.slane %v4305, 5
      %v5173 = vsel %vm1807, %v5171, %v5172
      %v5174 = vrot.slane %v5172, 4
      %v5175 = vrot.slane %v4306, 5
      %v5176 = vsel %vm1807, %v5174, %v5175
      %v5177 = vrot.slane %v5035, 5
      %v5178 = vrot.slane %v5177, 4
      %v5179 = vrot.slane %v4308, 5
      %v5180 = vsel %vm1807, %v5178, %v5179
      %v5181 = vrot.slane %v5179, 4
      %v5182 = vrot.slane %v4309, 5
      %v5183 = vsel %vm1807, %v5181, %v5182
      %v5184 = vrot.slane %v5036, 5
      %v5185 = vrot.slane %v5184, 4
      %v5186 = vrot.slane %v4311, 5
      %v5187 = vsel %vm1807, %v5185, %v5186
      %v5188 = vrot.slane %v5186, 4
      %v5189 = vrot.slane %v4312, 5
      %v5190 = vsel %vm1807, %v5188, %v5189
      %v5191 = vrot.slane %v5037, 5
      %v5192 = vrot.slane %v5191, 4
      %v5193 = vrot.slane %v4314, 5
      %v5194 = vsel %vm1807, %v5192, %v5193
      %v5195 = vrot.slane %v5193, 4
      %v5196 = vrot.slane %v4315, 5
      %v5197 = vsel %vm1807, %v5195, %v5196
      %s5198 = scalar_lea.vmem %s1, 512
      %v5199 = vld [vmem:[%s5198] sm:$0xf]
      %v5200 = vld [vmem:[%s5198 + $0x4] sm:$0xf]
      %v5201 = vld [vmem:[%s5198 + $0x8] sm:$0xf]
      %v5202 = vld [vmem:[%s5198 + $0xc] sm:$0xf]
      %v5203 = vld [vmem:[%s5198 + $0x10] sm:$0xf]
      %v5204 = vld [vmem:[%s5198 + $0x14] sm:$0xf]
      %v5205 = vld [vmem:[%s5198 + $0x18] sm:$0xf]
      %v5206 = vld [vmem:[%s5198 + $0x1c] sm:$0xf]
      %v5207 = vld [vmem:[%s5198 + $0x20] sm:$0xf]
      %v5208 = vld [vmem:[%s5198 + $0x24] sm:$0xf]
      %v5209 = vld [vmem:[%s5198 + $0x28] sm:$0xf]
      %v5210 = vld [vmem:[%s5198 + $0x2c] sm:$0xf]
      %v5211 = vld [vmem:[%s5198 + $0x30] sm:$0xf]
      %v5212 = vld [vmem:[%s5198 + $0x34] sm:$0xf]
      %v5213 = vld [vmem:[%s5198 + $0x38] sm:$0xf]
      %v5214 = vld [vmem:[%s5198 + $0x3c] sm:$0xf]
      %v5215 = vunpack.c.l.b16 %v5089
      %v5216 = vunpack.c.l.b16 %v5092
      %v5217 = vunpack.c.l.b16 %v5096
      %v5218 = vunpack.c.l.b16 %v5099
      %v5219 = vunpack.c.l.b16 %v5103
      %v5220 = vunpack.c.l.b16 %v5106
      %v5221 = vunpack.c.l.b16 %v5110
      %v5222 = vunpack.c.l.b16 %v5113
      %v5223 = vunpack.c.l.b16 %v5117
      %v5224 = vunpack.c.l.b16 %v5120
      %v5225 = vunpack.c.l.b16 %v5124
      %v5226 = vunpack.c.l.b16 %v5127
      %v5227 = vunpack.c.l.b16 %v5131
      %v5228 = vunpack.c.l.b16 %v5134
      %v5229 = vunpack.c.l.b16 %v5138
      %v5230 = vunpack.c.l.b16 %v5141
      %v5231 = vunpack.c.l.b16 %v5145
      %v5232 = vunpack.c.l.b16 %v5148
      %v5233 = vunpack.c.l.b16 %v5152
      %v5234 = vunpack.c.l.b16 %v5155
      %v5235 = vunpack.c.l.b16 %v5159
      %v5236 = vunpack.c.l.b16 %v5162
      %v5237 = vunpack.c.l.b16 %v5166
      %v5238 = vunpack.c.l.b16 %v5169
      %v5239 = vunpack.c.l.b16 %v5173
      %v5240 = vunpack.c.l.b16 %v5176
      %v5241 = vunpack.c.l.b16 %v5180
      %v5242 = vunpack.c.l.b16 %v5183
      %v5243 = vunpack.c.l.b16 %v5187
      %v5244 = vunpack.c.l.b16 %v5190
      %v5245 = vunpack.c.l.b16 %v5194
      %v5246 = vunpack.c.l.b16 %v5197
      %v5247 = vpack.c.b16 %v5216, %v5215
      %v5248 = vpack.c.b16 %v5218, %v5217
      %v5249 = vpack.c.b16 %v5220, %v5219
      %v5250 = vpack.c.b16 %v5222, %v5221
      %v5251 = vpack.c.b16 %v5224, %v5223
      %v5252 = vpack.c.b16 %v5226, %v5225
      %v5253 = vpack.c.b16 %v5228, %v5227
      %v5254 = vpack.c.b16 %v5230, %v5229
      %v5255 = vpack.c.b16 %v5232, %v5231
      %v5256 = vpack.c.b16 %v5234, %v5233
      %v5257 = vpack.c.b16 %v5236, %v5235
      %v5258 = vpack.c.b16 %v5238, %v5237
      %v5259 = vpack.c.b16 %v5240, %v5239
      %v5260 = vpack.c.b16 %v5242, %v5241
      %v5261 = vpack.c.b16 %v5244, %v5243
      %v5262 = vpack.c.b16 %v5246, %v5245
      %v5295 = vunpack.c.l.b16 %v5199
      %v5296 = vunpack.c.l.b16 %v5200
      %v5297 = vunpack.c.l.b16 %v5201
      %v5298 = vunpack.c.l.b16 %v5202
      %v5299 = vunpack.c.l.b16 %v5203
      %v5300 = vunpack.c.l.b16 %v5204
      %v5301 = vunpack.c.l.b16 %v5205
      %v5302 = vunpack.c.l.b16 %v5206
      %v5303 = vunpack.c.l.b16 %v5207
      %v5304 = vunpack.c.l.b16 %v5208
      %v5305 = vunpack.c.l.b16 %v5209
      %v5306 = vunpack.c.l.b16 %v5210
      %v5307 = vunpack.c.l.b16 %v5211
      %v5308 = vunpack.c.l.b16 %v5212
      %v5309 = vunpack.c.l.b16 %v5213
      %v5310 = vunpack.c.l.b16 %v5214
      %v5311 = vpack.c.b16 %v5296, %v5295
      %v5312 = vpack.c.b16 %v5298, %v5297
      %v5313 = vpack.c.b16 %v5300, %v5299
      %v5314 = vpack.c.b16 %v5302, %v5301
      %v5315 = vpack.c.b16 %v5304, %v5303
      %v5316 = vpack.c.b16 %v5306, %v5305
      %v5317 = vpack.c.b16 %v5308, %v5307
      %v5318 = vpack.c.b16 %v5310, %v5309
      %5327 = vmatprep.subr.bf16.mxu0 0
      %5328 = vmatpush1.bf16.msra.mxu0 %v5311
      %5329 = vmatprep.subr.bf16.mxu0 0
      %5330 = vmatpush1.bf16.msra.mxu0 %v5312
      %5331 = vmatprep.subr.bf16.mxu0 0
      %5332 = vmatpush1.bf16.msra.mxu0 %v5313
      %5333 = vmatprep.subr.bf16.mxu0 0
      %5334 = vmatpush1.bf16.msra.mxu0 %v5314
      %5335 = vmatprep.subr.bf16.mxu0 0
      %5336 = vmatpush1.bf16.msra.mxu0 %v5315
      %5337 = vmatprep.subr.bf16.mxu0 0
      %5338 = vmatpush1.bf16.msra.mxu0 %v5316
      %5339 = vmatprep.subr.bf16.mxu0 0
      %5340 = vmatpush1.bf16.msra.mxu0 %v5317
      %5341 = vmatprep.subr.bf16.mxu0 0
      %5342 = vmatpush1.bf16.msra.mxu0 %v5318
      %5343 = vmatprep.subr.bf16.mxu0 0
      %5344 = vmatpush1.bf16.msra.mxu0 0
      %5345 = vmatprep.subr.bf16.mxu0 0
      %5346 = vmatpush1.bf16.msra.mxu0 0
      %5347 = vmatprep.subr.bf16.mxu0 0
      %5348 = vmatpush1.bf16.msra.mxu0 0
      %5349 = vmatprep.subr.bf16.mxu0 0
      %5350 = vmatpush1.bf16.msra.mxu0 0
      %5351 = vmatprep.subr.bf16.mxu0 0
      %5352 = vmatpush1.bf16.msra.mxu0 0
      %5353 = vmatprep.subr.bf16.mxu0 0
      %5354 = vmatpush1.bf16.msra.mxu0 0
      %5355 = vmatprep.subr.bf16.mxu0 0
      %5356 = vmatpush1.bf16.msra.mxu0 0
      %5357 = vmatprep.subr.bf16.mxu0 0
      %5358 = vmatpush1.bf16.msra.mxu0 0
      %5359 = vmatprep.mubr.bf16.mxu0 0
      %5360 = vmatmul.mubr.bf16.gmra.mrb[0].mxu0 %v5247
      %v5361 = vpop.f32.mrb[0].mxu0
      %v5362 = vadd.f32 0.0, %v5361
      %v5363 = vpop.f32.mrb[0].mxu0
      %v5364 = vpop.f32.mrb[0].mxu0
      %v5365 = vadd.f32 0.0, %v5364
      %v5366 = vpop.f32.mrb[0].mxu0
      %5367 = vmatprep.mubr.bf16.mxu0 0
      %5368 = vmatmul.mubr.bf16.gmra.mrb[0].mxu0 %v5248
      %v5369 = vpop.f32.mrb[0].mxu0
      %v5370 = vadd.f32 0.0, %v5369
      %v5371 = vpop.f32.mrb[0].mxu0
      %v5372 = vpop.f32.mrb[0].mxu0
      %v5373 = vadd.f32 0.0, %v5372
      %v5374 = vpop.f32.mrb[0].mxu0
      %5375 = vmatprep.mubr.bf16.mxu0 0
      %5376 = vmatmul.mubr.bf16.gmra.mrb[0].mxu0 %v5249
      %v5377 = vpop.f32.mrb[0].mxu0
      %v5378 = vadd.f32 0.0, %v5377
      %v5379 = vpop.f32.mrb[0].mxu0
      %v5380 = vpop.f32.mrb[0].mxu0
      %v5381 = vadd.f32 0.0, %v5380
      %v5382 = vpop.f32.mrb[0].mxu0
      %5383 = vmatprep.mubr.bf16.mxu0 0
      %5384 = vmatmul.mubr.bf16.gmra.mrb[0].mxu0 %v5250
      %v5385 = vpop.f32.mrb[0].mxu0
      %v5386 = vadd.f32 0.0, %v5385
      %v5387 = vpop.f32.mrb[0].mxu0
      %v5388 = vpop.f32.mrb[0].mxu0
      %v5389 = vadd.f32 0.0, %v5388
      %v5390 = vpop.f32.mrb[0].mxu0
      %5391 = vmatprep.mubr.bf16.mxu0 0
      %5392 = vmatmul.mubr.bf16.gmra.mrb[0].mxu0 %v5251
      %v5393 = vpop.f32.mrb[0].mxu0
      %v5394 = vadd.f32 0.0, %v5393
      %v5395 = vpop.f32.mrb[0].mxu0
      %v5396 = vpop.f32.mrb[0].mxu0
      %v5397 = vadd.f32 0.0, %v5396
      %v5398 = vpop.f32.mrb[0].mxu0
      %5399 = vmatprep.mubr.bf16.mxu0 0
      %5400 = vmatmul.mubr.bf16.gmra.mrb[0].mxu0 %v5252
      %v5401 = vpop.f32.mrb[0].mxu0
      %v5402 = vadd.f32 0.0, %v5401
      %v5403 = vpop.f32.mrb[0].mxu0
      %v5404 = vpop.f32.mrb[0].mxu0
      %v5405 = vadd.f32 0.0, %v5404
      %v5406 = vpop.f32.mrb[0].mxu0
      %5407 = vmatprep.mubr.bf16.mxu0 0
      %5408 = vmatmul.mubr.bf16.gmra.mrb[0].mxu0 %v5253
      %v5409 = vpop.f32.mrb[0].mxu0
      %v5410 = vadd.f32 0.0, %v5409
      %v5411 = vpop.f32.mrb[0].mxu0
      %v5412 = vpop.f32.mrb[0].mxu0
      %v5413 = vadd.f32 0.0, %v5412
      %v5414 = vpop.f32.mrb[0].mxu0
      %5415 = vmatprep.mubr.bf16.mxu0 0
      %5416 = vmatmul.mubr.bf16.gmra.mrb[0].mxu0 %v5254
      %v5417 = vpop.f32.mrb[0].mxu0
      %v5418 = vadd.f32 0.0, %v5417
      %v5419 = vpop.f32.mrb[0].mxu0
      %v5420 = vpop.f32.mrb[0].mxu0
      %v5421 = vadd.f32 0.0, %v5420
      %v5422 = vpop.f32.mrb[0].mxu0
      %5423 = vmatprep.mubr.bf16.mxu0 0
      %5424 = vmatmul.mubr.bf16.gmra.mrb[0].mxu0 %v5255
      %v5425 = vpop.f32.mrb[0].mxu0
      %v5426 = vadd.f32 0.0, %v5425
      %v5427 = vpop.f32.mrb[0].mxu0
      %v5428 = vpop.f32.mrb[0].mxu0
      %v5429 = vadd.f32 0.0, %v5428
      %v5430 = vpop.f32.mrb[0].mxu0
      %5431 = vmatprep.mubr.bf16.mxu0 0
      %5432 = vmatmul.mubr.bf16.gmra.mrb[0].mxu0 %v5256
      %v5433 = vpop.f32.mrb[0].mxu0
      %v5434 = vadd.f32 0.0, %v5433
      %v5435 = vpop.f32.mrb[0].mxu0
      %v5436 = vpop.f32.mrb[0].mxu0
      %v5437 = vadd.f32 0.0, %v5436
      %v5438 = vpop.f32.mrb[0].mxu0
      %5439 = vmatprep.mubr.bf16.mxu0 0
      %5440 = vmatmul.mubr.bf16.gmra.mrb[0].mxu0 %v5257
      %v5441 = vpop.f32.mrb[0].mxu0
      %v5442 = vadd.f32 0.0, %v5441
      %v5443 = vpop.f32.mrb[0].mxu0
      %v5444 = vpop.f32.mrb[0].mxu0
      %v5445 = vadd.f32 0.0, %v5444
      %v5446 = vpop.f32.mrb[0].mxu0
      %5447 = vmatprep.mubr.bf16.mxu0 0
      %5448 = vmatmul.mubr.bf16.gmra.mrb[0].mxu0 %v5258
      %v5449 = vpop.f32.mrb[0].mxu0
      %v5450 = vadd.f32 0.0, %v5449
      %v5451 = vpop.f32.mrb[0].mxu0
      %v5452 = vpop.f32.mrb[0].mxu0
      %v5453 = vadd.f32 0.0, %v5452
      %v5454 = vpop.f32.mrb[0].mxu0
      %5455 = vmatprep.mubr.bf16.mxu0 0
      %5456 = vmatmul.mubr.bf16.gmra.mrb[0].mxu0 %v5259
      %v5457 = vpop.f32.mrb[0].mxu0
      %v5458 = vadd.f32 0.0, %v5457
      %v5459 = vpop.f32.mrb[0].mxu0
      %v5460 = vpop.f32.mrb[0].mxu0
      %v5461 = vadd.f32 0.0, %v5460
      %v5462 = vpop.f32.mrb[0].mxu0
      %5463 = vmatprep.mubr.bf16.mxu0 0
      %5464 = vmatmul.mubr.bf16.gmra.mrb[0].mxu0 %v5260
      %v5465 = vpop.f32.mrb[0].mxu0
      %v5466 = vadd.f32 0.0, %v5465
      %v5467 = vpop.f32.mrb[0].mxu0
      %v5468 = vpop.f32.mrb[0].mxu0
      %v5469 = vadd.f32 0.0, %v5468
      %v5470 = vpop.f32.mrb[0].mxu0
      %5471 = vmatprep.mubr.bf16.mxu0 0
      %5472 = vmatmul.mubr.bf16.gmra.mrb[0].mxu0 %v5261
      %v5473 = vpop.f32.mrb[0].mxu0
      %v5474 = vadd.f32 0.0, %v5473
      %v5475 = vpop.f32.mrb[0].mxu0
      %v5476 = vpop.f32.mrb[0].mxu0
      %v5477 = vadd.f32 0.0, %v5476
      %v5478 = vpop.f32.mrb[0].mxu0
      %5479 = vmatprep.mubr.bf16.mxu0 0
      %5480 = vmatmul.mubr.bf16.gmra.mrb[0].mxu0 %v5262
      %v5481 = vpop.f32.mrb[0].mxu0
      %v5482 = vadd.f32 0.0, %v5481
      %v5483 = vpop.f32.mrb[0].mxu0
      %v5484 = vpop.f32.mrb[0].mxu0
      %v5485 = vadd.f32 0.0, %v5484
      %v5486 = vpop.f32.mrb[0].mxu0
      %5487 = vdwg.mxu0
      %v5488 = vadd.f32 %v4990, %v5362
      %v5489 = vadd.f32 %v4991, %v5365
      %v5490 = vadd.f32 %v4992, %v5370
      %v5491 = vadd.f32 %v4993, %v5373
      %v5492 = vadd.f32 %v4994, %v5378
      %v5493 = vadd.f32 %v4995, %v5381
      %v5494 = vadd.f32 %v4996, %v5386
      %v5495 = vadd.f32 %v4997, %v5389
      %v5496 = vadd.f32 %v4998, %v5394
      %v5497 = vadd.f32 %v4999, %v5397
      %v5498 = vadd.f32 %v5000, %v5402
      %v5499 = vadd.f32 %v5001, %v5405
      %v5500 = vadd.f32 %v5002, %v5410
      %v5501 = vadd.f32 %v5003, %v5413
      %v5502 = vadd.f32 %v5004, %v5418
      %v5503 = vadd.f32 %v5005, %v5421
      %v5504 = vadd.f32 %v5006, %v5426
      %v5505 = vadd.f32 %v5007, %v5429
      %v5506 = vadd.f32 %v5008, %v5434
      %v5507 = vadd.f32 %v5009, %v5437
      %v5508 = vadd.f32 %v5010, %v5442
      %v5509 = vadd.f32 %v5011, %v5445
      %v5510 = vadd.f32 %v5012, %v5450
      %v5511 = vadd.f32 %v5013, %v5453
      %v5512 = vadd.f32 %v5014, %v5458
      %v5513 = vadd.f32 %v5015, %v5461
      %v5514 = vadd.f32 %v5016, %v5466
      %v5515 = vadd.f32 %v5017, %v5469
      %v5516 = vadd.f32 %v5018, %v5474
      %v5517 = vadd.f32 %v5019, %v5477
      %v5518 = vadd.f32 %v5020, %v5482
      %v5519 = vadd.f32 %v5021, %v5485
      %v5520 = vpack.c.bf16 %v5489, %v5488
      %v5521 = vpack.c.bf16 %v5491, %v5490
      %v5522 = vpack.c.bf16 %v5493, %v5492
      %v5523 = vpack.c.bf16 %v5495, %v5494
      %v5524 = vpack.c.bf16 %v5497, %v5496
      %v5525 = vpack.c.bf16 %v5499, %v5498
      %v5526 = vpack.c.bf16 %v5501, %v5500
      %v5527 = vpack.c.bf16 %v5503, %v5502
      %v5528 = vpack.c.bf16 %v5505, %v5504
      %v5529 = vpack.c.bf16 %v5507, %v5506
      %v5530 = vpack.c.bf16 %v5509, %v5508
      %v5531 = vpack.c.bf16 %v5511, %v5510
      %v5532 = vpack.c.bf16 %v5513, %v5512
      %v5533 = vpack.c.bf16 %v5515, %v5514
      %v5534 = vpack.c.bf16 %v5517, %v5516
      %v5535 = vpack.c.bf16 %v5519, %v5518
      %v5552 = vunpack.c.l.b16 %v5520
      %v5553 = vunpack.c.h.b16 %v5520
      %v5554 = vunpack.c.l.b16 %v5521
      %v5555 = vunpack.c.h.b16 %v5521
      %v5556 = vunpack.c.l.b16 %v5522
      %v5557 = vunpack.c.h.b16 %v5522
      %v5558 = vunpack.c.l.b16 %v5523
      %v5559 = vunpack.c.h.b16 %v5523
      %v5560 = vunpack.c.l.b16 %v5524
      %v5561 = vunpack.c.h.b16 %v5524
      %v5562 = vunpack.c.l.b16 %v5525
      %v5563 = vunpack.c.h.b16 %v5525
      %v5564 = vunpack.c.l.b16 %v5526
      %v5565 = vunpack.c.h.b16 %v5526
      %v5566 = vunpack.c.l.b16 %v5527
      %v5567 = vunpack.c.h.b16 %v5527
      %v5568 = vunpack.c.l.b16 %v5528
      %v5569 = vunpack.c.h.b16 %v5528
      %v5570 = vunpack.c.l.b16 %v5529
      %v5571 = vunpack.c.h.b16 %v5529
      %v5572 = vunpack.c.l.b16 %v5530
      %v5573 = vunpack.c.h.b16 %v5530
      %v5574 = vunpack.c.l.b16 %v5531
      %v5575 = vunpack.c.h.b16 %v5531
      %v5576 = vunpack.c.l.b16 %v5532
      %v5577 = vunpack.c.h.b16 %v5532
      %v5578 = vunpack.c.l.b16 %v5533
      %v5579 = vunpack.c.h.b16 %v5533
      %v5580 = vunpack.c.l.b16 %v5534
      %v5581 = vunpack.c.h.b16 %v5534
      %v5582 = vunpack.c.l.b16 %v5535
      %v5583 = vunpack.c.h.b16 %v5535
      %v5584 = vpack.c.b16 %v5552, %v5552
      %v5585 = vpack.c.b16 %v5553, %v5553
      %v5586 = vpack.c.b16 %v5554, %v5554
      %v5587 = vpack.c.b16 %v5555, %v5555
      %v5588 = vpack.c.b16 %v5556, %v5556
      %v5589 = vpack.c.b16 %v5557, %v5557
      %v5590 = vpack.c.b16 %v5558, %v5558
      %v5591 = vpack.c.b16 %v5559, %v5559
      %v5592 = vpack.c.b16 %v5560, %v5560
      %v5593 = vpack.c.b16 %v5561, %v5561
      %v5594 = vpack.c.b16 %v5562, %v5562
      %v5595 = vpack.c.b16 %v5563, %v5563
      %v5596 = vpack.c.b16 %v5564, %v5564
      %v5597 = vpack.c.b16 %v5565, %v5565
      %v5598 = vpack.c.b16 %v5566, %v5566
      %v5599 = vpack.c.b16 %v5567, %v5567
      %v5600 = vpack.c.b16 %v5568, %v5568
      %v5601 = vpack.c.b16 %v5569, %v5569
      %v5602 = vpack.c.b16 %v5570, %v5570
      %v5603 = vpack.c.b16 %v5571, %v5571
      %v5604 = vpack.c.b16 %v5572, %v5572
      %v5605 = vpack.c.b16 %v5573, %v5573
      %v5606 = vpack.c.b16 %v5574, %v5574
      %v5607 = vpack.c.b16 %v5575, %v5575
      %v5608 = vpack.c.b16 %v5576, %v5576
      %v5609 = vpack.c.b16 %v5577, %v5577
      %v5610 = vpack.c.b16 %v5578, %v5578
      %v5611 = vpack.c.b16 %v5579, %v5579
      %v5612 = vpack.c.b16 %v5580, %v5580
      %v5613 = vpack.c.b16 %v5581, %v5581
      %v5614 = vpack.c.b16 %v5582, %v5582
      %v5615 = vpack.c.b16 %v5583, %v5583
      %5648 = vst [vmem:[%s177] sm:$0xf] %v5584
      %5649 = vst [vmem:[%s177 + $0x4] sm:$0xf] %v5585
      %5650 = vst [vmem:[%s177 + $0x8] sm:$0xf] %v5586
      %5651 = vst [vmem:[%s177 + $0xc] sm:$0xf] %v5587
      %5652 = vst [vmem:[%s177 + $0x10] sm:$0xf] %v5588
      %5653 = vst [vmem:[%s177 + $0x14] sm:$0xf] %v5589
      %5654 = vst [vmem:[%s177 + $0x18] sm:$0xf] %v5590
      %5655 = vst [vmem:[%s177 + $0x1c] sm:$0xf] %v5591
      %5656 = vst [vmem:[%s177 + $0x20] sm:$0xf] %v5592
      %5657 = vst [vmem:[%s177 + $0x24] sm:$0xf] %v5593
      %5658 = vst [vmem:[%s177 + $0x28] sm:$0xf] %v5594
      %5659 = vst [vmem:[%s177 + $0x2c] sm:$0xf] %v5595
      %5660 = vst [vmem:[%s177 + $0x30] sm:$0xf] %v5596
      %5661 = vst [vmem:[%s177 + $0x34] sm:$0xf] %v5597
      %5662 = vst [vmem:[%s177 + $0x38] sm:$0xf] %v5598
      %5663 = vst [vmem:[%s177 + $0x3c] sm:$0xf] %v5599
      %5664 = vst [vmem:[%s177 + $0x40] sm:$0xf] %v5600
      %5665 = vst [vmem:[%s177 + $0x44] sm:$0xf] %v5601
      %5666 = vst [vmem:[%s177 + $0x48] sm:$0xf] %v5602
      %5667 = vst [vmem:[%s177 + $0x4c] sm:$0xf] %v5603
      %5668 = vst [vmem:[%s177 + $0x50] sm:$0xf] %v5604
      %5669 = vst [vmem:[%s177 + $0x54] sm:$0xf] %v5605
      %5670 = vst [vmem:[%s177 + $0x58] sm:$0xf] %v5606
      %5671 = vst [vmem:[%s177 + $0x5c] sm:$0xf] %v5607
      %5672 = vst [vmem:[%s177 + $0x60] sm:$0xf] %v5608
      %5673 = vst [vmem:[%s177 + $0x64] sm:$0xf] %v5609
      %5674 = vst [vmem:[%s177 + $0x68] sm:$0xf] %v5610
      %5675 = vst [vmem:[%s177 + $0x6c] sm:$0xf] %v5611
      %5676 = vst [vmem:[%s177 + $0x70] sm:$0xf] %v5612
      %5677 = vst [vmem:[%s177 + $0x74] sm:$0xf] %v5613
      %5678 = vst [vmem:[%s177 + $0x78] sm:$0xf] %v5614
      %5679 = vst [vmem:[%s177 + $0x7c] sm:$0xf] %v5615
      %v5680 = vadd.f32 %v5488, %v5489
      %v5681 = vadd.f32 %v5680, %v5490
      %v5682 = vadd.f32 %v5681, %v5491
      %v5683 = vadd.f32 %v5682, %v5492
      %v5684 = vadd.f32 %v5683, %v5493
      %v5685 = vadd.f32 %v5684, %v5494
      %v5686 = vadd.f32 %v5685, %v5495
      %v5687 = vadd.f32 %v5686, %v5496
      %v5688 = vadd.f32 %v5687, %v5497
      %v5689 = vadd.f32 %v5688, %v5498
      %v5690 = vadd.f32 %v5689, %v5499
      %v5691 = vadd.f32 %v5690, %v5500
      %v5692 = vadd.f32 %v5691, %v5501
      %v5693 = vadd.f32 %v5692, %v5502
      %v5694 = vadd.f32 %v5693, %v5503
      %v5695 = vadd.f32 %v5694, %v5504
      %v5696 = vadd.f32 %v5695, %v5505
      %v5697 = vadd.f32 %v5696, %v5506
      %v5698 = vadd.f32 %v5697, %v5507
      %v5699 = vadd.f32 %v5698, %v5508
      %v5700 = vadd.f32 %v5699, %v5509
      %v5701 = vadd.f32 %v5700, %v5510
      %v5702 = vadd.f32 %v5701, %v5511
      %v5703 = vadd.f32 %v5702, %v5512
      %v5704 = vadd.f32 %v5703, %v5513
      %v5705 = vadd.f32 %v5704, %v5514
      %v5706 = vadd.f32 %v5705, %v5515
      %v5707 = vadd.f32 %v5706, %v5516
      %v5708 = vadd.f32 %v5707, %v5517
      %v5709 = vadd.f32 %v5708, %v5518
      %v5710 = vadd.f32 %v5709, %v5519
      %v5711 = vrot.slane %v5710, 4
      %v5712 = vadd.f32 %v5710, %v5711
      %v5713 = vrot.slane %v5712, 2
      %v5714 = vadd.f32 %v5712, %v5713
      %v5715 = vrot.slane %v5714, 1
      %v5716 = vadd.f32 %v5714, %v5715
      %v5717 = vmul.f32 %v5488, %v5488
      %v5718 = vmul.f32 %v5489, %v5489
      %v5719 = vmul.f32 %v5490, %v5490
      %v5720 = vmul.f32 %v5491, %v5491
      %v5721 = vmul.f32 %v5492, %v5492
      %v5722 = vmul.f32 %v5493, %v5493
      %v5723 = vmul.f32 %v5494, %v5494
      %v5724 = vmul.f32 %v5495, %v5495
      %v5725 = vmul.f32 %v5496, %v5496
      %v5726 = vmul.f32 %v5497, %v5497
      %v5727 = vmul.f32 %v5498, %v5498
      %v5728 = vmul.f32 %v5499, %v5499
      %v5729 = vmul.f32 %v5500, %v5500
      %v5730 = vmul.f32 %v5501, %v5501
      %v5731 = vmul.f32 %v5502, %v5502
      %v5732 = vmul.f32 %v5503, %v5503
      %v5733 = vmul.f32 %v5504, %v5504
      %v5734 = vmul.f32 %v5505, %v5505
      %v5735 = vmul.f32 %v5506, %v5506
      %v5736 = vmul.f32 %v5507, %v5507
      %v5737 = vmul.f32 %v5508, %v5508
      %v5738 = vmul.f32 %v5509, %v5509
      %v5739 = vmul.f32 %v5510, %v5510
      %v5740 = vmul.f32 %v5511, %v5511
      %v5741 = vmul.f32 %v5512, %v5512
      %v5742 = vmul.f32 %v5513, %v5513
      %v5743 = vmul.f32 %v5514, %v5514
      %v5744 = vmul.f32 %v5515, %v5515
      %v5745 = vmul.f32 %v5516, %v5516
      %v5746 = vmul.f32 %v5517, %v5517
      %v5747 = vmul.f32 %v5518, %v5518
      %v5748 = vmul.f32 %v5519, %v5519
      %v5749 = vadd.f32 %v5717, %v5718
      %v5750 = vadd.f32 %v5749, %v5719
      %v5751 = vadd.f32 %v5750, %v5720
      %v5752 = vadd.f32 %v5751, %v5721
      %v5753 = vadd.f32 %v5752, %v5722
      %v5754 = vadd.f32 %v5753, %v5723
      %v5755 = vadd.f32 %v5754, %v5724
      %v5756 = vadd.f32 %v5755, %v5725
      %v5757 = vadd.f32 %v5756, %v5726
      %v5758 = vadd.f32 %v5757, %v5727
      %v5759 = vadd.f32 %v5758, %v5728
      %v5760 = vadd.f32 %v5759, %v5729
      %v5761 = vadd.f32 %v5760, %v5730
      %v5762 = vadd.f32 %v5761, %v5731
      %v5763 = vadd.f32 %v5762, %v5732
      %v5764 = vadd.f32 %v5763, %v5733
      %v5765 = vadd.f32 %v5764, %v5734
      %v5766 = vadd.f32 %v5765, %v5735
      %v5767 = vadd.f32 %v5766, %v5736
      %v5768 = vadd.f32 %v5767, %v5737
      %v5769 = vadd.f32 %v5768, %v5738
      %v5770 = vadd.f32 %v5769, %v5739
      %v5771 = vadd.f32 %v5770, %v5740
      %v5772 = vadd.f32 %v5771, %v5741
      %v5773 = vadd.f32 %v5772, %v5742
      %v5774 = vadd.f32 %v5773, %v5743
      %v5775 = vadd.f32 %v5774, %v5744
      %v5776 = vadd.f32 %v5775, %v5745
      %v5777 = vadd.f32 %v5776, %v5746
      %v5778 = vadd.f32 %v5777, %v5747
      %v5779 = vadd.f32 %v5778, %v5748
      %v5780 = vrot.slane %v5779, 4
      %v5781 = vadd.f32 %v5779, %v5780
      %v5782 = vrot.slane %v5781, 2
      %v5783 = vadd.f32 %v5781, %v5782
      %v5784 = vrot.slane %v5783, 1
      %v5785 = vadd.f32 %v5783, %v5784
      %vm5786 = vcmask 1040384
      %v5787 = vsel %vm5786, %v5716, %v5785
      %5788 = vst [vmem:[%s181] sm:$0x3] %v5787
      %p5789 = scmp.lt.s32.totalorder %s15, 1
      %s5790 = scalar_select %p5789, %s15, 1
      %s5791 = smul.addr %s5790, 32
      %s5792 = smul.addr %s5791, 4
      %s5793 = scalar_lea.vmem %s2, %s5792
      %p5794 = scmp.lt.s32.totalorder %s15, 1
      %s5795 = scalar_select %p5794, %s15, 1
      %s5796 = smul.addr %s5795, 2
      %s5797 = scalar_lea.vmem %s3, %s5796
      // Predicated region
      $region29: #{res_block_forward.3} parent=27 // pred_check
        %p5798 = pneg %p80
      $region30: #{res_block_forward.3} parent=27 // pred_check_branch
        %5800 = sbr.rel (%p5798) target = $region32
      $region31: #{res_block_forward.3} parent=27 // pred_region
        _
      $region32: #{res_block_forward.3} parent=27 // pred_fallthru
        _
      // Predicated region
      $region33: #{res_block_forward.3} parent=27 // pred_check
        %p5801 = pneg %p106
      $region34: #{res_block_forward.3} parent=27 // pred_check_branch
        %5803 = sbr.rel (%p5801) target = $region36
      $region35: #{res_block_forward.3} parent=27 // pred_region
        _
      $region36: #{res_block_forward.3} parent=27 // pred_fallthru
        _
    $region28: #{res_block_forward.3} parent=5 // pred_fallthru
      _
    %p5804 = scmp.le.s32.totalorder 2, %s10
    // Predicated region
    $region37: #{res_block_forward.3} parent=5 // pred_check
      %p5805 = pneg %p5804
    $region38: #{res_block_forward.3} parent=5 // pred_check_branch
      %5807 = sbr.rel (%p5805) target = $region40
    $region39: #{res_block_forward.3} parent=5 // pred_region
      %s5808 = ssub.s32 %s10, 2
      // Predicated region
      $region41: #{res_block_forward.3} parent=39 // pred_check
        %p5809 = pneg %p86
      $region42: #{res_block_forward.3} parent=39 // pred_check_branch
        %5811 = sbr.rel (%p5809) target = $region44
      $region43: #{res_block_forward.3} parent=39 // pred_region
        %p5812 = scmp.lt.s32.totalorder %s16, 1
        %s5813 = scalar_select %p5812, %s16, 1
        %s5814 = smul.addr %s5813, 32
        %s5815 = smul.addr %s5814, 4
        %s5816 = scalar_lea.vmem %s2, %s5815
      $region44: #{res_block_forward.3} parent=39 // pred_fallthru
        _
      // Predicated region
      $region45: #{res_block_forward.3} parent=39 // pred_check
        %p5817 = pneg %p112
      $region46: #{res_block_forward.3} parent=39 // pred_check_branch
        %5819 = sbr.rel (%p5817) target = $region48
      $region47: #{res_block_forward.3} parent=39 // pred_region
        %p5820 = scmp.lt.s32.totalorder %s16, 1
        %s5821 = scalar_select %p5820, %s16, 1
        %s5822 = smul.addr %s5821, 2
        %s5823 = scalar_lea.vmem %s3, %s5822
      $region48: #{res_block_forward.3} parent=39 // pred_fallthru
        _
    $region40: #{res_block_forward.3} parent=5 // pred_fallthru
      _
  $region6: #{res_block_forward.3} parent=0 // loop_footer
    %s14 = sadd.s32 1, %s10
  $region7: #{res_block_forward.3} parent=0 // loop_footer_branch
    %9 = sbr.rel target = $region3
  $region8: #{res_block_forward.3} parent=0 // loop_exit
    _

// kernel: res_block_forward.4
$region0: #{res_block_forward.4}
  #allocation0 [shape = 'u32[]', space=smem, size = 0x4, offset = 0x4, fixed_abs, tag = 'smem constant byte address 0x4 - core index']
  #allocation1 [shape = 'u32[144,128]{1,0:T(1,128)}', space=vmem, size = 0x12000, scoped, tag = 'internal scratch']
  #allocation2 [shape = 'bf16[18,18,128]{2,1,0:T(8,128)(2,1)}', space=vmem, size = 0x1b000, scoped, tag = 'scratch operand']
  %s0 = inlined_call_operand.vmem [shape: bf16[2,16,16,128], index: 0, kind: input, shape index: {}]
  %s1 = inlined_call_operand.vmem [shape: f32[1,128], index: 1, kind: input, shape index: {}]
  %s2 = inlined_call_operand.vmem [shape: f32[1,128], index: 2, kind: input, shape index: {}]
  %s3 = inlined_call_operand.vmem [shape: bf16[3,3,128,128], index: 3, kind: input, shape index: {}]
  %s4 = inlined_call_operand.vmem [shape: bf16[2,16,16,128], index: 4, kind: output, shape index: {0}]
  %s5 = inlined_call_operand.vmem [shape: f32[2,2,128], index: 5, kind: output, shape index: {1}]
  %6 = xla_tuple %s4, %s5
  %s7 = sld [smem:[#allocation0]]
  $region57: #{res_block_forward.4} parent=0
    _
  %s9 = ssub.s32 1, %s7
  %s10 = scalar_select 0, %s9, %s7
  loop: start=0, step=1, limit=4
  $region2: #{res_block_forward.4} parent=0 // loop_pre_header
    _
  $region3: #{res_block_forward.4} parent=0 // loop_header
    %s12 = sphi 0, %s16
    %p13 = scmp.ge.s32.totalorder %s12, 4
    %s22 = sphi 0, %s24
    %s25 = sphi 0, %s22
    %s26 = sphi 0, %s25
    %s42 = sphi 0, %s26
    %s46 = sphi 0, %s46
    %s48 = sphi 0, %s46
    %s49 = sphi 0, %s48
    %s63 = sphi 0, %s49
    %s67 = sphi 0, %s67
    %s69 = sphi 0, %s67
    %s70 = sphi 0, %s69
    %s84 = sphi 0, %s70
    %s88 = sphi 0, %s88
    %s90 = sphi 0, %s88
    %s91 = sphi 0, %s90
    %s105 = sphi 0, %s91
    %s111 = sphi 0, %s113
    %s114 = sphi 0, %s111
    %s115 = sphi 0, %s114
    %s131 = sphi 0, %s115
    %s137 = sphi 0, %s139
    %s140 = sphi 0, %s137
    %s141 = sphi 0, %s140
    %s157 = sphi 0, %s141
  $region4: #{res_block_forward.4} parent=0 // loop_header_branch
    %15 = sbr.rel (%p13) target = $region8
  $region5: #{res_block_forward.4} parent=0 // loop_body
    %s17 = ssub.s32 %s12, 1
    %s18 = ssub.s32 %s12, 2
    %s19 = sadd.s32 %s12, 1
    %s20 = ssub.s32 %s12, %s19
    %p21 = scmp.eq.s32.totalorder %s20, 0
    %s23 = sadd.s32 %s22, 1
    %s24 = scalar_select %p21, %s22, %s23
    %p27 = pneg %p21
    %p28 = scmp.eq.s32.totalorder %s12, 1
    %p29 = por %p27, %p28
    %p30 = scmp.ne.s32.totalorder %s22, %s25
    %p31 = scmp.eq.s32.totalorder %s12, 0
    %p32 = por %p30, %p31
    %p33 = scmp.ne.s32.totalorder %s22, %s25
    %p34 = scmp.eq.s32.totalorder %s17, 1
    %p35 = por %p33, %p34
    %p36 = scmp.ne.s32.totalorder %s25, %s26
    %p37 = scmp.eq.s32.totalorder %s17, 0
    %p38 = por %p36, %p37
    %p39 = scmp.ne.s32.totalorder %s25, %s26
    %p40 = scmp.eq.s32.totalorder %s18, 1
    %p41 = por %p39, %p40
    %p43 = scmp.ne.s32.totalorder %s26, %s42
    %p44 = scmp.eq.s32.totalorder %s18, 0
    %p45 = por %p43, %p44
    %s47 = sadd.s32 %s46, 1
    %p50 = scmp.eq.s32.totalorder %s12, 1
    %p51 = scmp.ne.s32.totalorder %s46, %s48
    %p52 = scmp.eq.s32.totalorder %s12, 0
    %p53 = por %p51, %p52
    %p54 = scmp.ne.s32.totalorder %s46, %s48
    %p55 = scmp.eq.s32.totalorder %s17, 1
    %p56 = por %p54, %p55
    %p57 = scmp.ne.s32.totalorder %s48, %s49
    %p58 = scmp.eq.s32.totalorder %s17, 0
    %p59 = por %p57, %p58
    %p60 = scmp.ne.s32.totalorder %s48, %s49
    %p61 = scmp.eq.s32.totalorder %s18, 1
    %p62 = por %p60, %p61
    %p64 = scmp.ne.s32.totalorder %s49, %s63
    %p65 = scmp.eq.s32.totalorder %s18, 0
    %p66 = por %p64, %p65
    %s68 = sadd.s32 %s67, 1
    %p71 = scmp.eq.s32.totalorder %s12, 1
    %p72 = scmp.ne.s32.totalorder %s67, %s69
    %p73 = scmp.eq.s32.totalorder %s12, 0
    %p74 = por %p72, %p73
    %p75 = scmp.ne.s32.totalorder %s67, %s69
    %p76 = scmp.eq.s32.totalorder %s17, 1
    %p77 = por %p75, %p76
    %p78 = scmp.ne.s32.totalorder %s69, %s70
    %p79 = scmp.eq.s32.totalorder %s17, 0
    %p80 = por %p78, %p79
    %p81 = scmp.ne.s32.totalorder %s69, %s70
    %p82 = scmp.eq.s32.totalorder %s18, 1
    %p83 = por %p81, %p82
    %p85 = scmp.ne.s32.totalorder %s70, %s84
    %p86 = scmp.eq.s32.totalorder %s18, 0
    %p87 = por %p85, %p86
    %s89 = sadd.s32 %s88, 1
    %p92 = scmp.eq.s32.totalorder %s12, 1
    %p93 = scmp.ne.s32.totalorder %s88, %s90
    %p94 = scmp.eq.s32.totalorder %s12, 0
    %p95 = por %p93, %p94
    %p96 = scmp.ne.s32.totalorder %s88, %s90
    %p97 = scmp.eq.s32.totalorder %s17, 1
    %p98 = por %p96, %p97
    %p99 = scmp.ne.s32.totalorder %s90, %s91
    %p100 = scmp.eq.s32.totalorder %s17, 0
    %p101 = por %p99, %p100
    %p102 = scmp.ne.s32.totalorder %s90, %s91
    %p103 = scmp.eq.s32.totalorder %s18, 1
    %p104 = por %p102, %p103
    %p106 = scmp.ne.s32.totalorder %s91, %s105
    %p107 = scmp.eq.s32.totalorder %s18, 0
    %p108 = por %p106, %p107
    %s109 = ssub.s32 %s12, %s19
    %p110 = scmp.eq.s32.totalorder %s109, 0
    %s112 = sadd.s32 %s111, 1
    %s113 = scalar_select %p110, %s111, %s112
    %p116 = pneg %p110
    %p117 = scmp.eq.s32.totalorder %s12, 1
    %p118 = por %p116, %p117
    %p119 = scmp.ne.s32.totalorder %s111, %s114
    %p120 = scmp.eq.s32.totalorder %s12, 0
    %p121 = por %p119, %p120
    %p122 = scmp.ne.s32.totalorder %s111, %s114
    %p123 = scmp.eq.s32.totalorder %s17, 1
    %p124 = por %p122, %p123
    %p125 = scmp.ne.s32.totalorder %s114, %s115
    %p126 = scmp.eq.s32.totalorder %s17, 0
    %p127 = por %p125, %p126
    %p128 = scmp.ne.s32.totalorder %s114, %s115
    %p129 = scmp.eq.s32.totalorder %s18, 1
    %p130 = por %p128, %p129
    %p132 = scmp.ne.s32.totalorder %s115, %s131
    %p133 = scmp.eq.s32.totalorder %s18, 0
    %p134 = por %p132, %p133
    %s135 = ssub.s32 %s12, %s19
    %p136 = scmp.eq.s32.totalorder %s135, 0
    %s138 = sadd.s32 %s137, 1
    %s139 = scalar_select %p136, %s137, %s138
    %p142 = pneg %p136
    %p143 = scmp.eq.s32.totalorder %s12, 1
    %p144 = por %p142, %p143
    %p145 = scmp.ne.s32.totalorder %s137, %s140
    %p146 = scmp.eq.s32.totalorder %s12, 0
    %p147 = por %p145, %p146
    %p148 = scmp.ne.s32.totalorder %s137, %s140
    %p149 = scmp.eq.s32.totalorder %s17, 1
    %p150 = por %p148, %p149
    %p151 = scmp.ne.s32.totalorder %s140, %s141
    %p152 = scmp.eq.s32.totalorder %s17, 0
    %p153 = por %p151, %p152
    %p154 = scmp.ne.s32.totalorder %s140, %s141
    %p155 = scmp.eq.s32.totalorder %s18, 1
    %p156 = por %p154, %p155
    %p158 = scmp.ne.s32.totalorder %s141, %s157
    %p159 = scmp.eq.s32.totalorder %s18, 0
    %p160 = por %p158, %p159
    %p161 = scmp.le.s32.totalorder 1, %s12
    %p162 = scmp.lt.s32.totalorder %s12, 3
    %p163 = pnand %p161, %p162
    %p164 = pneg %p163
    // Predicated region
    $region9: #{res_block_forward.4} parent=5 // pred_check
      _
    $region10: #{res_block_forward.4} parent=5 // pred_check_branch
      %166 = sbr.rel (%p163) target = $region12
    $region11: #{res_block_forward.4} parent=5 // pred_region
      %s167 = ssub.s32 %s12, 1
      // Predicated region
      $region13: #{res_block_forward.4} parent=11 // pred_check
        %p168 = pneg %p59
      $region14: #{res_block_forward.4} parent=11 // pred_check_branch
        %170 = sbr.rel (%p168) target = $region16
      $region15: #{res_block_forward.4} parent=11 // pred_region
        _
      $region16: #{res_block_forward.4} parent=11 // pred_fallthru
        _
      // Predicated region
      $region17: #{res_block_forward.4} parent=11 // pred_check
        %p171 = pneg %p80
      $region18: #{res_block_forward.4} parent=11 // pred_check_branch
        %173 = sbr.rel (%p171) target = $region20
      $region19: #{res_block_forward.4} parent=11 // pred_region
        _
      $region20: #{res_block_forward.4} parent=11 // pred_fallthru
        _
      // Predicated region
      $region21: #{res_block_forward.4} parent=11 // pred_check
        %p174 = pneg %p101
      $region22: #{res_block_forward.4} parent=11 // pred_check_branch
        %176 = sbr.rel (%p174) target = $region24
      $region23: #{res_block_forward.4} parent=11 // pred_region
        _
      $region24: #{res_block_forward.4} parent=11 // pred_fallthru
        _
    $region12: #{res_block_forward.4} parent=5 // pred_fallthru
      _
    %p177 = scmp.lt.s32.totalorder %s12, 2
    // Predicated region
    $region25: #{res_block_forward.4} parent=5 // pred_check
      %p178 = pneg %p177
    $region26: #{res_block_forward.4} parent=5 // pred_check_branch
      %180 = sbr.rel (%p178) target = $region28
    $region27: #{res_block_forward.4} parent=5 // pred_region
      // Predicated region
      $region29: #{res_block_forward.4} parent=27 // pred_check
        %p181 = pneg %p32
      $region30: #{res_block_forward.4} parent=27 // pred_check_branch
        %183 = sbr.rel (%p181) target = $region32
      $region31: #{res_block_forward.4} parent=27 // pred_region
        %p184 = scmp.lt.s32.totalorder %s12, 1
        %s185 = scalar_select %p184, %s12, 1
        %s186 = smul.addr %s185, 32
        %s187 = smul.addr %s186, 4
        %s188 = scalar_lea.vmem %s0, %s187
      $region32: #{res_block_forward.4} parent=27 // pred_fallthru
        _
    $region28: #{res_block_forward.4} parent=5 // pred_fallthru
      _
    %p189 = scmp.le.s32.totalorder 1, %s12
    %p190 = scmp.lt.s32.totalorder %s12, 3
    %p191 = pnand %p189, %p190
    %p192 = pneg %p191
    // Predicated region
    $region33: #{res_block_forward.4} parent=5 // pred_check
      _
    $region34: #{res_block_forward.4} parent=5 // pred_check_branch
      %194 = sbr.rel (%p191) target = $region36
    $region35: #{res_block_forward.4} parent=5 // pred_region
      %s195 = ssub.s32 %s12, 1
      %p196 = scmp.lt.s32.totalorder %s17, 1
      %s197 = scalar_select %p196, %s17, 1
      %s198 = smul.addr %s197, 32
      %s199 = smul.addr %s198, 4
      %s200 = scalar_lea.vmem %s0, %s199
      %p201 = pneg %p38
      %p202 = pneg %p35
      %p203 = pneg %p59
      %p204 = pneg %p56
      %p205 = pneg %p80
      %p206 = pneg %p77
      %p207 = pneg %p101
      %p208 = pneg %p98
      %p209 = pneg %p127
      %p210 = pneg %p124
      %p211 = scmp.lt.s32.totalorder %s17, 1
      %s212 = scalar_select %p211, %s17, 1
      %s213 = smul.addr %s212, 32
      %s214 = smul.addr %s213, 4
      %s215 = scalar_lea.vmem %s4, %s214
      %p216 = pneg %p153
      %p217 = pneg %p150
      %p218 = scmp.lt.s32.totalorder %s17, 1
      %s219 = scalar_select %p218, %s17, 1
      %s220 = smul.addr %s219, 2
      %s221 = scalar_lea.vmem %s5, %s220
      %p222 = scmp.lt.s32.totalorder %s17, 1
      %s223 = scalar_select %p222, %s17, 1
      %s224 = smul.addr %s223, 32
      %s225 = smul.addr %s224, 4
      %s226 = scalar_lea.vmem %s0, %s225
      %p227 = scmp.lt.s32.totalorder %s17, 1
      %s228 = scalar_select %p227, %s17, 1
      %s229 = smul.addr %s228, 32
      %s230 = smul.addr %s229, 4
      %s231 = scalar_lea.vmem %s4, %s230
      %p232 = scmp.lt.s32.totalorder %s17, 1
      %s233 = scalar_select %p232, %s17, 1
      %s234 = smul.addr %s233, 2
      %s235 = scalar_lea.vmem %s5, %s234
      %v237 = vld [vmem:[%s226] sm:$0xf]
      %v238 = vld [vmem:[%s226 + $0x4] sm:$0xf]
      %v239 = vld [vmem:[%s226 + $0x8] sm:$0xf]
      %v240 = vld [vmem:[%s226 + $0xc] sm:$0xf]
      %v241 = vld [vmem:[%s226 + $0x10] sm:$0xf]
      %v242 = vld [vmem:[%s226 + $0x14] sm:$0xf]
      %v243 = vld [vmem:[%s226 + $0x18] sm:$0xf]
      %v244 = vld [vmem:[%s226 + $0x1c] sm:$0xf]
      %v245 = vld [vmem:[%s226 + $0x20] sm:$0xf]
      %v246 = vld [vmem:[%s226 + $0x24] sm:$0xf]
      %v247 = vld [vmem:[%s226 + $0x28] sm:$0xf]
      %v248 = vld [vmem:[%s226 + $0x2c] sm:$0xf]
      %v249 = vld [vmem:[%s226 + $0x30] sm:$0xf]
      %v250 = vld [vmem:[%s226 + $0x34] sm:$0xf]
      %v251 = vld [vmem:[%s226 + $0x38] sm:$0xf]
      %v252 = vld [vmem:[%s226 + $0x3c] sm:$0xf]
      %v253 = vld [vmem:[%s226 + $0x40] sm:$0xf]
      %v254 = vld [vmem:[%s226 + $0x44] sm:$0xf]
      %v255 = vld [vmem:[%s226 + $0x48] sm:$0xf]
      %v256 = vld [vmem:[%s226 + $0x4c] sm:$0xf]
      %v257 = vld [vmem:[%s226 + $0x50] sm:$0xf]
      %v258 = vld [vmem:[%s226 + $0x54] sm:$0xf]
      %v259 = vld [vmem:[%s226 + $0x58] sm:$0xf]
      %v260 = vld [vmem:[%s226 + $0x5c] sm:$0xf]
      %v261 = vld [vmem:[%s226 + $0x60] sm:$0xf]
      %v262 = vld [vmem:[%s226 + $0x64] sm:$0xf]
      %v263 = vld [vmem:[%s226 + $0x68] sm:$0xf]
      %v264 = vld [vmem:[%s226 + $0x6c] sm:$0xf]
      %v265 = vld [vmem:[%s226 + $0x70] sm:$0xf]
      %v266 = vld [vmem:[%s226 + $0x74] sm:$0xf]
      %v267 = vld [vmem:[%s226 + $0x78] sm:$0xf]
      %v268 = vld [vmem:[%s226 + $0x7c] sm:$0xf]
      %v269 = vunpack.c.l.bf16 %v237
      %v270 = vunpack.c.l.bf16 %v238
      %v271 = vunpack.c.l.bf16 %v239
      %v272 = vunpack.c.l.bf16 %v240
      %v273 = vunpack.c.l.bf16 %v241
      %v274 = vunpack.c.l.bf16 %v242
      %v275 = vunpack.c.l.bf16 %v243
      %v276 = vunpack.c.l.bf16 %v244
      %v277 = vunpack.c.l.bf16 %v245
      %v278 = vunpack.c.l.bf16 %v246
      %v279 = vunpack.c.l.bf16 %v247
      %v280 = vunpack.c.l.bf16 %v248
      %v281 = vunpack.c.l.bf16 %v249
      %v282 = vunpack.c.l.bf16 %v250
      %v283 = vunpack.c.l.bf16 %v251
      %v284 = vunpack.c.l.bf16 %v252
      %v285 = vunpack.c.l.bf16 %v253
      %v286 = vunpack.c.l.bf16 %v254
      %v287 = vunpack.c.l.bf16 %v255
      %v288 = vunpack.c.l.bf16 %v256
      %v289 = vunpack.c.l.bf16 %v257
      %v290 = vunpack.c.l.bf16 %v258
      %v291 = vunpack.c.l.bf16 %v259
      %v292 = vunpack.c.l.bf16 %v260
      %v293 = vunpack.c.l.bf16 %v261
      %v294 = vunpack.c.l.bf16 %v262
      %v295 = vunpack.c.l.bf16 %v263
      %v296 = vunpack.c.l.bf16 %v264
      %v297 = vunpack.c.l.bf16 %v265
      %v298 = vunpack.c.l.bf16 %v266
      %v299 = vunpack.c.l.bf16 %v267
      %v300 = vunpack.c.l.bf16 %v268
      %v301 = vld [vmem:[%s1] sm:$0x1]
      %v303 = vlaneseq
      %v304 = vshrl.u32 %v303, 7
      %v305 = vsub.s32 0, %v304
      %v306 = vrot.slane %v301, %v305
      %v308 = vmul.f32 %v269, %v306
      %v309 = vmul.f32 %v270, %v306
      %v310 = vmul.f32 %v271, %v306
      %v311 = vmul.f32 %v272, %v306
      %v312 = vmul.f32 %v273, %v306
      %v313 = vmul.f32 %v274, %v306
      %v314 = vmul.f32 %v275, %v306
      %v315 = vmul.f32 %v276, %v306
      %v316 = vmul.f32 %v277, %v306
      %v317 = vmul.f32 %v278, %v306
      %v318 = vmul.f32 %v279, %v306
      %v319 = vmul.f32 %v280, %v306
      %v320 = vmul.f32 %v281, %v306
      %v321 = vmul.f32 %v282, %v306
      %v322 = vmul.f32 %v283, %v306
      %v323 = vmul.f32 %v284, %v306
      %v324 = vmul.f32 %v285, %v306
      %v325 = vmul.f32 %v286, %v306
      %v326 = vmul.f32 %v287, %v306
      %v327 = vmul.f32 %v288, %v306
      %v328 = vmul.f32 %v289, %v306
      %v329 = vmul.f32 %v290, %v306
      %v330 = vmul.f32 %v291, %v306
      %v331 = vmul.f32 %v292, %v306
      %v332 = vmul.f32 %v293, %v306
      %v333 = vmul.f32 %v294, %v306
      %v334 = vmul.f32 %v295, %v306
      %v335 = vmul.f32 %v296, %v306
      %v336 = vmul.f32 %v297, %v306
      %v337 = vmul.f32 %v298, %v306
      %v338 = vmul.f32 %v299, %v306
      %v339 = vmul.f32 %v300, %v306
      %v340 = vld [vmem:[%s2] sm:$0x1]
      %v342 = vlaneseq
      %v343 = vshrl.u32 %v342, 7
      %v344 = vsub.s32 0, %v343
      %v345 = vrot.slane %v340, %v344
      %v347 = vadd.f32 %v308, %v345
      %v348 = vadd.f32 %v309, %v345
      %v349 = vadd.f32 %v310, %v345
      %v350 = vadd.f32 %v311, %v345
      %v351 = vadd.f32 %v312, %v345
      %v352 = vadd.f32 %v313, %v345
      %v353 = vadd.f32 %v314, %v345
      %v354 = vadd.f32 %v315, %v345
      %v355 = vadd.f32 %v316, %v345
      %v356 = vadd.f32 %v317, %v345
      %v357 = vadd.f32 %v318, %v345
      %v358 = vadd.f32 %v319, %v345
      %v359 = vadd.f32 %v320, %v345
      %v360 = vadd.f32 %v321, %v345
      %v361 = vadd.f32 %v322, %v345
      %v362 = vadd.f32 %v323, %v345
      %v363 = vadd.f32 %v324, %v345
      %v364 = vadd.f32 %v325, %v345
      %v365 = vadd.f32 %v326, %v345
      %v366 = vadd.f32 %v327, %v345
      %v367 = vadd.f32 %v328, %v345
      %v368 = vadd.f32 %v329, %v345
      %v369 = vadd.f32 %v330, %v345
      %v370 = vadd.f32 %v331, %v345
      %v371 = vadd.f32 %v332, %v345
      %v372 = vadd.f32 %v333, %v345
      %v373 = vadd.f32 %v334, %v345
      %v374 = vadd.f32 %v335, %v345
      %v375 = vadd.f32 %v336, %v345
      %v376 = vadd.f32 %v337, %v345
      %v377 = vadd.f32 %v338, %v345
      %v378 = vadd.f32 %v339, %v345
      %v379 = vmax.f32 %v347, 0.0
      %v380 = vmax.f32 %v348, 0.0
      %v381 = vmax.f32 %v349, 0.0
      %v382 = vmax.f32 %v350, 0.0
      %v383 = vmax.f32 %v351, 0.0
      %v384 = vmax.f32 %v352, 0.0
      %v385 = vmax.f32 %v353, 0.0
      %v386 = vmax.f32 %v354, 0.0
      %v387 = vmax.f32 %v355, 0.0
      %v388 = vmax.f32 %v356, 0.0
      %v389 = vmax.f32 %v357, 0.0
      %v390 = vmax.f32 %v358, 0.0
      %v391 = vmax.f32 %v359, 0.0
      %v392 = vmax.f32 %v360, 0.0
      %v393 = vmax.f32 %v361, 0.0
      %v394 = vmax.f32 %v362, 0.0
      %v395 = vmax.f32 %v363, 0.0
      %v396 = vmax.f32 %v364, 0.0
      %v397 = vmax.f32 %v365, 0.0
      %v398 = vmax.f32 %v366, 0.0
      %v399 = vmax.f32 %v367, 0.0
      %v400 = vmax.f32 %v368, 0.0
      %v401 = vmax.f32 %v369, 0.0
      %v402 = vmax.f32 %v370, 0.0
      %v403 = vmax.f32 %v371, 0.0
      %v404 = vmax.f32 %v372, 0.0
      %v405 = vmax.f32 %v373, 0.0
      %v406 = vmax.f32 %v374, 0.0
      %v407 = vmax.f32 %v375, 0.0
      %v408 = vmax.f32 %v376, 0.0
      %v409 = vmax.f32 %v377, 0.0
      %v410 = vmax.f32 %v378, 0.0
      %v411 = vpack.c.bf16 %v380, %v379
      %v412 = vpack.c.bf16 %v382, %v381
      %v413 = vpack.c.bf16 %v384, %v383
      %v414 = vpack.c.bf16 %v386, %v385
      %v415 = vpack.c.bf16 %v388, %v387
      %v416 = vpack.c.bf16 %v390, %v389
      %v417 = vpack.c.bf16 %v392, %v391
      %v418 = vpack.c.bf16 %v394, %v393
      %v419 = vpack.c.bf16 %v396, %v395
      %v420 = vpack.c.bf16 %v398, %v397
      %v421 = vpack.c.bf16 %v400, %v399
      %v422 = vpack.c.bf16 %v402, %v401
      %v423 = vpack.c.bf16 %v404, %v403
      %v424 = vpack.c.bf16 %v406, %v405
      %v425 = vpack.c.bf16 %v408, %v407
      %v426 = vpack.c.bf16 %v410, %v409
      %v428 = vshrl.u32 %v411, 16
      %v430 = vrot.slane %v428, 7
      %v431 = vshll.u32 %v411, 16
      %v433 = vor.u32 %v430, %v431
      %v435 = vshrl.u32 %v412, 16
      %v437 = vrot.slane %v435, 7
      %v438 = vshll.u32 %v412, 16
      %v440 = vor.u32 %v437, %v438
      %v442 = vshrl.u32 %v413, 16
      %v444 = vrot.slane %v442, 7
      %v445 = vshll.u32 %v413, 16
      %v447 = vor.u32 %v444, %v445
      %v449 = vshrl.u32 %v414, 16
      %v451 = vrot.slane %v449, 7
      %v452 = vshll.u32 %v414, 16
      %v454 = vor.u32 %v451, %v452
      %v456 = vshrl.u32 %v415, 16
      %v458 = vrot.slane %v456, 7
      %v459 = vshll.u32 %v415, 16
      %v461 = vor.u32 %v458, %v459
      %v463 = vshrl.u32 %v416, 16
      %v465 = vrot.slane %v463, 7
      %v466 = vshll.u32 %v416, 16
      %v468 = vor.u32 %v465, %v466
      %v470 = vshrl.u32 %v417, 16
      %v472 = vrot.slane %v470, 7
      %v473 = vshll.u32 %v417, 16
      %v475 = vor.u32 %v472, %v473
      %v477 = vshrl.u32 %v418, 16
      %v479 = vrot.slane %v477, 7
      %v480 = vshll.u32 %v418, 16
      %v482 = vor.u32 %v479, %v480
      %v484 = vshrl.u32 %v419, 16
      %v486 = vrot.slane %v484, 7
      %v487 = vshll.u32 %v419, 16
      %v489 = vor.u32 %v486, %v487
      %v491 = vshrl.u32 %v420, 16
      %v493 = vrot.slane %v491, 7
      %v494 = vshll.u32 %v420, 16
      %v496 = vor.u32 %v493, %v494
      %v498 = vshrl.u32 %v421, 16
      %v500 = vrot.slane %v498, 7
      %v501 = vshll.u32 %v421, 16
      %v503 = vor.u32 %v500, %v501
      %v505 = vshrl.u32 %v422, 16
      %v507 = vrot.slane %v505, 7
      %v508 = vshll.u32 %v422, 16
      %v510 = vor.u32 %v507, %v508
      %v512 = vshrl.u32 %v423, 16
      %v514 = vrot.slane %v512, 7
      %v515 = vshll.u32 %v423, 16
      %v517 = vor.u32 %v514, %v515
      %v519 = vshrl.u32 %v424, 16
      %v521 = vrot.slane %v519, 7
      %v522 = vshll.u32 %v424, 16
      %v524 = vor.u32 %v521, %v522
      %v526 = vshrl.u32 %v425, 16
      %v528 = vrot.slane %v526, 7
      %v529 = vshll.u32 %v425, 16
      %v531 = vor.u32 %v528, %v529
      %v533 = vshrl.u32 %v426, 16
      %v535 = vrot.slane %v533, 7
      %v536 = vshll.u32 %v426, 16
      %v538 = vor.u32 %v535, %v536
      %vm571 = vcmask 1040384
      %vm572 = vsmask.f32 256
      %vm573 = vmand %vm571, %vm572
      %v574 = vsel %vm573, 0, %v433
      %v575 = vsel %vm573, 0, %v440
      %v576 = vsel %vm573, 0, %v447
      %v577 = vsel %vm573, 0, %v454
      %v578 = vsel %vm573, 0, %v461
      %v579 = vsel %vm573, 0, %v468
      %v580 = vsel %vm573, 0, %v475
      %v581 = vsel %vm573, 0, %v482
      %v582 = vsel %vm573, 0, %v489
      %v583 = vsel %vm573, 0, %v496
      %v584 = vsel %vm573, 0, %v503
      %v585 = vsel %vm573, 0, %v510
      %v586 = vsel %vm573, 0, %v517
      %v587 = vsel %vm573, 0, %v524
      %v588 = vsel %vm573, 0, %v531
      %v589 = vsel %vm573, 0, %v538
      %v590 = vsel %vm573, %v430, 0
      %v591 = vsel %vm573, %v437, 0
      %v592 = vsel %vm573, %v444, 0
      %v593 = vsel %vm573, %v451, 0
      %v594 = vsel %vm573, %v458, 0
      %v595 = vsel %vm573, %v465, 0
      %v596 = vsel %vm573, %v472, 0
      %v597 = vsel %vm573, %v479, 0
      %v598 = vsel %vm573, %v486, 0
      %v599 = vsel %vm573, %v493, 0
      %v600 = vsel %vm573, %v500, 0
      %v601 = vsel %vm573, %v507, 0
      %v602 = vsel %vm573, %v514, 0
      %v603 = vsel %vm573, %v521, 0
      %v604 = vsel %vm573, %v528, 0
      %v605 = vsel %vm573, %v535, 0
      %v639 = vunpack.c.l.b16 0
      %v640 = vunpack.c.h.b16 0
      %v641 = vunpack.c.l.b16 %v574
      %v642 = vunpack.c.h.b16 %v574
      %v643 = vunpack.c.l.b16 %v590
      %v644 = vunpack.c.l.b16 %v575
      %v645 = vunpack.c.h.b16 %v575
      %v646 = vunpack.c.l.b16 %v591
      %v647 = vunpack.c.l.b16 %v576
      %v648 = vunpack.c.h.b16 %v576
      %v649 = vunpack.c.l.b16 %v592
      %v650 = vunpack.c.l.b16 %v577
      %v651 = vunpack.c.h.b16 %v577
      %v652 = vunpack.c.l.b16 %v593
      %v653 = vunpack.c.l.b16 %v578
      %v654 = vunpack.c.h.b16 %v578
      %v655 = vunpack.c.l.b16 %v594
      %v656 = vunpack.c.l.b16 %v579
      %v657 = vunpack.c.h.b16 %v579
      %v658 = vunpack.c.l.b16 %v595
      %v659 = vunpack.c.l.b16 %v580
      %v660 = vunpack.c.h.b16 %v580
      %v661 = vunpack.c.l.b16 %v596
      %v662 = vunpack.c.l.b16 %v581
      %v663 = vunpack.c.h.b16 %v581
      %v664 = vunpack.c.l.b16 %v597
      %v665 = vunpack.c.l.b16 %v582
      %v666 = vunpack.c.h.b16 %v582
      %v667 = vunpack.c.l.b16 %v598
      %v668 = vunpack.c.l.b16 %v583
      %v669 = vunpack.c.h.b16 %v583
      %v670 = vunpack.c.l.b16 %v599
      %v671 = vunpack.c.l.b16 %v584
      %v672 = vunpack.c.h.b16 %v584
      %v673 = vunpack.c.l.b16 %v600
      %v674 = vunpack.c.l.b16 %v585
      %v675 = vunpack.c.h.b16 %v585
      %v676 = vunpack.c.l.b16 %v601
      %v677 = vunpack.c.l.b16 %v586
      %v678 = vunpack.c.h.b16 %v586
      %v679 = vunpack.c.l.b16 %v602
      %v680 = vunpack.c.l.b16 %v587
      %v681 = vunpack.c.h.b16 %v587
      %v682 = vunpack.c.l.b16 %v603
      %v683 = vunpack.c.l.b16 %v588
      %v684 = vunpack.c.h.b16 %v588
      %v685 = vunpack.c.l.b16 %v604
      %v686 = vunpack.c.l.b16 %v589
      %v687 = vunpack.c.h.b16 %v589
      %v688 = vunpack.c.l.b16 %v605
      %v689 = vpack.c.b16 %v639, %v639
      %v690 = vpack.c.b16 %v640, %v640
      %v691 = vpack.c.b16 %v641, %v641
      %v692 = vpack.c.b16 %v642, %v642
      %v693 = vpack.c.b16 %v643, %v643
      %v694 = vpack.c.b16 %v644, %v644
      %v695 = vpack.c.b16 %v645, %v645
      %v696 = vpack.c.b16 %v646, %v646
      %v697 = vpack.c.b16 %v647, %v647
      %v698 = vpack.c.b16 %v648, %v648
      %v699 = vpack.c.b16 %v649, %v649
      %v700 = vpack.c.b16 %v650, %v650
      %v701 = vpack.c.b16 %v651, %v651
      %v702 = vpack.c.b16 %v652, %v652
      %v703 = vpack.c.b16 %v653, %v653
      %v704 = vpack.c.b16 %v654, %v654
      %v705 = vpack.c.b16 %v655, %v655
      %v706 = vpack.c.b16 %v656, %v656
      %v707 = vpack.c.b16 %v657, %v657
      %v708 = vpack.c.b16 %v658, %v658
      %v709 = vpack.c.b16 %v659, %v659
      %v710 = vpack.c.b16 %v660, %v660
      %v711 = vpack.c.b16 %v661, %v661
      %v712 = vpack.c.b16 %v662, %v662
      %v713 = vpack.c.b16 %v663, %v663
      %v714 = vpack.c.b16 %v664, %v664
      %v715 = vpack.c.b16 %v665, %v665
      %v716 = vpack.c.b16 %v666, %v666
      %v717 = vpack.c.b16 %v667, %v667
      %v718 = vpack.c.b16 %v668, %v668
      %v719 = vpack.c.b16 %v669, %v669
      %v720 = vpack.c.b16 %v670, %v670
      %v721 = vpack.c.b16 %v671, %v671
      %v722 = vpack.c.b16 %v672, %v672
      %v723 = vpack.c.b16 %v673, %v673
      %v724 = vpack.c.b16 %v674, %v674
      %v725 = vpack.c.b16 %v675, %v675
      %v726 = vpack.c.b16 %v676, %v676
      %v727 = vpack.c.b16 %v677, %v677
      %v728 = vpack.c.b16 %v678, %v678
      %v729 = vpack.c.b16 %v679, %v679
      %v730 = vpack.c.b16 %v680, %v680
      %v731 = vpack.c.b16 %v681, %v681
      %v732 = vpack.c.b16 %v682, %v682
      %v733 = vpack.c.b16 %v683, %v683
      %v734 = vpack.c.b16 %v684, %v684
      %v735 = vpack.c.b16 %v685, %v685
      %v736 = vpack.c.b16 %v686, %v686
      %v737 = vpack.c.b16 %v687, %v687
      %v738 = vpack.c.b16 %v688, %v688
      %789 = vst [vmem:[#allocation2] sm:$0xf] %v689
      %790 = vst [vmem:[#allocation2 + $0x4] sm:$0xf] %v690
      %791 = vst [vmem:[#allocation2 + $0x8] sm:$0x1] %v689
      %792 = vst [vmem:[#allocation2 + $0xc] sm:$0xf] %v691
      %793 = vst [vmem:[#allocation2 + $0x10] sm:$0xf] %v692
      %794 = vst [vmem:[#allocation2 + $0x14] sm:$0x1] %v693
      %795 = vst [vmem:[#allocation2 + $0x18] sm:$0xf] %v694
      %796 = vst [vmem:[#allocation2 + $0x1c] sm:$0xf] %v695
      %797 = vst [vmem:[#allocation2 + $0x20] sm:$0x1] %v696
      %798 = vst [vmem:[#allocation2 + $0x24] sm:$0xf] %v697
      %799 = vst [vmem:[#allocation2 + $0x28] sm:$0xf] %v698
      %800 = vst [vmem:[#allocation2 + $0x2c] sm:$0x1] %v699
      %801 = vst [vmem:[#allocation2 + $0x30] sm:$0xf] %v700
      %802 = vst [vmem:[#allocation2 + $0x34] sm:$0xf] %v701
      %803 = vst [vmem:[#allocation2 + $0x38] sm:$0x1] %v702
      %804 = vst [vmem:[#allocation2 + $0x3c] sm:$0xf] %v703
      %805 = vst [vmem:[#allocation2 + $0x40] sm:$0xf] %v704
      %806 = vst [vmem:[#allocation2 + $0x44] sm:$0x1] %v705
      %807 = vst [vmem:[#allocation2 + $0x48] sm:$0xf] %v706
      %808 = vst [vmem:[#allocation2 + $0x4c] sm:$0xf] %v707
      %809 = vst [vmem:[#allocation2 + $0x50] sm:$0x1] %v708
      %810 = vst [vmem:[#allocation2 + $0x54] sm:$0xf] %v709
      %811 = vst [vmem:[#allocation2 + $0x58] sm:$0xf] %v710
      %812 = vst [vmem:[#allocation2 + $0x5c] sm:$0x1] %v711
      %813 = vst [vmem:[#allocation2 + $0x60] sm:$0xf] %v712
      %814 = vst [vmem:[#allocation2 + $0x64] sm:$0xf] %v713
      %815 = vst [vmem:[#allocation2 + $0x68] sm:$0x1] %v714
      %816 = vst [vmem:[#allocation2 + $0x6c] sm:$0xf] %v715
      %817 = vst [vmem:[#allocation2 + $0x70] sm:$0xf] %v716
      %818 = vst [vmem:[#allocation2 + $0x74] sm:$0x1] %v717
      %819 = vst [vmem:[#allocation2 + $0x78] sm:$0xf] %v718
      %820 = vst [vmem:[#allocation2 + $0x7c] sm:$0xf] %v719
      %821 = vst [vmem:[#allocation2 + $0x80] sm:$0x1] %v720
      %822 = vst [vmem:[#allocation2 + $0x84] sm:$0xf] %v721
      %823 = vst [vmem:[#allocation2 + $0x88] sm:$0xf] %v722
      %824 = vst [vmem:[#allocation2 + $0x8c] sm:$0x1] %v723
      %825 = vst [vmem:[#allocation2 + $0x90] sm:$0xf] %v724
      %826 = vst [vmem:[#allocation2 + $0x94] sm:$0xf] %v725
      %827 = vst [vmem:[#allocation2 + $0x98] sm:$0x1] %v726
      %828 = vst [vmem:[#allocation2 + $0x9c] sm:$0xf] %v727
      %829 = vst [vmem:[#allocation2 + $0xa0] sm:$0xf] %v728
      %830 = vst [vmem:[#allocation2 + $0xa4] sm:$0x1] %v729
      %831 = vst [vmem:[#allocation2 + $0xa8] sm:$0xf] %v730
      %832 = vst [vmem:[#allocation2 + $0xac] sm:$0xf] %v731
      %833 = vst [vmem:[#allocation2 + $0xb0] sm:$0x1] %v732
      %834 = vst [vmem:[#allocation2 + $0xb4] sm:$0xf] %v733
      %835 = vst [vmem:[#allocation2 + $0xb8] sm:$0xf] %v734
      %836 = vst [vmem:[#allocation2 + $0xbc] sm:$0x1] %v735
      %837 = vst [vmem:[#allocation2 + $0xc0] sm:$0xf] %v736
      %838 = vst [vmem:[#allocation2 + $0xc4] sm:$0xf] %v737
      %839 = vst [vmem:[#allocation2 + $0xc8] sm:$0x1] %v738
      %840 = vst [vmem:[#allocation2 + $0xcc] sm:$0xf] %v689
      %841 = vst [vmem:[#allocation2 + $0xd0] sm:$0xf] %v690
      %842 = vst [vmem:[#allocation2 + $0xd4] sm:$0x1] %v689
      %v843 = vld [vmem:[#allocation2] sm:$0xf]
      %v844 = vld [vmem:[#allocation2 + $0x4] sm:$0xf]
      %v845 = vld [vmem:[#allocation2 + $0xc] sm:$0xf]
      %v846 = vld [vmem:[#allocation2 + $0x10] sm:$0xf]
      %v847 = vld [vmem:[#allocation2 + $0x18] sm:$0xf]
      %v848 = vld [vmem:[#allocation2 + $0x1c] sm:$0xf]
      %v849 = vld [vmem:[#allocation2 + $0x24] sm:$0xf]
      %v850 = vld [vmem:[#allocation2 + $0x28] sm:$0xf]
      %v851 = vld [vmem:[#allocation2 + $0x30] sm:$0xf]
      %v852 = vld [vmem:[#allocation2 + $0x34] sm:$0xf]
      %v853 = vld [vmem:[#allocation2 + $0x3c] sm:$0xf]
      %v854 = vld [vmem:[#allocation2 + $0x40] sm:$0xf]
      %v855 = vld [vmem:[#allocation2 + $0x48] sm:$0xf]
      %v856 = vld [vmem:[#allocation2 + $0x4c] sm:$0xf]
      %v857 = vld [vmem:[#allocation2 + $0x54] sm:$0xf]
      %v858 = vld [vmem:[#allocation2 + $0x58] sm:$0xf]
      %v859 = vld [vmem:[#allocation2 + $0x60] sm:$0xf]
      %v860 = vld [vmem:[#allocation2 + $0x64] sm:$0xf]
      %v861 = vld [vmem:[#allocation2 + $0x6c] sm:$0xf]
      %v862 = vld [vmem:[#allocation2 + $0x70] sm:$0xf]
      %v863 = vld [vmem:[#allocation2 + $0x78] sm:$0xf]
      %v864 = vld [vmem:[#allocation2 + $0x7c] sm:$0xf]
      %v865 = vld [vmem:[#allocation2 + $0x84] sm:$0xf]
      %v866 = vld [vmem:[#allocation2 + $0x88] sm:$0xf]
      %v867 = vld [vmem:[#allocation2 + $0x90] sm:$0xf]
      %v868 = vld [vmem:[#allocation2 + $0x94] sm:$0xf]
      %v869 = vld [vmem:[#allocation2 + $0x9c] sm:$0xf]
      %v870 = vld [vmem:[#allocation2 + $0xa0] sm:$0xf]
      %v871 = vld [vmem:[#allocation2 + $0xa8] sm:$0xf]
      %v872 = vld [vmem:[#allocation2 + $0xac] sm:$0xf]
      %v873 = vld [vmem:[#allocation2 + $0xb4] sm:$0xf]
      %v874 = vld [vmem:[#allocation2 + $0xb8] sm:$0xf]
      %v875 = vld [vmem:[%s3] sm:$0xf]
      %v876 = vld [vmem:[%s3 + $0x4] sm:$0xf]
      %v877 = vld [vmem:[%s3 + $0x8] sm:$0xf]
      %v878 = vld [vmem:[%s3 + $0xc] sm:$0xf]
      %v879 = vld [vmem:[%s3 + $0x10] sm:$0xf]
      %v880 = vld [vmem:[%s3 + $0x14] sm:$0xf]
      %v881 = vld [vmem:[%s3 + $0x18] sm:$0xf]
      %v882 = vld [vmem:[%s3 + $0x1c] sm:$0xf]
      %v883 = vld [vmem:[%s3 + $0x20] sm:$0xf]
      %v884 = vld [vmem:[%s3 + $0x24] sm:$0xf]
      %v885 = vld [vmem:[%s3 + $0x28] sm:$0xf]
      %v886 = vld [vmem:[%s3 + $0x2c] sm:$0xf]
      %v887 = vld [vmem:[%s3 + $0x30] sm:$0xf]
      %v888 = vld [vmem:[%s3 + $0x34] sm:$0xf]
      %v889 = vld [vmem:[%s3 + $0x38] sm:$0xf]
      %v890 = vld [vmem:[%s3 + $0x3c] sm:$0xf]
      %v891 = vld [vmem:[#allocation2 + $0x8] sm:$0x1]
      %v892 = vld [vmem:[#allocation2 + $0x14] sm:$0x1]
      %v893 = vld [vmem:[#allocation2 + $0x20] sm:$0x1]
      %v894 = vld [vmem:[#allocation2 + $0x2c] sm:$0x1]
      %v895 = vld [vmem:[#allocation2 + $0x38] sm:$0x1]
      %v896 = vld [vmem:[#allocation2 + $0x44] sm:$0x1]
      %v897 = vld [vmem:[#allocation2 + $0x50] sm:$0x1]
      %v898 = vld [vmem:[#allocation2 + $0x5c] sm:$0x1]
      %v899 = vld [vmem:[#allocation2 + $0x68] sm:$0x1]
      %v900 = vld [vmem:[#allocation2 + $0x74] sm:$0x1]
      %v901 = vld [vmem:[#allocation2 + $0x80] sm:$0x1]
      %v902 = vld [vmem:[#allocation2 + $0x8c] sm:$0x1]
      %v903 = vld [vmem:[#allocation2 + $0x98] sm:$0x1]
      %v904 = vld [vmem:[#allocation2 + $0xa4] sm:$0x1]
      %v905 = vld [vmem:[#allocation2 + $0xb0] sm:$0x1]
      %v906 = vld [vmem:[#allocation2 + $0xbc] sm:$0x1]
      %vm907 = vsmask.f32 3328
      %vm908 = vsmask.f32 7440
      %vm909 = vmor %vm907, %vm908
      %v911 = vshrl.u32 %v843, 16
      %v913 = vrot.slane %v911, 4
      %v914 = vshll.u32 %v843, 16
      %v916 = vrot.slane %v914, 5
      %v917 = vor.u32 %v913, %v916
      %v918 = vrot.slane %v917, 4
      %v920 = vshll.u32 %v844, 16
      %v922 = vrot.slane %v920, 5
      %v923 = vsel %vm909, %v918, %v922
      %v924 = vshrl.u32 %v844, 16
      %v926 = vrot.slane %v924, 4
      %v927 = vor.u32 %v926, %v922
      %v928 = vrot.slane %v927, 4
      %v930 = vshll.u32 %v891, 16
      %v932 = vrot.slane %v930, 5
      %v933 = vsel %vm909, %v928, %v932
      %v935 = vshrl.u32 %v845, 16
      %v937 = vrot.slane %v935, 4
      %v938 = vshll.u32 %v845, 16
      %v940 = vrot.slane %v938, 5
      %v941 = vor.u32 %v937, %v940
      %v942 = vrot.slane %v941, 4
      %v944 = vshll.u32 %v846, 16
      %v946 = vrot.slane %v944, 5
      %v947 = vsel %vm909, %v942, %v946
      %v948 = vshrl.u32 %v846, 16
      %v950 = vrot.slane %v948, 4
      %v951 = vor.u32 %v950, %v946
      %v952 = vrot.slane %v951, 4
      %v954 = vshll.u32 %v892, 16
      %v956 = vrot.slane %v954, 5
      %v957 = vsel %vm909, %v952, %v956
      %v959 = vshrl.u32 %v847, 16
      %v961 = vrot.slane %v959, 4
      %v962 = vshll.u32 %v847, 16
      %v964 = vrot.slane %v962, 5
      %v965 = vor.u32 %v961, %v964
      %v966 = vrot.slane %v965, 4
      %v968 = vshll.u32 %v848, 16
      %v970 = vrot.slane %v968, 5
      %v971 = vsel %vm909, %v966, %v970
      %v972 = vshrl.u32 %v848, 16
      %v974 = vrot.slane %v972, 4
      %v975 = vor.u32 %v974, %v970
      %v976 = vrot.slane %v975, 4
      %v978 = vshll.u32 %v893, 16
      %v980 = vrot.slane %v978, 5
      %v981 = vsel %vm909, %v976, %v980
      %v983 = vshrl.u32 %v849, 16
      %v985 = vrot.slane %v983, 4
      %v986 = vshll.u32 %v849, 16
      %v988 = vrot.slane %v986, 5
      %v989 = vor.u32 %v985, %v988
      %v990 = vrot.slane %v989, 4
      %v992 = vshll.u32 %v850, 16
      %v994 = vrot.slane %v992, 5
      %v995 = vsel %vm909, %v990, %v994
      %v996 = vshrl.u32 %v850, 16
      %v998 = vrot.slane %v996, 4
      %v999 = vor.u32 %v998, %v994
      %v1000 = vrot.slane %v999, 4
      %v1002 = vshll.u32 %v894, 16
      %v1004 = vrot.slane %v1002, 5
      %v1005 = vsel %vm909, %v1000, %v1004
      %v1007 = vshrl.u32 %v851, 16
      %v1009 = vrot.slane %v1007, 4
      %v1010 = vshll.u32 %v851, 16
      %v1012 = vrot.slane %v1010, 5
      %v1013 = vor.u32 %v1009, %v1012
      %v1014 = vrot.slane %v1013, 4
      %v1016 = vshll.u32 %v852, 16
      %v1018 = vrot.slane %v1016, 5
      %v1019 = vsel %vm909, %v1014, %v1018
      %v1020 = vshrl.u32 %v852, 16
      %v1022 = vrot.slane %v1020, 4
      %v1023 = vor.u32 %v1022, %v1018
      %v1024 = vrot.slane %v1023, 4
      %v1026 = vshll.u32 %v895, 16
      %v1028 = vrot.slane %v1026, 5
      %v1029 = vsel %vm909, %v1024, %v1028
      %v1031 = vshrl.u32 %v853, 16
      %v1033 = vrot.slane %v1031, 4
      %v1034 = vshll.u32 %v853, 16
      %v1036 = vrot.slane %v1034, 5
      %v1037 = vor.u32 %v1033, %v1036
      %v1038 = vrot.slane %v1037, 4
      %v1040 = vshll.u32 %v854, 16
      %v1042 = vrot.slane %v1040, 5
      %v1043 = vsel %vm909, %v1038, %v1042
      %v1044 = vshrl.u32 %v854, 16
      %v1046 = vrot.slane %v1044, 4
      %v1047 = vor.u32 %v1046, %v1042
      %v1048 = vrot.slane %v1047, 4
      %v1050 = vshll.u32 %v896, 16
      %v1052 = vrot.slane %v1050, 5
      %v1053 = vsel %vm909, %v1048, %v1052
      %v1055 = vshrl.u32 %v855, 16
      %v1057 = vrot.slane %v1055, 4
      %v1058 = vshll.u32 %v855, 16
      %v1060 = vrot.slane %v1058, 5
      %v1061 = vor.u32 %v1057, %v1060
      %v1062 = vrot.slane %v1061, 4
      %v1064 = vshll.u32 %v856, 16
      %v1066 = vrot.slane %v1064, 5
      %v1067 = vsel %vm909, %v1062, %v1066
      %v1068 = vshrl.u32 %v856, 16
      %v1070 = vrot.slane %v1068, 4
      %v1071 = vor.u32 %v1070, %v1066
      %v1072 = vrot.slane %v1071, 4
      %v1074 = vshll.u32 %v897, 16
      %v1076 = vrot.slane %v1074, 5
      %v1077 = vsel %vm909, %v1072, %v1076
      %v1079 = vshrl.u32 %v857, 16
      %v1081 = vrot.slane %v1079, 4
      %v1082 = vshll.u32 %v857, 16
      %v1084 = vrot.slane %v1082, 5
      %v1085 = vor.u32 %v1081, %v1084
      %v1086 = vrot.slane %v1085, 4
      %v1088 = vshll.u32 %v858, 16
      %v1090 = vrot.slane %v1088, 5
      %v1091 = vsel %vm909, %v1086, %v1090
      %v1092 = vshrl.u32 %v858, 16
      %v1094 = vrot.slane %v1092, 4
      %v1095 = vor.u32 %v1094, %v1090
      %v1096 = vrot.slane %v1095, 4
      %v1098 = vshll.u32 %v898, 16
      %v1100 = vrot.slane %v1098, 5
      %v1101 = vsel %vm909, %v1096, %v1100
      %v1103 = vshrl.u32 %v859, 16
      %v1105 = vrot.slane %v1103, 4
      %v1106 = vshll.u32 %v859, 16
      %v1108 = vrot.slane %v1106, 5
      %v1109 = vor.u32 %v1105, %v1108
      %v1110 = vrot.slane %v1109, 4
      %v1112 = vshll.u32 %v860, 16
      %v1114 = vrot.slane %v1112, 5
      %v1115 = vsel %vm909, %v1110, %v1114
      %v1116 = vshrl.u32 %v860, 16
      %v1118 = vrot.slane %v1116, 4
      %v1119 = vor.u32 %v1118, %v1114
      %v1120 = vrot.slane %v1119, 4
      %v1122 = vshll.u32 %v899, 16
      %v1124 = vrot.slane %v1122, 5
      %v1125 = vsel %vm909, %v1120, %v1124
      %v1127 = vshrl.u32 %v861, 16
      %v1129 = vrot.slane %v1127, 4
      %v1130 = vshll.u32 %v861, 16
      %v1132 = vrot.slane %v1130, 5
      %v1133 = vor.u32 %v1129, %v1132
      %v1134 = vrot.slane %v1133, 4
      %v1136 = vshll.u32 %v862, 16
      %v1138 = vrot.slane %v1136, 5
      %v1139 = vsel %vm909, %v1134, %v1138
      %v1140 = vshrl.u32 %v862, 16
      %v1142 = vrot.slane %v1140, 4
      %v1143 = vor.u32 %v1142, %v1138
      %v1144 = vrot.slane %v1143, 4
      %v1146 = vshll.u32 %v900, 16
      %v1148 = vrot.slane %v1146, 5
      %v1149 = vsel %vm909, %v1144, %v1148
      %v1151 = vshrl.u32 %v863, 16
      %v1153 = vrot.slane %v1151, 4
      %v1154 = vshll.u32 %v863, 16
      %v1156 = vrot.slane %v1154, 5
      %v1157 = vor.u32 %v1153, %v1156
      %v1158 = vrot.slane %v1157, 4
      %v1160 = vshll.u32 %v864, 16
      %v1162 = vrot.slane %v1160, 5
      %v1163 = vsel %vm909, %v1158, %v1162
      %v1164 = vshrl.u32 %v864, 16
      %v1166 = vrot.slane %v1164, 4
      %v1167 = vor.u32 %v1166, %v1162
      %v1168 = vrot.slane %v1167, 4
      %v1170 = vshll.u32 %v901, 16
      %v1172 = vrot.slane %v1170, 5
      %v1173 = vsel %vm909, %v1168, %v1172
      %v1175 = vshrl.u32 %v865, 16
      %v1177 = vrot.slane %v1175, 4
      %v1178 = vshll.u32 %v865, 16
      %v1180 = vrot.slane %v1178, 5
      %v1181 = vor.u32 %v1177, %v1180
      %v1182 = vrot.slane %v1181, 4
      %v1184 = vshll.u32 %v866, 16
      %v1186 = vrot.slane %v1184, 5
      %v1187 = vsel %vm909, %v1182, %v1186
      %v1188 = vshrl.u32 %v866, 16
      %v1190 = vrot.slane %v1188, 4
      %v1191 = vor.u32 %v1190, %v1186
      %v1192 = vrot.slane %v1191, 4
      %v1194 = vshll.u32 %v902, 16
      %v1196 = vrot.slane %v1194, 5
      %v1197 = vsel %vm909, %v1192, %v1196
      %v1199 = vshrl.u32 %v867, 16
      %v1201 = vrot.slane %v1199, 4
      %v1202 = vshll.u32 %v867, 16
      %v1204 = vrot.slane %v1202, 5
      %v1205 = vor.u32 %v1201, %v1204
      %v1206 = vrot.slane %v1205, 4
      %v1208 = vshll.u32 %v868, 16
      %v1210 = vrot.slane %v1208, 5
      %v1211 = vsel %vm909, %v1206, %v1210
      %v1212 = vshrl.u32 %v868, 16
      %v1214 = vrot.slane %v1212, 4
      %v1215 = vor.u32 %v1214, %v1210
      %v1216 = vrot.slane %v1215, 4
      %v1218 = vshll.u32 %v903, 16
      %v1220 = vrot.slane %v1218, 5
      %v1221 = vsel %vm909, %v1216, %v1220
      %v1223 = vshrl.u32 %v869, 16
      %v1225 = vrot.slane %v1223, 4
      %v1226 = vshll.u32 %v869, 16
      %v1228 = vrot.slane %v1226, 5
      %v1229 = vor.u32 %v1225, %v1228
      %v1230 = vrot.slane %v1229, 4
      %v1232 = vshll.u32 %v870, 16
      %v1234 = vrot.slane %v1232, 5
      %v1235 = vsel %vm909, %v1230, %v1234
      %v1236 = vshrl.u32 %v870, 16
      %v1238 = vrot.slane %v1236, 4
      %v1239 = vor.u32 %v1238, %v1234
      %v1240 = vrot.slane %v1239, 4
      %v1242 = vshll.u32 %v904, 16
      %v1244 = vrot.slane %v1242, 5
      %v1245 = vsel %vm909, %v1240, %v1244
      %v1247 = vshrl.u32 %v871, 16
      %v1249 = vrot.slane %v1247, 4
      %v1250 = vshll.u32 %v871, 16
      %v1252 = vrot.slane %v1250, 5
      %v1253 = vor.u32 %v1249, %v1252
      %v1254 = vrot.slane %v1253, 4
      %v1256 = vshll.u32 %v872, 16
      %v1258 = vrot.slane %v1256, 5
      %v1259 = vsel %vm909, %v1254, %v1258
      %v1260 = vshrl.u32 %v872, 16
      %v1262 = vrot.slane %v1260, 4
      %v1263 = vor.u32 %v1262, %v1258
      %v1264 = vrot.slane %v1263, 4
      %v1266 = vshll.u32 %v905, 16
      %v1268 = vrot.slane %v1266, 5
      %v1269 = vsel %vm909, %v1264, %v1268
      %v1271 = vshrl.u32 %v873, 16
      %v1273 = vrot.slane %v1271, 4
      %v1274 = vshll.u32 %v873, 16
      %v1276 = vrot.slane %v1274, 5
      %v1277 = vor.u32 %v1273, %v1276
      %v1278 = vrot.slane %v1277, 4
      %v1280 = vshll.u32 %v874, 16
      %v1282 = vrot.slane %v1280, 5
      %v1283 = vsel %vm909, %v1278, %v1282
      %v1284 = vshrl.u32 %v874, 16
      %v1286 = vrot.slane %v1284, 4
      %v1287 = vor.u32 %v1286, %v1282
      %v1288 = vrot.slane %v1287, 4
      %v1290 = vshll.u32 %v906, 16
      %v1292 = vrot.slane %v1290, 5
      %v1293 = vsel %vm909, %v1288, %v1292
      %s1294 = scalar_lea.vmem %s3, 64
      %v1295 = vld [vmem:[%s1294] sm:$0xf]
      %v1296 = vld [vmem:[%s1294 + $0x4] sm:$0xf]
      %v1297 = vld [vmem:[%s1294 + $0x8] sm:$0xf]
      %v1298 = vld [vmem:[%s1294 + $0xc] sm:$0xf]
      %v1299 = vld [vmem:[%s1294 + $0x10] sm:$0xf]
      %v1300 = vld [vmem:[%s1294 + $0x14] sm:$0xf]
      %v1301 = vld [vmem:[%s1294 + $0x18] sm:$0xf]
      %v1302 = vld [vmem:[%s1294 + $0x1c] sm:$0xf]
      %v1303 = vld [vmem:[%s1294 + $0x20] sm:$0xf]
      %v1304 = vld [vmem:[%s1294 + $0x24] sm:$0xf]
      %v1305 = vld [vmem:[%s1294 + $0x28] sm:$0xf]
      %v1306 = vld [vmem:[%s1294 + $0x2c] sm:$0xf]
      %v1307 = vld [vmem:[%s1294 + $0x30] sm:$0xf]
      %v1308 = vld [vmem:[%s1294 + $0x34] sm:$0xf]
      %v1309 = vld [vmem:[%s1294 + $0x38] sm:$0xf]
      %v1310 = vld [vmem:[%s1294 + $0x3c] sm:$0xf]
      %v1311 = vunpack.c.l.b16 %v923
      %v1312 = vunpack.c.l.b16 %v933
      %v1313 = vunpack.c.l.b16 %v947
      %v1314 = vunpack.c.l.b16 %v957
      %v1315 = vunpack.c.l.b16 %v971
      %v1316 = vunpack.c.l.b16 %v981
      %v1317 = vunpack.c.l.b16 %v995
      %v1318 = vunpack.c.l.b16 %v1005
      %v1319 = vunpack.c.l.b16 %v1019
      %v1320 = vunpack.c.l.b16 %v1029
      %v1321 = vunpack.c.l.b16 %v1043
      %v1322 = vunpack.c.l.b16 %v1053
      %v1323 = vunpack.c.l.b16 %v1067
      %v1324 = vunpack.c.l.b16 %v1077
      %v1325 = vunpack.c.l.b16 %v1091
      %v1326 = vunpack.c.l.b16 %v1101
      %v1327 = vunpack.c.l.b16 %v1115
      %v1328 = vunpack.c.l.b16 %v1125
      %v1329 = vunpack.c.l.b16 %v1139
      %v1330 = vunpack.c.l.b16 %v1149
      %v1331 = vunpack.c.l.b16 %v1163
      %v1332 = vunpack.c.l.b16 %v1173
      %v1333 = vunpack.c.l.b16 %v1187
      %v1334 = vunpack.c.l.b16 %v1197
      %v1335 = vunpack.c.l.b16 %v1211
      %v1336 = vunpack.c.l.b16 %v1221
      %v1337 = vunpack.c.l.b16 %v1235
      %v1338 = vunpack.c.l.b16 %v1245
      %v1339 = vunpack.c.l.b16 %v1259
      %v1340 = vunpack.c.l.b16 %v1269
      %v1341 = vunpack.c.l.b16 %v1283
      %v1342 = vunpack.c.l.b16 %v1293
      %v1343 = vpack.c.b16 %v1312, %v1311
      %v1344 = vpack.c.b16 %v1314, %v1313
      %v1345 = vpack.c.b16 %v1316, %v1315
      %v1346 = vpack.c.b16 %v1318, %v1317
      %v1347 = vpack.c.b16 %v1320, %v1319
      %v1348 = vpack.c.b16 %v1322, %v1321
      %v1349 = vpack.c.b16 %v1324, %v1323
      %v1350 = vpack.c.b16 %v1326, %v1325
      %v1351 = vpack.c.b16 %v1328, %v1327
      %v1352 = vpack.c.b16 %v1330, %v1329
      %v1353 = vpack.c.b16 %v1332, %v1331
      %v1354 = vpack.c.b16 %v1334, %v1333
      %v1355 = vpack.c.b16 %v1336, %v1335
      %v1356 = vpack.c.b16 %v1338, %v1337
      %v1357 = vpack.c.b16 %v1340, %v1339
      %v1358 = vpack.c.b16 %v1342, %v1341
      %v1391 = vunpack.c.l.b16 %v1295
      %v1392 = vunpack.c.l.b16 %v1296
      %v1393 = vunpack.c.l.b16 %v1297
      %v1394 = vunpack.c.l.b16 %v1298
      %v1395 = vunpack.c.l.b16 %v1299
      %v1396 = vunpack.c.l.b16 %v1300
      %v1397 = vunpack.c.l.b16 %v1301
      %v1398 = vunpack.c.l.b16 %v1302
      %v1399 = vunpack.c.l.b16 %v1303
      %v1400 = vunpack.c.l.b16 %v1304
      %v1401 = vunpack.c.l.b16 %v1305
      %v1402 = vunpack.c.l.b16 %v1306
      %v1403 = vunpack.c.l.b16 %v1307
      %v1404 = vunpack.c.l.b16 %v1308
      %v1405 = vunpack.c.l.b16 %v1309
      %v1406 = vunpack.c.l.b16 %v1310
      %v1407 = vpack.c.b16 %v1392, %v1391
      %v1408 = vpack.c.b16 %v1394, %v1393
      %v1409 = vpack.c.b16 %v1396, %v1395
      %v1410 = vpack.c.b16 %v1398, %v1397
      %v1411 = vpack.c.b16 %v1400, %v1399
      %v1412 = vpack.c.b16 %v1402, %v1401
      %v1413 = vpack.c.b16 %v1404, %v1403
      %v1414 = vpack.c.b16 %v1406, %v1405
      %1423 = vmatprep.subr.bf16.mxu0 0
      %1424 = vmatpush1.bf16.msra.mxu0 %v1407
      %1425 = vmatprep.subr.bf16.mxu0 0
      %1426 = vmatpush1.bf16.msra.mxu0 %v1408
      %1427 = vmatprep.subr.bf16.mxu0 0
      %1428 = vmatpush1.bf16.msra.mxu0 %v1409
      %1429 = vmatprep.subr.bf16.mxu0 0
      %1430 = vmatpush1.bf16.msra.mxu0 %v1410
      %1431 = vmatprep.subr.bf16.mxu0 0
      %1432 = vmatpush1.bf16.msra.mxu0 %v1411
      %1433 = vmatprep.subr.bf16.mxu0 0
      %1434 = vmatpush1.bf16.msra.mxu0 %v1412
      %1435 = vmatprep.subr.bf16.mxu0 0
      %1436 = vmatpush1.bf16.msra.mxu0 %v1413
      %1437 = vmatprep.subr.bf16.mxu0 0
      %1438 = vmatpush1.bf16.msra.mxu0 %v1414
      %1439 = vmatprep.subr.bf16.mxu0 0
      %1440 = vmatpush1.bf16.msra.mxu0 0
      %1441 = vmatprep.subr.bf16.mxu0 0
      %1442 = vmatpush1.bf16.msra.mxu0 0
      %1443 = vmatprep.subr.bf16.mxu0 0
      %1444 = vmatpush1.bf16.msra.mxu0 0
      %1445 = vmatprep.subr.bf16.mxu0 0
      %1446 = vmatpush1.bf16.msra.mxu0 0
      %1447 = vmatprep.subr.bf16.mxu0 0
      %1448 = vmatpush1.bf16.msra.mxu0 0
      %1449 = vmatprep.subr.bf16.mxu0 0
      %1450 = vmatpush1.bf16.msra.mxu0 0
      %1451 = vmatprep.subr.bf16.mxu0 0
      %1452 = vmatpush1.bf16.msra.mxu0 0
      %1453 = vmatprep.subr.bf16.mxu0 0
      %1454 = vmatpush1.bf16.msra.mxu0 0
      %1455 = vmatprep.mubr.bf16.mxu0 0
      %1456 = vmatmul.mubr.bf16.gmra.mrb[0].mxu0 %v1343
      %v1457 = vpop.f32.mrb[0].mxu0
      %v1458 = vadd.f32 0.0, %v1457
      %v1459 = vpop.f32.mrb[0].mxu0
      %v1460 = vpop.f32.mrb[0].mxu0
      %v1461 = vadd.f32 0.0, %v1460
      %v1462 = vpop.f32.mrb[0].mxu0
      %1463 = vmatprep.mubr.bf16.mxu0 0
      %1464 = vmatmul.mubr.bf16.gmra.mrb[0].mxu0 %v1344
      %v1465 = vpop.f32.mrb[0].mxu0
      %v1466 = vadd.f32 0.0, %v1465
      %v1467 = vpop.f32.mrb[0].mxu0
      %v1468 = vpop.f32.mrb[0].mxu0
      %v1469 = vadd.f32 0.0, %v1468
      %v1470 = vpop.f32.mrb[0].mxu0
      %1471 = vmatprep.mubr.bf16.mxu0 0
      %1472 = vmatmul.mubr.bf16.gmra.mrb[0].mxu0 %v1345
      %v1473 = vpop.f32.mrb[0].mxu0
      %v1474 = vadd.f32 0.0, %v1473
      %v1475 = vpop.f32.mrb[0].mxu0
      %v1476 = vpop.f32.mrb[0].mxu0
      %v1477 = vadd.f32 0.0, %v1476
      %v1478 = vpop.f32.mrb[0].mxu0
      %1479 = vmatprep.mubr.bf16.mxu0 0
      %1480 = vmatmul.mubr.bf16.gmra.mrb[0].mxu0 %v1346
      %v1481 = vpop.f32.mrb[0].mxu0
      %v1482 = vadd.f32 0.0, %v1481
      %v1483 = vpop.f32.mrb[0].mxu0
      %v1484 = vpop.f32.mrb[0].mxu0
      %v1485 = vadd.f32 0.0, %v1484
      %v1486 = vpop.f32.mrb[0].mxu0
      %1487 = vmatprep.mubr.bf16.mxu0 0
      %1488 = vmatmul.mubr.bf16.gmra.mrb[0].mxu0 %v1347
      %v1489 = vpop.f32.mrb[0].mxu0
      %v1490 = vadd.f32 0.0, %v1489
      %v1491 = vpop.f32.mrb[0].mxu0
      %v1492 = vpop.f32.mrb[0].mxu0
      %v1493 = vadd.f32 0.0, %v1492
      %v1494 = vpop.f32.mrb[0].mxu0
      %1495 = vmatprep.mubr.bf16.mxu0 0
      %1496 = vmatmul.mubr.bf16.gmra.mrb[0].mxu0 %v1348
      %v1497 = vpop.f32.mrb[0].mxu0
      %v1498 = vadd.f32 0.0, %v1497
      %v1499 = vpop.f32.mrb[0].mxu0
      %v1500 = vpop.f32.mrb[0].mxu0
      %v1501 = vadd.f32 0.0, %v1500
      %v1502 = vpop.f32.mrb[0].mxu0
      %1503 = vmatprep.mubr.bf16.mxu0 0
      %1504 = vmatmul.mubr.bf16.gmra.mrb[0].mxu0 %v1349
      %v1505 = vpop.f32.mrb[0].mxu0
      %v1506 = vadd.f32 0.0, %v1505
      %v1507 = vpop.f32.mrb[0].mxu0
      %v1508 = vpop.f32.mrb[0].mxu0
      %v1509 = vadd.f32 0.0, %v1508
      %v1510 = vpop.f32.mrb[0].mxu0
      %1511 = vmatprep.mubr.bf16.mxu0 0
      %1512 = vmatmul.mubr.bf16.gmra.mrb[0].mxu0 %v1350
      %v1513 = vpop.f32.mrb[0].mxu0
      %v1514 = vadd.f32 0.0, %v1513
      %v1515 = vpop.f32.mrb[0].mxu0
      %v1516 = vpop.f32.mrb[0].mxu0
      %v1517 = vadd.f32 0.0, %v1516
      %v1518 = vpop.f32.mrb[0].mxu0
      %1519 = vmatprep.mubr.bf16.mxu0 0
      %1520 = vmatmul.mubr.bf16.gmra.mrb[0].mxu0 %v1351
      %v1521 = vpop.f32.mrb[0].mxu0
      %v1522 = vadd.f32 0.0, %v1521
      %v1523 = vpop.f32.mrb[0].mxu0
      %v1524 = vpop.f32.mrb[0].mxu0
      %v1525 = vadd.f32 0.0, %v1524
      %v1526 = vpop.f32.mrb[0].mxu0
      %1527 = vmatprep.mubr.bf16.mxu0 0
      %1528 = vmatmul.mubr.bf16.gmra.mrb[0].mxu0 %v1352
      %v1529 = vpop.f32.mrb[0].mxu0
      %v1530 = vadd.f32 0.0, %v1529
      %v1531 = vpop.f32.mrb[0].mxu0
      %v1532 = vpop.f32.mrb[0].mxu0
      %v1533 = vadd.f32 0.0, %v1532
      %v1534 = vpop.f32.mrb[0].mxu0
      %1535 = vmatprep.mubr.bf16.mxu0 0
      %1536 = vmatmul.mubr.bf16.gmra.mrb[0].mxu0 %v1353
      %v1537 = vpop.f32.mrb[0].mxu0
      %v1538 = vadd.f32 0.0, %v1537
      %v1539 = vpop.f32.mrb[0].mxu0
      %v1540 = vpop.f32.mrb[0].mxu0
      %v1541 = vadd.f32 0.0, %v1540
      %v1542 = vpop.f32.mrb[0].mxu0
      %1543 = vmatprep.mubr.bf16.mxu0 0
      %1544 = vmatmul.mubr.bf16.gmra.mrb[0].mxu0 %v1354
      %v1545 = vpop.f32.mrb[0].mxu0
      %v1546 = vadd.f32 0.0, %v1545
      %v1547 = vpop.f32.mrb[0].mxu0
      %v1548 = vpop.f32.mrb[0].mxu0
      %v1549 = vadd.f32 0.0, %v1548
      %v1550 = vpop.f32.mrb[0].mxu0
      %1551 = vmatprep.mubr.bf16.mxu0 0
      %1552 = vmatmul.mubr.bf16.gmra.mrb[0].mxu0 %v1355
      %v1553 = vpop.f32.mrb[0].mxu0
      %v1554 = vadd.f32 0.0, %v1553
      %v1555 = vpop.f32.mrb[0].mxu0
      %v1556 = vpop.f32.mrb[0].mxu0
      %v1557 = vadd.f32 0.0, %v1556
      %v1558 = vpop.f32.mrb[0].mxu0
      %1559 = vmatprep.mubr.bf16.mxu0 0
      %1560 = vmatmul.mubr.bf16.gmra.mrb[0].mxu0 %v1356
      %v1561 = vpop.f32.mrb[0].mxu0
      %v1562 = vadd.f32 0.0, %v1561
      %v1563 = vpop.f32.mrb[0].mxu0
      %v1564 = vpop.f32.mrb[0].mxu0
      %v1565 = vadd.f32 0.0, %v1564
      %v1566 = vpop.f32.mrb[0].mxu0
      %1567 = vmatprep.mubr.bf16.mxu0 0
      %1568 = vmatmul.mubr.bf16.gmra.mrb[0].mxu0 %v1357
      %v1569 = vpop.f32.mrb[0].mxu0
      %v1570 = vadd.f32 0.0, %v1569
      %v1571 = vpop.f32.mrb[0].mxu0
      %v1572 = vpop.f32.mrb[0].mxu0
      %v1573 = vadd.f32 0.0, %v1572
      %v1574 = vpop.f32.mrb[0].mxu0
      %1575 = vmatprep.mubr.bf16.mxu0 0
      %1576 = vmatmul.mubr.bf16.gmra.mrb[0].mxu0 %v1358
      %v1577 = vpop.f32.mrb[0].mxu0
      %v1578 = vadd.f32 0.0, %v1577
      %v1579 = vpop.f32.mrb[0].mxu0
      %v1580 = vpop.f32.mrb[0].mxu0
      %v1581 = vadd.f32 0.0, %v1580
      %v1582 = vpop.f32.mrb[0].mxu0
      %1583 = vdwg.mxu0
      %v1616 = vunpack.c.l.b16 %v843
      %v1617 = vunpack.c.l.b16 %v844
      %v1618 = vunpack.c.l.b16 %v845
      %v1619 = vunpack.c.l.b16 %v846
      %v1620 = vunpack.c.l.b16 %v847
      %v1621 = vunpack.c.l.b16 %v848
      %v1622 = vunpack.c.l.b16 %v849
      %v1623 = vunpack.c.l.b16 %v850
      %v1624 = vunpack.c.l.b16 %v851
      %v1625 = vunpack.c.l.b16 %v852
      %v1626 = vunpack.c.l.b16 %v853
      %v1627 = vunpack.c.l.b16 %v854
      %v1628 = vunpack.c.l.b16 %v855
      %v1629 = vunpack.c.l.b16 %v856
      %v1630 = vunpack.c.l.b16 %v857
      %v1631 = vunpack.c.l.b16 %v858
      %v1632 = vunpack.c.l.b16 %v859
      %v1633 = vunpack.c.l.b16 %v860
      %v1634 = vunpack.c.l.b16 %v861
      %v1635 = vunpack.c.l.b16 %v862
      %v1636 = vunpack.c.l.b16 %v863
      %v1637 = vunpack.c.l.b16 %v864
      %v1638 = vunpack.c.l.b16 %v865
      %v1639 = vunpack.c.l.b16 %v866
      %v1640 = vunpack.c.l.b16 %v867
      %v1641 = vunpack.c.l.b16 %v868
      %v1642 = vunpack.c.l.b16 %v869
      %v1643 = vunpack.c.l.b16 %v870
      %v1644 = vunpack.c.l.b16 %v871
      %v1645 = vunpack.c.l.b16 %v872
      %v1646 = vunpack.c.l.b16 %v873
      %v1647 = vunpack.c.l.b16 %v874
      %v1648 = vpack.c.b16 %v1617, %v1616
      %v1649 = vpack.c.b16 %v1619, %v1618
      %v1650 = vpack.c.b16 %v1621, %v1620
      %v1651 = vpack.c.b16 %v1623, %v1622
      %v1652 = vpack.c.b16 %v1625, %v1624
      %v1653 = vpack.c.b16 %v1627, %v1626
      %v1654 = vpack.c.b16 %v1629, %v1628
      %v1655 = vpack.c.b16 %v1631, %v1630
      %v1656 = vpack.c.b16 %v1633, %v1632
      %v1657 = vpack.c.b16 %v1635, %v1634
      %v1658 = vpack.c.b16 %v1637, %v1636
      %v1659 = vpack.c.b16 %v1639, %v1638
      %v1660 = vpack.c.b16 %v1641, %v1640
      %v1661 = vpack.c.b16 %v1643, %v1642
      %v1662 = vpack.c.b16 %v1645, %v1644
      %v1663 = vpack.c.b16 %v1647, %v1646
      %v1696 = vunpack.c.l.b16 %v875
      %v1697 = vunpack.c.l.b16 %v876
      %v1698 = vunpack.c.l.b16 %v877
      %v1699 = vunpack.c.l.b16 %v878
      %v1700 = vunpack.c.l.b16 %v879
      %v1701 = vunpack.c.l.b16 %v880
      %v1702 = vunpack.c.l.b16 %v881
      %v1703 = vunpack.c.l.b16 %v882
      %v1704 = vunpack.c.l.b16 %v883
      %v1705 = vunpack.c.l.b16 %v884
      %v1706 = vunpack.c.l.b16 %v885
      %v1707 = vunpack.c.l.b16 %v886
      %v1708 = vunpack.c.l.b16 %v887
      %v1709 = vunpack.c.l.b16 %v888
      %v1710 = vunpack.c.l.b16 %v889
      %v1711 = vunpack.c.l.b16 %v890
      %v1712 = vpack.c.b16 %v1697, %v1696
      %v1713 = vpack.c.b16 %v1699, %v1698
      %v1714 = vpack.c.b16 %v1701, %v1700
      %v1715 = vpack.c.b16 %v1703, %v1702
      %v1716 = vpack.c.b16 %v1705, %v1704
      %v1717 = vpack.c.b16 %v1707, %v1706
      %v1718 = vpack.c.b16 %v1709, %v1708
      %v1719 = vpack.c.b16 %v1711, %v1710
      %1728 = vmatprep.subr.bf16.mxu0 0
      %1729 = vmatpush1.bf16.msra.mxu0 %v1712
      %1730 = vmatprep.subr.bf16.mxu0 0
      %1731 = vmatpush1.bf16.msra.mxu0 %v1713
      %1732 = vmatprep.subr.bf16.mxu0 0
      %1733 = vmatpush1.bf16.msra.mxu0 %v1714
      %1734 = vmatprep.subr.bf16.mxu0 0
      %1735 = vmatpush1.bf16.msra.mxu0 %v1715
      %1736 = vmatprep.subr.bf16.mxu0 0
      %1737 = vmatpush1.bf16.msra.mxu0 %v1716
      %1738 = vmatprep.subr.bf16.mxu0 0
      %1739 = vmatpush1.bf16.msra.mxu0 %v1717
      %1740 = vmatprep.subr.bf16.mxu0 0
      %1741 = vmatpush1.bf16.msra.mxu0 %v1718
      %1742 = vmatprep.subr.bf16.mxu0 0
      %1743 = vmatpush1.bf16.msra.mxu0 %v1719
      %1744 = vmatprep.subr.bf16.mxu0 0
      %1745 = vmatpush1.bf16.msra.mxu0 0
      %1746 = vmatprep.subr.bf16.mxu0 0
      %1747 = vmatpush1.bf16.msra.mxu0 0
      %1748 = vmatprep.subr.bf16.mxu0 0
      %1749 = vmatpush1.bf16.msra.mxu0 0
      %1750 = vmatprep.subr.bf16.mxu0 0
      %1751 = vmatpush1.bf16.msra.mxu0 0
      %1752 = vmatprep.subr.bf16.mxu0 0
      %1753 = vmatpush1.bf16.msra.mxu0 0
      %1754 = vmatprep.subr.bf16.mxu0 0
      %1755 = vmatpush1.bf16.msra.mxu0 0
      %1756 = vmatprep.subr.bf16.mxu0 0
      %1757 = vmatpush1.bf16.msra.mxu0 0
      %1758 = vmatprep.subr.bf16.mxu0 0
      %1759 = vmatpush1.bf16.msra.mxu0 0
      %1760 = vmatprep.mubr.bf16.mxu0 0
      %1761 = vmatmul.mubr.bf16.gmra.mrb[0].mxu0 %v1648
      %v1762 = vpop.f32.mrb[0].mxu0
      %v1763 = vadd.f32 %v1458, %v1762
      %v1764 = vpop.f32.mrb[0].mxu0
      %v1765 = vpop.f32.mrb[0].mxu0
      %v1766 = vadd.f32 %v1461, %v1765
      %v1767 = vpop.f32.mrb[0].mxu0
      %1768 = vmatprep.mubr.bf16.mxu0 0
      %1769 = vmatmul.mubr.bf16.gmra.mrb[0].mxu0 %v1649
      %v1770 = vpop.f32.mrb[0].mxu0
      %v1771 = vadd.f32 %v1466, %v1770
      %v1772 = vpop.f32.mrb[0].mxu0
      %v1773 = vpop.f32.mrb[0].mxu0
      %v1774 = vadd.f32 %v1469, %v1773
      %v1775 = vpop.f32.mrb[0].mxu0
      %1776 = vmatprep.mubr.bf16.mxu0 0
      %1777 = vmatmul.mubr.bf16.gmra.mrb[0].mxu0 %v1650
      %v1778 = vpop.f32.mrb[0].mxu0
      %v1779 = vadd.f32 %v1474, %v1778
      %v1780 = vpop.f32.mrb[0].mxu0
      %v1781 = vpop.f32.mrb[0].mxu0
      %v1782 = vadd.f32 %v1477, %v1781
      %v1783 = vpop.f32.mrb[0].mxu0
      %1784 = vmatprep.mubr.bf16.mxu0 0
      %1785 = vmatmul.mubr.bf16.gmra.mrb[0].mxu0 %v1651
      %v1786 = vpop.f32.mrb[0].mxu0
      %v1787 = vadd.f32 %v1482, %v1786
      %v1788 = vpop.f32.mrb[0].mxu0
      %v1789 = vpop.f32.mrb[0].mxu0
      %v1790 = vadd.f32 %v1485, %v1789
      %v1791 = vpop.f32.mrb[0].mxu0
      %1792 = vmatprep.mubr.bf16.mxu0 0
      %1793 = vmatmul.mubr.bf16.gmra.mrb[0].mxu0 %v1652
      %v1794 = vpop.f32.mrb[0].mxu0
      %v1795 = vadd.f32 %v1490, %v1794
      %v1796 = vpop.f32.mrb[0].mxu0
      %v1797 = vpop.f32.mrb[0].mxu0
      %v1798 = vadd.f32 %v1493, %v1797
      %v1799 = vpop.f32.mrb[0].mxu0
      %1800 = vmatprep.mubr.bf16.mxu0 0
      %1801 = vmatmul.mubr.bf16.gmra.mrb[0].mxu0 %v1653
      %v1802 = vpop.f32.mrb[0].mxu0
      %v1803 = vadd.f32 %v1498, %v1802
      %v1804 = vpop.f32.mrb[0].mxu0
      %v1805 = vpop.f32.mrb[0].mxu0
      %v1806 = vadd.f32 %v1501, %v1805
      %v1807 = vpop.f32.mrb[0].mxu0
      %1808 = vmatprep.mubr.bf16.mxu0 0
      %1809 = vmatmul.mubr.bf16.gmra.mrb[0].mxu0 %v1654
      %v1810 = vpop.f32.mrb[0].mxu0
      %v1811 = vadd.f32 %v1506, %v1810
      %v1812 = vpop.f32.mrb[0].mxu0
      %v1813 = vpop.f32.mrb[0].mxu0
      %v1814 = vadd.f32 %v1509, %v1813
      %v1815 = vpop.f32.mrb[0].mxu0
      %1816 = vmatprep.mubr.bf16.mxu0 0
      %1817 = vmatmul.mubr.bf16.gmra.mrb[0].mxu0 %v1655
      %v1818 = vpop.f32.mrb[0].mxu0
      %v1819 = vadd.f32 %v1514, %v1818
      %v1820 = vpop.f32.mrb[0].mxu0
      %v1821 = vpop.f32.mrb[0].mxu0
      %v1822 = vadd.f32 %v1517, %v1821
      %v1823 = vpop.f32.mrb[0].mxu0
      %1824 = vmatprep.mubr.bf16.mxu0 0
      %1825 = vmatmul.mubr.bf16.gmra.mrb[0].mxu0 %v1656
      %v1826 = vpop.f32.mrb[0].mxu0
      %v1827 = vadd.f32 %v1522, %v1826
      %v1828 = vpop.f32.mrb[0].mxu0
      %v1829 = vpop.f32.mrb[0].mxu0
      %v1830 = vadd.f32 %v1525, %v1829
      %v1831 = vpop.f32.mrb[0].mxu0
      %1832 = vmatprep.mubr.bf16.mxu0 0
      %1833 = vmatmul.mubr.bf16.gmra.mrb[0].mxu0 %v1657
      %v1834 = vpop.f32.mrb[0].mxu0
      %v1835 = vadd.f32 %v1530, %v1834
      %v1836 = vpop.f32.mrb[0].mxu0
      %v1837 = vpop.f32.mrb[0].mxu0
      %v1838 = vadd.f32 %v1533, %v1837
      %v1839 = vpop.f32.mrb[0].mxu0
      %1840 = vmatprep.mubr.bf16.mxu0 0
      %1841 = vmatmul.mubr.bf16.gmra.mrb[0].mxu0 %v1658
      %v1842 = vpop.f32.mrb[0].mxu0
      %v1843 = vadd.f32 %v1538, %v1842
      %v1844 = vpop.f32.mrb[0].mxu0
      %v1845 = vpop.f32.mrb[0].mxu0
      %v1846 = vadd.f32 %v1541, %v1845
      %v1847 = vpop.f32.mrb[0].mxu0
      %1848 = vmatprep.mubr.bf16.mxu0 0
      %1849 = vmatmul.mubr.bf16.gmra.mrb[0].mxu0 %v1659
      %v1850 = vpop.f32.mrb[0].mxu0
      %v1851 = vadd.f32 %v1546, %v1850
      %v1852 = vpop.f32.mrb[0].mxu0
      %v1853 = vpop.f32.mrb[0].mxu0
      %v1854 = vadd.f32 %v1549, %v1853
      %v1855 = vpop.f32.mrb[0].mxu0
      %1856 = vmatprep.mubr.bf16.mxu0 0
      %1857 = vmatmul.mubr.bf16.gmra.mrb[0].mxu0 %v1660
      %v1858 = vpop.f32.mrb[0].mxu0
      %v1859 = vadd.f32 %v1554, %v1858
      %v1860 = vpop.f32.mrb[0].mxu0
      %v1861 = vpop.f32.mrb[0].mxu0
      %v1862 = vadd.f32 %v1557, %v1861
      %v1863 = vpop.f32.mrb[0].mxu0
      %1864 = vmatprep.mubr.bf16.mxu0 0
      %1865 = vmatmul.mubr.bf16.gmra.mrb[0].mxu0 %v1661
      %v1866 = vpop.f32.mrb[0].mxu0
      %v1867 = vadd.f32 %v1562, %v1866
      %v1868 = vpop.f32.mrb[0].mxu0
      %v1869 = vpop.f32.mrb[0].mxu0
      %v1870 = vadd.f32 %v1565, %v1869
      %v1871 = vpop.f32.mrb[0].mxu0
      %1872 = vmatprep.mubr.bf16.mxu0 0
      %1873 = vmatmul.mubr.bf16.gmra.mrb[0].mxu0 %v1662
      %v1874 = vpop.f32.mrb[0].mxu0
      %v1875 = vadd.f32 %v1570, %v1874
      %v1876 = vpop.f32.mrb[0].mxu0
      %v1877 = vpop.f32.mrb[0].mxu0
      %v1878 = vadd.f32 %v1573, %v1877
      %v1879 = vpop.f32.mrb[0].mxu0
      %1880 = vmatprep.mubr.bf16.mxu0 0
      %1881 = vmatmul.mubr.bf16.gmra.mrb[0].mxu0 %v1663
      %v1882 = vpop.f32.mrb[0].mxu0
      %v1883 = vadd.f32 %v1578, %v1882
      %v1884 = vpop.f32.mrb[0].mxu0
      %v1885 = vpop.f32.mrb[0].mxu0
      %v1886 = vadd.f32 %v1581, %v1885
      %v1887 = vpop.f32.mrb[0].mxu0
      %1888 = vdwg.mxu0
      %v1889 = vld [vmem:[#allocation2] sm:$0xe]
      %v1890 = vld [vmem:[#allocation2 + $0xc] sm:$0xe]
      %v1891 = vld [vmem:[#allocation2 + $0x18] sm:$0xe]
      %v1892 = vld [vmem:[#allocation2 + $0x24] sm:$0xe]
      %v1893 = vld [vmem:[#allocation2 + $0x30] sm:$0xe]
      %v1894 = vld [vmem:[#allocation2 + $0x3c] sm:$0xe]
      %v1895 = vld [vmem:[#allocation2 + $0x48] sm:$0xe]
      %v1896 = vld [vmem:[#allocation2 + $0x54] sm:$0xe]
      %v1897 = vld [vmem:[#allocation2 + $0x60] sm:$0xe]
      %v1898 = vld [vmem:[#allocation2 + $0x6c] sm:$0xe]
      %v1899 = vld [vmem:[#allocation2 + $0x78] sm:$0xe]
      %v1900 = vld [vmem:[#allocation2 + $0x84] sm:$0xe]
      %v1901 = vld [vmem:[#allocation2 + $0x90] sm:$0xe]
      %v1902 = vld [vmem:[#allocation2 + $0x9c] sm:$0xe]
      %v1903 = vld [vmem:[#allocation2 + $0xa8] sm:$0xe]
      %v1904 = vld [vmem:[#allocation2 + $0xb4] sm:$0xe]
      %vm1937 = vcmask 1042432
      %vm1938 = vcmask 1046532
      %vm1939 = vmor %vm1937, %vm1938
      %v1940 = vrot.slane %v1889, 5
      %v1941 = vrot.slane %v1940, 4
      %v1942 = vrot.slane %v844, 5
      %v1943 = vsel %vm1939, %v1941, %v1942
      %v1944 = vrot.slane %v1942, 4
      %v1945 = vrot.slane %v891, 5
      %v1946 = vsel %vm1939, %v1944, %v1945
      %v1947 = vrot.slane %v1890, 5
      %v1948 = vrot.slane %v1947, 4
      %v1949 = vrot.slane %v846, 5
      %v1950 = vsel %vm1939, %v1948, %v1949
      %v1951 = vrot.slane %v1949, 4
      %v1952 = vrot.slane %v892, 5
      %v1953 = vsel %vm1939, %v1951, %v1952
      %v1954 = vrot.slane %v1891, 5
      %v1955 = vrot.slane %v1954, 4
      %v1956 = vrot.slane %v848, 5
      %v1957 = vsel %vm1939, %v1955, %v1956
      %v1958 = vrot.slane %v1956, 4
      %v1959 = vrot.slane %v893, 5
      %v1960 = vsel %vm1939, %v1958, %v1959
      %v1961 = vrot.slane %v1892, 5
      %v1962 = vrot.slane %v1961, 4
      %v1963 = vrot.slane %v850, 5
      %v1964 = vsel %vm1939, %v1962, %v1963
      %v1965 = vrot.slane %v1963, 4
      %v1966 = vrot.slane %v894, 5
      %v1967 = vsel %vm1939, %v1965, %v1966
      %v1968 = vrot.slane %v1893, 5
      %v1969 = vrot.slane %v1968, 4
      %v1970 = vrot.slane %v852, 5
      %v1971 = vsel %vm1939, %v1969, %v1970
      %v1972 = vrot.slane %v1970, 4
      %v1973 = vrot.slane %v895, 5
      %v1974 = vsel %vm1939, %v1972, %v1973
      %v1975 = vrot.slane %v1894, 5
      %v1976 = vrot.slane %v1975, 4
      %v1977 = vrot.slane %v854, 5
      %v1978 = vsel %vm1939, %v1976, %v1977
      %v1979 = vrot.slane %v1977, 4
      %v1980 = vrot.slane %v896, 5
      %v1981 = vsel %vm1939, %v1979, %v1980
      %v1982 = vrot.slane %v1895, 5
      %v1983 = vrot.slane %v1982, 4
      %v1984 = vrot.slane %v856, 5
      %v1985 = vsel %vm1939, %v1983, %v1984
      %v1986 = vrot.slane %v1984, 4
      %v1987 = vrot.slane %v897, 5
      %v1988 = vsel %vm1939, %v1986, %v1987
      %v1989 = vrot.slane %v1896, 5
      %v1990 = vrot.slane %v1989, 4
      %v1991 = vrot.slane %v858, 5
      %v1992 = vsel %vm1939, %v1990, %v1991
      %v1993 = vrot.slane %v1991, 4
      %v1994 = vrot.slane %v898, 5
      %v1995 = vsel %vm1939, %v1993, %v1994
      %v1996 = vrot.slane %v1897, 5
      %v1997 = vrot.slane %v1996, 4
      %v1998 = vrot.slane %v860, 5
      %v1999 = vsel %vm1939, %v1997, %v1998
      %v2000 = vrot.slane %v1998, 4
      %v2001 = vrot.slane %v899, 5
      %v2002 = vsel %vm1939, %v2000, %v2001
      %v2003 = vrot.slane %v1898, 5
      %v2004 = vrot.slane %v2003, 4
      %v2005 = vrot.slane %v862, 5
      %v2006 = vsel %vm1939, %v2004, %v2005
      %v2007 = vrot.slane %v2005, 4
      %v2008 = vrot.slane %v900, 5
      %v2009 = vsel %vm1939, %v2007, %v2008
      %v2010 = vrot.slane %v1899, 5
      %v2011 = vrot.slane %v2010, 4
      %v2012 = vrot.slane %v864, 5
      %v2013 = vsel %vm1939, %v2011, %v2012
      %v2014 = vrot.slane %v2012, 4
      %v2015 = vrot.slane %v901, 5
      %v2016 = vsel %vm1939, %v2014, %v2015
      %v2017 = vrot.slane %v1900, 5
      %v2018 = vrot.slane %v2017, 4
      %v2019 = vrot.slane %v866, 5
      %v2020 = vsel %vm1939, %v2018, %v2019
      %v2021 = vrot.slane %v2019, 4
      %v2022 = vrot.slane %v902, 5
      %v2023 = vsel %vm1939, %v2021, %v2022
      %v2024 = vrot.slane %v1901, 5
      %v2025 = vrot.slane %v2024, 4
      %v2026 = vrot.slane %v868, 5
      %v2027 = vsel %vm1939, %v2025, %v2026
      %v2028 = vrot.slane %v2026, 4
      %v2029 = vrot.slane %v903, 5
      %v2030 = vsel %vm1939, %v2028, %v2029
      %v2031 = vrot.slane %v1902, 5
      %v2032 = vrot.slane %v2031, 4
      %v2033 = vrot.slane %v870, 5
      %v2034 = vsel %vm1939, %v2032, %v2033
      %v2035 = vrot.slane %v2033, 4
      %v2036 = vrot.slane %v904, 5
      %v2037 = vsel %vm1939, %v2035, %v2036
      %v2038 = vrot.slane %v1903, 5
      %v2039 = vrot.slane %v2038, 4
      %v2040 = vrot.slane %v872, 5
      %v2041 = vsel %vm1939, %v2039, %v2040
      %v2042 = vrot.slane %v2040, 4
      %v2043 = vrot.slane %v905, 5
      %v2044 = vsel %vm1939, %v2042, %v2043
      %v2045 = vrot.slane %v1904, 5
      %v2046 = vrot.slane %v2045, 4
      %v2047 = vrot.slane %v874, 5
      %v2048 = vsel %vm1939, %v2046, %v2047
      %v2049 = vrot.slane %v2047, 4
      %v2050 = vrot.slane %v906, 5
      %v2051 = vsel %vm1939, %v2049, %v2050
      %s2052 = scalar_lea.vmem %s3, 128
      %v2053 = vld [vmem:[%s2052] sm:$0xf]
      %v2054 = vld [vmem:[%s2052 + $0x4] sm:$0xf]
      %v2055 = vld [vmem:[%s2052 + $0x8] sm:$0xf]
      %v2056 = vld [vmem:[%s2052 + $0xc] sm:$0xf]
      %v2057 = vld [vmem:[%s2052 + $0x10] sm:$0xf]
      %v2058 = vld [vmem:[%s2052 + $0x14] sm:$0xf]
      %v2059 = vld [vmem:[%s2052 + $0x18] sm:$0xf]
      %v2060 = vld [vmem:[%s2052 + $0x1c] sm:$0xf]
      %v2061 = vld [vmem:[%s2052 + $0x20] sm:$0xf]
      %v2062 = vld [vmem:[%s2052 + $0x24] sm:$0xf]
      %v2063 = vld [vmem:[%s2052 + $0x28] sm:$0xf]
      %v2064 = vld [vmem:[%s2052 + $0x2c] sm:$0xf]
      %v2065 = vld [vmem:[%s2052 + $0x30] sm:$0xf]
      %v2066 = vld [vmem:[%s2052 + $0x34] sm:$0xf]
      %v2067 = vld [vmem:[%s2052 + $0x38] sm:$0xf]
      %v2068 = vld [vmem:[%s2052 + $0x3c] sm:$0xf]
      %v2069 = vunpack.c.l.b16 %v1943
      %v2070 = vunpack.c.l.b16 %v1946
      %v2071 = vunpack.c.l.b16 %v1950
      %v2072 = vunpack.c.l.b16 %v1953
      %v2073 = vunpack.c.l.b16 %v1957
      %v2074 = vunpack.c.l.b16 %v1960
      %v2075 = vunpack.c.l.b16 %v1964
      %v2076 = vunpack.c.l.b16 %v1967
      %v2077 = vunpack.c.l.b16 %v1971
      %v2078 = vunpack.c.l.b16 %v1974
      %v2079 = vunpack.c.l.b16 %v1978
      %v2080 = vunpack.c.l.b16 %v1981
      %v2081 = vunpack.c.l.b16 %v1985
      %v2082 = vunpack.c.l.b16 %v1988
      %v2083 = vunpack.c.l.b16 %v1992
      %v2084 = vunpack.c.l.b16 %v1995
      %v2085 = vunpack.c.l.b16 %v1999
      %v2086 = vunpack.c.l.b16 %v2002
      %v2087 = vunpack.c.l.b16 %v2006
      %v2088 = vunpack.c.l.b16 %v2009
      %v2089 = vunpack.c.l.b16 %v2013
      %v2090 = vunpack.c.l.b16 %v2016
      %v2091 = vunpack.c.l.b16 %v2020
      %v2092 = vunpack.c.l.b16 %v2023
      %v2093 = vunpack.c.l.b16 %v2027
      %v2094 = vunpack.c.l.b16 %v2030
      %v2095 = vunpack.c.l.b16 %v2034
      %v2096 = vunpack.c.l.b16 %v2037
      %v2097 = vunpack.c.l.b16 %v2041
      %v2098 = vunpack.c.l.b16 %v2044
      %v2099 = vunpack.c.l.b16 %v2048
      %v2100 = vunpack.c.l.b16 %v2051
      %v2101 = vpack.c.b16 %v2070, %v2069
      %v2102 = vpack.c.b16 %v2072, %v2071
      %v2103 = vpack.c.b16 %v2074, %v2073
      %v2104 = vpack.c.b16 %v2076, %v2075
      %v2105 = vpack.c.b16 %v2078, %v2077
      %v2106 = vpack.c.b16 %v2080, %v2079
      %v2107 = vpack.c.b16 %v2082, %v2081
      %v2108 = vpack.c.b16 %v2084, %v2083
      %v2109 = vpack.c.b16 %v2086, %v2085
      %v2110 = vpack.c.b16 %v2088, %v2087
      %v2111 = vpack.c.b16 %v2090, %v2089
      %v2112 = vpack.c.b16 %v2092, %v2091
      %v2113 = vpack.c.b16 %v2094, %v2093
      %v2114 = vpack.c.b16 %v2096, %v2095
      %v2115 = vpack.c.b16 %v2098, %v2097
      %v2116 = vpack.c.b16 %v2100, %v2099
      %v2149 = vunpack.c.l.b16 %v2053
      %v2150 = vunpack.c.l.b16 %v2054
      %v2151 = vunpack.c.l.b16 %v2055
      %v2152 = vunpack.c.l.b16 %v2056
      %v2153 = vunpack.c.l.b16 %v2057
      %v2154 = vunpack.c.l.b16 %v2058
      %v2155 = vunpack.c.l.b16 %v2059
      %v2156 = vunpack.c.l.b16 %v2060
      %v2157 = vunpack.c.l.b16 %v2061
      %v2158 = vunpack.c.l.b16 %v2062
      %v2159 = vunpack.c.l.b16 %v2063
      %v2160 = vunpack.c.l.b16 %v2064
      %v2161 = vunpack.c.l.b16 %v2065
      %v2162 = vunpack.c.l.b16 %v2066
      %v2163 = vunpack.c.l.b16 %v2067
      %v2164 = vunpack.c.l.b16 %v2068
      %v2165 = vpack.c.b16 %v2150, %v2149
      %v2166 = vpack.c.b16 %v2152, %v2151
      %v2167 = vpack.c.b16 %v2154, %v2153
      %v2168 = vpack.c.b16 %v2156, %v2155
      %v2169 = vpack.c.b16 %v2158, %v2157
      %v2170 = vpack.c.b16 %v2160, %v2159
      %v2171 = vpack.c.b16 %v2162, %v2161
      %v2172 = vpack.c.b16 %v2164, %v2163
      %2181 = vmatprep.subr.bf16.mxu0 0
      %2182 = vmatpush1.bf16.msra.mxu0 %v2165
      %2183 = vmatprep.subr.bf16.mxu0 0
      %2184 = vmatpush1.bf16.msra.mxu0 %v2166
      %2185 = vmatprep.subr.bf16.mxu0 0
      %2186 = vmatpush1.bf16.msra.mxu0 %v2167
      %2187 = vmatprep.subr.bf16.mxu0 0
      %2188 = vmatpush1.bf16.msra.mxu0 %v2168
      %2189 = vmatprep.subr.bf16.mxu0 0
      %2190 = vmatpush1.bf16.msra.mxu0 %v2169
      %2191 = vmatprep.subr.bf16.mxu0 0
      %2192 = vmatpush1.bf16.msra.mxu0 %v2170
      %2193 = vmatprep.subr.bf16.mxu0 0
      %2194 = vmatpush1.bf16.msra.mxu0 %v2171
      %2195 = vmatprep.subr.bf16.mxu0 0
      %2196 = vmatpush1.bf16.msra.mxu0 %v2172
      %2197 = vmatprep.subr.bf16.mxu0 0
      %2198 = vmatpush1.bf16.msra.mxu0 0
      %2199 = vmatprep.subr.bf16.mxu0 0
      %2200 = vmatpush1.bf16.msra.mxu0 0
      %2201 = vmatprep.subr.bf16.mxu0 0
      %2202 = vmatpush1.bf16.msra.mxu0 0
      %2203 = vmatprep.subr.bf16.mxu0 0
      %2204 = vmatpush1.bf16.msra.mxu0 0
      %2205 = vmatprep.subr.bf16.mxu0 0
      %2206 = vmatpush1.bf16.msra.mxu0 0
      %2207 = vmatprep.subr.bf16.mxu0 0
      %2208 = vmatpush1.bf16.msra.mxu0 0
      %2209 = vmatprep.subr.bf16.mxu0 0
      %2210 = vmatpush1.bf16.msra.mxu0 0
      %2211 = vmatprep.subr.bf16.mxu0 0
      %2212 = vmatpush1.bf16.msra.mxu0 0
      %2213 = vmatprep.mubr.bf16.mxu0 0
      %2214 = vmatmul.mubr.bf16.gmra.mrb[0].mxu0 %v2101
      %v2215 = vpop.f32.mrb[0].mxu0
      %v2216 = vadd.f32 0.0, %v2215
      %v2217 = vpop.f32.mrb[0].mxu0
      %v2218 = vpop.f32.mrb[0].mxu0
      %v2219 = vadd.f32 0.0, %v2218
      %v2220 = vpop.f32.mrb[0].mxu0
      %2221 = vmatprep.mubr.bf16.mxu0 0
      %2222 = vmatmul.mubr.bf16.gmra.mrb[0].mxu0 %v2102
      %v2223 = vpop.f32.mrb[0].mxu0
      %v2224 = vadd.f32 0.0, %v2223
      %v2225 = vpop.f32.mrb[0].mxu0
      %v2226 = vpop.f32.mrb[0].mxu0
      %v2227 = vadd.f32 0.0, %v2226
      %v2228 = vpop.f32.mrb[0].mxu0
      %2229 = vmatprep.mubr.bf16.mxu0 0
      %2230 = vmatmul.mubr.bf16.gmra.mrb[0].mxu0 %v2103
      %v2231 = vpop.f32.mrb[0].mxu0
      %v2232 = vadd.f32 0.0, %v2231
      %v2233 = vpop.f32.mrb[0].mxu0
      %v2234 = vpop.f32.mrb[0].mxu0
      %v2235 = vadd.f32 0.0, %v2234
      %v2236 = vpop.f32.mrb[0].mxu0
      %2237 = vmatprep.mubr.bf16.mxu0 0
      %2238 = vmatmul.mubr.bf16.gmra.mrb[0].mxu0 %v2104
      %v2239 = vpop.f32.mrb[0].mxu0
      %v2240 = vadd.f32 0.0, %v2239
      %v2241 = vpop.f32.mrb[0].mxu0
      %v2242 = vpop.f32.mrb[0].mxu0
      %v2243 = vadd.f32 0.0, %v2242
      %v2244 = vpop.f32.mrb[0].mxu0
      %2245 = vmatprep.mubr.bf16.mxu0 0
      %2246 = vmatmul.mubr.bf16.gmra.mrb[0].mxu0 %v2105
      %v2247 = vpop.f32.mrb[0].mxu0
      %v2248 = vadd.f32 0.0, %v2247
      %v2249 = vpop.f32.mrb[0].mxu0
      %v2250 = vpop.f32.mrb[0].mxu0
      %v2251 = vadd.f32 0.0, %v2250
      %v2252 = vpop.f32.mrb[0].mxu0
      %2253 = vmatprep.mubr.bf16.mxu0 0
      %2254 = vmatmul.mubr.bf16.gmra.mrb[0].mxu0 %v2106
      %v2255 = vpop.f32.mrb[0].mxu0
      %v2256 = vadd.f32 0.0, %v2255
      %v2257 = vpop.f32.mrb[0].mxu0
      %v2258 = vpop.f32.mrb[0].mxu0
      %v2259 = vadd.f32 0.0, %v2258
      %v2260 = vpop.f32.mrb[0].mxu0
      %2261 = vmatprep.mubr.bf16.mxu0 0
      %2262 = vmatmul.mubr.bf16.gmra.mrb[0].mxu0 %v2107
      %v2263 = vpop.f32.mrb[0].mxu0
      %v2264 = vadd.f32 0.0, %v2263
      %v2265 = vpop.f32.mrb[0].mxu0
      %v2266 = vpop.f32.mrb[0].mxu0
      %v2267 = vadd.f32 0.0, %v2266
      %v2268 = vpop.f32.mrb[0].mxu0
      %2269 = vmatprep.mubr.bf16.mxu0 0
      %2270 = vmatmul.mubr.bf16.gmra.mrb[0].mxu0 %v2108
      %v2271 = vpop.f32.mrb[0].mxu0
      %v2272 = vadd.f32 0.0, %v2271
      %v2273 = vpop.f32.mrb[0].mxu0
      %v2274 = vpop.f32.mrb[0].mxu0
      %v2275 = vadd.f32 0.0, %v2274
      %v2276 = vpop.f32.mrb[0].mxu0
      %2277 = vmatprep.mubr.bf16.mxu0 0
      %2278 = vmatmul.mubr.bf16.gmra.mrb[0].mxu0 %v2109
      %v2279 = vpop.f32.mrb[0].mxu0
      %v2280 = vadd.f32 0.0, %v2279
      %v2281 = vpop.f32.mrb[0].mxu0
      %v2282 = vpop.f32.mrb[0].mxu0
      %v2283 = vadd.f32 0.0, %v2282
      %v2284 = vpop.f32.mrb[0].mxu0
      %2285 = vmatprep.mubr.bf16.mxu0 0
      %2286 = vmatmul.mubr.bf16.gmra.mrb[0].mxu0 %v2110
      %v2287 = vpop.f32.mrb[0].mxu0
      %v2288 = vadd.f32 0.0, %v2287
      %v2289 = vpop.f32.mrb[0].mxu0
      %v2290 = vpop.f32.mrb[0].mxu0
      %v2291 = vadd.f32 0.0, %v2290
      %v2292 = vpop.f32.mrb[0].mxu0
      %2293 = vmatprep.mubr.bf16.mxu0 0
      %2294 = vmatmul.mubr.bf16.gmra.mrb[0].mxu0 %v2111
      %v2295 = vpop.f32.mrb[0].mxu0
      %v2296 = vadd.f32 0.0, %v2295
      %v2297 = vpop.f32.mrb[0].mxu0
      %v2298 = vpop.f32.mrb[0].mxu0
      %v2299 = vadd.f32 0.0, %v2298
      %v2300 = vpop.f32.mrb[0].mxu0
      %2301 = vmatprep.mubr.bf16.mxu0 0
      %2302 = vmatmul.mubr.bf16.gmra.mrb[0].mxu0 %v2112
      %v2303 = vpop.f32.mrb[0].mxu0
      %v2304 = vadd.f32 0.0, %v2303
      %v2305 = vpop.f32.mrb[0].mxu0
      %v2306 = vpop.f32.mrb[0].mxu0
      %v2307 = vadd.f32 0.0, %v2306
      %v2308 = vpop.f32.mrb[0].mxu0
      %2309 = vmatprep.mubr.bf16.mxu0 0
      %2310 = vmatmul.mubr.bf16.gmra.mrb[0].mxu0 %v2113
      %v2311 = vpop.f32.mrb[0].mxu0
      %v2312 = vadd.f32 0.0, %v2311
      %v2313 = vpop.f32.mrb[0].mxu0
      %v2314 = vpop.f32.mrb[0].mxu0
      %v2315 = vadd.f32 0.0, %v2314
      %v2316 = vpop.f32.mrb[0].mxu0
      %2317 = vmatprep.mubr.bf16.mxu0 0
      %2318 = vmatmul.mubr.bf16.gmra.mrb[0].mxu0 %v2114
      %v2319 = vpop.f32.mrb[0].mxu0
      %v2320 = vadd.f32 0.0, %v2319
      %v2321 = vpop.f32.mrb[0].mxu0
      %v2322 = vpop.f32.mrb[0].mxu0
      %v2323 = vadd.f32 0.0, %v2322
      %v2324 = vpop.f32.mrb[0].mxu0
      %2325 = vmatprep.mubr.bf16.mxu0 0
      %2326 = vmatmul.mubr.bf16.gmra.mrb[0].mxu0 %v2115
      %v2327 = vpop.f32.mrb[0].mxu0
      %v2328 = vadd.f32 0.0, %v2327
      %v2329 = vpop.f32.mrb[0].mxu0
      %v2330 = vpop.f32.mrb[0].mxu0
      %v2331 = vadd.f32 0.0, %v2330
      %v2332 = vpop.f32.mrb[0].mxu0
      %2333 = vmatprep.mubr.bf16.mxu0 0
      %2334 = vmatmul.mubr.bf16.gmra.mrb[0].mxu0 %v2116
      %v2335 = vpop.f32.mrb[0].mxu0
      %v2336 = vadd.f32 0.0, %v2335
      %v2337 = vpop.f32.mrb[0].mxu0
      %v2338 = vpop.f32.mrb[0].mxu0
      %v2339 = vadd.f32 0.0, %v2338
      %v2340 = vpop.f32.mrb[0].mxu0
      %2341 = vdwg.mxu0
      %v2342 = vadd.f32 %v1763, %v2216
      %v2343 = vadd.f32 %v1766, %v2219
      %v2344 = vadd.f32 %v1771, %v2224
      %v2345 = vadd.f32 %v1774, %v2227
      %v2346 = vadd.f32 %v1779, %v2232
      %v2347 = vadd.f32 %v1782, %v2235
      %v2348 = vadd.f32 %v1787, %v2240
      %v2349 = vadd.f32 %v1790, %v2243
      %v2350 = vadd.f32 %v1795, %v2248
      %v2351 = vadd.f32 %v1798, %v2251
      %v2352 = vadd.f32 %v1803, %v2256
      %v2353 = vadd.f32 %v1806, %v2259
      %v2354 = vadd.f32 %v1811, %v2264
      %v2355 = vadd.f32 %v1814, %v2267
      %v2356 = vadd.f32 %v1819, %v2272
      %v2357 = vadd.f32 %v1822, %v2275
      %v2358 = vadd.f32 %v1827, %v2280
      %v2359 = vadd.f32 %v1830, %v2283
      %v2360 = vadd.f32 %v1835, %v2288
      %v2361 = vadd.f32 %v1838, %v2291
      %v2362 = vadd.f32 %v1843, %v2296
      %v2363 = vadd.f32 %v1846, %v2299
      %v2364 = vadd.f32 %v1851, %v2304
      %v2365 = vadd.f32 %v1854, %v2307
      %v2366 = vadd.f32 %v1859, %v2312
      %v2367 = vadd.f32 %v1862, %v2315
      %v2368 = vadd.f32 %v1867, %v2320
      %v2369 = vadd.f32 %v1870, %v2323
      %v2370 = vadd.f32 %v1875, %v2328
      %v2371 = vadd.f32 %v1878, %v2331
      %v2372 = vadd.f32 %v1883, %v2336
      %v2373 = vadd.f32 %v1886, %v2339
      %s2374 = scalar_lea.vmem [#allocation2], 12
      %v2375 = vld [vmem:[%s2374] sm:$0xf]
      %v2376 = vld [vmem:[%s2374 + $0x4] sm:$0xf]
      %v2377 = vld [vmem:[%s2374 + $0xc] sm:$0xf]
      %v2378 = vld [vmem:[%s2374 + $0x10] sm:$0xf]
      %v2379 = vld [vmem:[%s2374 + $0x18] sm:$0xf]
      %v2380 = vld [vmem:[%s2374 + $0x1c] sm:$0xf]
      %v2381 = vld [vmem:[%s2374 + $0x24] sm:$0xf]
      %v2382 = vld [vmem:[%s2374 + $0x28] sm:$0xf]
      %v2383 = vld [vmem:[%s2374 + $0x30] sm:$0xf]
      %v2384 = vld [vmem:[%s2374 + $0x34] sm:$0xf]
      %v2385 = vld [vmem:[%s2374 + $0x3c] sm:$0xf]
      %v2386 = vld [vmem:[%s2374 + $0x40] sm:$0xf]
      %v2387 = vld [vmem:[%s2374 + $0x48] sm:$0xf]
      %v2388 = vld [vmem:[%s2374 + $0x4c] sm:$0xf]
      %v2389 = vld [vmem:[%s2374 + $0x54] sm:$0xf]
      %v2390 = vld [vmem:[%s2374 + $0x58] sm:$0xf]
      %v2391 = vld [vmem:[%s2374 + $0x60] sm:$0xf]
      %v2392 = vld [vmem:[%s2374 + $0x64] sm:$0xf]
      %v2393 = vld [vmem:[%s2374 + $0x6c] sm:$0xf]
      %v2394 = vld [vmem:[%s2374 + $0x70] sm:$0xf]
      %v2395 = vld [vmem:[%s2374 + $0x78] sm:$0xf]
      %v2396 = vld [vmem:[%s2374 + $0x7c] sm:$0xf]
      %v2397 = vld [vmem:[%s2374 + $0x84] sm:$0xf]
      %v2398 = vld [vmem:[%s2374 + $0x88] sm:$0xf]
      %v2399 = vld [vmem:[%s2374 + $0x90] sm:$0xf]
      %v2400 = vld [vmem:[%s2374 + $0x94] sm:$0xf]
      %v2401 = vld [vmem:[%s2374 + $0x9c] sm:$0xf]
      %v2402 = vld [vmem:[%s2374 + $0xa0] sm:$0xf]
      %v2403 = vld [vmem:[%s2374 + $0xa8] sm:$0xf]
      %v2404 = vld [vmem:[%s2374 + $0xac] sm:$0xf]
      %v2405 = vld [vmem:[%s2374 + $0xb4] sm:$0xf]
      %v2406 = vld [vmem:[%s2374 + $0xb8] sm:$0xf]
      %s2407 = scalar_lea.vmem %s3, 192
      %v2408 = vld [vmem:[%s2407] sm:$0xf]
      %v2409 = vld [vmem:[%s2407 + $0x4] sm:$0xf]
      %v2410 = vld [vmem:[%s2407 + $0x8] sm:$0xf]
      %v2411 = vld [vmem:[%s2407 + $0xc] sm:$0xf]
      %v2412 = vld [vmem:[%s2407 + $0x10] sm:$0xf]
      %v2413 = vld [vmem:[%s2407 + $0x14] sm:$0xf]
      %v2414 = vld [vmem:[%s2407 + $0x18] sm:$0xf]
      %v2415 = vld [vmem:[%s2407 + $0x1c] sm:$0xf]
      %v2416 = vld [vmem:[%s2407 + $0x20] sm:$0xf]
      %v2417 = vld [vmem:[%s2407 + $0x24] sm:$0xf]
      %v2418 = vld [vmem:[%s2407 + $0x28] sm:$0xf]
      %v2419 = vld [vmem:[%s2407 + $0x2c] sm:$0xf]
      %v2420 = vld [vmem:[%s2407 + $0x30] sm:$0xf]
      %v2421 = vld [vmem:[%s2407 + $0x34] sm:$0xf]
      %v2422 = vld [vmem:[%s2407 + $0x38] sm:$0xf]
      %v2423 = vld [vmem:[%s2407 + $0x3c] sm:$0xf]
      %v2456 = vunpack.c.l.b16 %v2375
      %v2457 = vunpack.c.l.b16 %v2376
      %v2458 = vunpack.c.l.b16 %v2377
      %v2459 = vunpack.c.l.b16 %v2378
      %v2460 = vunpack.c.l.b16 %v2379
      %v2461 = vunpack.c.l.b16 %v2380
      %v2462 = vunpack.c.l.b16 %v2381
      %v2463 = vunpack.c.l.b16 %v2382
      %v2464 = vunpack.c.l.b16 %v2383
      %v2465 = vunpack.c.l.b16 %v2384
      %v2466 = vunpack.c.l.b16 %v2385
      %v2467 = vunpack.c.l.b16 %v2386
      %v2468 = vunpack.c.l.b16 %v2387
      %v2469 = vunpack.c.l.b16 %v2388
      %v2470 = vunpack.c.l.b16 %v2389
      %v2471 = vunpack.c.l.b16 %v2390
      %v2472 = vunpack.c.l.b16 %v2391
      %v2473 = vunpack.c.l.b16 %v2392
      %v2474 = vunpack.c.l.b16 %v2393
      %v2475 = vunpack.c.l.b16 %v2394
      %v2476 = vunpack.c.l.b16 %v2395
      %v2477 = vunpack.c.l.b16 %v2396
      %v2478 = vunpack.c.l.b16 %v2397
      %v2479 = vunpack.c.l.b16 %v2398
      %v2480 = vunpack.c.l.b16 %v2399
      %v2481 = vunpack.c.l.b16 %v2400
      %v2482 = vunpack.c.l.b16 %v2401
      %v2483 = vunpack.c.l.b16 %v2402
      %v2484 = vunpack.c.l.b16 %v2403
      %v2485 = vunpack.c.l.b16 %v2404
      %v2486 = vunpack.c.l.b16 %v2405
      %v2487 = vunpack.c.l.b16 %v2406
      %v2488 = vpack.c.b16 %v2457, %v2456
      %v2489 = vpack.c.b16 %v2459, %v2458
      %v2490 = vpack.c.b16 %v2461, %v2460
      %v2491 = vpack.c.b16 %v2463, %v2462
      %v2492 = vpack.c.b16 %v2465, %v2464
      %v2493 = vpack.c.b16 %v2467, %v2466
      %v2494 = vpack.c.b16 %v2469, %v2468
      %v2495 = vpack.c.b16 %v2471, %v2470
      %v2496 = vpack.c.b16 %v2473, %v2472
      %v2497 = vpack.c.b16 %v2475, %v2474
      %v2498 = vpack.c.b16 %v2477, %v2476
      %v2499 = vpack.c.b16 %v2479, %v2478
      %v2500 = vpack.c.b16 %v2481, %v2480
      %v2501 = vpack.c.b16 %v2483, %v2482
      %v2502 = vpack.c.b16 %v2485, %v2484
      %v2503 = vpack.c.b16 %v2487, %v2486
      %v2536 = vunpack.c.l.b16 %v2408
      %v2537 = vunpack.c.l.b16 %v2409
      %v2538 = vunpack.c.l.b16 %v2410
      %v2539 = vunpack.c.l.b16 %v2411
      %v2540 = vunpack.c.l.b16 %v2412
      %v2541 = vunpack.c.l.b16 %v2413
      %v2542 = vunpack.c.l.b16 %v2414
      %v2543 = vunpack.c.l.b16 %v2415
      %v2544 = vunpack.c.l.b16 %v2416
      %v2545 = vunpack.c.l.b16 %v2417
      %v2546 = vunpack.c.l.b16 %v2418
      %v2547 = vunpack.c.l.b16 %v2419
      %v2548 = vunpack.c.l.b16 %v2420
      %v2549 = vunpack.c.l.b16 %v2421
      %v2550 = vunpack.c.l.b16 %v2422
      %v2551 = vunpack.c.l.b16 %v2423
      %v2552 = vpack.c.b16 %v2537, %v2536
      %v2553 = vpack.c.b16 %v2539, %v2538
      %v2554 = vpack.c.b16 %v2541, %v2540
      %v2555 = vpack.c.b16 %v2543, %v2542
      %v2556 = vpack.c.b16 %v2545, %v2544
      %v2557 = vpack.c.b16 %v2547, %v2546
      %v2558 = vpack.c.b16 %v2549, %v2548
      %v2559 = vpack.c.b16 %v2551, %v2550
      %2568 = vmatprep.subr.bf16.mxu0 0
      %2569 = vmatpush1.bf16.msra.mxu0 %v2552
      %2570 = vmatprep.subr.bf16.mxu0 0
      %2571 = vmatpush1.bf16.msra.mxu0 %v2553
      %2572 = vmatprep.subr.bf16.mxu0 0
      %2573 = vmatpush1.bf16.msra.mxu0 %v2554
      %2574 = vmatprep.subr.bf16.mxu0 0
      %2575 = vmatpush1.bf16.msra.mxu0 %v2555
      %2576 = vmatprep.subr.bf16.mxu0 0
      %2577 = vmatpush1.bf16.msra.mxu0 %v2556
      %2578 = vmatprep.subr.bf16.mxu0 0
      %2579 = vmatpush1.bf16.msra.mxu0 %v2557
      %2580 = vmatprep.subr.bf16.mxu0 0
      %2581 = vmatpush1.bf16.msra.mxu0 %v2558
      %2582 = vmatprep.subr.bf16.mxu0 0
      %2583 = vmatpush1.bf16.msra.mxu0 %v2559
      %2584 = vmatprep.subr.bf16.mxu0 0
      %2585 = vmatpush1.bf16.msra.mxu0 0
      %2586 = vmatprep.subr.bf16.mxu0 0
      %2587 = vmatpush1.bf16.msra.mxu0 0
      %2588 = vmatprep.subr.bf16.mxu0 0
      %2589 = vmatpush1.bf16.msra.mxu0 0
      %2590 = vmatprep.subr.bf16.mxu0 0
      %2591 = vmatpush1.bf16.msra.mxu0 0
      %2592 = vmatprep.subr.bf16.mxu0 0
      %2593 = vmatpush1.bf16.msra.mxu0 0
      %2594 = vmatprep.subr.bf16.mxu0 0
      %2595 = vmatpush1.bf16.msra.mxu0 0
      %2596 = vmatprep.subr.bf16.mxu0 0
      %2597 = vmatpush1.bf16.msra.mxu0 0
      %2598 = vmatprep.subr.bf16.mxu0 0
      %2599 = vmatpush1.bf16.msra.mxu0 0
      %2600 = vmatprep.mubr.bf16.mxu0 0
      %2601 = vmatmul.mubr.bf16.gmra.mrb[0].mxu0 %v2488
      %v2602 = vpop.f32.mrb[0].mxu0
      %v2603 = vadd.f32 0.0, %v2602
      %v2604 = vpop.f32.mrb[0].mxu0
      %v2605 = vpop.f32.mrb[0].mxu0
      %v2606 = vadd.f32 0.0, %v2605
      %v2607 = vpop.f32.mrb[0].mxu0
      %2608 = vmatprep.mubr.bf16.mxu0 0
      %2609 = vmatmul.mubr.bf16.gmra.mrb[0].mxu0 %v2489
      %v2610 = vpop.f32.mrb[0].mxu0
      %v2611 = vadd.f32 0.0, %v2610
      %v2612 = vpop.f32.mrb[0].mxu0
      %v2613 = vpop.f32.mrb[0].mxu0
      %v2614 = vadd.f32 0.0, %v2613
      %v2615 = vpop.f32.mrb[0].mxu0
      %2616 = vmatprep.mubr.bf16.mxu0 0
      %2617 = vmatmul.mubr.bf16.gmra.mrb[0].mxu0 %v2490
      %v2618 = vpop.f32.mrb[0].mxu0
      %v2619 = vadd.f32 0.0, %v2618
      %v2620 = vpop.f32.mrb[0].mxu0
      %v2621 = vpop.f32.mrb[0].mxu0
      %v2622 = vadd.f32 0.0, %v2621
      %v2623 = vpop.f32.mrb[0].mxu0
      %2624 = vmatprep.mubr.bf16.mxu0 0
      %2625 = vmatmul.mubr.bf16.gmra.mrb[0].mxu0 %v2491
      %v2626 = vpop.f32.mrb[0].mxu0
      %v2627 = vadd.f32 0.0, %v2626
      %v2628 = vpop.f32.mrb[0].mxu0
      %v2629 = vpop.f32.mrb[0].mxu0
      %v2630 = vadd.f32 0.0, %v2629
      %v2631 = vpop.f32.mrb[0].mxu0
      %2632 = vmatprep.mubr.bf16.mxu0 0
      %2633 = vmatmul.mubr.bf16.gmra.mrb[0].mxu0 %v2492
      %v2634 = vpop.f32.mrb[0].mxu0
      %v2635 = vadd.f32 0.0, %v2634
      %v2636 = vpop.f32.mrb[0].mxu0
      %v2637 = vpop.f32.mrb[0].mxu0
      %v2638 = vadd.f32 0.0, %v2637
      %v2639 = vpop.f32.mrb[0].mxu0
      %2640 = vmatprep.mubr.bf16.mxu0 0
      %2641 = vmatmul.mubr.bf16.gmra.mrb[0].mxu0 %v2493
      %v2642 = vpop.f32.mrb[0].mxu0
      %v2643 = vadd.f32 0.0, %v2642
      %v2644 = vpop.f32.mrb[0].mxu0
      %v2645 = vpop.f32.mrb[0].mxu0
      %v2646 = vadd.f32 0.0, %v2645
      %v2647 = vpop.f32.mrb[0].mxu0
      %2648 = vmatprep.mubr.bf16.mxu0 0
      %2649 = vmatmul.mubr.bf16.gmra.mrb[0].mxu0 %v2494
      %v2650 = vpop.f32.mrb[0].mxu0
      %v2651 = vadd.f32 0.0, %v2650
      %v2652 = vpop.f32.mrb[0].mxu0
      %v2653 = vpop.f32.mrb[0].mxu0
      %v2654 = vadd.f32 0.0, %v2653
      %v2655 = vpop.f32.mrb[0].mxu0
      %2656 = vmatprep.mubr.bf16.mxu0 0
      %2657 = vmatmul.mubr.bf16.gmra.mrb[0].mxu0 %v2495
      %v2658 = vpop.f32.mrb[0].mxu0
      %v2659 = vadd.f32 0.0, %v2658
      %v2660 = vpop.f32.mrb[0].mxu0
      %v2661 = vpop.f32.mrb[0].mxu0
      %v2662 = vadd.f32 0.0, %v2661
      %v2663 = vpop.f32.mrb[0].mxu0
      %2664 = vmatprep.mubr.bf16.mxu0 0
      %2665 = vmatmul.mubr.bf16.gmra.mrb[0].mxu0 %v2496
      %v2666 = vpop.f32.mrb[0].mxu0
      %v2667 = vadd.f32 0.0, %v2666
      %v2668 = vpop.f32.mrb[0].mxu0
      %v2669 = vpop.f32.mrb[0].mxu0
      %v2670 = vadd.f32 0.0, %v2669
      %v2671 = vpop.f32.mrb[0].mxu0
      %2672 = vmatprep.mubr.bf16.mxu0 0
      %2673 = vmatmul.mubr.bf16.gmra.mrb[0].mxu0 %v2497
      %v2674 = vpop.f32.mrb[0].mxu0
      %v2675 = vadd.f32 0.0, %v2674
      %v2676 = vpop.f32.mrb[0].mxu0
      %v2677 = vpop.f32.mrb[0].mxu0
      %v2678 = vadd.f32 0.0, %v2677
      %v2679 = vpop.f32.mrb[0].mxu0
      %2680 = vmatprep.mubr.bf16.mxu0 0
      %2681 = vmatmul.mubr.bf16.gmra.mrb[0].mxu0 %v2498
      %v2682 = vpop.f32.mrb[0].mxu0
      %v2683 = vadd.f32 0.0, %v2682
      %v2684 = vpop.f32.mrb[0].mxu0
      %v2685 = vpop.f32.mrb[0].mxu0
      %v2686 = vadd.f32 0.0, %v2685
      %v2687 = vpop.f32.mrb[0].mxu0
      %2688 = vmatprep.mubr.bf16.mxu0 0
      %2689 = vmatmul.mubr.bf16.gmra.mrb[0].mxu0 %v2499
      %v2690 = vpop.f32.mrb[0].mxu0
      %v2691 = vadd.f32 0.0, %v2690
      %v2692 = vpop.f32.mrb[0].mxu0
      %v2693 = vpop.f32.mrb[0].mxu0
      %v2694 = vadd.f32 0.0, %v2693
      %v2695 = vpop.f32.mrb[0].mxu0
      %2696 = vmatprep.mubr.bf16.mxu0 0
      %2697 = vmatmul.mubr.bf16.gmra.mrb[0].mxu0 %v2500
      %v2698 = vpop.f32.mrb[0].mxu0
      %v2699 = vadd.f32 0.0, %v2698
      %v2700 = vpop.f32.mrb[0].mxu0
      %v2701 = vpop.f32.mrb[0].mxu0
      %v2702 = vadd.f32 0.0, %v2701
      %v2703 = vpop.f32.mrb[0].mxu0
      %2704 = vmatprep.mubr.bf16.mxu0 0
      %2705 = vmatmul.mubr.bf16.gmra.mrb[0].mxu0 %v2501
      %v2706 = vpop.f32.mrb[0].mxu0
      %v2707 = vadd.f32 0.0, %v2706
      %v2708 = vpop.f32.mrb[0].mxu0
      %v2709 = vpop.f32.mrb[0].mxu0
      %v2710 = vadd.f32 0.0, %v2709
      %v2711 = vpop.f32.mrb[0].mxu0
      %2712 = vmatprep.mubr.bf16.mxu0 0
      %2713 = vmatmul.mubr.bf16.gmra.mrb[0].mxu0 %v2502
      %v2714 = vpop.f32.mrb[0].mxu0
      %v2715 = vadd.f32 0.0, %v2714
      %v2716 = vpop.f32.mrb[0].mxu0
      %v2717 = vpop.f32.mrb[0].mxu0
      %v2718 = vadd.f32 0.0, %v2717
      %v2719 = vpop.f32.mrb[0].mxu0
      %2720 = vmatprep.mubr.bf16.mxu0 0
      %2721 = vmatmul.mubr.bf16.gmra.mrb[0].mxu0 %v2503
      %v2722 = vpop.f32.mrb[0].mxu0
      %v2723 = vadd.f32 0.0, %v2722
      %v2724 = vpop.f32.mrb[0].mxu0
      %v2725 = vpop.f32.mrb[0].mxu0
      %v2726 = vadd.f32 0.0, %v2725
      %v2727 = vpop.f32.mrb[0].mxu0
      %2728 = vdwg.mxu0
      %v2729 = vadd.f32 %v2342, %v2603
      %v2730 = vadd.f32 %v2343, %v2606
      %v2731 = vadd.f32 %v2344, %v2611
      %v2732 = vadd.f32 %v2345, %v2614
      %v2733 = vadd.f32 %v2346, %v2619
      %v2734 = vadd.f32 %v2347, %v2622
      %v2735 = vadd.f32 %v2348, %v2627
      %v2736 = vadd.f32 %v2349, %v2630
      %v2737 = vadd.f32 %v2350, %v2635
      %v2738 = vadd.f32 %v2351, %v2638
      %v2739 = vadd.f32 %v2352, %v2643
      %v2740 = vadd.f32 %v2353, %v2646
      %v2741 = vadd.f32 %v2354, %v2651
      %v2742 = vadd.f32 %v2355, %v2654
      %v2743 = vadd.f32 %v2356, %v2659
      %v2744 = vadd.f32 %v2357, %v2662
      %v2745 = vadd.f32 %v2358, %v2667
      %v2746 = vadd.f32 %v2359, %v2670
      %v2747 = vadd.f32 %v2360, %v2675
      %v2748 = vadd.f32 %v2361, %v2678
      %v2749 = vadd.f32 %v2362, %v2683
      %v2750 = vadd.f32 %v2363, %v2686
      %v2751 = vadd.f32 %v2364, %v2691
      %v2752 = vadd.f32 %v2365, %v2694
      %v2753 = vadd.f32 %v2366, %v2699
      %v2754 = vadd.f32 %v2367, %v2702
      %v2755 = vadd.f32 %v2368, %v2707
      %v2756 = vadd.f32 %v2369, %v2710
      %v2757 = vadd.f32 %v2370, %v2715
      %v2758 = vadd.f32 %v2371, %v2718
      %v2759 = vadd.f32 %v2372, %v2723
      %v2760 = vadd.f32 %v2373, %v2726
      %v2761 = vld [vmem:[%s2374] sm:$0xf]
      %v2762 = vld [vmem:[%s2374 + $0x4] sm:$0xf]
      %v2763 = vld [vmem:[%s2374 + $0x8] sm:$0x1]
      %v2764 = vld [vmem:[%s2374 + $0xc] sm:$0xf]
      %v2765 = vld [vmem:[%s2374 + $0x10] sm:$0xf]
      %v2766 = vld [vmem:[%s2374 + $0x14] sm:$0x1]
      %v2767 = vld [vmem:[%s2374 + $0x18] sm:$0xf]
      %v2768 = vld [vmem:[%s2374 + $0x1c] sm:$0xf]
      %v2769 = vld [vmem:[%s2374 + $0x20] sm:$0x1]
      %v2770 = vld [vmem:[%s2374 + $0x24] sm:$0xf]
      %v2771 = vld [vmem:[%s2374 + $0x28] sm:$0xf]
      %v2772 = vld [vmem:[%s2374 + $0x2c] sm:$0x1]
      %v2773 = vld [vmem:[%s2374 + $0x30] sm:$0xf]
      %v2774 = vld [vmem:[%s2374 + $0x34] sm:$0xf]
      %v2775 = vld [vmem:[%s2374 + $0x38] sm:$0x1]
      %v2776 = vld [vmem:[%s2374 + $0x3c] sm:$0xf]
      %v2777 = vld [vmem:[%s2374 + $0x40] sm:$0xf]
      %v2778 = vld [vmem:[%s2374 + $0x44] sm:$0x1]
      %v2779 = vld [vmem:[%s2374 + $0x48] sm:$0xf]
      %v2780 = vld [vmem:[%s2374 + $0x4c] sm:$0xf]
      %v2781 = vld [vmem:[%s2374 + $0x50] sm:$0x1]
      %v2782 = vld [vmem:[%s2374 + $0x54] sm:$0xf]
      %v2783 = vld [vmem:[%s2374 + $0x58] sm:$0xf]
      %v2784 = vld [vmem:[%s2374 + $0x5c] sm:$0x1]
      %v2785 = vld [vmem:[%s2374 + $0x60] sm:$0xf]
      %v2786 = vld [vmem:[%s2374 + $0x64] sm:$0xf]
      %v2787 = vld [vmem:[%s2374 + $0x68] sm:$0x1]
      %v2788 = vld [vmem:[%s2374 + $0x6c] sm:$0xf]
      %v2789 = vld [vmem:[%s2374 + $0x70] sm:$0xf]
      %v2790 = vld [vmem:[%s2374 + $0x74] sm:$0x1]
      %v2791 = vld [vmem:[%s2374 + $0x78] sm:$0xf]
      %v2792 = vld [vmem:[%s2374 + $0x7c] sm:$0xf]
      %v2793 = vld [vmem:[%s2374 + $0x80] sm:$0x1]
      %v2794 = vld [vmem:[%s2374 + $0x84] sm:$0xf]
      %v2795 = vld [vmem:[%s2374 + $0x88] sm:$0xf]
      %v2796 = vld [vmem:[%s2374 + $0x8c] sm:$0x1]
      %v2797 = vld [vmem:[%s2374 + $0x90] sm:$0xf]
      %v2798 = vld [vmem:[%s2374 + $0x94] sm:$0xf]
      %v2799 = vld [vmem:[%s2374 + $0x98] sm:$0x1]
      %v2800 = vld [vmem:[%s2374 + $0x9c] sm:$0xf]
      %v2801 = vld [vmem:[%s2374 + $0xa0] sm:$0xf]
      %v2802 = vld [vmem:[%s2374 + $0xa4] sm:$0x1]
      %v2803 = vld [vmem:[%s2374 + $0xa8] sm:$0xf]
      %v2804 = vld [vmem:[%s2374 + $0xac] sm:$0xf]
      %v2805 = vld [vmem:[%s2374 + $0xb0] sm:$0x1]
      %v2806 = vld [vmem:[%s2374 + $0xb4] sm:$0xf]
      %v2807 = vld [vmem:[%s2374 + $0xb8] sm:$0xf]
      %v2808 = vld [vmem:[%s2374 + $0xbc] sm:$0x1]
      %v2810 = vshrl.u32 %v2761, 16
      %v2812 = vrot.slane %v2810, 4
      %v2813 = vshll.u32 %v2761, 16
      %v2815 = vrot.slane %v2813, 5
      %v2816 = vor.u32 %v2812, %v2815
      %v2817 = vrot.slane %v2816, 4
      %v2819 = vshll.u32 %v2762, 16
      %v2821 = vrot.slane %v2819, 5
      %v2822 = vsel %vm909, %v2817, %v2821
      %v2823 = vshrl.u32 %v2762, 16
      %v2825 = vrot.slane %v2823, 4
      %v2826 = vor.u32 %v2825, %v2821
      %v2827 = vrot.slane %v2826, 4
      %v2829 = vshll.u32 %v2763, 16
      %v2831 = vrot.slane %v2829, 5
      %v2832 = vsel %vm909, %v2827, %v2831
      %v2834 = vshrl.u32 %v2764, 16
      %v2836 = vrot.slane %v2834, 4
      %v2837 = vshll.u32 %v2764, 16
      %v2839 = vrot.slane %v2837, 5
      %v2840 = vor.u32 %v2836, %v2839
      %v2841 = vrot.slane %v2840, 4
      %v2843 = vshll.u32 %v2765, 16
      %v2845 = vrot.slane %v2843, 5
      %v2846 = vsel %vm909, %v2841, %v2845
      %v2847 = vshrl.u32 %v2765, 16
      %v2849 = vrot.slane %v2847, 4
      %v2850 = vor.u32 %v2849, %v2845
      %v2851 = vrot.slane %v2850, 4
      %v2853 = vshll.u32 %v2766, 16
      %v2855 = vrot.slane %v2853, 5
      %v2856 = vsel %vm909, %v2851, %v2855
      %v2858 = vshrl.u32 %v2767, 16
      %v2860 = vrot.slane %v2858, 4
      %v2861 = vshll.u32 %v2767, 16
      %v2863 = vrot.slane %v2861, 5
      %v2864 = vor.u32 %v2860, %v2863
      %v2865 = vrot.slane %v2864, 4
      %v2867 = vshll.u32 %v2768, 16
      %v2869 = vrot.slane %v2867, 5
      %v2870 = vsel %vm909, %v2865, %v2869
      %v2871 = vshrl.u32 %v2768, 16
      %v2873 = vrot.slane %v2871, 4
      %v2874 = vor.u32 %v2873, %v2869
      %v2875 = vrot.slane %v2874, 4
      %v2877 = vshll.u32 %v2769, 16
      %v2879 = vrot.slane %v2877, 5
      %v2880 = vsel %vm909, %v2875, %v2879
      %v2882 = vshrl.u32 %v2770, 16
      %v2884 = vrot.slane %v2882, 4
      %v2885 = vshll.u32 %v2770, 16
      %v2887 = vrot.slane %v2885, 5
      %v2888 = vor.u32 %v2884, %v2887
      %v2889 = vrot.slane %v2888, 4
      %v2891 = vshll.u32 %v2771, 16
      %v2893 = vrot.slane %v2891, 5
      %v2894 = vsel %vm909, %v2889, %v2893
      %v2895 = vshrl.u32 %v2771, 16
      %v2897 = vrot.slane %v2895, 4
      %v2898 = vor.u32 %v2897, %v2893
      %v2899 = vrot.slane %v2898, 4
      %v2901 = vshll.u32 %v2772, 16
      %v2903 = vrot.slane %v2901, 5
      %v2904 = vsel %vm909, %v2899, %v2903
      %v2906 = vshrl.u32 %v2773, 16
      %v2908 = vrot.slane %v2906, 4
      %v2909 = vshll.u32 %v2773, 16
      %v2911 = vrot.slane %v2909, 5
      %v2912 = vor.u32 %v2908, %v2911
      %v2913 = vrot.slane %v2912, 4
      %v2915 = vshll.u32 %v2774, 16
      %v2917 = vrot.slane %v2915, 5
      %v2918 = vsel %vm909, %v2913, %v2917
      %v2919 = vshrl.u32 %v2774, 16
      %v2921 = vrot.slane %v2919, 4
      %v2922 = vor.u32 %v2921, %v2917
      %v2923 = vrot.slane %v2922, 4
      %v2925 = vshll.u32 %v2775, 16
      %v2927 = vrot.slane %v2925, 5
      %v2928 = vsel %vm909, %v2923, %v2927
      %v2930 = vshrl.u32 %v2776, 16
      %v2932 = vrot.slane %v2930, 4
      %v2933 = vshll.u32 %v2776, 16
      %v2935 = vrot.slane %v2933, 5
      %v2936 = vor.u32 %v2932, %v2935
      %v2937 = vrot.slane %v2936, 4
      %v2939 = vshll.u32 %v2777, 16
      %v2941 = vrot.slane %v2939, 5
      %v2942 = vsel %vm909, %v2937, %v2941
      %v2943 = vshrl.u32 %v2777, 16
      %v2945 = vrot.slane %v2943, 4
      %v2946 = vor.u32 %v2945, %v2941
      %v2947 = vrot.slane %v2946, 4
      %v2949 = vshll.u32 %v2778, 16
      %v2951 = vrot.slane %v2949, 5
      %v2952 = vsel %vm909, %v2947, %v2951
      %v2954 = vshrl.u32 %v2779, 16
      %v2956 = vrot.slane %v2954, 4
      %v2957 = vshll.u32 %v2779, 16
      %v2959 = vrot.slane %v2957, 5
      %v2960 = vor.u32 %v2956, %v2959
      %v2961 = vrot.slane %v2960, 4
      %v2963 = vshll.u32 %v2780, 16
      %v2965 = vrot.slane %v2963, 5
      %v2966 = vsel %vm909, %v2961, %v2965
      %v2967 = vshrl.u32 %v2780, 16
      %v2969 = vrot.slane %v2967, 4
      %v2970 = vor.u32 %v2969, %v2965
      %v2971 = vrot.slane %v2970, 4
      %v2973 = vshll.u32 %v2781, 16
      %v2975 = vrot.slane %v2973, 5
      %v2976 = vsel %vm909, %v2971, %v2975
      %v2978 = vshrl.u32 %v2782, 16
      %v2980 = vrot.slane %v2978, 4
      %v2981 = vshll.u32 %v2782, 16
      %v2983 = vrot.slane %v2981, 5
      %v2984 = vor.u32 %v2980, %v2983
      %v2985 = vrot.slane %v2984, 4
      %v2987 = vshll.u32 %v2783, 16
      %v2989 = vrot.slane %v2987, 5
      %v2990 = vsel %vm909, %v2985, %v2989
      %v2991 = vshrl.u32 %v2783, 16
      %v2993 = vrot.slane %v2991, 4
      %v2994 = vor.u32 %v2993, %v2989
      %v2995 = vrot.slane %v2994, 4
      %v2997 = vshll.u32 %v2784, 16
      %v2999 = vrot.slane %v2997, 5
      %v3000 = vsel %vm909, %v2995, %v2999
      %v3002 = vshrl.u32 %v2785, 16
      %v3004 = vrot.slane %v3002, 4
      %v3005 = vshll.u32 %v2785, 16
      %v3007 = vrot.slane %v3005, 5
      %v3008 = vor.u32 %v3004, %v3007
      %v3009 = vrot.slane %v3008, 4
      %v3011 = vshll.u32 %v2786, 16
      %v3013 = vrot.slane %v3011, 5
      %v3014 = vsel %vm909, %v3009, %v3013
      %v3015 = vshrl.u32 %v2786, 16
      %v3017 = vrot.slane %v3015, 4
      %v3018 = vor.u32 %v3017, %v3013
      %v3019 = vrot.slane %v3018, 4
      %v3021 = vshll.u32 %v2787, 16
      %v3023 = vrot.slane %v3021, 5
      %v3024 = vsel %vm909, %v3019, %v3023
      %v3026 = vshrl.u32 %v2788, 16
      %v3028 = vrot.slane %v3026, 4
      %v3029 = vshll.u32 %v2788, 16
      %v3031 = vrot.slane %v3029, 5
      %v3032 = vor.u32 %v3028, %v3031
      %v3033 = vrot.slane %v3032, 4
      %v3035 = vshll.u32 %v2789, 16
      %v3037 = vrot.slane %v3035, 5
      %v3038 = vsel %vm909, %v3033, %v3037
      %v3039 = vshrl.u32 %v2789, 16
      %v3041 = vrot.slane %v3039, 4
      %v3042 = vor.u32 %v3041, %v3037
      %v3043 = vrot.slane %v3042, 4
      %v3045 = vshll.u32 %v2790, 16
      %v3047 = vrot.slane %v3045, 5
      %v3048 = vsel %vm909, %v3043, %v3047
      %v3050 = vshrl.u32 %v2791, 16
      %v3052 = vrot.slane %v3050, 4
      %v3053 = vshll.u32 %v2791, 16
      %v3055 = vrot.slane %v3053, 5
      %v3056 = vor.u32 %v3052, %v3055
      %v3057 = vrot.slane %v3056, 4
      %v3059 = vshll.u32 %v2792, 16
      %v3061 = vrot.slane %v3059, 5
      %v3062 = vsel %vm909, %v3057, %v3061
      %v3063 = vshrl.u32 %v2792, 16
      %v3065 = vrot.slane %v3063, 4
      %v3066 = vor.u32 %v3065, %v3061
      %v3067 = vrot.slane %v3066, 4
      %v3069 = vshll.u32 %v2793, 16
      %v3071 = vrot.slane %v3069, 5
      %v3072 = vsel %vm909, %v3067, %v3071
      %v3074 = vshrl.u32 %v2794, 16
      %v3076 = vrot.slane %v3074, 4
      %v3077 = vshll.u32 %v2794, 16
      %v3079 = vrot.slane %v3077, 5
      %v3080 = vor.u32 %v3076, %v3079
      %v3081 = vrot.slane %v3080, 4
      %v3083 = vshll.u32 %v2795, 16
      %v3085 = vrot.slane %v3083, 5
      %v3086 = vsel %vm909, %v3081, %v3085
      %v3087 = vshrl.u32 %v2795, 16
      %v3089 = vrot.slane %v3087, 4
      %v3090 = vor.u32 %v3089, %v3085
      %v3091 = vrot.slane %v3090, 4
      %v3093 = vshll.u32 %v2796, 16
      %v3095 = vrot.slane %v3093, 5
      %v3096 = vsel %vm909, %v3091, %v3095
      %v3098 = vshrl.u32 %v2797, 16
      %v3100 = vrot.slane %v3098, 4
      %v3101 = vshll.u32 %v2797, 16
      %v3103 = vrot.slane %v3101, 5
      %v3104 = vor.u32 %v3100, %v3103
      %v3105 = vrot.slane %v3104, 4
      %v3107 = vshll.u32 %v2798, 16
      %v3109 = vrot.slane %v3107, 5
      %v3110 = vsel %vm909, %v3105, %v3109
      %v3111 = vshrl.u32 %v2798, 16
      %v3113 = vrot.slane %v3111, 4
      %v3114 = vor.u32 %v3113, %v3109
      %v3115 = vrot.slane %v3114, 4
      %v3117 = vshll.u32 %v2799, 16
      %v3119 = vrot.slane %v3117, 5
      %v3120 = vsel %vm909, %v3115, %v3119
      %v3122 = vshrl.u32 %v2800, 16
      %v3124 = vrot.slane %v3122, 4
      %v3125 = vshll.u32 %v2800, 16
      %v3127 = vrot.slane %v3125, 5
      %v3128 = vor.u32 %v3124, %v3127
      %v3129 = vrot.slane %v3128, 4
      %v3131 = vshll.u32 %v2801, 16
      %v3133 = vrot.slane %v3131, 5
      %v3134 = vsel %vm909, %v3129, %v3133
      %v3135 = vshrl.u32 %v2801, 16
      %v3137 = vrot.slane %v3135, 4
      %v3138 = vor.u32 %v3137, %v3133
      %v3139 = vrot.slane %v3138, 4
      %v3141 = vshll.u32 %v2802, 16
      %v3143 = vrot.slane %v3141, 5
      %v3144 = vsel %vm909, %v3139, %v3143
      %v3146 = vshrl.u32 %v2803, 16
      %v3148 = vrot.slane %v3146, 4
      %v3149 = vshll.u32 %v2803, 16
      %v3151 = vrot.slane %v3149, 5
      %v3152 = vor.u32 %v3148, %v3151
      %v3153 = vrot.slane %v3152, 4
      %v3155 = vshll.u32 %v2804, 16
      %v3157 = vrot.slane %v3155, 5
      %v3158 = vsel %vm909, %v3153, %v3157
      %v3159 = vshrl.u32 %v2804, 16
      %v3161 = vrot.slane %v3159, 4
      %v3162 = vor.u32 %v3161, %v3157
      %v3163 = vrot.slane %v3162, 4
      %v3165 = vshll.u32 %v2805, 16
      %v3167 = vrot.slane %v3165, 5
      %v3168 = vsel %vm909, %v3163, %v3167
      %v3170 = vshrl.u32 %v2806, 16
      %v3172 = vrot.slane %v3170, 4
      %v3173 = vshll.u32 %v2806, 16
      %v3175 = vrot.slane %v3173, 5
      %v3176 = vor.u32 %v3172, %v3175
      %v3177 = vrot.slane %v3176, 4
      %v3179 = vshll.u32 %v2807, 16
      %v3181 = vrot.slane %v3179, 5
      %v3182 = vsel %vm909, %v3177, %v3181
      %v3183 = vshrl.u32 %v2807, 16
      %v3185 = vrot.slane %v3183, 4
      %v3186 = vor.u32 %v3185, %v3181
      %v3187 = vrot.slane %v3186, 4
      %v3189 = vshll.u32 %v2808, 16
      %v3191 = vrot.slane %v3189, 5
      %v3192 = vsel %vm909, %v3187, %v3191
      %s3193 = scalar_lea.vmem %s3, 256
      %v3194 = vld [vmem:[%s3193] sm:$0xf]
      %v3195 = vld [vmem:[%s3193 + $0x4] sm:$0xf]
      %v3196 = vld [vmem:[%s3193 + $0x8] sm:$0xf]
      %v3197 = vld [vmem:[%s3193 + $0xc] sm:$0xf]
      %v3198 = vld [vmem:[%s3193 + $0x10] sm:$0xf]
      %v3199 = vld [vmem:[%s3193 + $0x14] sm:$0xf]
      %v3200 = vld [vmem:[%s3193 + $0x18] sm:$0xf]
      %v3201 = vld [vmem:[%s3193 + $0x1c] sm:$0xf]
      %v3202 = vld [vmem:[%s3193 + $0x20] sm:$0xf]
      %v3203 = vld [vmem:[%s3193 + $0x24] sm:$0xf]
      %v3204 = vld [vmem:[%s3193 + $0x28] sm:$0xf]
      %v3205 = vld [vmem:[%s3193 + $0x2c] sm:$0xf]
      %v3206 = vld [vmem:[%s3193 + $0x30] sm:$0xf]
      %v3207 = vld [vmem:[%s3193 + $0x34] sm:$0xf]
      %v3208 = vld [vmem:[%s3193 + $0x38] sm:$0xf]
      %v3209 = vld [vmem:[%s3193 + $0x3c] sm:$0xf]
      %v3210 = vunpack.c.l.b16 %v2822
      %v3211 = vunpack.c.l.b16 %v2832
      %v3212 = vunpack.c.l.b16 %v2846
      %v3213 = vunpack.c.l.b16 %v2856
      %v3214 = vunpack.c.l.b16 %v2870
      %v3215 = vunpack.c.l.b16 %v2880
      %v3216 = vunpack.c.l.b16 %v2894
      %v3217 = vunpack.c.l.b16 %v2904
      %v3218 = vunpack.c.l.b16 %v2918
      %v3219 = vunpack.c.l.b16 %v2928
      %v3220 = vunpack.c.l.b16 %v2942
      %v3221 = vunpack.c.l.b16 %v2952
      %v3222 = vunpack.c.l.b16 %v2966
      %v3223 = vunpack.c.l.b16 %v2976
      %v3224 = vunpack.c.l.b16 %v2990
      %v3225 = vunpack.c.l.b16 %v3000
      %v3226 = vunpack.c.l.b16 %v3014
      %v3227 = vunpack.c.l.b16 %v3024
      %v3228 = vunpack.c.l.b16 %v3038
      %v3229 = vunpack.c.l.b16 %v3048
      %v3230 = vunpack.c.l.b16 %v3062
      %v3231 = vunpack.c.l.b16 %v3072
      %v3232 = vunpack.c.l.b16 %v3086
      %v3233 = vunpack.c.l.b16 %v3096
      %v3234 = vunpack.c.l.b16 %v3110
      %v3235 = vunpack.c.l.b16 %v3120
      %v3236 = vunpack.c.l.b16 %v3134
      %v3237 = vunpack.c.l.b16 %v3144
      %v3238 = vunpack.c.l.b16 %v3158
      %v3239 = vunpack.c.l.b16 %v3168
      %v3240 = vunpack.c.l.b16 %v3182
      %v3241 = vunpack.c.l.b16 %v3192
      %v3242 = vpack.c.b16 %v3211, %v3210
      %v3243 = vpack.c.b16 %v3213, %v3212
      %v3244 = vpack.c.b16 %v3215, %v3214
      %v3245 = vpack.c.b16 %v3217, %v3216
      %v3246 = vpack.c.b16 %v3219, %v3218
      %v3247 = vpack.c.b16 %v3221, %v3220
      %v3248 = vpack.c.b16 %v3223, %v3222
      %v3249 = vpack.c.b16 %v3225, %v3224
      %v3250 = vpack.c.b16 %v3227, %v3226
      %v3251 = vpack.c.b16 %v3229, %v3228
      %v3252 = vpack.c.b16 %v3231, %v3230
      %v3253 = vpack.c.b16 %v3233, %v3232
      %v3254 = vpack.c.b16 %v3235, %v3234
      %v3255 = vpack.c.b16 %v3237, %v3236
      %v3256 = vpack.c.b16 %v3239, %v3238
      %v3257 = vpack.c.b16 %v3241, %v3240
      %v3290 = vunpack.c.l.b16 %v3194
      %v3291 = vunpack.c.l.b16 %v3195
      %v3292 = vunpack.c.l.b16 %v3196
      %v3293 = vunpack.c.l.b16 %v3197
      %v3294 = vunpack.c.l.b16 %v3198
      %v3295 = vunpack.c.l.b16 %v3199
      %v3296 = vunpack.c.l.b16 %v3200
      %v3297 = vunpack.c.l.b16 %v3201
      %v3298 = vunpack.c.l.b16 %v3202
      %v3299 = vunpack.c.l.b16 %v3203
      %v3300 = vunpack.c.l.b16 %v3204
      %v3301 = vunpack.c.l.b16 %v3205
      %v3302 = vunpack.c.l.b16 %v3206
      %v3303 = vunpack.c.l.b16 %v3207
      %v3304 = vunpack.c.l.b16 %v3208
      %v3305 = vunpack.c.l.b16 %v3209
      %v3306 = vpack.c.b16 %v3291, %v3290
      %v3307 = vpack.c.b16 %v3293, %v3292
      %v3308 = vpack.c.b16 %v3295, %v3294
      %v3309 = vpack.c.b16 %v3297, %v3296
      %v3310 = vpack.c.b16 %v3299, %v3298
      %v3311 = vpack.c.b16 %v3301, %v3300
      %v3312 = vpack.c.b16 %v3303, %v3302
      %v3313 = vpack.c.b16 %v3305, %v3304
      %3322 = vmatprep.subr.bf16.mxu0 0
      %3323 = vmatpush1.bf16.msra.mxu0 %v3306
      %3324 = vmatprep.subr.bf16.mxu0 0
      %3325 = vmatpush1.bf16.msra.mxu0 %v3307
      %3326 = vmatprep.subr.bf16.mxu0 0
      %3327 = vmatpush1.bf16.msra.mxu0 %v3308
      %3328 = vmatprep.subr.bf16.mxu0 0
      %3329 = vmatpush1.bf16.msra.mxu0 %v3309
      %3330 = vmatprep.subr.bf16.mxu0 0
      %3331 = vmatpush1.bf16.msra.mxu0 %v3310
      %3332 = vmatprep.subr.bf16.mxu0 0
      %3333 = vmatpush1.bf16.msra.mxu0 %v3311
      %3334 = vmatprep.subr.bf16.mxu0 0
      %3335 = vmatpush1.bf16.msra.mxu0 %v3312
      %3336 = vmatprep.subr.bf16.mxu0 0
      %3337 = vmatpush1.bf16.msra.mxu0 %v3313
      %3338 = vmatprep.subr.bf16.mxu0 0
      %3339 = vmatpush1.bf16.msra.mxu0 0
      %3340 = vmatprep.subr.bf16.mxu0 0
      %3341 = vmatpush1.bf16.msra.mxu0 0
      %3342 = vmatprep.subr.bf16.mxu0 0
      %3343 = vmatpush1.bf16.msra.mxu0 0
      %3344 = vmatprep.subr.bf16.mxu0 0
      %3345 = vmatpush1.bf16.msra.mxu0 0
      %3346 = vmatprep.subr.bf16.mxu0 0
      %3347 = vmatpush1.bf16.msra.mxu0 0
      %3348 = vmatprep.subr.bf16.mxu0 0
      %3349 = vmatpush1.bf16.msra.mxu0 0
      %3350 = vmatprep.subr.bf16.mxu0 0
      %3351 = vmatpush1.bf16.msra.mxu0 0
      %3352 = vmatprep.subr.bf16.mxu0 0
      %3353 = vmatpush1.bf16.msra.mxu0 0
      %3354 = vmatprep.mubr.bf16.mxu0 0
      %3355 = vmatmul.mubr.bf16.gmra.mrb[0].mxu0 %v3242
      %v3356 = vpop.f32.mrb[0].mxu0
      %v3357 = vadd.f32 0.0, %v3356
      %v3358 = vpop.f32.mrb[0].mxu0
      %v3359 = vpop.f32.mrb[0].mxu0
      %v3360 = vadd.f32 0.0, %v3359
      %v3361 = vpop.f32.mrb[0].mxu0
      %3362 = vmatprep.mubr.bf16.mxu0 0
      %3363 = vmatmul.mubr.bf16.gmra.mrb[0].mxu0 %v3243
      %v3364 = vpop.f32.mrb[0].mxu0
      %v3365 = vadd.f32 0.0, %v3364
      %v3366 = vpop.f32.mrb[0].mxu0
      %v3367 = vpop.f32.mrb[0].mxu0
      %v3368 = vadd.f32 0.0, %v3367
      %v3369 = vpop.f32.mrb[0].mxu0
      %3370 = vmatprep.mubr.bf16.mxu0 0
      %3371 = vmatmul.mubr.bf16.gmra.mrb[0].mxu0 %v3244
      %v3372 = vpop.f32.mrb[0].mxu0
      %v3373 = vadd.f32 0.0, %v3372
      %v3374 = vpop.f32.mrb[0].mxu0
      %v3375 = vpop.f32.mrb[0].mxu0
      %v3376 = vadd.f32 0.0, %v3375
      %v3377 = vpop.f32.mrb[0].mxu0
      %3378 = vmatprep.mubr.bf16.mxu0 0
      %3379 = vmatmul.mubr.bf16.gmra.mrb[0].mxu0 %v3245
      %v3380 = vpop.f32.mrb[0].mxu0
      %v3381 = vadd.f32 0.0, %v3380
      %v3382 = vpop.f32.mrb[0].mxu0
      %v3383 = vpop.f32.mrb[0].mxu0
      %v3384 = vadd.f32 0.0, %v3383
      %v3385 = vpop.f32.mrb[0].mxu0
      %3386 = vmatprep.mubr.bf16.mxu0 0
      %3387 = vmatmul.mubr.bf16.gmra.mrb[0].mxu0 %v3246
      %v3388 = vpop.f32.mrb[0].mxu0
      %v3389 = vadd.f32 0.0, %v3388
      %v3390 = vpop.f32.mrb[0].mxu0
      %v3391 = vpop.f32.mrb[0].mxu0
      %v3392 = vadd.f32 0.0, %v3391
      %v3393 = vpop.f32.mrb[0].mxu0
      %3394 = vmatprep.mubr.bf16.mxu0 0
      %3395 = vmatmul.mubr.bf16.gmra.mrb[0].mxu0 %v3247
      %v3396 = vpop.f32.mrb[0].mxu0
      %v3397 = vadd.f32 0.0, %v3396
      %v3398 = vpop.f32.mrb[0].mxu0
      %v3399 = vpop.f32.mrb[0].mxu0
      %v3400 = vadd.f32 0.0, %v3399
      %v3401 = vpop.f32.mrb[0].mxu0
      %3402 = vmatprep.mubr.bf16.mxu0 0
      %3403 = vmatmul.mubr.bf16.gmra.mrb[0].mxu0 %v3248
      %v3404 = vpop.f32.mrb[0].mxu0
      %v3405 = vadd.f32 0.0, %v3404
      %v3406 = vpop.f32.mrb[0].mxu0
      %v3407 = vpop.f32.mrb[0].mxu0
      %v3408 = vadd.f32 0.0, %v3407
      %v3409 = vpop.f32.mrb[0].mxu0
      %3410 = vmatprep.mubr.bf16.mxu0 0
      %3411 = vmatmul.mubr.bf16.gmra.mrb[0].mxu0 %v3249
      %v3412 = vpop.f32.mrb[0].mxu0
      %v3413 = vadd.f32 0.0, %v3412
      %v3414 = vpop.f32.mrb[0].mxu0
      %v3415 = vpop.f32.mrb[0].mxu0
      %v3416 = vadd.f32 0.0, %v3415
      %v3417 = vpop.f32.mrb[0].mxu0
      %3418 = vmatprep.mubr.bf16.mxu0 0
      %3419 = vmatmul.mubr.bf16.gmra.mrb[0].mxu0 %v3250
      %v3420 = vpop.f32.mrb[0].mxu0
      %v3421 = vadd.f32 0.0, %v3420
      %v3422 = vpop.f32.mrb[0].mxu0
      %v3423 = vpop.f32.mrb[0].mxu0
      %v3424 = vadd.f32 0.0, %v3423
      %v3425 = vpop.f32.mrb[0].mxu0
      %3426 = vmatprep.mubr.bf16.mxu0 0
      %3427 = vmatmul.mubr.bf16.gmra.mrb[0].mxu0 %v3251
      %v3428 = vpop.f32.mrb[0].mxu0
      %v3429 = vadd.f32 0.0, %v3428
      %v3430 = vpop.f32.mrb[0].mxu0
      %v3431 = vpop.f32.mrb[0].mxu0
      %v3432 = vadd.f32 0.0, %v3431
      %v3433 = vpop.f32.mrb[0].mxu0
      %3434 = vmatprep.mubr.bf16.mxu0 0
      %3435 = vmatmul.mubr.bf16.gmra.mrb[0].mxu0 %v3252
      %v3436 = vpop.f32.mrb[0].mxu0
      %v3437 = vadd.f32 0.0, %v3436
      %v3438 = vpop.f32.mrb[0].mxu0
      %v3439 = vpop.f32.mrb[0].mxu0
      %v3440 = vadd.f32 0.0, %v3439
      %v3441 = vpop.f32.mrb[0].mxu0
      %3442 = vmatprep.mubr.bf16.mxu0 0
      %3443 = vmatmul.mubr.bf16.gmra.mrb[0].mxu0 %v3253
      %v3444 = vpop.f32.mrb[0].mxu0
      %v3445 = vadd.f32 0.0, %v3444
      %v3446 = vpop.f32.mrb[0].mxu0
      %v3447 = vpop.f32.mrb[0].mxu0
      %v3448 = vadd.f32 0.0, %v3447
      %v3449 = vpop.f32.mrb[0].mxu0
      %3450 = vmatprep.mubr.bf16.mxu0 0
      %3451 = vmatmul.mubr.bf16.gmra.mrb[0].mxu0 %v3254
      %v3452 = vpop.f32.mrb[0].mxu0
      %v3453 = vadd.f32 0.0, %v3452
      %v3454 = vpop.f32.mrb[0].mxu0
      %v3455 = vpop.f32.mrb[0].mxu0
      %v3456 = vadd.f32 0.0, %v3455
      %v3457 = vpop.f32.mrb[0].mxu0
      %3458 = vmatprep.mubr.bf16.mxu0 0
      %3459 = vmatmul.mubr.bf16.gmra.mrb[0].mxu0 %v3255
      %v3460 = vpop.f32.mrb[0].mxu0
      %v3461 = vadd.f32 0.0, %v3460
      %v3462 = vpop.f32.mrb[0].mxu0
      %v3463 = vpop.f32.mrb[0].mxu0
      %v3464 = vadd.f32 0.0, %v3463
      %v3465 = vpop.f32.mrb[0].mxu0
      %3466 = vmatprep.mubr.bf16.mxu0 0
      %3467 = vmatmul.mubr.bf16.gmra.mrb[0].mxu0 %v3256
      %v3468 = vpop.f32.mrb[0].mxu0
      %v3469 = vadd.f32 0.0, %v3468
      %v3470 = vpop.f32.mrb[0].mxu0
      %v3471 = vpop.f32.mrb[0].mxu0
      %v3472 = vadd.f32 0.0, %v3471
      %v3473 = vpop.f32.mrb[0].mxu0
      %3474 = vmatprep.mubr.bf16.mxu0 0
      %3475 = vmatmul.mubr.bf16.gmra.mrb[0].mxu0 %v3257
      %v3476 = vpop.f32.mrb[0].mxu0
      %v3477 = vadd.f32 0.0, %v3476
      %v3478 = vpop.f32.mrb[0].mxu0
      %v3479 = vpop.f32.mrb[0].mxu0
      %v3480 = vadd.f32 0.0, %v3479
      %v3481 = vpop.f32.mrb[0].mxu0
      %3482 = vdwg.mxu0
      %v3483 = vadd.f32 %v2729, %v3357
      %v3484 = vadd.f32 %v2730, %v3360
      %v3485 = vadd.f32 %v2731, %v3365
      %v3486 = vadd.f32 %v2732, %v3368
      %v3487 = vadd.f32 %v2733, %v3373
      %v3488 = vadd.f32 %v2734, %v3376
      %v3489 = vadd.f32 %v2735, %v3381
      %v3490 = vadd.f32 %v2736, %v3384
      %v3491 = vadd.f32 %v2737, %v3389
      %v3492 = vadd.f32 %v2738, %v3392
      %v3493 = vadd.f32 %v2739, %v3397
      %v3494 = vadd.f32 %v2740, %v3400
      %v3495 = vadd.f32 %v2741, %v3405
      %v3496 = vadd.f32 %v2742, %v3408
      %v3497 = vadd.f32 %v2743, %v3413
      %v3498 = vadd.f32 %v2744, %v3416
      %v3499 = vadd.f32 %v2745, %v3421
      %v3500 = vadd.f32 %v2746, %v3424
      %v3501 = vadd.f32 %v2747, %v3429
      %v3502 = vadd.f32 %v2748, %v3432
      %v3503 = vadd.f32 %v2749, %v3437
      %v3504 = vadd.f32 %v2750, %v3440
      %v3505 = vadd.f32 %v2751, %v3445
      %v3506 = vadd.f32 %v2752, %v3448
      %v3507 = vadd.f32 %v2753, %v3453
      %v3508 = vadd.f32 %v2754, %v3456
      %v3509 = vadd.f32 %v2755, %v3461
      %v3510 = vadd.f32 %v2756, %v3464
      %v3511 = vadd.f32 %v2757, %v3469
      %v3512 = vadd.f32 %v2758, %v3472
      %v3513 = vadd.f32 %v2759, %v3477
      %v3514 = vadd.f32 %v2760, %v3480
      %v3515 = vld [vmem:[%s2374] sm:$0xe]
      %v3516 = vld [vmem:[%s2374 + $0xc] sm:$0xe]
      %v3517 = vld [vmem:[%s2374 + $0x18] sm:$0xe]
      %v3518 = vld [vmem:[%s2374 + $0x24] sm:$0xe]
      %v3519 = vld [vmem:[%s2374 + $0x30] sm:$0xe]
      %v3520 = vld [vmem:[%s2374 + $0x3c] sm:$0xe]
      %v3521 = vld [vmem:[%s2374 + $0x48] sm:$0xe]
      %v3522 = vld [vmem:[%s2374 + $0x54] sm:$0xe]
      %v3523 = vld [vmem:[%s2374 + $0x60] sm:$0xe]
      %v3524 = vld [vmem:[%s2374 + $0x6c] sm:$0xe]
      %v3525 = vld [vmem:[%s2374 + $0x78] sm:$0xe]
      %v3526 = vld [vmem:[%s2374 + $0x84] sm:$0xe]
      %v3527 = vld [vmem:[%s2374 + $0x90] sm:$0xe]
      %v3528 = vld [vmem:[%s2374 + $0x9c] sm:$0xe]
      %v3529 = vld [vmem:[%s2374 + $0xa8] sm:$0xe]
      %v3530 = vld [vmem:[%s2374 + $0xb4] sm:$0xe]
      %v3579 = vrot.slane %v3515, 5
      %v3580 = vrot.slane %v3579, 4
      %v3581 = vrot.slane %v2762, 5
      %v3582 = vsel %vm1939, %v3580, %v3581
      %v3583 = vrot.slane %v3581, 4
      %v3584 = vrot.slane %v2763, 5
      %v3585 = vsel %vm1939, %v3583, %v3584
      %v3586 = vrot.slane %v3516, 5
      %v3587 = vrot.slane %v3586, 4
      %v3588 = vrot.slane %v2765, 5
      %v3589 = vsel %vm1939, %v3587, %v3588
      %v3590 = vrot.slane %v3588, 4
      %v3591 = vrot.slane %v2766, 5
      %v3592 = vsel %vm1939, %v3590, %v3591
      %v3593 = vrot.slane %v3517, 5
      %v3594 = vrot.slane %v3593, 4
      %v3595 = vrot.slane %v2768, 5
      %v3596 = vsel %vm1939, %v3594, %v3595
      %v3597 = vrot.slane %v3595, 4
      %v3598 = vrot.slane %v2769, 5
      %v3599 = vsel %vm1939, %v3597, %v3598
      %v3600 = vrot.slane %v3518, 5
      %v3601 = vrot.slane %v3600, 4
      %v3602 = vrot.slane %v2771, 5
      %v3603 = vsel %vm1939, %v3601, %v3602
      %v3604 = vrot.slane %v3602, 4
      %v3605 = vrot.slane %v2772, 5
      %v3606 = vsel %vm1939, %v3604, %v3605
      %v3607 = vrot.slane %v3519, 5
      %v3608 = vrot.slane %v3607, 4
      %v3609 = vrot.slane %v2774, 5
      %v3610 = vsel %vm1939, %v3608, %v3609
      %v3611 = vrot.slane %v3609, 4
      %v3612 = vrot.slane %v2775, 5
      %v3613 = vsel %vm1939, %v3611, %v3612
      %v3614 = vrot.slane %v3520, 5
      %v3615 = vrot.slane %v3614, 4
      %v3616 = vrot.slane %v2777, 5
      %v3617 = vsel %vm1939, %v3615, %v3616
      %v3618 = vrot.slane %v3616, 4
      %v3619 = vrot.slane %v2778, 5
      %v3620 = vsel %vm1939, %v3618, %v3619
      %v3621 = vrot.slane %v3521, 5
      %v3622 = vrot.slane %v3621, 4
      %v3623 = vrot.slane %v2780, 5
      %v3624 = vsel %vm1939, %v3622, %v3623
      %v3625 = vrot.slane %v3623, 4
      %v3626 = vrot.slane %v2781, 5
      %v3627 = vsel %vm1939, %v3625, %v3626
      %v3628 = vrot.slane %v3522, 5
      %v3629 = vrot.slane %v3628, 4
      %v3630 = vrot.slane %v2783, 5
      %v3631 = vsel %vm1939, %v3629, %v3630
      %v3632 = vrot.slane %v3630, 4
      %v3633 = vrot.slane %v2784, 5
      %v3634 = vsel %vm1939, %v3632, %v3633
      %v3635 = vrot.slane %v3523, 5
      %v3636 = vrot.slane %v3635, 4
      %v3637 = vrot.slane %v2786, 5
      %v3638 = vsel %vm1939, %v3636, %v3637
      %v3639 = vrot.slane %v3637, 4
      %v3640 = vrot.slane %v2787, 5
      %v3641 = vsel %vm1939, %v3639, %v3640
      %v3642 = vrot.slane %v3524, 5
      %v3643 = vrot.slane %v3642, 4
      %v3644 = vrot.slane %v2789, 5
      %v3645 = vsel %vm1939, %v3643, %v3644
      %v3646 = vrot.slane %v3644, 4
      %v3647 = vrot.slane %v2790, 5
      %v3648 = vsel %vm1939, %v3646, %v3647
      %v3649 = vrot.slane %v3525, 5
      %v3650 = vrot.slane %v3649, 4
      %v3651 = vrot.slane %v2792, 5
      %v3652 = vsel %vm1939, %v3650, %v3651
      %v3653 = vrot.slane %v3651, 4
      %v3654 = vrot.slane %v2793, 5
      %v3655 = vsel %vm1939, %v3653, %v3654
      %v3656 = vrot.slane %v3526, 5
      %v3657 = vrot.slane %v3656, 4
      %v3658 = vrot.slane %v2795, 5
      %v3659 = vsel %vm1939, %v3657, %v3658
      %v3660 = vrot.slane %v3658, 4
      %v3661 = vrot.slane %v2796, 5
      %v3662 = vsel %vm1939, %v3660, %v3661
      %v3663 = vrot.slane %v3527, 5
      %v3664 = vrot.slane %v3663, 4
      %v3665 = vrot.slane %v2798, 5
      %v3666 = vsel %vm1939, %v3664, %v3665
      %v3667 = vrot.slane %v3665, 4
      %v3668 = vrot.slane %v2799, 5
      %v3669 = vsel %vm1939, %v3667, %v3668
      %v3670 = vrot.slane %v3528, 5
      %v3671 = vrot.slane %v3670, 4
      %v3672 = vrot.slane %v2801, 5
      %v3673 = vsel %vm1939, %v3671, %v3672
      %v3674 = vrot.slane %v3672, 4
      %v3675 = vrot.slane %v2802, 5
      %v3676 = vsel %vm1939, %v3674, %v3675
      %v3677 = vrot.slane %v3529, 5
      %v3678 = vrot.slane %v3677, 4
      %v3679 = vrot.slane %v2804, 5
      %v3680 = vsel %vm1939, %v3678, %v3679
      %v3681 = vrot.slane %v3679, 4
      %v3682 = vrot.slane %v2805, 5
      %v3683 = vsel %vm1939, %v3681, %v3682
      %v3684 = vrot.slane %v3530, 5
      %v3685 = vrot.slane %v3684, 4
      %v3686 = vrot.slane %v2807, 5
      %v3687 = vsel %vm1939, %v3685, %v3686
      %v3688 = vrot.slane %v3686, 4
      %v3689 = vrot.slane %v2808, 5
      %v3690 = vsel %vm1939, %v3688, %v3689
      %s3691 = scalar_lea.vmem %s3, 320
      %v3692 = vld [vmem:[%s3691] sm:$0xf]
      %v3693 = vld [vmem:[%s3691 + $0x4] sm:$0xf]
      %v3694 = vld [vmem:[%s3691 + $0x8] sm:$0xf]
      %v3695 = vld [vmem:[%s3691 + $0xc] sm:$0xf]
      %v3696 = vld [vmem:[%s3691 + $0x10] sm:$0xf]
      %v3697 = vld [vmem:[%s3691 + $0x14] sm:$0xf]
      %v3698 = vld [vmem:[%s3691 + $0x18] sm:$0xf]
      %v3699 = vld [vmem:[%s3691 + $0x1c] sm:$0xf]
      %v3700 = vld [vmem:[%s3691 + $0x20] sm:$0xf]
      %v3701 = vld [vmem:[%s3691 + $0x24] sm:$0xf]
      %v3702 = vld [vmem:[%s3691 + $0x28] sm:$0xf]
      %v3703 = vld [vmem:[%s3691 + $0x2c] sm:$0xf]
      %v3704 = vld [vmem:[%s3691 + $0x30] sm:$0xf]
      %v3705 = vld [vmem:[%s3691 + $0x34] sm:$0xf]
      %v3706 = vld [vmem:[%s3691 + $0x38] sm:$0xf]
      %v3707 = vld [vmem:[%s3691 + $0x3c] sm:$0xf]
      %v3708 = vunpack.c.l.b16 %v3582
      %v3709 = vunpack.c.l.b16 %v3585
      %v3710 = vunpack.c.l.b16 %v3589
      %v3711 = vunpack.c.l.b16 %v3592
      %v3712 = vunpack.c.l.b16 %v3596
      %v3713 = vunpack.c.l.b16 %v3599
      %v3714 = vunpack.c.l.b16 %v3603
      %v3715 = vunpack.c.l.b16 %v3606
      %v3716 = vunpack.c.l.b16 %v3610
      %v3717 = vunpack.c.l.b16 %v3613
      %v3718 = vunpack.c.l.b16 %v3617
      %v3719 = vunpack.c.l.b16 %v3620
      %v3720 = vunpack.c.l.b16 %v3624
      %v3721 = vunpack.c.l.b16 %v3627
      %v3722 = vunpack.c.l.b16 %v3631
      %v3723 = vunpack.c.l.b16 %v3634
      %v3724 = vunpack.c.l.b16 %v3638
      %v3725 = vunpack.c.l.b16 %v3641
      %v3726 = vunpack.c.l.b16 %v3645
      %v3727 = vunpack.c.l.b16 %v3648
      %v3728 = vunpack.c.l.b16 %v3652
      %v3729 = vunpack.c.l.b16 %v3655
      %v3730 = vunpack.c.l.b16 %v3659
      %v3731 = vunpack.c.l.b16 %v3662
      %v3732 = vunpack.c.l.b16 %v3666
      %v3733 = vunpack.c.l.b16 %v3669
      %v3734 = vunpack.c.l.b16 %v3673
      %v3735 = vunpack.c.l.b16 %v3676
      %v3736 = vunpack.c.l.b16 %v3680
      %v3737 = vunpack.c.l.b16 %v3683
      %v3738 = vunpack.c.l.b16 %v3687
      %v3739 = vunpack.c.l.b16 %v3690
      %v3740 = vpack.c.b16 %v3709, %v3708
      %v3741 = vpack.c.b16 %v3711, %v3710
      %v3742 = vpack.c.b16 %v3713, %v3712
      %v3743 = vpack.c.b16 %v3715, %v3714
      %v3744 = vpack.c.b16 %v3717, %v3716
      %v3745 = vpack.c.b16 %v3719, %v3718
      %v3746 = vpack.c.b16 %v3721, %v3720
      %v3747 = vpack.c.b16 %v3723, %v3722
      %v3748 = vpack.c.b16 %v3725, %v3724
      %v3749 = vpack.c.b16 %v3727, %v3726
      %v3750 = vpack.c.b16 %v3729, %v3728
      %v3751 = vpack.c.b16 %v3731, %v3730
      %v3752 = vpack.c.b16 %v3733, %v3732
      %v3753 = vpack.c.b16 %v3735, %v3734
      %v3754 = vpack.c.b16 %v3737, %v3736
      %v3755 = vpack.c.b16 %v3739, %v3738
      %v3788 = vunpack.c.l.b16 %v3692
      %v3789 = vunpack.c.l.b16 %v3693
      %v3790 = vunpack.c.l.b16 %v3694
      %v3791 = vunpack.c.l.b16 %v3695
      %v3792 = vunpack.c.l.b16 %v3696
      %v3793 = vunpack.c.l.b16 %v3697
      %v3794 = vunpack.c.l.b16 %v3698
      %v3795 = vunpack.c.l.b16 %v3699
      %v3796 = vunpack.c.l.b16 %v3700
      %v3797 = vunpack.c.l.b16 %v3701
      %v3798 = vunpack.c.l.b16 %v3702
      %v3799 = vunpack.c.l.b16 %v3703
      %v3800 = vunpack.c.l.b16 %v3704
      %v3801 = vunpack.c.l.b16 %v3705
      %v3802 = vunpack.c.l.b16 %v3706
      %v3803 = vunpack.c.l.b16 %v3707
      %v3804 = vpack.c.b16 %v3789, %v3788
      %v3805 = vpack.c.b16 %v3791, %v3790
      %v3806 = vpack.c.b16 %v3793, %v3792
      %v3807 = vpack.c.b16 %v3795, %v3794
      %v3808 = vpack.c.b16 %v3797, %v3796
      %v3809 = vpack.c.b16 %v3799, %v3798
      %v3810 = vpack.c.b16 %v3801, %v3800
      %v3811 = vpack.c.b16 %v3803, %v3802
      %3820 = vmatprep.subr.bf16.mxu0 0
      %3821 = vmatpush1.bf16.msra.mxu0 %v3804
      %3822 = vmatprep.subr.bf16.mxu0 0
      %3823 = vmatpush1.bf16.msra.mxu0 %v3805
      %3824 = vmatprep.subr.bf16.mxu0 0
      %3825 = vmatpush1.bf16.msra.mxu0 %v3806
      %3826 = vmatprep.subr.bf16.mxu0 0
      %3827 = vmatpush1.bf16.msra.mxu0 %v3807
      %3828 = vmatprep.subr.bf16.mxu0 0
      %3829 = vmatpush1.bf16.msra.mxu0 %v3808
      %3830 = vmatprep.subr.bf16.mxu0 0
      %3831 = vmatpush1.bf16.msra.mxu0 %v3809
      %3832 = vmatprep.subr.bf16.mxu0 0
      %3833 = vmatpush1.bf16.msra.mxu0 %v3810
      %3834 = vmatprep.subr.bf16.mxu0 0
      %3835 = vmatpush1.bf16.msra.mxu0 %v3811
      %3836 = vmatprep.subr.bf16.mxu0 0
      %3837 = vmatpush1.bf16.msra.mxu0 0
      %3838 = vmatprep.subr.bf16.mxu0 0
      %3839 = vmatpush1.bf16.msra.mxu0 0
      %3840 = vmatprep.subr.bf16.mxu0 0
      %3841 = vmatpush1.bf16.msra.mxu0 0
      %3842 = vmatprep.subr.bf16.mxu0 0
      %3843 = vmatpush1.bf16.msra.mxu0 0
      %3844 = vmatprep.subr.bf16.mxu0 0
      %3845 = vmatpush1.bf16.msra.mxu0 0
      %3846 = vmatprep.subr.bf16.mxu0 0
      %3847 = vmatpush1.bf16.msra.mxu0 0
      %3848 = vmatprep.subr.bf16.mxu0 0
      %3849 = vmatpush1.bf16.msra.mxu0 0
      %3850 = vmatprep.subr.bf16.mxu0 0
      %3851 = vmatpush1.bf16.msra.mxu0 0
      %3852 = vmatprep.mubr.bf16.mxu0 0
      %3853 = vmatmul.mubr.bf16.gmra.mrb[0].mxu0 %v3740
      %v3854 = vpop.f32.mrb[0].mxu0
      %v3855 = vadd.f32 0.0, %v3854
      %v3856 = vpop.f32.mrb[0].mxu0
      %v3857 = vpop.f32.mrb[0].mxu0
      %v3858 = vadd.f32 0.0, %v3857
      %v3859 = vpop.f32.mrb[0].mxu0
      %3860 = vmatprep.mubr.bf16.mxu0 0
      %3861 = vmatmul.mubr.bf16.gmra.mrb[0].mxu0 %v3741
      %v3862 = vpop.f32.mrb[0].mxu0
      %v3863 = vadd.f32 0.0, %v3862
      %v3864 = vpop.f32.mrb[0].mxu0
      %v3865 = vpop.f32.mrb[0].mxu0
      %v3866 = vadd.f32 0.0, %v3865
      %v3867 = vpop.f32.mrb[0].mxu0
      %3868 = vmatprep.mubr.bf16.mxu0 0
      %3869 = vmatmul.mubr.bf16.gmra.mrb[0].mxu0 %v3742
      %v3870 = vpop.f32.mrb[0].mxu0
      %v3871 = vadd.f32 0.0, %v3870
      %v3872 = vpop.f32.mrb[0].mxu0
      %v3873 = vpop.f32.mrb[0].mxu0
      %v3874 = vadd.f32 0.0, %v3873
      %v3875 = vpop.f32.mrb[0].mxu0
      %3876 = vmatprep.mubr.bf16.mxu0 0
      %3877 = vmatmul.mubr.bf16.gmra.mrb[0].mxu0 %v3743
      %v3878 = vpop.f32.mrb[0].mxu0
      %v3879 = vadd.f32 0.0, %v3878
      %v3880 = vpop.f32.mrb[0].mxu0
      %v3881 = vpop.f32.mrb[0].mxu0
      %v3882 = vadd.f32 0.0, %v3881
      %v3883 = vpop.f32.mrb[0].mxu0
      %3884 = vmatprep.mubr.bf16.mxu0 0
      %3885 = vmatmul.mubr.bf16.gmra.mrb[0].mxu0 %v3744
      %v3886 = vpop.f32.mrb[0].mxu0
      %v3887 = vadd.f32 0.0, %v3886
      %v3888 = vpop.f32.mrb[0].mxu0
      %v3889 = vpop.f32.mrb[0].mxu0
      %v3890 = vadd.f32 0.0, %v3889
      %v3891 = vpop.f32.mrb[0].mxu0
      %3892 = vmatprep.mubr.bf16.mxu0 0
      %3893 = vmatmul.mubr.bf16.gmra.mrb[0].mxu0 %v3745
      %v3894 = vpop.f32.mrb[0].mxu0
      %v3895 = vadd.f32 0.0, %v3894
      %v3896 = vpop.f32.mrb[0].mxu0
      %v3897 = vpop.f32.mrb[0].mxu0
      %v3898 = vadd.f32 0.0, %v3897
      %v3899 = vpop.f32.mrb[0].mxu0
      %3900 = vmatprep.mubr.bf16.mxu0 0
      %3901 = vmatmul.mubr.bf16.gmra.mrb[0].mxu0 %v3746
      %v3902 = vpop.f32.mrb[0].mxu0
      %v3903 = vadd.f32 0.0, %v3902
      %v3904 = vpop.f32.mrb[0].mxu0
      %v3905 = vpop.f32.mrb[0].mxu0
      %v3906 = vadd.f32 0.0, %v3905
      %v3907 = vpop.f32.mrb[0].mxu0
      %3908 = vmatprep.mubr.bf16.mxu0 0
      %3909 = vmatmul.mubr.bf16.gmra.mrb[0].mxu0 %v3747
      %v3910 = vpop.f32.mrb[0].mxu0
      %v3911 = vadd.f32 0.0, %v3910
      %v3912 = vpop.f32.mrb[0].mxu0
      %v3913 = vpop.f32.mrb[0].mxu0
      %v3914 = vadd.f32 0.0, %v3913
      %v3915 = vpop.f32.mrb[0].mxu0
      %3916 = vmatprep.mubr.bf16.mxu0 0
      %3917 = vmatmul.mubr.bf16.gmra.mrb[0].mxu0 %v3748
      %v3918 = vpop.f32.mrb[0].mxu0
      %v3919 = vadd.f32 0.0, %v3918
      %v3920 = vpop.f32.mrb[0].mxu0
      %v3921 = vpop.f32.mrb[0].mxu0
      %v3922 = vadd.f32 0.0, %v3921
      %v3923 = vpop.f32.mrb[0].mxu0
      %3924 = vmatprep.mubr.bf16.mxu0 0
      %3925 = vmatmul.mubr.bf16.gmra.mrb[0].mxu0 %v3749
      %v3926 = vpop.f32.mrb[0].mxu0
      %v3927 = vadd.f32 0.0, %v3926
      %v3928 = vpop.f32.mrb[0].mxu0
      %v3929 = vpop.f32.mrb[0].mxu0
      %v3930 = vadd.f32 0.0, %v3929
      %v3931 = vpop.f32.mrb[0].mxu0
      %3932 = vmatprep.mubr.bf16.mxu0 0
      %3933 = vmatmul.mubr.bf16.gmra.mrb[0].mxu0 %v3750
      %v3934 = vpop.f32.mrb[0].mxu0
      %v3935 = vadd.f32 0.0, %v3934
      %v3936 = vpop.f32.mrb[0].mxu0
      %v3937 = vpop.f32.mrb[0].mxu0
      %v3938 = vadd.f32 0.0, %v3937
      %v3939 = vpop.f32.mrb[0].mxu0
      %3940 = vmatprep.mubr.bf16.mxu0 0
      %3941 = vmatmul.mubr.bf16.gmra.mrb[0].mxu0 %v3751
      %v3942 = vpop.f32.mrb[0].mxu0
      %v3943 = vadd.f32 0.0, %v3942
      %v3944 = vpop.f32.mrb[0].mxu0
      %v3945 = vpop.f32.mrb[0].mxu0
      %v3946 = vadd.f32 0.0, %v3945
      %v3947 = vpop.f32.mrb[0].mxu0
      %3948 = vmatprep.mubr.bf16.mxu0 0
      %3949 = vmatmul.mubr.bf16.gmra.mrb[0].mxu0 %v3752
      %v3950 = vpop.f32.mrb[0].mxu0
      %v3951 = vadd.f32 0.0, %v3950
      %v3952 = vpop.f32.mrb[0].mxu0
      %v3953 = vpop.f32.mrb[0].mxu0
      %v3954 = vadd.f32 0.0, %v3953
      %v3955 = vpop.f32.mrb[0].mxu0
      %3956 = vmatprep.mubr.bf16.mxu0 0
      %3957 = vmatmul.mubr.bf16.gmra.mrb[0].mxu0 %v3753
      %v3958 = vpop.f32.mrb[0].mxu0
      %v3959 = vadd.f32 0.0, %v3958
      %v3960 = vpop.f32.mrb[0].mxu0
      %v3961 = vpop.f32.mrb[0].mxu0
      %v3962 = vadd.f32 0.0, %v3961
      %v3963 = vpop.f32.mrb[0].mxu0
      %3964 = vmatprep.mubr.bf16.mxu0 0
      %3965 = vmatmul.mubr.bf16.gmra.mrb[0].mxu0 %v3754
      %v3966 = vpop.f32.mrb[0].mxu0
      %v3967 = vadd.f32 0.0, %v3966
      %v3968 = vpop.f32.mrb[0].mxu0
      %v3969 = vpop.f32.mrb[0].mxu0
      %v3970 = vadd.f32 0.0, %v3969
      %v3971 = vpop.f32.mrb[0].mxu0
      %3972 = vmatprep.mubr.bf16.mxu0 0
      %3973 = vmatmul.mubr.bf16.gmra.mrb[0].mxu0 %v3755
      %v3974 = vpop.f32.mrb[0].mxu0
      %v3975 = vadd.f32 0.0, %v3974
      %v3976 = vpop.f32.mrb[0].mxu0
      %v3977 = vpop.f32.mrb[0].mxu0
      %v3978 = vadd.f32 0.0, %v3977
      %v3979 = vpop.f32.mrb[0].mxu0
      %3980 = vdwg.mxu0
      %v3981 = vadd.f32 %v3483, %v3855
      %v3982 = vadd.f32 %v3484, %v3858
      %v3983 = vadd.f32 %v3485, %v3863
      %v3984 = vadd.f32 %v3486, %v3866
      %v3985 = vadd.f32 %v3487, %v3871
      %v3986 = vadd.f32 %v3488, %v3874
      %v3987 = vadd.f32 %v3489, %v3879
      %v3988 = vadd.f32 %v3490, %v3882
      %v3989 = vadd.f32 %v3491, %v3887
      %v3990 = vadd.f32 %v3492, %v3890
      %v3991 = vadd.f32 %v3493, %v3895
      %v3992 = vadd.f32 %v3494, %v3898
      %v3993 = vadd.f32 %v3495, %v3903
      %v3994 = vadd.f32 %v3496, %v3906
      %v3995 = vadd.f32 %v3497, %v3911
      %v3996 = vadd.f32 %v3498, %v3914
      %v3997 = vadd.f32 %v3499, %v3919
      %v3998 = vadd.f32 %v3500, %v3922
      %v3999 = vadd.f32 %v3501, %v3927
      %v4000 = vadd.f32 %v3502, %v3930
      %v4001 = vadd.f32 %v3503, %v3935
      %v4002 = vadd.f32 %v3504, %v3938
      %v4003 = vadd.f32 %v3505, %v3943
      %v4004 = vadd.f32 %v3506, %v3946
      %v4005 = vadd.f32 %v3507, %v3951
      %v4006 = vadd.f32 %v3508, %v3954
      %v4007 = vadd.f32 %v3509, %v3959
      %v4008 = vadd.f32 %v3510, %v3962
      %v4009 = vadd.f32 %v3511, %v3967
      %v4010 = vadd.f32 %v3512, %v3970
      %v4011 = vadd.f32 %v3513, %v3975
      %v4012 = vadd.f32 %v3514, %v3978
      %s4013 = scalar_lea.vmem [#allocation2], 24
      %v4014 = vld [vmem:[%s4013] sm:$0xf]
      %v4015 = vld [vmem:[%s4013 + $0x4] sm:$0xf]
      %v4016 = vld [vmem:[%s4013 + $0xc] sm:$0xf]
      %v4017 = vld [vmem:[%s4013 + $0x10] sm:$0xf]
      %v4018 = vld [vmem:[%s4013 + $0x18] sm:$0xf]
      %v4019 = vld [vmem:[%s4013 + $0x1c] sm:$0xf]
      %v4020 = vld [vmem:[%s4013 + $0x24] sm:$0xf]
      %v4021 = vld [vmem:[%s4013 + $0x28] sm:$0xf]
      %v4022 = vld [vmem:[%s4013 + $0x30] sm:$0xf]
      %v4023 = vld [vmem:[%s4013 + $0x34] sm:$0xf]
      %v4024 = vld [vmem:[%s4013 + $0x3c] sm:$0xf]
      %v4025 = vld [vmem:[%s4013 + $0x40] sm:$0xf]
      %v4026 = vld [vmem:[%s4013 + $0x48] sm:$0xf]
      %v4027 = vld [vmem:[%s4013 + $0x4c] sm:$0xf]
      %v4028 = vld [vmem:[%s4013 + $0x54] sm:$0xf]
      %v4029 = vld [vmem:[%s4013 + $0x58] sm:$0xf]
      %v4030 = vld [vmem:[%s4013 + $0x60] sm:$0xf]
      %v4031 = vld [vmem:[%s4013 + $0x64] sm:$0xf]
      %v4032 = vld [vmem:[%s4013 + $0x6c] sm:$0xf]
      %v4033 = vld [vmem:[%s4013 + $0x70] sm:$0xf]
      %v4034 = vld [vmem:[%s4013 + $0x78] sm:$0xf]
      %v4035 = vld [vmem:[%s4013 + $0x7c] sm:$0xf]
      %v4036 = vld [vmem:[%s4013 + $0x84] sm:$0xf]
      %v4037 = vld [vmem:[%s4013 + $0x88] sm:$0xf]
      %v4038 = vld [vmem:[%s4013 + $0x90] sm:$0xf]
      %v4039 = vld [vmem:[%s4013 + $0x94] sm:$0xf]
      %v4040 = vld [vmem:[%s4013 + $0x9c] sm:$0xf]
      %v4041 = vld [vmem:[%s4013 + $0xa0] sm:$0xf]
      %v4042 = vld [vmem:[%s4013 + $0xa8] sm:$0xf]
      %v4043 = vld [vmem:[%s4013 + $0xac] sm:$0xf]
      %v4044 = vld [vmem:[%s4013 + $0xb4] sm:$0xf]
      %v4045 = vld [vmem:[%s4013 + $0xb8] sm:$0xf]
      %s4046 = scalar_lea.vmem %s3, 384
      %v4047 = vld [vmem:[%s4046] sm:$0xf]
      %v4048 = vld [vmem:[%s4046 + $0x4] sm:$0xf]
      %v4049 = vld [vmem:[%s4046 + $0x8] sm:$0xf]
      %v4050 = vld [vmem:[%s4046 + $0xc] sm:$0xf]
      %v4051 = vld [vmem:[%s4046 + $0x10] sm:$0xf]
      %v4052 = vld [vmem:[%s4046 + $0x14] sm:$0xf]
      %v4053 = vld [vmem:[%s4046 + $0x18] sm:$0xf]
      %v4054 = vld [vmem:[%s4046 + $0x1c] sm:$0xf]
      %v4055 = vld [vmem:[%s4046 + $0x20] sm:$0xf]
      %v4056 = vld [vmem:[%s4046 + $0x24] sm:$0xf]
      %v4057 = vld [vmem:[%s4046 + $0x28] sm:$0xf]
      %v4058 = vld [vmem:[%s4046 + $0x2c] sm:$0xf]
      %v4059 = vld [vmem:[%s4046 + $0x30] sm:$0xf]
      %v4060 = vld [vmem:[%s4046 + $0x34] sm:$0xf]
      %v4061 = vld [vmem:[%s4046 + $0x38] sm:$0xf]
      %v4062 = vld [vmem:[%s4046 + $0x3c] sm:$0xf]
      %v4095 = vunpack.c.l.b16 %v4014
      %v4096 = vunpack.c.l.b16 %v4015
      %v4097 = vunpack.c.l.b16 %v4016
      %v4098 = vunpack.c.l.b16 %v4017
      %v4099 = vunpack.c.l.b16 %v4018
      %v4100 = vunpack.c.l.b16 %v4019
      %v4101 = vunpack.c.l.b16 %v4020
      %v4102 = vunpack.c.l.b16 %v4021
      %v4103 = vunpack.c.l.b16 %v4022
      %v4104 = vunpack.c.l.b16 %v4023
      %v4105 = vunpack.c.l.b16 %v4024
      %v4106 = vunpack.c.l.b16 %v4025
      %v4107 = vunpack.c.l.b16 %v4026
      %v4108 = vunpack.c.l.b16 %v4027
      %v4109 = vunpack.c.l.b16 %v4028
      %v4110 = vunpack.c.l.b16 %v4029
      %v4111 = vunpack.c.l.b16 %v4030
      %v4112 = vunpack.c.l.b16 %v4031
      %v4113 = vunpack.c.l.b16 %v4032
      %v4114 = vunpack.c.l.b16 %v4033
      %v4115 = vunpack.c.l.b16 %v4034
      %v4116 = vunpack.c.l.b16 %v4035
      %v4117 = vunpack.c.l.b16 %v4036
      %v4118 = vunpack.c.l.b16 %v4037
      %v4119 = vunpack.c.l.b16 %v4038
      %v4120 = vunpack.c.l.b16 %v4039
      %v4121 = vunpack.c.l.b16 %v4040
      %v4122 = vunpack.c.l.b16 %v4041
      %v4123 = vunpack.c.l.b16 %v4042
      %v4124 = vunpack.c.l.b16 %v4043
      %v4125 = vunpack.c.l.b16 %v4044
      %v4126 = vunpack.c.l.b16 %v4045
      %v4127 = vpack.c.b16 %v4096, %v4095
      %v4128 = vpack.c.b16 %v4098, %v4097
      %v4129 = vpack.c.b16 %v4100, %v4099
      %v4130 = vpack.c.b16 %v4102, %v4101
      %v4131 = vpack.c.b16 %v4104, %v4103
      %v4132 = vpack.c.b16 %v4106, %v4105
      %v4133 = vpack.c.b16 %v4108, %v4107
      %v4134 = vpack.c.b16 %v4110, %v4109
      %v4135 = vpack.c.b16 %v4112, %v4111
      %v4136 = vpack.c.b16 %v4114, %v4113
      %v4137 = vpack.c.b16 %v4116, %v4115
      %v4138 = vpack.c.b16 %v4118, %v4117
      %v4139 = vpack.c.b16 %v4120, %v4119
      %v4140 = vpack.c.b16 %v4122, %v4121
      %v4141 = vpack.c.b16 %v4124, %v4123
      %v4142 = vpack.c.b16 %v4126, %v4125
      %v4175 = vunpack.c.l.b16 %v4047
      %v4176 = vunpack.c.l.b16 %v4048
      %v4177 = vunpack.c.l.b16 %v4049
      %v4178 = vunpack.c.l.b16 %v4050
      %v4179 = vunpack.c.l.b16 %v4051
      %v4180 = vunpack.c.l.b16 %v4052
      %v4181 = vunpack.c.l.b16 %v4053
      %v4182 = vunpack.c.l.b16 %v4054
      %v4183 = vunpack.c.l.b16 %v4055
      %v4184 = vunpack.c.l.b16 %v4056
      %v4185 = vunpack.c.l.b16 %v4057
      %v4186 = vunpack.c.l.b16 %v4058
      %v4187 = vunpack.c.l.b16 %v4059
      %v4188 = vunpack.c.l.b16 %v4060
      %v4189 = vunpack.c.l.b16 %v4061
      %v4190 = vunpack.c.l.b16 %v4062
      %v4191 = vpack.c.b16 %v4176, %v4175
      %v4192 = vpack.c.b16 %v4178, %v4177
      %v4193 = vpack.c.b16 %v4180, %v4179
      %v4194 = vpack.c.b16 %v4182, %v4181
      %v4195 = vpack.c.b16 %v4184, %v4183
      %v4196 = vpack.c.b16 %v4186, %v4185
      %v4197 = vpack.c.b16 %v4188, %v4187
      %v4198 = vpack.c.b16 %v4190, %v4189
      %4207 = vmatprep.subr.bf16.mxu0 0
      %4208 = vmatpush1.bf16.msra.mxu0 %v4191
      %4209 = vmatprep.subr.bf16.mxu0 0
      %4210 = vmatpush1.bf16.msra.mxu0 %v4192
      %4211 = vmatprep.subr.bf16.mxu0 0
      %4212 = vmatpush1.bf16.msra.mxu0 %v4193
      %4213 = vmatprep.subr.bf16.mxu0 0
      %4214 = vmatpush1.bf16.msra.mxu0 %v4194
      %4215 = vmatprep.subr.bf16.mxu0 0
      %4216 = vmatpush1.bf16.msra.mxu0 %v4195
      %4217 = vmatprep.subr.bf16.mxu0 0
      %4218 = vmatpush1.bf16.msra.mxu0 %v4196
      %4219 = vmatprep.subr.bf16.mxu0 0
      %4220 = vmatpush1.bf16.msra.mxu0 %v4197
      %4221 = vmatprep.subr.bf16.mxu0 0
      %4222 = vmatpush1.bf16.msra.mxu0 %v4198
      %4223 = vmatprep.subr.bf16.mxu0 0
      %4224 = vmatpush1.bf16.msra.mxu0 0
      %4225 = vmatprep.subr.bf16.mxu0 0
      %4226 = vmatpush1.bf16.msra.mxu0 0
      %4227 = vmatprep.subr.bf16.mxu0 0
      %4228 = vmatpush1.bf16.msra.mxu0 0
      %4229 = vmatprep.subr.bf16.mxu0 0
      %4230 = vmatpush1.bf16.msra.mxu0 0
      %4231 = vmatprep.subr.bf16.mxu0 0
      %4232 = vmatpush1.bf16.msra.mxu0 0
      %4233 = vmatprep.subr.bf16.mxu0 0
      %4234 = vmatpush1.bf16.msra.mxu0 0
      %4235 = vmatprep.subr.bf16.mxu0 0
      %4236 = vmatpush1.bf16.msra.mxu0 0
      %4237 = vmatprep.subr.bf16.mxu0 0
      %4238 = vmatpush1.bf16.msra.mxu0 0
      %4239 = vmatprep.mubr.bf16.mxu0 0
      %4240 = vmatmul.mubr.bf16.gmra.mrb[0].mxu0 %v4127
      %v4241 = vpop.f32.mrb[0].mxu0
      %v4242 = vadd.f32 0.0, %v4241
      %v4243 = vpop.f32.mrb[0].mxu0
      %v4244 = vpop.f32.mrb[0].mxu0
      %v4245 = vadd.f32 0.0, %v4244
      %v4246 = vpop.f32.mrb[0].mxu0
      %4247 = vmatprep.mubr.bf16.mxu0 0
      %4248 = vmatmul.mubr.bf16.gmra.mrb[0].mxu0 %v4128
      %v4249 = vpop.f32.mrb[0].mxu0
      %v4250 = vadd.f32 0.0, %v4249
      %v4251 = vpop.f32.mrb[0].mxu0
      %v4252 = vpop.f32.mrb[0].mxu0
      %v4253 = vadd.f32 0.0, %v4252
      %v4254 = vpop.f32.mrb[0].mxu0
      %4255 = vmatprep.mubr.bf16.mxu0 0
      %4256 = vmatmul.mubr.bf16.gmra.mrb[0].mxu0 %v4129
      %v4257 = vpop.f32.mrb[0].mxu0
      %v4258 = vadd.f32 0.0, %v4257
      %v4259 = vpop.f32.mrb[0].mxu0
      %v4260 = vpop.f32.mrb[0].mxu0
      %v4261 = vadd.f32 0.0, %v4260
      %v4262 = vpop.f32.mrb[0].mxu0
      %4263 = vmatprep.mubr.bf16.mxu0 0
      %4264 = vmatmul.mubr.bf16.gmra.mrb[0].mxu0 %v4130
      %v4265 = vpop.f32.mrb[0].mxu0
      %v4266 = vadd.f32 0.0, %v4265
      %v4267 = vpop.f32.mrb[0].mxu0
      %v4268 = vpop.f32.mrb[0].mxu0
      %v4269 = vadd.f32 0.0, %v4268
      %v4270 = vpop.f32.mrb[0].mxu0
      %4271 = vmatprep.mubr.bf16.mxu0 0
      %4272 = vmatmul.mubr.bf16.gmra.mrb[0].mxu0 %v4131
      %v4273 = vpop.f32.mrb[0].mxu0
      %v4274 = vadd.f32 0.0, %v4273
      %v4275 = vpop.f32.mrb[0].mxu0
      %v4276 = vpop.f32.mrb[0].mxu0
      %v4277 = vadd.f32 0.0, %v4276
      %v4278 = vpop.f32.mrb[0].mxu0
      %4279 = vmatprep.mubr.bf16.mxu0 0
      %4280 = vmatmul.mubr.bf16.gmra.mrb[0].mxu0 %v4132
      %v4281 = vpop.f32.mrb[0].mxu0
      %v4282 = vadd.f32 0.0, %v4281
      %v4283 = vpop.f32.mrb[0].mxu0
      %v4284 = vpop.f32.mrb[0].mxu0
      %v4285 = vadd.f32 0.0, %v4284
      %v4286 = vpop.f32.mrb[0].mxu0
      %4287 = vmatprep.mubr.bf16.mxu0 0
      %4288 = vmatmul.mubr.bf16.gmra.mrb[0].mxu0 %v4133
      %v4289 = vpop.f32.mrb[0].mxu0
      %v4290 = vadd.f32 0.0, %v4289
      %v4291 = vpop.f32.mrb[0].mxu0
      %v4292 = vpop.f32.mrb[0].mxu0
      %v4293 = vadd.f32 0.0, %v4292
      %v4294 = vpop.f32.mrb[0].mxu0
      %4295 = vmatprep.mubr.bf16.mxu0 0
      %4296 = vmatmul.mubr.bf16.gmra.mrb[0].mxu0 %v4134
      %v4297 = vpop.f32.mrb[0].mxu0
      %v4298 = vadd.f32 0.0, %v4297
      %v4299 = vpop.f32.mrb[0].mxu0
      %v4300 = vpop.f32.mrb[0].mxu0
      %v4301 = vadd.f32 0.0, %v4300
      %v4302 = vpop.f32.mrb[0].mxu0
      %4303 = vmatprep.mubr.bf16.mxu0 0
      %4304 = vmatmul.mubr.bf16.gmra.mrb[0].mxu0 %v4135
      %v4305 = vpop.f32.mrb[0].mxu0
      %v4306 = vadd.f32 0.0, %v4305
      %v4307 = vpop.f32.mrb[0].mxu0
      %v4308 = vpop.f32.mrb[0].mxu0
      %v4309 = vadd.f32 0.0, %v4308
      %v4310 = vpop.f32.mrb[0].mxu0
      %4311 = vmatprep.mubr.bf16.mxu0 0
      %4312 = vmatmul.mubr.bf16.gmra.mrb[0].mxu0 %v4136
      %v4313 = vpop.f32.mrb[0].mxu0
      %v4314 = vadd.f32 0.0, %v4313
      %v4315 = vpop.f32.mrb[0].mxu0
      %v4316 = vpop.f32.mrb[0].mxu0
      %v4317 = vadd.f32 0.0, %v4316
      %v4318 = vpop.f32.mrb[0].mxu0
      %4319 = vmatprep.mubr.bf16.mxu0 0
      %4320 = vmatmul.mubr.bf16.gmra.mrb[0].mxu0 %v4137
      %v4321 = vpop.f32.mrb[0].mxu0
      %v4322 = vadd.f32 0.0, %v4321
      %v4323 = vpop.f32.mrb[0].mxu0
      %v4324 = vpop.f32.mrb[0].mxu0
      %v4325 = vadd.f32 0.0, %v4324
      %v4326 = vpop.f32.mrb[0].mxu0
      %4327 = vmatprep.mubr.bf16.mxu0 0
      %4328 = vmatmul.mubr.bf16.gmra.mrb[0].mxu0 %v4138
      %v4329 = vpop.f32.mrb[0].mxu0
      %v4330 = vadd.f32 0.0, %v4329
      %v4331 = vpop.f32.mrb[0].mxu0
      %v4332 = vpop.f32.mrb[0].mxu0
      %v4333 = vadd.f32 0.0, %v4332
      %v4334 = vpop.f32.mrb[0].mxu0
      %4335 = vmatprep.mubr.bf16.mxu0 0
      %4336 = vmatmul.mubr.bf16.gmra.mrb[0].mxu0 %v4139
      %v4337 = vpop.f32.mrb[0].mxu0
      %v4338 = vadd.f32 0.0, %v4337
      %v4339 = vpop.f32.mrb[0].mxu0
      %v4340 = vpop.f32.mrb[0].mxu0
      %v4341 = vadd.f32 0.0, %v4340
      %v4342 = vpop.f32.mrb[0].mxu0
      %4343 = vmatprep.mubr.bf16.mxu0 0
      %4344 = vmatmul.mubr.bf16.gmra.mrb[0].mxu0 %v4140
      %v4345 = vpop.f32.mrb[0].mxu0
      %v4346 = vadd.f32 0.0, %v4345
      %v4347 = vpop.f32.mrb[0].mxu0
      %v4348 = vpop.f32.mrb[0].mxu0
      %v4349 = vadd.f32 0.0, %v4348
      %v4350 = vpop.f32.mrb[0].mxu0
      %4351 = vmatprep.mubr.bf16.mxu0 0
      %4352 = vmatmul.mubr.bf16.gmra.mrb[0].mxu0 %v4141
      %v4353 = vpop.f32.mrb[0].mxu0
      %v4354 = vadd.f32 0.0, %v4353
      %v4355 = vpop.f32.mrb[0].mxu0
      %v4356 = vpop.f32.mrb[0].mxu0
      %v4357 = vadd.f32 0.0, %v4356
      %v4358 = vpop.f32.mrb[0].mxu0
      %4359 = vmatprep.mubr.bf16.mxu0 0
      %4360 = vmatmul.mubr.bf16.gmra.mrb[0].mxu0 %v4142
      %v4361 = vpop.f32.mrb[0].mxu0
      %v4362 = vadd.f32 0.0, %v4361
      %v4363 = vpop.f32.mrb[0].mxu0
      %v4364 = vpop.f32.mrb[0].mxu0
      %v4365 = vadd.f32 0.0, %v4364
      %v4366 = vpop.f32.mrb[0].mxu0
      %4367 = vdwg.mxu0
      %v4368 = vadd.f32 %v3981, %v4242
      %v4369 = vadd.f32 %v3982, %v4245
      %v4370 = vadd.f32 %v3983, %v4250
      %v4371 = vadd.f32 %v3984, %v4253
      %v4372 = vadd.f32 %v3985, %v4258
      %v4373 = vadd.f32 %v3986, %v4261
      %v4374 = vadd.f32 %v3987, %v4266
      %v4375 = vadd.f32 %v3988, %v4269
      %v4376 = vadd.f32 %v3989, %v4274
      %v4377 = vadd.f32 %v3990, %v4277
      %v4378 = vadd.f32 %v3991, %v4282
      %v4379 = vadd.f32 %v3992, %v4285
      %v4380 = vadd.f32 %v3993, %v4290
      %v4381 = vadd.f32 %v3994, %v4293
      %v4382 = vadd.f32 %v3995, %v4298
      %v4383 = vadd.f32 %v3996, %v4301
      %v4384 = vadd.f32 %v3997, %v4306
      %v4385 = vadd.f32 %v3998, %v4309
      %v4386 = vadd.f32 %v3999, %v4314
      %v4387 = vadd.f32 %v4000, %v4317
      %v4388 = vadd.f32 %v4001, %v4322
      %v4389 = vadd.f32 %v4002, %v4325
      %v4390 = vadd.f32 %v4003, %v4330
      %v4391 = vadd.f32 %v4004, %v4333
      %v4392 = vadd.f32 %v4005, %v4338
      %v4393 = vadd.f32 %v4006, %v4341
      %v4394 = vadd.f32 %v4007, %v4346
      %v4395 = vadd.f32 %v4008, %v4349
      %v4396 = vadd.f32 %v4009, %v4354
      %v4397 = vadd.f32 %v4010, %v4357
      %v4398 = vadd.f32 %v4011, %v4362
      %v4399 = vadd.f32 %v4012, %v4365
      %v4400 = vld [vmem:[%s4013] sm:$0xf]
      %v4401 = vld [vmem:[%s4013 + $0x4] sm:$0xf]
      %v4402 = vld [vmem:[%s4013 + $0x8] sm:$0x1]
      %v4403 = vld [vmem:[%s4013 + $0xc] sm:$0xf]
      %v4404 = vld [vmem:[%s4013 + $0x10] sm:$0xf]
      %v4405 = vld [vmem:[%s4013 + $0x14] sm:$0x1]
      %v4406 = vld [vmem:[%s4013 + $0x18] sm:$0xf]
      %v4407 = vld [vmem:[%s4013 + $0x1c] sm:$0xf]
      %v4408 = vld [vmem:[%s4013 + $0x20] sm:$0x1]
      %v4409 = vld [vmem:[%s4013 + $0x24] sm:$0xf]
      %v4410 = vld [vmem:[%s4013 + $0x28] sm:$0xf]
      %v4411 = vld [vmem:[%s4013 + $0x2c] sm:$0x1]
      %v4412 = vld [vmem:[%s4013 + $0x30] sm:$0xf]
      %v4413 = vld [vmem:[%s4013 + $0x34] sm:$0xf]
      %v4414 = vld [vmem:[%s4013 + $0x38] sm:$0x1]
      %v4415 = vld [vmem:[%s4013 + $0x3c] sm:$0xf]
      %v4416 = vld [vmem:[%s4013 + $0x40] sm:$0xf]
      %v4417 = vld [vmem:[%s4013 + $0x44] sm:$0x1]
      %v4418 = vld [vmem:[%s4013 + $0x48] sm:$0xf]
      %v4419 = vld [vmem:[%s4013 + $0x4c] sm:$0xf]
      %v4420 = vld [vmem:[%s4013 + $0x50] sm:$0x1]
      %v4421 = vld [vmem:[%s4013 + $0x54] sm:$0xf]
      %v4422 = vld [vmem:[%s4013 + $0x58] sm:$0xf]
      %v4423 = vld [vmem:[%s4013 + $0x5c] sm:$0x1]
      %v4424 = vld [vmem:[%s4013 + $0x60] sm:$0xf]
      %v4425 = vld [vmem:[%s4013 + $0x64] sm:$0xf]
      %v4426 = vld [vmem:[%s4013 + $0x68] sm:$0x1]
      %v4427 = vld [vmem:[%s4013 + $0x6c] sm:$0xf]
      %v4428 = vld [vmem:[%s4013 + $0x70] sm:$0xf]
      %v4429 = vld [vmem:[%s4013 + $0x74] sm:$0x1]
      %v4430 = vld [vmem:[%s4013 + $0x78] sm:$0xf]
      %v4431 = vld [vmem:[%s4013 + $0x7c] sm:$0xf]
      %v4432 = vld [vmem:[%s4013 + $0x80] sm:$0x1]
      %v4433 = vld [vmem:[%s4013 + $0x84] sm:$0xf]
      %v4434 = vld [vmem:[%s4013 + $0x88] sm:$0xf]
      %v4435 = vld [vmem:[%s4013 + $0x8c] sm:$0x1]
      %v4436 = vld [vmem:[%s4013 + $0x90] sm:$0xf]
      %v4437 = vld [vmem:[%s4013 + $0x94] sm:$0xf]
      %v4438 = vld [vmem:[%s4013 + $0x98] sm:$0x1]
      %v4439 = vld [vmem:[%s4013 + $0x9c] sm:$0xf]
      %v4440 = vld [vmem:[%s4013 + $0xa0] sm:$0xf]
      %v4441 = vld [vmem:[%s4013 + $0xa4] sm:$0x1]
      %v4442 = vld [vmem:[%s4013 + $0xa8] sm:$0xf]
      %v4443 = vld [vmem:[%s4013 + $0xac] sm:$0xf]
      %v4444 = vld [vmem:[%s4013 + $0xb0] sm:$0x1]
      %v4445 = vld [vmem:[%s4013 + $0xb4] sm:$0xf]
      %v4446 = vld [vmem:[%s4013 + $0xb8] sm:$0xf]
      %v4447 = vld [vmem:[%s4013 + $0xbc] sm:$0x1]
      %v4449 = vshrl.u32 %v4400, 16
      %v4451 = vrot.slane %v4449, 4
      %v4452 = vshll.u32 %v4400, 16
      %v4454 = vrot.slane %v4452, 5
      %v4455 = vor.u32 %v4451, %v4454
      %v4456 = vrot.slane %v4455, 4
      %v4458 = vshll.u32 %v4401, 16
      %v4460 = vrot.slane %v4458, 5
      %v4461 = vsel %vm909, %v4456, %v4460
      %v4462 = vshrl.u32 %v4401, 16
      %v4464 = vrot.slane %v4462, 4
      %v4465 = vor.u32 %v4464, %v4460
      %v4466 = vrot.slane %v4465, 4
      %v4468 = vshll.u32 %v4402, 16
      %v4470 = vrot.slane %v4468, 5
      %v4471 = vsel %vm909, %v4466, %v4470
      %v4473 = vshrl.u32 %v4403, 16
      %v4475 = vrot.slane %v4473, 4
      %v4476 = vshll.u32 %v4403, 16
      %v4478 = vrot.slane %v4476, 5
      %v4479 = vor.u32 %v4475, %v4478
      %v4480 = vrot.slane %v4479, 4
      %v4482 = vshll.u32 %v4404, 16
      %v4484 = vrot.slane %v4482, 5
      %v4485 = vsel %vm909, %v4480, %v4484
      %v4486 = vshrl.u32 %v4404, 16
      %v4488 = vrot.slane %v4486, 4
      %v4489 = vor.u32 %v4488, %v4484
      %v4490 = vrot.slane %v4489, 4
      %v4492 = vshll.u32 %v4405, 16
      %v4494 = vrot.slane %v4492, 5
      %v4495 = vsel %vm909, %v4490, %v4494
      %v4497 = vshrl.u32 %v4406, 16
      %v4499 = vrot.slane %v4497, 4
      %v4500 = vshll.u32 %v4406, 16
      %v4502 = vrot.slane %v4500, 5
      %v4503 = vor.u32 %v4499, %v4502
      %v4504 = vrot.slane %v4503, 4
      %v4506 = vshll.u32 %v4407, 16
      %v4508 = vrot.slane %v4506, 5
      %v4509 = vsel %vm909, %v4504, %v4508
      %v4510 = vshrl.u32 %v4407, 16
      %v4512 = vrot.slane %v4510, 4
      %v4513 = vor.u32 %v4512, %v4508
      %v4514 = vrot.slane %v4513, 4
      %v4516 = vshll.u32 %v4408, 16
      %v4518 = vrot.slane %v4516, 5
      %v4519 = vsel %vm909, %v4514, %v4518
      %v4521 = vshrl.u32 %v4409, 16
      %v4523 = vrot.slane %v4521, 4
      %v4524 = vshll.u32 %v4409, 16
      %v4526 = vrot.slane %v4524, 5
      %v4527 = vor.u32 %v4523, %v4526
      %v4528 = vrot.slane %v4527, 4
      %v4530 = vshll.u32 %v4410, 16
      %v4532 = vrot.slane %v4530, 5
      %v4533 = vsel %vm909, %v4528, %v4532
      %v4534 = vshrl.u32 %v4410, 16
      %v4536 = vrot.slane %v4534, 4
      %v4537 = vor.u32 %v4536, %v4532
      %v4538 = vrot.slane %v4537, 4
      %v4540 = vshll.u32 %v4411, 16
      %v4542 = vrot.slane %v4540, 5
      %v4543 = vsel %vm909, %v4538, %v4542
      %v4545 = vshrl.u32 %v4412, 16
      %v4547 = vrot.slane %v4545, 4
      %v4548 = vshll.u32 %v4412, 16
      %v4550 = vrot.slane %v4548, 5
      %v4551 = vor.u32 %v4547, %v4550
      %v4552 = vrot.slane %v4551, 4
      %v4554 = vshll.u32 %v4413, 16
      %v4556 = vrot.slane %v4554, 5
      %v4557 = vsel %vm909, %v4552, %v4556
      %v4558 = vshrl.u32 %v4413, 16
      %v4560 = vrot.slane %v4558, 4
      %v4561 = vor.u32 %v4560, %v4556
      %v4562 = vrot.slane %v4561, 4
      %v4564 = vshll.u32 %v4414, 16
      %v4566 = vrot.slane %v4564, 5
      %v4567 = vsel %vm909, %v4562, %v4566
      %v4569 = vshrl.u32 %v4415, 16
      %v4571 = vrot.slane %v4569, 4
      %v4572 = vshll.u32 %v4415, 16
      %v4574 = vrot.slane %v4572, 5
      %v4575 = vor.u32 %v4571, %v4574
      %v4576 = vrot.slane %v4575, 4
      %v4578 = vshll.u32 %v4416, 16
      %v4580 = vrot.slane %v4578, 5
      %v4581 = vsel %vm909, %v4576, %v4580
      %v4582 = vshrl.u32 %v4416, 16
      %v4584 = vrot.slane %v4582, 4
      %v4585 = vor.u32 %v4584, %v4580
      %v4586 = vrot.slane %v4585, 4
      %v4588 = vshll.u32 %v4417, 16
      %v4590 = vrot.slane %v4588, 5
      %v4591 = vsel %vm909, %v4586, %v4590
      %v4593 = vshrl.u32 %v4418, 16
      %v4595 = vrot.slane %v4593, 4
      %v4596 = vshll.u32 %v4418, 16
      %v4598 = vrot.slane %v4596, 5
      %v4599 = vor.u32 %v4595, %v4598
      %v4600 = vrot.slane %v4599, 4
      %v4602 = vshll.u32 %v4419, 16
      %v4604 = vrot.slane %v4602, 5
      %v4605 = vsel %vm909, %v4600, %v4604
      %v4606 = vshrl.u32 %v4419, 16
      %v4608 = vrot.slane %v4606, 4
      %v4609 = vor.u32 %v4608, %v4604
      %v4610 = vrot.slane %v4609, 4
      %v4612 = vshll.u32 %v4420, 16
      %v4614 = vrot.slane %v4612, 5
      %v4615 = vsel %vm909, %v4610, %v4614
      %v4617 = vshrl.u32 %v4421, 16
      %v4619 = vrot.slane %v4617, 4
      %v4620 = vshll.u32 %v4421, 16
      %v4622 = vrot.slane %v4620, 5
      %v4623 = vor.u32 %v4619, %v4622
      %v4624 = vrot.slane %v4623, 4
      %v4626 = vshll.u32 %v4422, 16
      %v4628 = vrot.slane %v4626, 5
      %v4629 = vsel %vm909, %v4624, %v4628
      %v4630 = vshrl.u32 %v4422, 16
      %v4632 = vrot.slane %v4630, 4
      %v4633 = vor.u32 %v4632, %v4628
      %v4634 = vrot.slane %v4633, 4
      %v4636 = vshll.u32 %v4423, 16
      %v4638 = vrot.slane %v4636, 5
      %v4639 = vsel %vm909, %v4634, %v4638
      %v4641 = vshrl.u32 %v4424, 16
      %v4643 = vrot.slane %v4641, 4
      %v4644 = vshll.u32 %v4424, 16
      %v4646 = vrot.slane %v4644, 5
      %v4647 = vor.u32 %v4643, %v4646
      %v4648 = vrot.slane %v4647, 4
      %v4650 = vshll.u32 %v4425, 16
      %v4652 = vrot.slane %v4650, 5
      %v4653 = vsel %vm909, %v4648, %v4652
      %v4654 = vshrl.u32 %v4425, 16
      %v4656 = vrot.slane %v4654, 4
      %v4657 = vor.u32 %v4656, %v4652
      %v4658 = vrot.slane %v4657, 4
      %v4660 = vshll.u32 %v4426, 16
      %v4662 = vrot.slane %v4660, 5
      %v4663 = vsel %vm909, %v4658, %v4662
      %v4665 = vshrl.u32 %v4427, 16
      %v4667 = vrot.slane %v4665, 4
      %v4668 = vshll.u32 %v4427, 16
      %v4670 = vrot.slane %v4668, 5
      %v4671 = vor.u32 %v4667, %v4670
      %v4672 = vrot.slane %v4671, 4
      %v4674 = vshll.u32 %v4428, 16
      %v4676 = vrot.slane %v4674, 5
      %v4677 = vsel %vm909, %v4672, %v4676
      %v4678 = vshrl.u32 %v4428, 16
      %v4680 = vrot.slane %v4678, 4
      %v4681 = vor.u32 %v4680, %v4676
      %v4682 = vrot.slane %v4681, 4
      %v4684 = vshll.u32 %v4429, 16
      %v4686 = vrot.slane %v4684, 5
      %v4687 = vsel %vm909, %v4682, %v4686
      %v4689 = vshrl.u32 %v4430, 16
      %v4691 = vrot.slane %v4689, 4
      %v4692 = vshll.u32 %v4430, 16
      %v4694 = vrot.slane %v4692, 5
      %v4695 = vor.u32 %v4691, %v4694
      %v4696 = vrot.slane %v4695, 4
      %v4698 = vshll.u32 %v4431, 16
      %v4700 = vrot.slane %v4698, 5
      %v4701 = vsel %vm909, %v4696, %v4700
      %v4702 = vshrl.u32 %v4431, 16
      %v4704 = vrot.slane %v4702, 4
      %v4705 = vor.u32 %v4704, %v4700
      %v4706 = vrot.slane %v4705, 4
      %v4708 = vshll.u32 %v4432, 16
      %v4710 = vrot.slane %v4708, 5
      %v4711 = vsel %vm909, %v4706, %v4710
      %v4713 = vshrl.u32 %v4433, 16
      %v4715 = vrot.slane %v4713, 4
      %v4716 = vshll.u32 %v4433, 16
      %v4718 = vrot.slane %v4716, 5
      %v4719 = vor.u32 %v4715, %v4718
      %v4720 = vrot.slane %v4719, 4
      %v4722 = vshll.u32 %v4434, 16
      %v4724 = vrot.slane %v4722, 5
      %v4725 = vsel %vm909, %v4720, %v4724
      %v4726 = vshrl.u32 %v4434, 16
      %v4728 = vrot.slane %v4726, 4
      %v4729 = vor.u32 %v4728, %v4724
      %v4730 = vrot.slane %v4729, 4
      %v4732 = vshll.u32 %v4435, 16
      %v4734 = vrot.slane %v4732, 5
      %v4735 = vsel %vm909, %v4730, %v4734
      %v4737 = vshrl.u32 %v4436, 16
      %v4739 = vrot.slane %v4737, 4
      %v4740 = vshll.u32 %v4436, 16
      %v4742 = vrot.slane %v4740, 5
      %v4743 = vor.u32 %v4739, %v4742
      %v4744 = vrot.slane %v4743, 4
      %v4746 = vshll.u32 %v4437, 16
      %v4748 = vrot.slane %v4746, 5
      %v4749 = vsel %vm909, %v4744, %v4748
      %v4750 = vshrl.u32 %v4437, 16
      %v4752 = vrot.slane %v4750, 4
      %v4753 = vor.u32 %v4752, %v4748
      %v4754 = vrot.slane %v4753, 4
      %v4756 = vshll.u32 %v4438, 16
      %v4758 = vrot.slane %v4756, 5
      %v4759 = vsel %vm909, %v4754, %v4758
      %v4761 = vshrl.u32 %v4439, 16
      %v4763 = vrot.slane %v4761, 4
      %v4764 = vshll.u32 %v4439, 16
      %v4766 = vrot.slane %v4764, 5
      %v4767 = vor.u32 %v4763, %v4766
      %v4768 = vrot.slane %v4767, 4
      %v4770 = vshll.u32 %v4440, 16
      %v4772 = vrot.slane %v4770, 5
      %v4773 = vsel %vm909, %v4768, %v4772
      %v4774 = vshrl.u32 %v4440, 16
      %v4776 = vrot.slane %v4774, 4
      %v4777 = vor.u32 %v4776, %v4772
      %v4778 = vrot.slane %v4777, 4
      %v4780 = vshll.u32 %v4441, 16
      %v4782 = vrot.slane %v4780, 5
      %v4783 = vsel %vm909, %v4778, %v4782
      %v4785 = vshrl.u32 %v4442, 16
      %v4787 = vrot.slane %v4785, 4
      %v4788 = vshll.u32 %v4442, 16
      %v4790 = vrot.slane %v4788, 5
      %v4791 = vor.u32 %v4787, %v4790
      %v4792 = vrot.slane %v4791, 4
      %v4794 = vshll.u32 %v4443, 16
      %v4796 = vrot.slane %v4794, 5
      %v4797 = vsel %vm909, %v4792, %v4796
      %v4798 = vshrl.u32 %v4443, 16
      %v4800 = vrot.slane %v4798, 4
      %v4801 = vor.u32 %v4800, %v4796
      %v4802 = vrot.slane %v4801, 4
      %v4804 = vshll.u32 %v4444, 16
      %v4806 = vrot.slane %v4804, 5
      %v4807 = vsel %vm909, %v4802, %v4806
      %v4809 = vshrl.u32 %v4445, 16
      %v4811 = vrot.slane %v4809, 4
      %v4812 = vshll.u32 %v4445, 16
      %v4814 = vrot.slane %v4812, 5
      %v4815 = vor.u32 %v4811, %v4814
      %v4816 = vrot.slane %v4815, 4
      %v4818 = vshll.u32 %v4446, 16
      %v4820 = vrot.slane %v4818, 5
      %v4821 = vsel %vm909, %v4816, %v4820
      %v4822 = vshrl.u32 %v4446, 16
      %v4824 = vrot.slane %v4822, 4
      %v4825 = vor.u32 %v4824, %v4820
      %v4826 = vrot.slane %v4825, 4
      %v4828 = vshll.u32 %v4447, 16
      %v4830 = vrot.slane %v4828, 5
      %v4831 = vsel %vm909, %v4826, %v4830
      %s4832 = scalar_lea.vmem %s3, 448
      %v4833 = vld [vmem:[%s4832] sm:$0xf]
      %v4834 = vld [vmem:[%s4832 + $0x4] sm:$0xf]
      %v4835 = vld [vmem:[%s4832 + $0x8] sm:$0xf]
      %v4836 = vld [vmem:[%s4832 + $0xc] sm:$0xf]
      %v4837 = vld [vmem:[%s4832 + $0x10] sm:$0xf]
      %v4838 = vld [vmem:[%s4832 + $0x14] sm:$0xf]
      %v4839 = vld [vmem:[%s4832 + $0x18] sm:$0xf]
      %v4840 = vld [vmem:[%s4832 + $0x1c] sm:$0xf]
      %v4841 = vld [vmem:[%s4832 + $0x20] sm:$0xf]
      %v4842 = vld [vmem:[%s4832 + $0x24] sm:$0xf]
      %v4843 = vld [vmem:[%s4832 + $0x28] sm:$0xf]
      %v4844 = vld [vmem:[%s4832 + $0x2c] sm:$0xf]
      %v4845 = vld [vmem:[%s4832 + $0x30] sm:$0xf]
      %v4846 = vld [vmem:[%s4832 + $0x34] sm:$0xf]
      %v4847 = vld [vmem:[%s4832 + $0x38] sm:$0xf]
      %v4848 = vld [vmem:[%s4832 + $0x3c] sm:$0xf]
      %v4849 = vunpack.c.l.b16 %v4461
      %v4850 = vunpack.c.l.b16 %v4471
      %v4851 = vunpack.c.l.b16 %v4485
      %v4852 = vunpack.c.l.b16 %v4495
      %v4853 = vunpack.c.l.b16 %v4509
      %v4854 = vunpack.c.l.b16 %v4519
      %v4855 = vunpack.c.l.b16 %v4533
      %v4856 = vunpack.c.l.b16 %v4543
      %v4857 = vunpack.c.l.b16 %v4557
      %v4858 = vunpack.c.l.b16 %v4567
      %v4859 = vunpack.c.l.b16 %v4581
      %v4860 = vunpack.c.l.b16 %v4591
      %v4861 = vunpack.c.l.b16 %v4605
      %v4862 = vunpack.c.l.b16 %v4615
      %v4863 = vunpack.c.l.b16 %v4629
      %v4864 = vunpack.c.l.b16 %v4639
      %v4865 = vunpack.c.l.b16 %v4653
      %v4866 = vunpack.c.l.b16 %v4663
      %v4867 = vunpack.c.l.b16 %v4677
      %v4868 = vunpack.c.l.b16 %v4687
      %v4869 = vunpack.c.l.b16 %v4701
      %v4870 = vunpack.c.l.b16 %v4711
      %v4871 = vunpack.c.l.b16 %v4725
      %v4872 = vunpack.c.l.b16 %v4735
      %v4873 = vunpack.c.l.b16 %v4749
      %v4874 = vunpack.c.l.b16 %v4759
      %v4875 = vunpack.c.l.b16 %v4773
      %v4876 = vunpack.c.l.b16 %v4783
      %v4877 = vunpack.c.l.b16 %v4797
      %v4878 = vunpack.c.l.b16 %v4807
      %v4879 = vunpack.c.l.b16 %v4821
      %v4880 = vunpack.c.l.b16 %v4831
      %v4881 = vpack.c.b16 %v4850, %v4849
      %v4882 = vpack.c.b16 %v4852, %v4851
      %v4883 = vpack.c.b16 %v4854, %v4853
      %v4884 = vpack.c.b16 %v4856, %v4855
      %v4885 = vpack.c.b16 %v4858, %v4857
      %v4886 = vpack.c.b16 %v4860, %v4859
      %v4887 = vpack.c.b16 %v4862, %v4861
      %v4888 = vpack.c.b16 %v4864, %v4863
      %v4889 = vpack.c.b16 %v4866, %v4865
      %v4890 = vpack.c.b16 %v4868, %v4867
      %v4891 = vpack.c.b16 %v4870, %v4869
      %v4892 = vpack.c.b16 %v4872, %v4871
      %v4893 = vpack.c.b16 %v4874, %v4873
      %v4894 = vpack.c.b16 %v4876, %v4875
      %v4895 = vpack.c.b16 %v4878, %v4877
      %v4896 = vpack.c.b16 %v4880, %v4879
      %v4929 = vunpack.c.l.b16 %v4833
      %v4930 = vunpack.c.l.b16 %v4834
      %v4931 = vunpack.c.l.b16 %v4835
      %v4932 = vunpack.c.l.b16 %v4836
      %v4933 = vunpack.c.l.b16 %v4837
      %v4934 = vunpack.c.l.b16 %v4838
      %v4935 = vunpack.c.l.b16 %v4839
      %v4936 = vunpack.c.l.b16 %v4840
      %v4937 = vunpack.c.l.b16 %v4841
      %v4938 = vunpack.c.l.b16 %v4842
      %v4939 = vunpack.c.l.b16 %v4843
      %v4940 = vunpack.c.l.b16 %v4844
      %v4941 = vunpack.c.l.b16 %v4845
      %v4942 = vunpack.c.l.b16 %v4846
      %v4943 = vunpack.c.l.b16 %v4847
      %v4944 = vunpack.c.l.b16 %v4848
      %v4945 = vpack.c.b16 %v4930, %v4929
      %v4946 = vpack.c.b16 %v4932, %v4931
      %v4947 = vpack.c.b16 %v4934, %v4933
      %v4948 = vpack.c.b16 %v4936, %v4935
      %v4949 = vpack.c.b16 %v4938, %v4937
      %v4950 = vpack.c.b16 %v4940, %v4939
      %v4951 = vpack.c.b16 %v4942, %v4941
      %v4952 = vpack.c.b16 %v4944, %v4943
      %4961 = vmatprep.subr.bf16.mxu0 0
      %4962 = vmatpush1.bf16.msra.mxu0 %v4945
      %4963 = vmatprep.subr.bf16.mxu0 0
      %4964 = vmatpush1.bf16.msra.mxu0 %v4946
      %4965 = vmatprep.subr.bf16.mxu0 0
      %4966 = vmatpush1.bf16.msra.mxu0 %v4947
      %4967 = vmatprep.subr.bf16.mxu0 0
      %4968 = vmatpush1.bf16.msra.mxu0 %v4948
      %4969 = vmatprep.subr.bf16.mxu0 0
      %4970 = vmatpush1.bf16.msra.mxu0 %v4949
      %4971 = vmatprep.subr.bf16.mxu0 0
      %4972 = vmatpush1.bf16.msra.mxu0 %v4950
      %4973 = vmatprep.subr.bf16.mxu0 0
      %4974 = vmatpush1.bf16.msra.mxu0 %v4951
      %4975 = vmatprep.subr.bf16.mxu0 0
      %4976 = vmatpush1.bf16.msra.mxu0 %v4952
      %4977 = vmatprep.subr.bf16.mxu0 0
      %4978 = vmatpush1.bf16.msra.mxu0 0
      %4979 = vmatprep.subr.bf16.mxu0 0
      %4980 = vmatpush1.bf16.msra.mxu0 0
      %4981 = vmatprep.subr.bf16.mxu0 0
      %4982 = vmatpush1.bf16.msra.mxu0 0
      %4983 = vmatprep.subr.bf16.mxu0 0
      %4984 = vmatpush1.bf16.msra.mxu0 0
      %4985 = vmatprep.subr.bf16.mxu0 0
      %4986 = vmatpush1.bf16.msra.mxu0 0
      %4987 = vmatprep.subr.bf16.mxu0 0
      %4988 = vmatpush1.bf16.msra.mxu0 0
      %4989 = vmatprep.subr.bf16.mxu0 0
      %4990 = vmatpush1.bf16.msra.mxu0 0
      %4991 = vmatprep.subr.bf16.mxu0 0
      %4992 = vmatpush1.bf16.msra.mxu0 0
      %4993 = vmatprep.mubr.bf16.mxu0 0
      %4994 = vmatmul.mubr.bf16.gmra.mrb[0].mxu0 %v4881
      %v4995 = vpop.f32.mrb[0].mxu0
      %v4996 = vadd.f32 0.0, %v4995
      %v4997 = vpop.f32.mrb[0].mxu0
      %v4998 = vpop.f32.mrb[0].mxu0
      %v4999 = vadd.f32 0.0, %v4998
      %v5000 = vpop.f32.mrb[0].mxu0
      %5001 = vmatprep.mubr.bf16.mxu0 0
      %5002 = vmatmul.mubr.bf16.gmra.mrb[0].mxu0 %v4882
      %v5003 = vpop.f32.mrb[0].mxu0
      %v5004 = vadd.f32 0.0, %v5003
      %v5005 = vpop.f32.mrb[0].mxu0
      %v5006 = vpop.f32.mrb[0].mxu0
      %v5007 = vadd.f32 0.0, %v5006
      %v5008 = vpop.f32.mrb[0].mxu0
      %5009 = vmatprep.mubr.bf16.mxu0 0
      %5010 = vmatmul.mubr.bf16.gmra.mrb[0].mxu0 %v4883
      %v5011 = vpop.f32.mrb[0].mxu0
      %v5012 = vadd.f32 0.0, %v5011
      %v5013 = vpop.f32.mrb[0].mxu0
      %v5014 = vpop.f32.mrb[0].mxu0
      %v5015 = vadd.f32 0.0, %v5014
      %v5016 = vpop.f32.mrb[0].mxu0
      %5017 = vmatprep.mubr.bf16.mxu0 0
      %5018 = vmatmul.mubr.bf16.gmra.mrb[0].mxu0 %v4884
      %v5019 = vpop.f32.mrb[0].mxu0
      %v5020 = vadd.f32 0.0, %v5019
      %v5021 = vpop.f32.mrb[0].mxu0
      %v5022 = vpop.f32.mrb[0].mxu0
      %v5023 = vadd.f32 0.0, %v5022
      %v5024 = vpop.f32.mrb[0].mxu0
      %5025 = vmatprep.mubr.bf16.mxu0 0
      %5026 = vmatmul.mubr.bf16.gmra.mrb[0].mxu0 %v4885
      %v5027 = vpop.f32.mrb[0].mxu0
      %v5028 = vadd.f32 0.0, %v5027
      %v5029 = vpop.f32.mrb[0].mxu0
      %v5030 = vpop.f32.mrb[0].mxu0
      %v5031 = vadd.f32 0.0, %v5030
      %v5032 = vpop.f32.mrb[0].mxu0
      %5033 = vmatprep.mubr.bf16.mxu0 0
      %5034 = vmatmul.mubr.bf16.gmra.mrb[0].mxu0 %v4886
      %v5035 = vpop.f32.mrb[0].mxu0
      %v5036 = vadd.f32 0.0, %v5035
      %v5037 = vpop.f32.mrb[0].mxu0
      %v5038 = vpop.f32.mrb[0].mxu0
      %v5039 = vadd.f32 0.0, %v5038
      %v5040 = vpop.f32.mrb[0].mxu0
      %5041 = vmatprep.mubr.bf16.mxu0 0
      %5042 = vmatmul.mubr.bf16.gmra.mrb[0].mxu0 %v4887
      %v5043 = vpop.f32.mrb[0].mxu0
      %v5044 = vadd.f32 0.0, %v5043
      %v5045 = vpop.f32.mrb[0].mxu0
      %v5046 = vpop.f32.mrb[0].mxu0
      %v5047 = vadd.f32 0.0, %v5046
      %v5048 = vpop.f32.mrb[0].mxu0
      %5049 = vmatprep.mubr.bf16.mxu0 0
      %5050 = vmatmul.mubr.bf16.gmra.mrb[0].mxu0 %v4888
      %v5051 = vpop.f32.mrb[0].mxu0
      %v5052 = vadd.f32 0.0, %v5051
      %v5053 = vpop.f32.mrb[0].mxu0
      %v5054 = vpop.f32.mrb[0].mxu0
      %v5055 = vadd.f32 0.0, %v5054
      %v5056 = vpop.f32.mrb[0].mxu0
      %5057 = vmatprep.mubr.bf16.mxu0 0
      %5058 = vmatmul.mubr.bf16.gmra.mrb[0].mxu0 %v4889
      %v5059 = vpop.f32.mrb[0].mxu0
      %v5060 = vadd.f32 0.0, %v5059
      %v5061 = vpop.f32.mrb[0].mxu0
      %v5062 = vpop.f32.mrb[0].mxu0
      %v5063 = vadd.f32 0.0, %v5062
      %v5064 = vpop.f32.mrb[0].mxu0
      %5065 = vmatprep.mubr.bf16.mxu0 0
      %5066 = vmatmul.mubr.bf16.gmra.mrb[0].mxu0 %v4890
      %v5067 = vpop.f32.mrb[0].mxu0
      %v5068 = vadd.f32 0.0, %v5067
      %v5069 = vpop.f32.mrb[0].mxu0
      %v5070 = vpop.f32.mrb[0].mxu0
      %v5071 = vadd.f32 0.0, %v5070
      %v5072 = vpop.f32.mrb[0].mxu0
      %5073 = vmatprep.mubr.bf16.mxu0 0
      %5074 = vmatmul.mubr.bf16.gmra.mrb[0].mxu0 %v4891
      %v5075 = vpop.f32.mrb[0].mxu0
      %v5076 = vadd.f32 0.0, %v5075
      %v5077 = vpop.f32.mrb[0].mxu0
      %v5078 = vpop.f32.mrb[0].mxu0
      %v5079 = vadd.f32 0.0, %v5078
      %v5080 = vpop.f32.mrb[0].mxu0
      %5081 = vmatprep.mubr.bf16.mxu0 0
      %5082 = vmatmul.mubr.bf16.gmra.mrb[0].mxu0 %v4892
      %v5083 = vpop.f32.mrb[0].mxu0
      %v5084 = vadd.f32 0.0, %v5083
      %v5085 = vpop.f32.mrb[0].mxu0
      %v5086 = vpop.f32.mrb[0].mxu0
      %v5087 = vadd.f32 0.0, %v5086
      %v5088 = vpop.f32.mrb[0].mxu0
      %5089 = vmatprep.mubr.bf16.mxu0 0
      %5090 = vmatmul.mubr.bf16.gmra.mrb[0].mxu0 %v4893
      %v5091 = vpop.f32.mrb[0].mxu0
      %v5092 = vadd.f32 0.0, %v5091
      %v5093 = vpop.f32.mrb[0].mxu0
      %v5094 = vpop.f32.mrb[0].mxu0
      %v5095 = vadd.f32 0.0, %v5094
      %v5096 = vpop.f32.mrb[0].mxu0
      %5097 = vmatprep.mubr.bf16.mxu0 0
      %5098 = vmatmul.mubr.bf16.gmra.mrb[0].mxu0 %v4894
      %v5099 = vpop.f32.mrb[0].mxu0
      %v5100 = vadd.f32 0.0, %v5099
      %v5101 = vpop.f32.mrb[0].mxu0
      %v5102 = vpop.f32.mrb[0].mxu0
      %v5103 = vadd.f32 0.0, %v5102
      %v5104 = vpop.f32.mrb[0].mxu0
      %5105 = vmatprep.mubr.bf16.mxu0 0
      %5106 = vmatmul.mubr.bf16.gmra.mrb[0].mxu0 %v4895
      %v5107 = vpop.f32.mrb[0].mxu0
      %v5108 = vadd.f32 0.0, %v5107
      %v5109 = vpop.f32.mrb[0].mxu0
      %v5110 = vpop.f32.mrb[0].mxu0
      %v5111 = vadd.f32 0.0, %v5110
      %v5112 = vpop.f32.mrb[0].mxu0
      %5113 = vmatprep.mubr.bf16.mxu0 0
      %5114 = vmatmul.mubr.bf16.gmra.mrb[0].mxu0 %v4896
      %v5115 = vpop.f32.mrb[0].mxu0
      %v5116 = vadd.f32 0.0, %v5115
      %v5117 = vpop.f32.mrb[0].mxu0
      %v5118 = vpop.f32.mrb[0].mxu0
      %v5119 = vadd.f32 0.0, %v5118
      %v5120 = vpop.f32.mrb[0].mxu0
      %5121 = vdwg.mxu0
      %v5122 = vadd.f32 %v4368, %v4996
      %v5123 = vadd.f32 %v4369, %v4999
      %v5124 = vadd.f32 %v4370, %v5004
      %v5125 = vadd.f32 %v4371, %v5007
      %v5126 = vadd.f32 %v4372, %v5012
      %v5127 = vadd.f32 %v4373, %v5015
      %v5128 = vadd.f32 %v4374, %v5020
      %v5129 = vadd.f32 %v4375, %v5023
      %v5130 = vadd.f32 %v4376, %v5028
      %v5131 = vadd.f32 %v4377, %v5031
      %v5132 = vadd.f32 %v4378, %v5036
      %v5133 = vadd.f32 %v4379, %v5039
      %v5134 = vadd.f32 %v4380, %v5044
      %v5135 = vadd.f32 %v4381, %v5047
      %v5136 = vadd.f32 %v4382, %v5052
      %v5137 = vadd.f32 %v4383, %v5055
      %v5138 = vadd.f32 %v4384, %v5060
      %v5139 = vadd.f32 %v4385, %v5063
      %v5140 = vadd.f32 %v4386, %v5068
      %v5141 = vadd.f32 %v4387, %v5071
      %v5142 = vadd.f32 %v4388, %v5076
      %v5143 = vadd.f32 %v4389, %v5079
      %v5144 = vadd.f32 %v4390, %v5084
      %v5145 = vadd.f32 %v4391, %v5087
      %v5146 = vadd.f32 %v4392, %v5092
      %v5147 = vadd.f32 %v4393, %v5095
      %v5148 = vadd.f32 %v4394, %v5100
      %v5149 = vadd.f32 %v4395, %v5103
      %v5150 = vadd.f32 %v4396, %v5108
      %v5151 = vadd.f32 %v4397, %v5111
      %v5152 = vadd.f32 %v4398, %v5116
      %v5153 = vadd.f32 %v4399, %v5119
      %v5154 = vld [vmem:[%s4013] sm:$0xe]
      %v5155 = vld [vmem:[%s4013 + $0xc] sm:$0xe]
      %v5156 = vld [vmem:[%s4013 + $0x18] sm:$0xe]
      %v5157 = vld [vmem:[%s4013 + $0x24] sm:$0xe]
      %v5158 = vld [vmem:[%s4013 + $0x30] sm:$0xe]
      %v5159 = vld [vmem:[%s4013 + $0x3c] sm:$0xe]
      %v5160 = vld [vmem:[%s4013 + $0x48] sm:$0xe]
      %v5161 = vld [vmem:[%s4013 + $0x54] sm:$0xe]
      %v5162 = vld [vmem:[%s4013 + $0x60] sm:$0xe]
      %v5163 = vld [vmem:[%s4013 + $0x6c] sm:$0xe]
      %v5164 = vld [vmem:[%s4013 + $0x78] sm:$0xe]
      %v5165 = vld [vmem:[%s4013 + $0x84] sm:$0xe]
      %v5166 = vld [vmem:[%s4013 + $0x90] sm:$0xe]
      %v5167 = vld [vmem:[%s4013 + $0x9c] sm:$0xe]
      %v5168 = vld [vmem:[%s4013 + $0xa8] sm:$0xe]
      %v5169 = vld [vmem:[%s4013 + $0xb4] sm:$0xe]
      %v5218 = vrot.slane %v5154, 5
      %v5219 = vrot.slane %v5218, 4
      %v5220 = vrot.slane %v4401, 5
      %v5221 = vsel %vm1939, %v5219, %v5220
      %v5222 = vrot.slane %v5220, 4
      %v5223 = vrot.slane %v4402, 5
      %v5224 = vsel %vm1939, %v5222, %v5223
      %v5225 = vrot.slane %v5155, 5
      %v5226 = vrot.slane %v5225, 4
      %v5227 = vrot.slane %v4404, 5
      %v5228 = vsel %vm1939, %v5226, %v5227
      %v5229 = vrot.slane %v5227, 4
      %v5230 = vrot.slane %v4405, 5
      %v5231 = vsel %vm1939, %v5229, %v5230
      %v5232 = vrot.slane %v5156, 5
      %v5233 = vrot.slane %v5232, 4
      %v5234 = vrot.slane %v4407, 5
      %v5235 = vsel %vm1939, %v5233, %v5234
      %v5236 = vrot.slane %v5234, 4
      %v5237 = vrot.slane %v4408, 5
      %v5238 = vsel %vm1939, %v5236, %v5237
      %v5239 = vrot.slane %v5157, 5
      %v5240 = vrot.slane %v5239, 4
      %v5241 = vrot.slane %v4410, 5
      %v5242 = vsel %vm1939, %v5240, %v5241
      %v5243 = vrot.slane %v5241, 4
      %v5244 = vrot.slane %v4411, 5
      %v5245 = vsel %vm1939, %v5243, %v5244
      %v5246 = vrot.slane %v5158, 5
      %v5247 = vrot.slane %v5246, 4
      %v5248 = vrot.slane %v4413, 5
      %v5249 = vsel %vm1939, %v5247, %v5248
      %v5250 = vrot.slane %v5248, 4
      %v5251 = vrot.slane %v4414, 5
      %v5252 = vsel %vm1939, %v5250, %v5251
      %v5253 = vrot.slane %v5159, 5
      %v5254 = vrot.slane %v5253, 4
      %v5255 = vrot.slane %v4416, 5
      %v5256 = vsel %vm1939, %v5254, %v5255
      %v5257 = vrot.slane %v5255, 4
      %v5258 = vrot.slane %v4417, 5
      %v5259 = vsel %vm1939, %v5257, %v5258
      %v5260 = vrot.slane %v5160, 5
      %v5261 = vrot.slane %v5260, 4
      %v5262 = vrot.slane %v4419, 5
      %v5263 = vsel %vm1939, %v5261, %v5262
      %v5264 = vrot.slane %v5262, 4
      %v5265 = vrot.slane %v4420, 5
      %v5266 = vsel %vm1939, %v5264, %v5265
      %v5267 = vrot.slane %v5161, 5
      %v5268 = vrot.slane %v5267, 4
      %v5269 = vrot.slane %v4422, 5
      %v5270 = vsel %vm1939, %v5268, %v5269
      %v5271 = vrot.slane %v5269, 4
      %v5272 = vrot.slane %v4423, 5
      %v5273 = vsel %vm1939, %v5271, %v5272
      %v5274 = vrot.slane %v5162, 5
      %v5275 = vrot.slane %v5274, 4
      %v5276 = vrot.slane %v4425, 5
      %v5277 = vsel %vm1939, %v5275, %v5276
      %v5278 = vrot.slane %v5276, 4
      %v5279 = vrot.slane %v4426, 5
      %v5280 = vsel %vm1939, %v5278, %v5279
      %v5281 = vrot.slane %v5163, 5
      %v5282 = vrot.slane %v5281, 4
      %v5283 = vrot.slane %v4428, 5
      %v5284 = vsel %vm1939, %v5282, %v5283
      %v5285 = vrot.slane %v5283, 4
      %v5286 = vrot.slane %v4429, 5
      %v5287 = vsel %vm1939, %v5285, %v5286
      %v5288 = vrot.slane %v5164, 5
      %v5289 = vrot.slane %v5288, 4
      %v5290 = vrot.slane %v4431, 5
      %v5291 = vsel %vm1939, %v5289, %v5290
      %v5292 = vrot.slane %v5290, 4
      %v5293 = vrot.slane %v4432, 5
      %v5294 = vsel %vm1939, %v5292, %v5293
      %v5295 = vrot.slane %v5165, 5
      %v5296 = vrot.slane %v5295, 4
      %v5297 = vrot.slane %v4434, 5
      %v5298 = vsel %vm1939, %v5296, %v5297
      %v5299 = vrot.slane %v5297, 4
      %v5300 = vrot.slane %v4435, 5
      %v5301 = vsel %vm1939, %v5299, %v5300
      %v5302 = vrot.slane %v5166, 5
      %v5303 = vrot.slane %v5302, 4
      %v5304 = vrot.slane %v4437, 5
      %v5305 = vsel %vm1939, %v5303, %v5304
      %v5306 = vrot.slane %v5304, 4
      %v5307 = vrot.slane %v4438, 5
      %v5308 = vsel %vm1939, %v5306, %v5307
      %v5309 = vrot.slane %v5167, 5
      %v5310 = vrot.slane %v5309, 4
      %v5311 = vrot.slane %v4440, 5
      %v5312 = vsel %vm1939, %v5310, %v5311
      %v5313 = vrot.slane %v5311, 4
      %v5314 = vrot.slane %v4441, 5
      %v5315 = vsel %vm1939, %v5313, %v5314
      %v5316 = vrot.slane %v5168, 5
      %v5317 = vrot.slane %v5316, 4
      %v5318 = vrot.slane %v4443, 5
      %v5319 = vsel %vm1939, %v5317, %v5318
      %v5320 = vrot.slane %v5318, 4
      %v5321 = vrot.slane %v4444, 5
      %v5322 = vsel %vm1939, %v5320, %v5321
      %v5323 = vrot.slane %v5169, 5
      %v5324 = vrot.slane %v5323, 4
      %v5325 = vrot.slane %v4446, 5
      %v5326 = vsel %vm1939, %v5324, %v5325
      %v5327 = vrot.slane %v5325, 4
      %v5328 = vrot.slane %v4447, 5
      %v5329 = vsel %vm1939, %v5327, %v5328
      %s5330 = scalar_lea.vmem %s3, 512
      %v5331 = vld [vmem:[%s5330] sm:$0xf]
      %v5332 = vld [vmem:[%s5330 + $0x4] sm:$0xf]
      %v5333 = vld [vmem:[%s5330 + $0x8] sm:$0xf]
      %v5334 = vld [vmem:[%s5330 + $0xc] sm:$0xf]
      %v5335 = vld [vmem:[%s5330 + $0x10] sm:$0xf]
      %v5336 = vld [vmem:[%s5330 + $0x14] sm:$0xf]
      %v5337 = vld [vmem:[%s5330 + $0x18] sm:$0xf]
      %v5338 = vld [vmem:[%s5330 + $0x1c] sm:$0xf]
      %v5339 = vld [vmem:[%s5330 + $0x20] sm:$0xf]
      %v5340 = vld [vmem:[%s5330 + $0x24] sm:$0xf]
      %v5341 = vld [vmem:[%s5330 + $0x28] sm:$0xf]
      %v5342 = vld [vmem:[%s5330 + $0x2c] sm:$0xf]
      %v5343 = vld [vmem:[%s5330 + $0x30] sm:$0xf]
      %v5344 = vld [vmem:[%s5330 + $0x34] sm:$0xf]
      %v5345 = vld [vmem:[%s5330 + $0x38] sm:$0xf]
      %v5346 = vld [vmem:[%s5330 + $0x3c] sm:$0xf]
      %v5347 = vunpack.c.l.b16 %v5221
      %v5348 = vunpack.c.l.b16 %v5224
      %v5349 = vunpack.c.l.b16 %v5228
      %v5350 = vunpack.c.l.b16 %v5231
      %v5351 = vunpack.c.l.b16 %v5235
      %v5352 = vunpack.c.l.b16 %v5238
      %v5353 = vunpack.c.l.b16 %v5242
      %v5354 = vunpack.c.l.b16 %v5245
      %v5355 = vunpack.c.l.b16 %v5249
      %v5356 = vunpack.c.l.b16 %v5252
      %v5357 = vunpack.c.l.b16 %v5256
      %v5358 = vunpack.c.l.b16 %v5259
      %v5359 = vunpack.c.l.b16 %v5263
      %v5360 = vunpack.c.l.b16 %v5266
      %v5361 = vunpack.c.l.b16 %v5270
      %v5362 = vunpack.c.l.b16 %v5273
      %v5363 = vunpack.c.l.b16 %v5277
      %v5364 = vunpack.c.l.b16 %v5280
      %v5365 = vunpack.c.l.b16 %v5284
      %v5366 = vunpack.c.l.b16 %v5287
      %v5367 = vunpack.c.l.b16 %v5291
      %v5368 = vunpack.c.l.b16 %v5294
      %v5369 = vunpack.c.l.b16 %v5298
      %v5370 = vunpack.c.l.b16 %v5301
      %v5371 = vunpack.c.l.b16 %v5305
      %v5372 = vunpack.c.l.b16 %v5308
      %v5373 = vunpack.c.l.b16 %v5312
      %v5374 = vunpack.c.l.b16 %v5315
      %v5375 = vunpack.c.l.b16 %v5319
      %v5376 = vunpack.c.l.b16 %v5322
      %v5377 = vunpack.c.l.b16 %v5326
      %v5378 = vunpack.c.l.b16 %v5329
      %v5379 = vpack.c.b16 %v5348, %v5347
      %v5380 = vpack.c.b16 %v5350, %v5349
      %v5381 = vpack.c.b16 %v5352, %v5351
      %v5382 = vpack.c.b16 %v5354, %v5353
      %v5383 = vpack.c.b16 %v5356, %v5355
      %v5384 = vpack.c.b16 %v5358, %v5357
      %v5385 = vpack.c.b16 %v5360, %v5359
      %v5386 = vpack.c.b16 %v5362, %v5361
      %v5387 = vpack.c.b16 %v5364, %v5363
      %v5388 = vpack.c.b16 %v5366, %v5365
      %v5389 = vpack.c.b16 %v5368, %v5367
      %v5390 = vpack.c.b16 %v5370, %v5369
      %v5391 = vpack.c.b16 %v5372, %v5371
      %v5392 = vpack.c.b16 %v5374, %v5373
      %v5393 = vpack.c.b16 %v5376, %v5375
      %v5394 = vpack.c.b16 %v5378, %v5377
      %v5427 = vunpack.c.l.b16 %v5331
      %v5428 = vunpack.c.l.b16 %v5332
      %v5429 = vunpack.c.l.b16 %v5333
      %v5430 = vunpack.c.l.b16 %v5334
      %v5431 = vunpack.c.l.b16 %v5335
      %v5432 = vunpack.c.l.b16 %v5336
      %v5433 = vunpack.c.l.b16 %v5337
      %v5434 = vunpack.c.l.b16 %v5338
      %v5435 = vunpack.c.l.b16 %v5339
      %v5436 = vunpack.c.l.b16 %v5340
      %v5437 = vunpack.c.l.b16 %v5341
      %v5438 = vunpack.c.l.b16 %v5342
      %v5439 = vunpack.c.l.b16 %v5343
      %v5440 = vunpack.c.l.b16 %v5344
      %v5441 = vunpack.c.l.b16 %v5345
      %v5442 = vunpack.c.l.b16 %v5346
      %v5443 = vpack.c.b16 %v5428, %v5427
      %v5444 = vpack.c.b16 %v5430, %v5429
      %v5445 = vpack.c.b16 %v5432, %v5431
      %v5446 = vpack.c.b16 %v5434, %v5433
      %v5447 = vpack.c.b16 %v5436, %v5435
      %v5448 = vpack.c.b16 %v5438, %v5437
      %v5449 = vpack.c.b16 %v5440, %v5439
      %v5450 = vpack.c.b16 %v5442, %v5441
      %5459 = vmatprep.subr.bf16.mxu0 0
      %5460 = vmatpush1.bf16.msra.mxu0 %v5443
      %5461 = vmatprep.subr.bf16.mxu0 0
      %5462 = vmatpush1.bf16.msra.mxu0 %v5444
      %5463 = vmatprep.subr.bf16.mxu0 0
      %5464 = vmatpush1.bf16.msra.mxu0 %v5445
      %5465 = vmatprep.subr.bf16.mxu0 0
      %5466 = vmatpush1.bf16.msra.mxu0 %v5446
      %5467 = vmatprep.subr.bf16.mxu0 0
      %5468 = vmatpush1.bf16.msra.mxu0 %v5447
      %5469 = vmatprep.subr.bf16.mxu0 0
      %5470 = vmatpush1.bf16.msra.mxu0 %v5448
      %5471 = vmatprep.subr.bf16.mxu0 0
      %5472 = vmatpush1.bf16.msra.mxu0 %v5449
      %5473 = vmatprep.subr.bf16.mxu0 0
      %5474 = vmatpush1.bf16.msra.mxu0 %v5450
      %5475 = vmatprep.subr.bf16.mxu0 0
      %5476 = vmatpush1.bf16.msra.mxu0 0
      %5477 = vmatprep.subr.bf16.mxu0 0
      %5478 = vmatpush1.bf16.msra.mxu0 0
      %5479 = vmatprep.subr.bf16.mxu0 0
      %5480 = vmatpush1.bf16.msra.mxu0 0
      %5481 = vmatprep.subr.bf16.mxu0 0
      %5482 = vmatpush1.bf16.msra.mxu0 0
      %5483 = vmatprep.subr.bf16.mxu0 0
      %5484 = vmatpush1.bf16.msra.mxu0 0
      %5485 = vmatprep.subr.bf16.mxu0 0
      %5486 = vmatpush1.bf16.msra.mxu0 0
      %5487 = vmatprep.subr.bf16.mxu0 0
      %5488 = vmatpush1.bf16.msra.mxu0 0
      %5489 = vmatprep.subr.bf16.mxu0 0
      %5490 = vmatpush1.bf16.msra.mxu0 0
      %5491 = vmatprep.mubr.bf16.mxu0 0
      %5492 = vmatmul.mubr.bf16.gmra.mrb[0].mxu0 %v5379
      %v5493 = vpop.f32.mrb[0].mxu0
      %v5494 = vadd.f32 0.0, %v5493
      %v5495 = vpop.f32.mrb[0].mxu0
      %v5496 = vpop.f32.mrb[0].mxu0
      %v5497 = vadd.f32 0.0, %v5496
      %v5498 = vpop.f32.mrb[0].mxu0
      %5499 = vmatprep.mubr.bf16.mxu0 0
      %5500 = vmatmul.mubr.bf16.gmra.mrb[0].mxu0 %v5380
      %v5501 = vpop.f32.mrb[0].mxu0
      %v5502 = vadd.f32 0.0, %v5501
      %v5503 = vpop.f32.mrb[0].mxu0
      %v5504 = vpop.f32.mrb[0].mxu0
      %v5505 = vadd.f32 0.0, %v5504
      %v5506 = vpop.f32.mrb[0].mxu0
      %5507 = vmatprep.mubr.bf16.mxu0 0
      %5508 = vmatmul.mubr.bf16.gmra.mrb[0].mxu0 %v5381
      %v5509 = vpop.f32.mrb[0].mxu0
      %v5510 = vadd.f32 0.0, %v5509
      %v5511 = vpop.f32.mrb[0].mxu0
      %v5512 = vpop.f32.mrb[0].mxu0
      %v5513 = vadd.f32 0.0, %v5512
      %v5514 = vpop.f32.mrb[0].mxu0
      %5515 = vmatprep.mubr.bf16.mxu0 0
      %5516 = vmatmul.mubr.bf16.gmra.mrb[0].mxu0 %v5382
      %v5517 = vpop.f32.mrb[0].mxu0
      %v5518 = vadd.f32 0.0, %v5517
      %v5519 = vpop.f32.mrb[0].mxu0
      %v5520 = vpop.f32.mrb[0].mxu0
      %v5521 = vadd.f32 0.0, %v5520
      %v5522 = vpop.f32.mrb[0].mxu0
      %5523 = vmatprep.mubr.bf16.mxu0 0
      %5524 = vmatmul.mubr.bf16.gmra.mrb[0].mxu0 %v5383
      %v5525 = vpop.f32.mrb[0].mxu0
      %v5526 = vadd.f32 0.0, %v5525
      %v5527 = vpop.f32.mrb[0].mxu0
      %v5528 = vpop.f32.mrb[0].mxu0
      %v5529 = vadd.f32 0.0, %v5528
      %v5530 = vpop.f32.mrb[0].mxu0
      %5531 = vmatprep.mubr.bf16.mxu0 0
      %5532 = vmatmul.mubr.bf16.gmra.mrb[0].mxu0 %v5384
      %v5533 = vpop.f32.mrb[0].mxu0
      %v5534 = vadd.f32 0.0, %v5533
      %v5535 = vpop.f32.mrb[0].mxu0
      %v5536 = vpop.f32.mrb[0].mxu0
      %v5537 = vadd.f32 0.0, %v5536
      %v5538 = vpop.f32.mrb[0].mxu0
      %5539 = vmatprep.mubr.bf16.mxu0 0
      %5540 = vmatmul.mubr.bf16.gmra.mrb[0].mxu0 %v5385
      %v5541 = vpop.f32.mrb[0].mxu0
      %v5542 = vadd.f32 0.0, %v5541
      %v5543 = vpop.f32.mrb[0].mxu0
      %v5544 = vpop.f32.mrb[0].mxu0
      %v5545 = vadd.f32 0.0, %v5544
      %v5546 = vpop.f32.mrb[0].mxu0
      %5547 = vmatprep.mubr.bf16.mxu0 0
      %5548 = vmatmul.mubr.bf16.gmra.mrb[0].mxu0 %v5386
      %v5549 = vpop.f32.mrb[0].mxu0
      %v5550 = vadd.f32 0.0, %v5549
      %v5551 = vpop.f32.mrb[0].mxu0
      %v5552 = vpop.f32.mrb[0].mxu0
      %v5553 = vadd.f32 0.0, %v5552
      %v5554 = vpop.f32.mrb[0].mxu0
      %5555 = vmatprep.mubr.bf16.mxu0 0
      %5556 = vmatmul.mubr.bf16.gmra.mrb[0].mxu0 %v5387
      %v5557 = vpop.f32.mrb[0].mxu0
      %v5558 = vadd.f32 0.0, %v5557
      %v5559 = vpop.f32.mrb[0].mxu0
      %v5560 = vpop.f32.mrb[0].mxu0
      %v5561 = vadd.f32 0.0, %v5560
      %v5562 = vpop.f32.mrb[0].mxu0
      %5563 = vmatprep.mubr.bf16.mxu0 0
      %5564 = vmatmul.mubr.bf16.gmra.mrb[0].mxu0 %v5388
      %v5565 = vpop.f32.mrb[0].mxu0
      %v5566 = vadd.f32 0.0, %v5565
      %v5567 = vpop.f32.mrb[0].mxu0
      %v5568 = vpop.f32.mrb[0].mxu0
      %v5569 = vadd.f32 0.0, %v5568
      %v5570 = vpop.f32.mrb[0].mxu0
      %5571 = vmatprep.mubr.bf16.mxu0 0
      %5572 = vmatmul.mubr.bf16.gmra.mrb[0].mxu0 %v5389
      %v5573 = vpop.f32.mrb[0].mxu0
      %v5574 = vadd.f32 0.0, %v5573
      %v5575 = vpop.f32.mrb[0].mxu0
      %v5576 = vpop.f32.mrb[0].mxu0
      %v5577 = vadd.f32 0.0, %v5576
      %v5578 = vpop.f32.mrb[0].mxu0
      %5579 = vmatprep.mubr.bf16.mxu0 0
      %5580 = vmatmul.mubr.bf16.gmra.mrb[0].mxu0 %v5390
      %v5581 = vpop.f32.mrb[0].mxu0
      %v5582 = vadd.f32 0.0, %v5581
      %v5583 = vpop.f32.mrb[0].mxu0
      %v5584 = vpop.f32.mrb[0].mxu0
      %v5585 = vadd.f32 0.0, %v5584
      %v5586 = vpop.f32.mrb[0].mxu0
      %5587 = vmatprep.mubr.bf16.mxu0 0
      %5588 = vmatmul.mubr.bf16.gmra.mrb[0].mxu0 %v5391
      %v5589 = vpop.f32.mrb[0].mxu0
      %v5590 = vadd.f32 0.0, %v5589
      %v5591 = vpop.f32.mrb[0].mxu0
      %v5592 = vpop.f32.mrb[0].mxu0
      %v5593 = vadd.f32 0.0, %v5592
      %v5594 = vpop.f32.mrb[0].mxu0
      %5595 = vmatprep.mubr.bf16.mxu0 0
      %5596 = vmatmul.mubr.bf16.gmra.mrb[0].mxu0 %v5392
      %v5597 = vpop.f32.mrb[0].mxu0
      %v5598 = vadd.f32 0.0, %v5597
      %v5599 = vpop.f32.mrb[0].mxu0
      %v5600 = vpop.f32.mrb[0].mxu0
      %v5601 = vadd.f32 0.0, %v5600
      %v5602 = vpop.f32.mrb[0].mxu0
      %5603 = vmatprep.mubr.bf16.mxu0 0
      %5604 = vmatmul.mubr.bf16.gmra.mrb[0].mxu0 %v5393
      %v5605 = vpop.f32.mrb[0].mxu0
      %v5606 = vadd.f32 0.0, %v5605
      %v5607 = vpop.f32.mrb[0].mxu0
      %v5608 = vpop.f32.mrb[0].mxu0
      %v5609 = vadd.f32 0.0, %v5608
      %v5610 = vpop.f32.mrb[0].mxu0
      %5611 = vmatprep.mubr.bf16.mxu0 0
      %5612 = vmatmul.mubr.bf16.gmra.mrb[0].mxu0 %v5394
      %v5613 = vpop.f32.mrb[0].mxu0
      %v5614 = vadd.f32 0.0, %v5613
      %v5615 = vpop.f32.mrb[0].mxu0
      %v5616 = vpop.f32.mrb[0].mxu0
      %v5617 = vadd.f32 0.0, %v5616
      %v5618 = vpop.f32.mrb[0].mxu0
      %5619 = vdwg.mxu0
      %v5620 = vadd.f32 %v5122, %v5494
      %v5621 = vadd.f32 %v5123, %v5497
      %v5622 = vadd.f32 %v5124, %v5502
      %v5623 = vadd.f32 %v5125, %v5505
      %v5624 = vadd.f32 %v5126, %v5510
      %v5625 = vadd.f32 %v5127, %v5513
      %v5626 = vadd.f32 %v5128, %v5518
      %v5627 = vadd.f32 %v5129, %v5521
      %v5628 = vadd.f32 %v5130, %v5526
      %v5629 = vadd.f32 %v5131, %v5529
      %v5630 = vadd.f32 %v5132, %v5534
      %v5631 = vadd.f32 %v5133, %v5537
      %v5632 = vadd.f32 %v5134, %v5542
      %v5633 = vadd.f32 %v5135, %v5545
      %v5634 = vadd.f32 %v5136, %v5550
      %v5635 = vadd.f32 %v5137, %v5553
      %v5636 = vadd.f32 %v5138, %v5558
      %v5637 = vadd.f32 %v5139, %v5561
      %v5638 = vadd.f32 %v5140, %v5566
      %v5639 = vadd.f32 %v5141, %v5569
      %v5640 = vadd.f32 %v5142, %v5574
      %v5641 = vadd.f32 %v5143, %v5577
      %v5642 = vadd.f32 %v5144, %v5582
      %v5643 = vadd.f32 %v5145, %v5585
      %v5644 = vadd.f32 %v5146, %v5590
      %v5645 = vadd.f32 %v5147, %v5593
      %v5646 = vadd.f32 %v5148, %v5598
      %v5647 = vadd.f32 %v5149, %v5601
      %v5648 = vadd.f32 %v5150, %v5606
      %v5649 = vadd.f32 %v5151, %v5609
      %v5650 = vadd.f32 %v5152, %v5614
      %v5651 = vadd.f32 %v5153, %v5617
      %v5652 = vpack.c.bf16 %v5621, %v5620
      %v5653 = vpack.c.bf16 %v5623, %v5622
      %v5654 = vpack.c.bf16 %v5625, %v5624
      %v5655 = vpack.c.bf16 %v5627, %v5626
      %v5656 = vpack.c.bf16 %v5629, %v5628
      %v5657 = vpack.c.bf16 %v5631, %v5630
      %v5658 = vpack.c.bf16 %v5633, %v5632
      %v5659 = vpack.c.bf16 %v5635, %v5634
      %v5660 = vpack.c.bf16 %v5637, %v5636
      %v5661 = vpack.c.bf16 %v5639, %v5638
      %v5662 = vpack.c.bf16 %v5641, %v5640
      %v5663 = vpack.c.bf16 %v5643, %v5642
      %v5664 = vpack.c.bf16 %v5645, %v5644
      %v5665 = vpack.c.bf16 %v5647, %v5646
      %v5666 = vpack.c.bf16 %v5649, %v5648
      %v5667 = vpack.c.bf16 %v5651, %v5650
      %v5684 = vunpack.c.l.b16 %v5652
      %v5685 = vunpack.c.h.b16 %v5652
      %v5686 = vunpack.c.l.b16 %v5653
      %v5687 = vunpack.c.h.b16 %v5653
      %v5688 = vunpack.c.l.b16 %v5654
      %v5689 = vunpack.c.h.b16 %v5654
      %v5690 = vunpack.c.l.b16 %v5655
      %v5691 = vunpack.c.h.b16 %v5655
      %v5692 = vunpack.c.l.b16 %v5656
      %v5693 = vunpack.c.h.b16 %v5656
      %v5694 = vunpack.c.l.b16 %v5657
      %v5695 = vunpack.c.h.b16 %v5657
      %v5696 = vunpack.c.l.b16 %v5658
      %v5697 = vunpack.c.h.b16 %v5658
      %v5698 = vunpack.c.l.b16 %v5659
      %v5699 = vunpack.c.h.b16 %v5659
      %v5700 = vunpack.c.l.b16 %v5660
      %v5701 = vunpack.c.h.b16 %v5660
      %v5702 = vunpack.c.l.b16 %v5661
      %v5703 = vunpack.c.h.b16 %v5661
      %v5704 = vunpack.c.l.b16 %v5662
      %v5705 = vunpack.c.h.b16 %v5662
      %v5706 = vunpack.c.l.b16 %v5663
      %v5707 = vunpack.c.h.b16 %v5663
      %v5708 = vunpack.c.l.b16 %v5664
      %v5709 = vunpack.c.h.b16 %v5664
      %v5710 = vunpack.c.l.b16 %v5665
      %v5711 = vunpack.c.h.b16 %v5665
      %v5712 = vunpack.c.l.b16 %v5666
      %v5713 = vunpack.c.h.b16 %v5666
      %v5714 = vunpack.c.l.b16 %v5667
      %v5715 = vunpack.c.h.b16 %v5667
      %v5716 = vpack.c.b16 %v5684, %v5684
      %v5717 = vpack.c.b16 %v5685, %v5685
      %v5718 = vpack.c.b16 %v5686, %v5686
      %v5719 = vpack.c.b16 %v5687, %v5687
      %v5720 = vpack.c.b16 %v5688, %v5688
      %v5721 = vpack.c.b16 %v5689, %v5689
      %v5722 = vpack.c.b16 %v5690, %v5690
      %v5723 = vpack.c.b16 %v5691, %v5691
      %v5724 = vpack.c.b16 %v5692, %v5692
      %v5725 = vpack.c.b16 %v5693, %v5693
      %v5726 = vpack.c.b16 %v5694, %v5694
      %v5727 = vpack.c.b16 %v5695, %v5695
      %v5728 = vpack.c.b16 %v5696, %v5696
      %v5729 = vpack.c.b16 %v5697, %v5697
      %v5730 = vpack.c.b16 %v5698, %v5698
      %v5731 = vpack.c.b16 %v5699, %v5699
      %v5732 = vpack.c.b16 %v5700, %v5700
      %v5733 = vpack.c.b16 %v5701, %v5701
      %v5734 = vpack.c.b16 %v5702, %v5702
      %v5735 = vpack.c.b16 %v5703, %v5703
      %v5736 = vpack.c.b16 %v5704, %v5704
      %v5737 = vpack.c.b16 %v5705, %v5705
      %v5738 = vpack.c.b16 %v5706, %v5706
      %v5739 = vpack.c.b16 %v5707, %v5707
      %v5740 = vpack.c.b16 %v5708, %v5708
      %v5741 = vpack.c.b16 %v5709, %v5709
      %v5742 = vpack.c.b16 %v5710, %v5710
      %v5743 = vpack.c.b16 %v5711, %v5711
      %v5744 = vpack.c.b16 %v5712, %v5712
      %v5745 = vpack.c.b16 %v5713, %v5713
      %v5746 = vpack.c.b16 %v5714, %v5714
      %v5747 = vpack.c.b16 %v5715, %v5715
      %5780 = vst [vmem:[%s231] sm:$0xf] %v5716
      %5781 = vst [vmem:[%s231 + $0x4] sm:$0xf] %v5717
      %5782 = vst [vmem:[%s231 + $0x8] sm:$0xf] %v5718
      %5783 = vst [vmem:[%s231 + $0xc] sm:$0xf] %v5719
      %5784 = vst [vmem:[%s231 + $0x10] sm:$0xf] %v5720
      %5785 = vst [vmem:[%s231 + $0x14] sm:$0xf] %v5721
      %5786 = vst [vmem:[%s231 + $0x18] sm:$0xf] %v5722
      %5787 = vst [vmem:[%s231 + $0x1c] sm:$0xf] %v5723
      %5788 = vst [vmem:[%s231 + $0x20] sm:$0xf] %v5724
      %5789 = vst [vmem:[%s231 + $0x24] sm:$0xf] %v5725
      %5790 = vst [vmem:[%s231 + $0x28] sm:$0xf] %v5726
      %5791 = vst [vmem:[%s231 + $0x2c] sm:$0xf] %v5727
      %5792 = vst [vmem:[%s231 + $0x30] sm:$0xf] %v5728
      %5793 = vst [vmem:[%s231 + $0x34] sm:$0xf] %v5729
      %5794 = vst [vmem:[%s231 + $0x38] sm:$0xf] %v5730
      %5795 = vst [vmem:[%s231 + $0x3c] sm:$0xf] %v5731
      %5796 = vst [vmem:[%s231 + $0x40] sm:$0xf] %v5732
      %5797 = vst [vmem:[%s231 + $0x44] sm:$0xf] %v5733
      %5798 = vst [vmem:[%s231 + $0x48] sm:$0xf] %v5734
      %5799 = vst [vmem:[%s231 + $0x4c] sm:$0xf] %v5735
      %5800 = vst [vmem:[%s231 + $0x50] sm:$0xf] %v5736
      %5801 = vst [vmem:[%s231 + $0x54] sm:$0xf] %v5737
      %5802 = vst [vmem:[%s231 + $0x58] sm:$0xf] %v5738
      %5803 = vst [vmem:[%s231 + $0x5c] sm:$0xf] %v5739
      %5804 = vst [vmem:[%s231 + $0x60] sm:$0xf] %v5740
      %5805 = vst [vmem:[%s231 + $0x64] sm:$0xf] %v5741
      %5806 = vst [vmem:[%s231 + $0x68] sm:$0xf] %v5742
      %5807 = vst [vmem:[%s231 + $0x6c] sm:$0xf] %v5743
      %5808 = vst [vmem:[%s231 + $0x70] sm:$0xf] %v5744
      %5809 = vst [vmem:[%s231 + $0x74] sm:$0xf] %v5745
      %5810 = vst [vmem:[%s231 + $0x78] sm:$0xf] %v5746
      %5811 = vst [vmem:[%s231 + $0x7c] sm:$0xf] %v5747
      %v5812 = vadd.f32 %v5620, %v5621
      %v5813 = vadd.f32 %v5812, %v5622
      %v5814 = vadd.f32 %v5813, %v5623
      %v5815 = vadd.f32 %v5814, %v5624
      %v5816 = vadd.f32 %v5815, %v5625
      %v5817 = vadd.f32 %v5816, %v5626
      %v5818 = vadd.f32 %v5817, %v5627
      %v5819 = vadd.f32 %v5818, %v5628
      %v5820 = vadd.f32 %v5819, %v5629
      %v5821 = vadd.f32 %v5820, %v5630
      %v5822 = vadd.f32 %v5821, %v5631
      %v5823 = vadd.f32 %v5822, %v5632
      %v5824 = vadd.f32 %v5823, %v5633
      %v5825 = vadd.f32 %v5824, %v5634
      %v5826 = vadd.f32 %v5825, %v5635
      %v5827 = vadd.f32 %v5826, %v5636
      %v5828 = vadd.f32 %v5827, %v5637
      %v5829 = vadd.f32 %v5828, %v5638
      %v5830 = vadd.f32 %v5829, %v5639
      %v5831 = vadd.f32 %v5830, %v5640
      %v5832 = vadd.f32 %v5831, %v5641
      %v5833 = vadd.f32 %v5832, %v5642
      %v5834 = vadd.f32 %v5833, %v5643
      %v5835 = vadd.f32 %v5834, %v5644
      %v5836 = vadd.f32 %v5835, %v5645
      %v5837 = vadd.f32 %v5836, %v5646
      %v5838 = vadd.f32 %v5837, %v5647
      %v5839 = vadd.f32 %v5838, %v5648
      %v5840 = vadd.f32 %v5839, %v5649
      %v5841 = vadd.f32 %v5840, %v5650
      %v5842 = vadd.f32 %v5841, %v5651
      %v5843 = vrot.slane %v5842, 4
      %v5844 = vadd.f32 %v5842, %v5843
      %v5845 = vrot.slane %v5844, 2
      %v5846 = vadd.f32 %v5844, %v5845
      %v5847 = vrot.slane %v5846, 1
      %v5848 = vadd.f32 %v5846, %v5847
      %v5849 = vmul.f32 %v5620, %v5620
      %v5850 = vmul.f32 %v5621, %v5621
      %v5851 = vmul.f32 %v5622, %v5622
      %v5852 = vmul.f32 %v5623, %v5623
      %v5853 = vmul.f32 %v5624, %v5624
      %v5854 = vmul.f32 %v5625, %v5625
      %v5855 = vmul.f32 %v5626, %v5626
      %v5856 = vmul.f32 %v5627, %v5627
      %v5857 = vmul.f32 %v5628, %v5628
      %v5858 = vmul.f32 %v5629, %v5629
      %v5859 = vmul.f32 %v5630, %v5630
      %v5860 = vmul.f32 %v5631, %v5631
      %v5861 = vmul.f32 %v5632, %v5632
      %v5862 = vmul.f32 %v5633, %v5633
      %v5863 = vmul.f32 %v5634, %v5634
      %v5864 = vmul.f32 %v5635, %v5635
      %v5865 = vmul.f32 %v5636, %v5636
      %v5866 = vmul.f32 %v5637, %v5637
      %v5867 = vmul.f32 %v5638, %v5638
      %v5868 = vmul.f32 %v5639, %v5639
      %v5869 = vmul.f32 %v5640, %v5640
      %v5870 = vmul.f32 %v5641, %v5641
      %v5871 = vmul.f32 %v5642, %v5642
      %v5872 = vmul.f32 %v5643, %v5643
      %v5873 = vmul.f32 %v5644, %v5644
      %v5874 = vmul.f32 %v5645, %v5645
      %v5875 = vmul.f32 %v5646, %v5646
      %v5876 = vmul.f32 %v5647, %v5647
      %v5877 = vmul.f32 %v5648, %v5648
      %v5878 = vmul.f32 %v5649, %v5649
      %v5879 = vmul.f32 %v5650, %v5650
      %v5880 = vmul.f32 %v5651, %v5651
      %v5881 = vadd.f32 %v5849, %v5850
      %v5882 = vadd.f32 %v5881, %v5851
      %v5883 = vadd.f32 %v5882, %v5852
      %v5884 = vadd.f32 %v5883, %v5853
      %v5885 = vadd.f32 %v5884, %v5854
      %v5886 = vadd.f32 %v5885, %v5855
      %v5887 = vadd.f32 %v5886, %v5856
      %v5888 = vadd.f32 %v5887, %v5857
      %v5889 = vadd.f32 %v5888, %v5858
      %v5890 = vadd.f32 %v5889, %v5859
      %v5891 = vadd.f32 %v5890, %v5860
      %v5892 = vadd.f32 %v5891, %v5861
      %v5893 = vadd.f32 %v5892, %v5862
      %v5894 = vadd.f32 %v5893, %v5863
      %v5895 = vadd.f32 %v5894, %v5864
      %v5896 = vadd.f32 %v5895, %v5865
      %v5897 = vadd.f32 %v5896, %v5866
      %v5898 = vadd.f32 %v5897, %v5867
      %v5899 = vadd.f32 %v5898, %v5868
      %v5900 = vadd.f32 %v5899, %v5869
      %v5901 = vadd.f32 %v5900, %v5870
      %v5902 = vadd.f32 %v5901, %v5871
      %v5903 = vadd.f32 %v5902, %v5872
      %v5904 = vadd.f32 %v5903, %v5873
      %v5905 = vadd.f32 %v5904, %v5874
      %v5906 = vadd.f32 %v5905, %v5875
      %v5907 = vadd.f32 %v5906, %v5876
      %v5908 = vadd.f32 %v5907, %v5877
      %v5909 = vadd.f32 %v5908, %v5878
      %v5910 = vadd.f32 %v5909, %v5879
      %v5911 = vadd.f32 %v5910, %v5880
      %v5912 = vrot.slane %v5911, 4
      %v5913 = vadd.f32 %v5911, %v5912
      %v5914 = vrot.slane %v5913, 2
      %v5915 = vadd.f32 %v5913, %v5914
      %v5916 = vrot.slane %v5915, 1
      %v5917 = vadd.f32 %v5915, %v5916
      %vm5918 = vcmask 1040384
      %v5919 = vsel %vm5918, %v5848, %v5917
      %5920 = vst [vmem:[%s235] sm:$0x3] %v5919
      %p5921 = scmp.lt.s32.totalorder %s17, 1
      %s5922 = scalar_select %p5921, %s17, 1
      %s5923 = smul.addr %s5922, 32
      %s5924 = smul.addr %s5923, 4
      %s5925 = scalar_lea.vmem %s4, %s5924
      %p5926 = scmp.lt.s32.totalorder %s17, 1
      %s5927 = scalar_select %p5926, %s17, 1
      %s5928 = smul.addr %s5927, 2
      %s5929 = scalar_lea.vmem %s5, %s5928
      // Predicated region
      $region37: #{res_block_forward.4} parent=35 // pred_check
        %p5930 = pneg %p124
      $region38: #{res_block_forward.4} parent=35 // pred_check_branch
        %5932 = sbr.rel (%p5930) target = $region40
      $region39: #{res_block_forward.4} parent=35 // pred_region
        _
      $region40: #{res_block_forward.4} parent=35 // pred_fallthru
        _
      // Predicated region
      $region41: #{res_block_forward.4} parent=35 // pred_check
        %p5933 = pneg %p150
      $region42: #{res_block_forward.4} parent=35 // pred_check_branch
        %5935 = sbr.rel (%p5933) target = $region44
      $region43: #{res_block_forward.4} parent=35 // pred_region
        _
      $region44: #{res_block_forward.4} parent=35 // pred_fallthru
        _
    $region36: #{res_block_forward.4} parent=5 // pred_fallthru
      _
    %p5936 = scmp.le.s32.totalorder 2, %s12
    // Predicated region
    $region45: #{res_block_forward.4} parent=5 // pred_check
      %p5937 = pneg %p5936
    $region46: #{res_block_forward.4} parent=5 // pred_check_branch
      %5939 = sbr.rel (%p5937) target = $region48
    $region47: #{res_block_forward.4} parent=5 // pred_region
      %s5940 = ssub.s32 %s12, 2
      // Predicated region
      $region49: #{res_block_forward.4} parent=47 // pred_check
        %p5941 = pneg %p130
      $region50: #{res_block_forward.4} parent=47 // pred_check_branch
        %5943 = sbr.rel (%p5941) target = $region52
      $region51: #{res_block_forward.4} parent=47 // pred_region
        %p5944 = scmp.lt.s32.totalorder %s18, 1
        %s5945 = scalar_select %p5944, %s18, 1
        %s5946 = smul.addr %s5945, 32
        %s5947 = smul.addr %s5946, 4
        %s5948 = scalar_lea.vmem %s4, %s5947
      $region52: #{res_block_forward.4} parent=47 // pred_fallthru
        _
      // Predicated region
      $region53: #{res_block_forward.4} parent=47 // pred_check
        %p5949 = pneg %p156
      $region54: #{res_block_forward.4} parent=47 // pred_check_branch
        %5951 = sbr.rel (%p5949) target = $region56
      $region55: #{res_block_forward.4} parent=47 // pred_region
        %p5952 = scmp.lt.s32.totalorder %s18, 1
        %s5953 = scalar_select %p5952, %s18, 1
        %s5954 = smul.addr %s5953, 2
        %s5955 = scalar_lea.vmem %s5, %s5954
      $region56: #{res_block_forward.4} parent=47 // pred_fallthru
        _
    $region48: #{res_block_forward.4} parent=5 // pred_fallthru
      _
  $region6: #{res_block_forward.4} parent=0 // loop_footer
    %s16 = sadd.s32 1, %s12
  $region7: #{res_block_forward.4} parent=0 // loop_footer_branch
    %11 = sbr.rel target = $region3
  $region8: #{res_block_forward.4} parent=0 // loop_exit
    _

</llo_original>
